<compile_context>
chip_gen: v5e
topology: v5e:2x2
jax: 0.10.0
libtpu: 0.0.40
codegen_flags: <defaults>
</compile_context>

<pallas_src>
import functools

import jax
import jax.numpy as jnp
import numpy as np
from jax.experimental import pallas as pl
from jax.experimental.pallas import tpu as pltpu

# Activations fed to the kernels.  jnp.bfloat16 halves DMA/VMEM on v6e/v7x
# (accumulation stays f32) but loosens accuracy past the 2e-3 check below,
# so the default stays float32.
COMPUTE_DTYPE = jnp.float32

_COMPILER_PARAMS = pltpu.CompilerParams(
    dimension_semantics=("parallel", "parallel"),
    vmem_limit_bytes=32 * 1024 * 1024,
)


# ---------------------------------------------------------------------------
# Pallas kernels
# ---------------------------------------------------------------------------

def _dense_conv_kernel(s0_ref, s1_ref, s2_ref, w_ref, mask_ref,
                       o_ref, sum_ref, sq_ref, *, H, W):
    """Dense 3x3x3 conv for one (n, d) output plane + BN partial statistics.

    s*_ref  : ((H+3)*(W+2), Cin)  padded planes at depth d, d+1, d+2
              (H,W flattened; the two W-gap columns per row are kept).
    w_ref   : (27, Cin, Cout)     weights per kernel offset.
    mask_ref: (H*(W+2), 1)        1.0 on real columns, 0.0 on W-gap columns.
    o_ref   : (H*(W+2), Cout)     conv output (gap rows contain junk).
    sum_ref, sq_ref : (1, Cout)   per-tile sum / sum-of-squares (gaps masked).
    """
    R = W + 2
    HR = H * R
    refs = (s0_ref, s1_ref, s2_ref)
    cout = o_ref.shape[-1]
    acc = jnp.zeros((HR, cout), jnp.float32)
    for kd in range(3):
        slab = refs[kd][...]                     # ((H+3)*R, Cin)
        for kh in range(3):
            for kw in range(3):
                k = (kd * 3 + kh) * 3 + kw
                s = kh * R + kw                  # contiguous sublane slice
                acc = acc + jnp.dot(slab[s:s + HR, :], w_ref[k],
                                    preferred_element_type=jnp.float32)
    o_ref[...] = acc.astype(o_ref.dtype)
    vacc = acc * mask_ref[...]                   # drop the W-gap rows
    sum_ref[...] = jnp.sum(vacc, axis=0, keepdims=True)
    sq_ref[...] = jnp.sum(vacc * vacc, axis=0, keepdims=True)


def _dw_prod_kernel(x0_ref, x1_ref, x2_ref, g0_ref, g1_ref, g2_ref,
                    wx_ref, wg_ref, o_ref, *, H, W, C):
    """Fused depthwise 3x3x3 diff convs + x_diff * g_diff^2 for one (n, d) plane.

    x*/g*  : (H+2, (W+2)*C)  padded planes, channels fused into the lane dim.
    wx/wg  : (27, W*C)       per-offset per-channel weights, lane-tiled W times.
    o_ref  : (H, W*C)        lane-dense output.
    """
    WC = W * C
    xrefs = (x0_ref, x1_ref, x2_ref)
    grefs = (g0_ref, g1_ref, g2_ref)
    xacc = jnp.zeros((H, WC), jnp.float32)
    gacc = jnp.zeros((H, WC), jnp.float32)
    for kd in range(3):
        xs = xrefs[kd][...].astype(jnp.float32)   # (H+2, (W+2)*C)
        gs = grefs[kd][...].astype(jnp.float32)
        for kh in range(3):
            for kw in range(3):
                k = (kd * 3 + kh) * 3 + kw
                wx = wx_ref[pl.ds(k, 1), :].astype(jnp.float32)   # (1, W*C)
                wg = wg_ref[pl.ds(k, 1), :].astype(jnp.float32)
                xacc = xacc + xs[kh:kh + H, kw * C:kw * C + WC] * wx
                gacc = gacc + gs[kh:kh + H, kw * C:kw * C + WC] * wg
    o_ref[...] = (xacc * gacc * gacc).astype(o_ref.dtype)


# ---------------------------------------------------------------------------
# Wrappers (padding, layout glue, pallas_call plumbing)
# ---------------------------------------------------------------------------

def conv3d_dense(x_ndhwc, weight_oidhw):
    """Dense Conv3d, kernel 3, stride 1, padding 1, no bias.

    Returns (out_ndhwc, per-channel sum, per-channel sum-of-squares)."""
    n, d, h, w, cin = x_ndhwc.shape
    cout = weight_oidhw.shape[0]
    r = w + 2
    hr = h * r
    # Pad D/H/W by 1; H gets one extra trailing row so every shifted slice of
    # the flattened (H, W) plane (including its gap rows) stays in bounds.
    xp = jnp.pad(x_ndhwc, ((0, 0), (1, 1), (1, 2), (1, 1), (0, 0)))
    xp = xp.reshape(n, d + 2, (h + 3) * r, cin).astype(COMPUTE_DTYPE)
    # (Cout, Cin, 3,3,3) -> (27, Cin, Cout), k = kd*9 + kh*3 + kw
    wk = jnp.transpose(weight_oidhw, (2, 3, 4, 1, 0)).reshape(27, cin, cout)
    wk = wk.astype(COMPUTE_DTYPE)
    mask = (jnp.arange(hr) % r < w).astype(jnp.float32).reshape(hr, 1)

    def slab_spec(kd):
        return pl.BlockSpec((None, None, (h + 3) * r, cin),
                            lambda i, j, kd=kd: (i, j + kd, 0, 0))

    kern = functools.partial(_dense_conv_kernel, H=h, W=w)
    out, ssum, ssq = pl.pallas_call(
        kern,
        out_shape=(jax.ShapeDtypeStruct((n, d, hr, cout), x_ndhwc.dtype),
                   jax.ShapeDtypeStruct((n, d, 1, cout), jnp.float32),
                   jax.ShapeDtypeStruct((n, d, 1, cout), jnp.float32)),
        grid_spec=pltpu.PrefetchScalarGridSpec(
            num_scalar_prefetch=0,
            grid=(n, d),
            in_specs=[slab_spec(0), slab_spec(1), slab_spec(2),
                      pl.BlockSpec((27, cin, cout), lambda i, j: (0, 0, 0)),
                      pl.BlockSpec((hr, 1), lambda i, j: (0, 0))],
            out_specs=[pl.BlockSpec((None, None, hr, cout),
                                    lambda i, j: (i, j, 0, 0)),
                       pl.BlockSpec((None, None, 1, cout),
                                    lambda i, j: (i, j, 0, 0)),
                       pl.BlockSpec((None, None, 1, cout),
                                    lambda i, j: (i, j, 0, 0))]),
        compiler_params=_COMPILER_PARAMS,
    )(xp, xp, xp, wk, mask)

    out = out.reshape(n, d, h, r, cout)[:, :, :, :w, :]    # drop W-gap columns
    return out, jnp.sum(ssum, axis=(0, 1, 2)), jnp.sum(ssq, axis=(0, 1, 2))


def dw_diff_product(x_ndhwc, g_ndhwc, x_kdiff, g_kdiff):
    """Fused depthwise diff convs + x_diff * g_diff^2 (NDHWC in / out)."""
    n, d, h, w, c = x_ndhwc.shape
    wc = w * c
    xp = jnp.pad(x_ndhwc, ((0, 0), (1, 1), (1, 1), (1, 1), (0, 0)))
    xp = xp.reshape(n, d + 2, h + 2, (w + 2) * c).astype(COMPUTE_DTYPE)
    gp = jnp.pad(g_ndhwc, ((0, 0), (1, 1), (1, 1), (1, 1), (0, 0)))
    gp = gp.reshape(n, d + 2, h + 2, (w + 2) * c).astype(COMPUTE_DTYPE)
    # (C,1,3,3,3) -> (27, C) -> lane-tiled to (27, W*C)  (lane j = w*C + c)
    wx = jnp.tile(jnp.transpose(x_kdiff, (2, 3, 4, 1, 0)).reshape(27, c), (1, w))
    wg = jnp.tile(jnp.transpose(g_kdiff, (2, 3, 4, 1, 0)).reshape(27, c), (1, w))
    wx = wx.astype(COMPUTE_DTYPE)
    wg = wg.astype(COMPUTE_DTYPE)

    def slab_spec(kd):
        return pl.BlockSpec((None, None, h + 2, (w + 2) * c),
                            lambda i, j, kd=kd: (i, j + kd, 0, 0))

    w_spec = pl.BlockSpec((27, wc), lambda i, j: (0, 0))
    kern = functools.partial(_dw_prod_kernel, H=h, W=w, C=c)
    out = pl.pallas_call(
        kern,
        out_shape=jax.ShapeDtypeStruct((n, d, h, wc), x_ndhwc.dtype),
        grid_spec=pltpu.PrefetchScalarGridSpec(
            num_scalar_prefetch=0,
            grid=(n, d),
            in_specs=[slab_spec(0), slab_spec(1), slab_spec(2),
                      slab_spec(0), slab_spec(1), slab_spec(2),
                      w_spec, w_spec],
            out_specs=pl.BlockSpec((None, None, h, wc),
                                   lambda i, j: (i, j, 0, 0))),
        compiler_params=_COMPILER_PARAMS,
    )(xp, xp, xp, gp, gp, gp, wx, wg)
    return out.reshape(n, d, h, w, c)


# ---------------------------------------------------------------------------
# SDC module (parameters + forward)
# ---------------------------------------------------------------------------

def kernel_initialize(kern):
    kern = kern.at[:, :, 0, 0, 0].set(-1.0)
    kern = kern.at[:, :, 0, 0, 2].set(1.0)
    kern = kern.at[:, :, 0, 2, 0].set(1.0)
    kern = kern.at[:, :, 2, 0, 0].set(1.0)
    kern = kern.at[:, :, 0, 2, 2].set(-1.0)
    kern = kern.at[:, :, 2, 0, 2].set(-1.0)
    kern = kern.at[:, :, 2, 2, 0].set(-1.0)
    kern = kern.at[:, :, 2, 2, 2].set(1.0)
    return kern


def init_sdc_params(key, in_channels, guidance_channels):
    k1, k2, kx, kg = jax.random.split(key, 4)
    return {
        # Conv3dbn conv: (Cin, Cg, 3,3,3), no bias (use_batchnorm=True)
        "conv1_w": 0.1 * jax.random.normal(
            k1, (in_channels, guidance_channels, 3, 3, 3), jnp.float32),
        # final Conv3d: (Cin, Cin, 3,3,3), bias=False
        "conv_w": 0.1 * jax.random.normal(
            k2, (in_channels, in_channels, 3, 3, 3), jnp.float32),
        # depthwise diff kernels: randn + corner initialization
        "x_kernel_diff": kernel_initialize(
            jax.random.normal(kx, (in_channels, 1, 3, 3, 3), jnp.float32)),
        "guidance_kernel_diff": kernel_initialize(
            jax.random.normal(kg, (in_channels, 1, 3, 3, 3), jnp.float32)),
        # BatchNorm3d default init
        "bn_gamma": jnp.ones((in_channels,), jnp.float32),
        "bn_beta": jnp.zeros((in_channels,), jnp.float32),
    }


@jax.jit
def sdc_forward(params, x_ncdhw, guidance_ncdhw):
    # NCDHW -> NDHWC (interface of the original module is NCDHW)
    x = jnp.transpose(x_ncdhw, (0, 2, 3, 4, 1))
    g = jnp.transpose(guidance_ncdhw, (0, 2, 3, 4, 1))
    n, d, h, w, _ = x.shape
    m = n * d * h * w

    # Stage 1: g1 = Conv3d(guidance) with fused BN batch statistics.
    g1, ssum, ssq = conv3d_dense(g, params["conv1_w"])
    mean = ssum / m
    var = jnp.maximum(ssq / m - mean * mean, 0.0)
    scale = params["bn_gamma"] * jax.lax.rsqrt(var + 1e-5)
    shift = params["bn_beta"] - mean * scale
    # The BN affine fuses with the zero-pad done inside dw_diff_product.
    g1 = g1 * scale + shift

    # Stage 2: fused depthwise diff convs + x_diff * g_diff^2 (lane-dense).
    prod = dw_diff_product(x, g1, params["x_kernel_diff"],
                           params["guidance_kernel_diff"])

    # Stage 3: out = Conv3d(x_diff * g_diff^2)
    out, _, _ = conv3d_dense(prod, params["conv_w"])

    # NDHWC -> NCDHW
    return jnp.transpose(out, (0, 4, 1, 2, 3))


# ---------------------------------------------------------------------------
# Pure-JAX reference (for correctness check)
# ---------------------------------------------------------------------------

def _ref_conv3d(x_ncdhw, w_oidhw, groups=1):
    return jax.lax.conv_general_dilated(
        x_ncdhw, w_oidhw, window_strides=(1, 1, 1),
        padding=((1, 1), (1, 1), (1, 1)),
        dimension_numbers=("NCDHW", "OIDHW", "NCDHW"),
        feature_group_count=groups)


def sdc_forward_ref(params, x, guidance):
    g1 = _ref_conv3d(guidance, params["conv1_w"])
    mean = jnp.mean(g1, axis=(0, 2, 3, 4), keepdims=True)
    var = jnp.mean(jnp.square(g1 - mean), axis=(0, 2, 3, 4), keepdims=True)
    g1 = (g1 - mean) * jax.lax.rsqrt(var + 1e-5)
    g1 = g1 * params["bn_gamma"].reshape(1, -1, 1, 1, 1) + \
         params["bn_beta"].reshape(1, -1, 1, 1, 1)
    cin = x.shape[1]
    xd = _ref_conv3d(x, params["x_kernel_diff"], groups=cin)
    gd = _ref_conv3d(g1, params["guidance_kernel_diff"], groups=cin)
    return _ref_conv3d(xd * gd * gd, params["conv_w"])


# ---------------------------------------------------------------------------

if __name__ == "__main__":
    in_channels = 4
    guidance_channels = 2
    N, D, H, W = 2, 8, 8, 8

    key = jax.random.PRNGKey(0)
    kp, kx, kg = jax.random.split(key, 3)
    params = init_sdc_params(kp, in_channels, guidance_channels)

    x = jax.random.normal(kx, (N, in_channels, D, H, W), jnp.float32)
    guidance = jax.random.normal(kg, (N, guidance_channels, D, H, W), jnp.float32)

    out = sdc_forward(params, x, guidance)
    out = jax.block_until_ready(out)

    ref = jax.block_until_ready(sdc_forward_ref(params, x, guidance))
    np.testing.assert_allclose(np.asarray(out), np.asarray(ref),
                               rtol=2e-3, atol=2e-3)

    print("KERNEL_OK")
</pallas_src>

<mosaic_0001>
module attributes {stable_mosaic.version = 11 : i64} {
  func.func @_dense_conv_kernel(%arg0: i32, %arg1: i32, %arg2: memref<1x1x110x2xf32, #tpu.memory_space<vmem>>, %arg3: memref<1x1x110x2xf32, #tpu.memory_space<vmem>>, %arg4: memref<1x1x110x2xf32, #tpu.memory_space<vmem>>, %arg5: memref<27x2x4xf32, #tpu.memory_space<vmem>>, %arg6: memref<80x1xf32, #tpu.memory_space<vmem>>, %arg7: memref<1x1x80x4xf32, #tpu.memory_space<vmem>>, %arg8: memref<1x1x1x4xf32, #tpu.memory_space<vmem>>, %arg9: memref<1x1x1x4xf32, #tpu.memory_space<vmem>>) attributes {dimension_semantics = [#tpu.dimension_semantics<parallel>, #tpu.dimension_semantics<parallel>], iteration_bounds = array<i64: 2, 8>, scalar_prefetch = 0 : i64, scratch_operands = 0 : i64, tpu.core_type = #tpu.core_type<tc>, window_params = [{transform_indices = @transform_0, window_bounds = array<i64: 1, 1, 110, 2>}, {transform_indices = @transform_1, window_bounds = array<i64: 1, 1, 110, 2>}, {transform_indices = @transform_2, window_bounds = array<i64: 1, 1, 110, 2>}, {pipeline_mode = #tpu.pipeline_mode<synchronous>, transform_indices = @transform_3, window_bounds = array<i64: 27, 2, 4>}, {pipeline_mode = #tpu.pipeline_mode<synchronous>, transform_indices = @transform_4, window_bounds = array<i64: 80, 1>}, {transform_indices = @transform_5, window_bounds = array<i64: 1, 1, 80, 4>}, {transform_indices = @transform_6, window_bounds = array<i64: 1, 1, 1, 4>}, {transform_indices = @transform_7, window_bounds = array<i64: 1, 1, 1, 4>}]} {
    %cst = arith.constant 0.000000e+00 : f32
    %0 = vector.broadcast %cst : f32 to vector<80x4xf32>
    %c0 = arith.constant 0 : index
    %c0_0 = arith.constant 0 : index
    %c0_1 = arith.constant 0 : index
    %c0_2 = arith.constant 0 : index
    %1 = vector.load %arg2[%c0, %c0_0, %c0_1, %c0_2] : memref<1x1x110x2xf32, #tpu.memory_space<vmem>>, vector<1x1x110x2xf32>
    %2 = vector.shape_cast %1 : vector<1x1x110x2xf32> to vector<110x2xf32>
    %3 = vector.extract_strided_slice %2 {offsets = [0, 0], sizes = [80, 2], strides = [1, 1]} : vector<110x2xf32> to vector<80x2xf32>
    %c0_3 = arith.constant 0 : index
    %c0_4 = arith.constant 0 : index
    %c0_5 = arith.constant 0 : index
    %4 = vector.load %arg5[%c0_3, %c0_4, %c0_5] : memref<27x2x4xf32, #tpu.memory_space<vmem>>, vector<1x2x4xf32>
    %5 = vector.shape_cast %4 : vector<1x2x4xf32> to vector<2x4xf32>
    %cst_6 = arith.constant dense<0.000000e+00> : vector<80x4xf32>
    %6 = tpu.matmul %3, %5, %cst_6 {dimension_numbers = #tpu.dot_dimension_numbers<[1], [0], [0], [1], [0, 0, 1, 1], [], []>} : vector<80x2xf32>, vector<2x4xf32>, vector<80x4xf32> -> vector<80x4xf32>
    %7 = arith.addf %0, %6 : vector<80x4xf32>
    %8 = vector.extract_strided_slice %2 {offsets = [1, 0], sizes = [80, 2], strides = [1, 1]} : vector<110x2xf32> to vector<80x2xf32>
    %c1 = arith.constant 1 : index
    %c0_7 = arith.constant 0 : index
    %c0_8 = arith.constant 0 : index
    %9 = vector.load %arg5[%c1, %c0_7, %c0_8] : memref<27x2x4xf32, #tpu.memory_space<vmem>>, vector<1x2x4xf32>
    %10 = vector.shape_cast %9 : vector<1x2x4xf32> to vector<2x4xf32>
    %cst_9 = arith.constant dense<0.000000e+00> : vector<80x4xf32>
    %11 = tpu.matmul %8, %10, %cst_9 {dimension_numbers = #tpu.dot_dimension_numbers<[1], [0], [0], [1], [0, 0, 1, 1], [], []>} : vector<80x2xf32>, vector<2x4xf32>, vector<80x4xf32> -> vector<80x4xf32>
    %12 = arith.addf %7, %11 : vector<80x4xf32>
    %13 = vector.extract_strided_slice %2 {offsets = [2, 0], sizes = [80, 2], strides = [1, 1]} : vector<110x2xf32> to vector<80x2xf32>
    %c2 = arith.constant 2 : index
    %c0_10 = arith.constant 0 : index
    %c0_11 = arith.constant 0 : index
    %14 = vector.load %arg5[%c2, %c0_10, %c0_11] : memref<27x2x4xf32, #tpu.memory_space<vmem>>, vector<1x2x4xf32>
    %15 = vector.shape_cast %14 : vector<1x2x4xf32> to vector<2x4xf32>
    %cst_12 = arith.constant dense<0.000000e+00> : vector<80x4xf32>
    %16 = tpu.matmul %13, %15, %cst_12 {dimension_numbers = #tpu.dot_dimension_numbers<[1], [0], [0], [1], [0, 0, 1, 1], [], []>} : vector<80x2xf32>, vector<2x4xf32>, vector<80x4xf32> -> vector<80x4xf32>
    %17 = arith.addf %12, %16 : vector<80x4xf32>
    %18 = vector.extract_strided_slice %2 {offsets = [10, 0], sizes = [80, 2], strides = [1, 1]} : vector<110x2xf32> to vector<80x2xf32>
    %c3 = arith.constant 3 : index
    %c0_13 = arith.constant 0 : index
    %c0_14 = arith.constant 0 : index
    %19 = vector.load %arg5[%c3, %c0_13, %c0_14] : memref<27x2x4xf32, #tpu.memory_space<vmem>>, vector<1x2x4xf32>
    %20 = vector.shape_cast %19 : vector<1x2x4xf32> to vector<2x4xf32>
    %cst_15 = arith.constant dense<0.000000e+00> : vector<80x4xf32>
    %21 = tpu.matmul %18, %20, %cst_15 {dimension_numbers = #tpu.dot_dimension_numbers<[1], [0], [0], [1], [0, 0, 1, 1], [], []>} : vector<80x2xf32>, vector<2x4xf32>, vector<80x4xf32> -> vector<80x4xf32>
    %22 = arith.addf %17, %21 : vector<80x4xf32>
    %23 = vector.extract_strided_slice %2 {offsets = [11, 0], sizes = [80, 2], strides = [1, 1]} : vector<110x2xf32> to vector<80x2xf32>
    %c4 = arith.constant 4 : index
    %c0_16 = arith.constant 0 : index
    %c0_17 = arith.constant 0 : index
    %24 = vector.load %arg5[%c4, %c0_16, %c0_17] : memref<27x2x4xf32, #tpu.memory_space<vmem>>, vector<1x2x4xf32>
    %25 = vector.shape_cast %24 : vector<1x2x4xf32> to vector<2x4xf32>
    %cst_18 = arith.constant dense<0.000000e+00> : vector<80x4xf32>
    %26 = tpu.matmul %23, %25, %cst_18 {dimension_numbers = #tpu.dot_dimension_numbers<[1], [0], [0], [1], [0, 0, 1, 1], [], []>} : vector<80x2xf32>, vector<2x4xf32>, vector<80x4xf32> -> vector<80x4xf32>
    %27 = arith.addf %22, %26 : vector<80x4xf32>
    %28 = vector.extract_strided_slice %2 {offsets = [12, 0], sizes = [80, 2], strides = [1, 1]} : vector<110x2xf32> to vector<80x2xf32>
    %c5 = arith.constant 5 : index
    %c0_19 = arith.constant 0 : index
    %c0_20 = arith.constant 0 : index
    %29 = vector.load %arg5[%c5, %c0_19, %c0_20] : memref<27x2x4xf32, #tpu.memory_space<vmem>>, vector<1x2x4xf32>
    %30 = vector.shape_cast %29 : vector<1x2x4xf32> to vector<2x4xf32>
    %cst_21 = arith.constant dense<0.000000e+00> : vector<80x4xf32>
    %31 = tpu.matmul %28, %30, %cst_21 {dimension_numbers = #tpu.dot_dimension_numbers<[1], [0], [0], [1], [0, 0, 1, 1], [], []>} : vector<80x2xf32>, vector<2x4xf32>, vector<80x4xf32> -> vector<80x4xf32>
    %32 = arith.addf %27, %31 : vector<80x4xf32>
    %33 = vector.extract_strided_slice %2 {offsets = [20, 0], sizes = [80, 2], strides = [1, 1]} : vector<110x2xf32> to vector<80x2xf32>
    %c6 = arith.constant 6 : index
    %c0_22 = arith.constant 0 : index
    %c0_23 = arith.constant 0 : index
    %34 = vector.load %arg5[%c6, %c0_22, %c0_23] : memref<27x2x4xf32, #tpu.memory_space<vmem>>, vector<1x2x4xf32>
    %35 = vector.shape_cast %34 : vector<1x2x4xf32> to vector<2x4xf32>
    %cst_24 = arith.constant dense<0.000000e+00> : vector<80x4xf32>
    %36 = tpu.matmul %33, %35, %cst_24 {dimension_numbers = #tpu.dot_dimension_numbers<[1], [0], [0], [1], [0, 0, 1, 1], [], []>} : vector<80x2xf32>, vector<2x4xf32>, vector<80x4xf32> -> vector<80x4xf32>
    %37 = arith.addf %32, %36 : vector<80x4xf32>
    %38 = vector.extract_strided_slice %2 {offsets = [21, 0], sizes = [80, 2], strides = [1, 1]} : vector<110x2xf32> to vector<80x2xf32>
    %c7 = arith.constant 7 : index
    %c0_25 = arith.constant 0 : index
    %c0_26 = arith.constant 0 : index
    %39 = vector.load %arg5[%c7, %c0_25, %c0_26] : memref<27x2x4xf32, #tpu.memory_space<vmem>>, vector<1x2x4xf32>
    %40 = vector.shape_cast %39 : vector<1x2x4xf32> to vector<2x4xf32>
    %cst_27 = arith.constant dense<0.000000e+00> : vector<80x4xf32>
    %41 = tpu.matmul %38, %40, %cst_27 {dimension_numbers = #tpu.dot_dimension_numbers<[1], [0], [0], [1], [0, 0, 1, 1], [], []>} : vector<80x2xf32>, vector<2x4xf32>, vector<80x4xf32> -> vector<80x4xf32>
    %42 = arith.addf %37, %41 : vector<80x4xf32>
    %43 = vector.extract_strided_slice %2 {offsets = [22, 0], sizes = [80, 2], strides = [1, 1]} : vector<110x2xf32> to vector<80x2xf32>
    %c8 = arith.constant 8 : index
    %c0_28 = arith.constant 0 : index
    %c0_29 = arith.constant 0 : index
    %44 = vector.load %arg5[%c8, %c0_28, %c0_29] : memref<27x2x4xf32, #tpu.memory_space<vmem>>, vector<1x2x4xf32>
    %45 = vector.shape_cast %44 : vector<1x2x4xf32> to vector<2x4xf32>
    %cst_30 = arith.constant dense<0.000000e+00> : vector<80x4xf32>
    %46 = tpu.matmul %43, %45, %cst_30 {dimension_numbers = #tpu.dot_dimension_numbers<[1], [0], [0], [1], [0, 0, 1, 1], [], []>} : vector<80x2xf32>, vector<2x4xf32>, vector<80x4xf32> -> vector<80x4xf32>
    %47 = arith.addf %42, %46 : vector<80x4xf32>
    %c0_31 = arith.constant 0 : index
    %c0_32 = arith.constant 0 : index
    %c0_33 = arith.constant 0 : index
    %c0_34 = arith.constant 0 : index
    %48 = vector.load %arg3[%c0_31, %c0_32, %c0_33, %c0_34] : memref<1x1x110x2xf32, #tpu.memory_space<vmem>>, vector<1x1x110x2xf32>
    %49 = vector.shape_cast %48 : vector<1x1x110x2xf32> to vector<110x2xf32>
    %50 = vector.extract_strided_slice %49 {offsets = [0, 0], sizes = [80, 2], strides = [1, 1]} : vector<110x2xf32> to vector<80x2xf32>
    %c9 = arith.constant 9 : index
    %c0_35 = arith.constant 0 : index
    %c0_36 = arith.constant 0 : index
    %51 = vector.load %arg5[%c9, %c0_35, %c0_36] : memref<27x2x4xf32, #tpu.memory_space<vmem>>, vector<1x2x4xf32>
    %52 = vector.shape_cast %51 : vector<1x2x4xf32> to vector<2x4xf32>
    %cst_37 = arith.constant dense<0.000000e+00> : vector<80x4xf32>
    %53 = tpu.matmul %50, %52, %cst_37 {dimension_numbers = #tpu.dot_dimension_numbers<[1], [0], [0], [1], [0, 0, 1, 1], [], []>} : vector<80x2xf32>, vector<2x4xf32>, vector<80x4xf32> -> vector<80x4xf32>
    %54 = arith.addf %47, %53 : vector<80x4xf32>
    %55 = vector.extract_strided_slice %49 {offsets = [1, 0], sizes = [80, 2], strides = [1, 1]} : vector<110x2xf32> to vector<80x2xf32>
    %c10 = arith.constant 10 : index
    %c0_38 = arith.constant 0 : index
    %c0_39 = arith.constant 0 : index
    %56 = vector.load %arg5[%c10, %c0_38, %c0_39] : memref<27x2x4xf32, #tpu.memory_space<vmem>>, vector<1x2x4xf32>
    %57 = vector.shape_cast %56 : vector<1x2x4xf32> to vector<2x4xf32>
    %cst_40 = arith.constant dense<0.000000e+00> : vector<80x4xf32>
    %58 = tpu.matmul %55, %57, %cst_40 {dimension_numbers = #tpu.dot_dimension_numbers<[1], [0], [0], [1], [0, 0, 1, 1], [], []>} : vector<80x2xf32>, vector<2x4xf32>, vector<80x4xf32> -> vector<80x4xf32>
    %59 = arith.addf %54, %58 : vector<80x4xf32>
    %60 = vector.extract_strided_slice %49 {offsets = [2, 0], sizes = [80, 2], strides = [1, 1]} : vector<110x2xf32> to vector<80x2xf32>
    %c11 = arith.constant 11 : index
    %c0_41 = arith.constant 0 : index
    %c0_42 = arith.constant 0 : index
    %61 = vector.load %arg5[%c11, %c0_41, %c0_42] : memref<27x2x4xf32, #tpu.memory_space<vmem>>, vector<1x2x4xf32>
    %62 = vector.shape_cast %61 : vector<1x2x4xf32> to vector<2x4xf32>
    %cst_43 = arith.constant dense<0.000000e+00> : vector<80x4xf32>
    %63 = tpu.matmul %60, %62, %cst_43 {dimension_numbers = #tpu.dot_dimension_numbers<[1], [0], [0], [1], [0, 0, 1, 1], [], []>} : vector<80x2xf32>, vector<2x4xf32>, vector<80x4xf32> -> vector<80x4xf32>
    %64 = arith.addf %59, %63 : vector<80x4xf32>
    %65 = vector.extract_strided_slice %49 {offsets = [10, 0], sizes = [80, 2], strides = [1, 1]} : vector<110x2xf32> to vector<80x2xf32>
    %c12 = arith.constant 12 : index
    %c0_44 = arith.constant 0 : index
    %c0_45 = arith.constant 0 : index
    %66 = vector.load %arg5[%c12, %c0_44, %c0_45] : memref<27x2x4xf32, #tpu.memory_space<vmem>>, vector<1x2x4xf32>
    %67 = vector.shape_cast %66 : vector<1x2x4xf32> to vector<2x4xf32>
    %cst_46 = arith.constant dense<0.000000e+00> : vector<80x4xf32>
    %68 = tpu.matmul %65, %67, %cst_46 {dimension_numbers = #tpu.dot_dimension_numbers<[1], [0], [0], [1], [0, 0, 1, 1], [], []>} : vector<80x2xf32>, vector<2x4xf32>, vector<80x4xf32> -> vector<80x4xf32>
    %69 = arith.addf %64, %68 : vector<80x4xf32>
    %70 = vector.extract_strided_slice %49 {offsets = [11, 0], sizes = [80, 2], strides = [1, 1]} : vector<110x2xf32> to vector<80x2xf32>
    %c13 = arith.constant 13 : index
    %c0_47 = arith.constant 0 : index
    %c0_48 = arith.constant 0 : index
    %71 = vector.load %arg5[%c13, %c0_47, %c0_48] : memref<27x2x4xf32, #tpu.memory_space<vmem>>, vector<1x2x4xf32>
    %72 = vector.shape_cast %71 : vector<1x2x4xf32> to vector<2x4xf32>
    %cst_49 = arith.constant dense<0.000000e+00> : vector<80x4xf32>
    %73 = tpu.matmul %70, %72, %cst_49 {dimension_numbers = #tpu.dot_dimension_numbers<[1], [0], [0], [1], [0, 0, 1, 1], [], []>} : vector<80x2xf32>, vector<2x4xf32>, vector<80x4xf32> -> vector<80x4xf32>
    %74 = arith.addf %69, %73 : vector<80x4xf32>
    %75 = vector.extract_strided_slice %49 {offsets = [12, 0], sizes = [80, 2], strides = [1, 1]} : vector<110x2xf32> to vector<80x2xf32>
    %c14 = arith.constant 14 : index
    %c0_50 = arith.constant 0 : index
    %c0_51 = arith.constant 0 : index
    %76 = vector.load %arg5[%c14, %c0_50, %c0_51] : memref<27x2x4xf32, #tpu.memory_space<vmem>>, vector<1x2x4xf32>
    %77 = vector.shape_cast %76 : vector<1x2x4xf32> to vector<2x4xf32>
    %cst_52 = arith.constant dense<0.000000e+00> : vector<80x4xf32>
    %78 = tpu.matmul %75, %77, %cst_52 {dimension_numbers = #tpu.dot_dimension_numbers<[1], [0], [0], [1], [0, 0, 1, 1], [], []>} : vector<80x2xf32>, vector<2x4xf32>, vector<80x4xf32> -> vector<80x4xf32>
    %79 = arith.addf %74, %78 : vector<80x4xf32>
    %80 = vector.extract_strided_slice %49 {offsets = [20, 0], sizes = [80, 2], strides = [1, 1]} : vector<110x2xf32> to vector<80x2xf32>
    %c15 = arith.constant 15 : index
    %c0_53 = arith.constant 0 : index
    %c0_54 = arith.constant 0 : index
    %81 = vector.load %arg5[%c15, %c0_53, %c0_54] : memref<27x2x4xf32, #tpu.memory_space<vmem>>, vector<1x2x4xf32>
    %82 = vector.shape_cast %81 : vector<1x2x4xf32> to vector<2x4xf32>
    %cst_55 = arith.constant dense<0.000000e+00> : vector<80x4xf32>
    %83 = tpu.matmul %80, %82, %cst_55 {dimension_numbers = #tpu.dot_dimension_numbers<[1], [0], [0], [1], [0, 0, 1, 1], [], []>} : vector<80x2xf32>, vector<2x4xf32>, vector<80x4xf32> -> vector<80x4xf32>
    %84 = arith.addf %79, %83 : vector<80x4xf32>
    %85 = vector.extract_strided_slice %49 {offsets = [21, 0], sizes = [80, 2], strides = [1, 1]} : vector<110x2xf32> to vector<80x2xf32>
    %c16 = arith.constant 16 : index
    %c0_56 = arith.constant 0 : index
    %c0_57 = arith.constant 0 : index
    %86 = vector.load %arg5[%c16, %c0_56, %c0_57] : memref<27x2x4xf32, #tpu.memory_space<vmem>>, vector<1x2x4xf32>
    %87 = vector.shape_cast %86 : vector<1x2x4xf32> to vector<2x4xf32>
    %cst_58 = arith.constant dense<0.000000e+00> : vector<80x4xf32>
    %88 = tpu.matmul %85, %87, %cst_58 {dimension_numbers = #tpu.dot_dimension_numbers<[1], [0], [0], [1], [0, 0, 1, 1], [], []>} : vector<80x2xf32>, vector<2x4xf32>, vector<80x4xf32> -> vector<80x4xf32>
    %89 = arith.addf %84, %88 : vector<80x4xf32>
    %90 = vector.extract_strided_slice %49 {offsets = [22, 0], sizes = [80, 2], strides = [1, 1]} : vector<110x2xf32> to vector<80x2xf32>
    %c17 = arith.constant 17 : index
    %c0_59 = arith.constant 0 : index
    %c0_60 = arith.constant 0 : index
    %91 = vector.load %arg5[%c17, %c0_59, %c0_60] : memref<27x2x4xf32, #tpu.memory_space<vmem>>, vector<1x2x4xf32>
    %92 = vector.shape_cast %91 : vector<1x2x4xf32> to vector<2x4xf32>
    %cst_61 = arith.constant dense<0.000000e+00> : vector<80x4xf32>
    %93 = tpu.matmul %90, %92, %cst_61 {dimension_numbers = #tpu.dot_dimension_numbers<[1], [0], [0], [1], [0, 0, 1, 1], [], []>} : vector<80x2xf32>, vector<2x4xf32>, vector<80x4xf32> -> vector<80x4xf32>
    %94 = arith.addf %89, %93 : vector<80x4xf32>
    %c0_62 = arith.constant 0 : index
    %c0_63 = arith.constant 0 : index
    %c0_64 = arith.constant 0 : index
    %c0_65 = arith.constant 0 : index
    %95 = vector.load %arg4[%c0_62, %c0_63, %c0_64, %c0_65] : memref<1x1x110x2xf32, #tpu.memory_space<vmem>>, vector<1x1x110x2xf32>
    %96 = vector.shape_cast %95 : vector<1x1x110x2xf32> to vector<110x2xf32>
    %97 = vector.extract_strided_slice %96 {offsets = [0, 0], sizes = [80, 2], strides = [1, 1]} : vector<110x2xf32> to vector<80x2xf32>
    %c18 = arith.constant 18 : index
    %c0_66 = arith.constant 0 : index
    %c0_67 = arith.constant 0 : index
    %98 = vector.load %arg5[%c18, %c0_66, %c0_67] : memref<27x2x4xf32, #tpu.memory_space<vmem>>, vector<1x2x4xf32>
    %99 = vector.shape_cast %98 : vector<1x2x4xf32> to vector<2x4xf32>
    %cst_68 = arith.constant dense<0.000000e+00> : vector<80x4xf32>
    %100 = tpu.matmul %97, %99, %cst_68 {dimension_numbers = #tpu.dot_dimension_numbers<[1], [0], [0], [1], [0, 0, 1, 1], [], []>} : vector<80x2xf32>, vector<2x4xf32>, vector<80x4xf32> -> vector<80x4xf32>
    %101 = arith.addf %94, %100 : vector<80x4xf32>
    %102 = vector.extract_strided_slice %96 {offsets = [1, 0], sizes = [80, 2], strides = [1, 1]} : vector<110x2xf32> to vector<80x2xf32>
    %c19 = arith.constant 19 : index
    %c0_69 = arith.constant 0 : index
    %c0_70 = arith.constant 0 : index
    %103 = vector.load %arg5[%c19, %c0_69, %c0_70] : memref<27x2x4xf32, #tpu.memory_space<vmem>>, vector<1x2x4xf32>
    %104 = vector.shape_cast %103 : vector<1x2x4xf32> to vector<2x4xf32>
    %cst_71 = arith.constant dense<0.000000e+00> : vector<80x4xf32>
    %105 = tpu.matmul %102, %104, %cst_71 {dimension_numbers = #tpu.dot_dimension_numbers<[1], [0], [0], [1], [0, 0, 1, 1], [], []>} : vector<80x2xf32>, vector<2x4xf32>, vector<80x4xf32> -> vector<80x4xf32>
    %106 = arith.addf %101, %105 : vector<80x4xf32>
    %107 = vector.extract_strided_slice %96 {offsets = [2, 0], sizes = [80, 2], strides = [1, 1]} : vector<110x2xf32> to vector<80x2xf32>
    %c20 = arith.constant 20 : index
    %c0_72 = arith.constant 0 : index
    %c0_73 = arith.constant 0 : index
    %108 = vector.load %arg5[%c20, %c0_72, %c0_73] : memref<27x2x4xf32, #tpu.memory_space<vmem>>, vector<1x2x4xf32>
    %109 = vector.shape_cast %108 : vector<1x2x4xf32> to vector<2x4xf32>
    %cst_74 = arith.constant dense<0.000000e+00> : vector<80x4xf32>
    %110 = tpu.matmul %107, %109, %cst_74 {dimension_numbers = #tpu.dot_dimension_numbers<[1], [0], [0], [1], [0, 0, 1, 1], [], []>} : vector<80x2xf32>, vector<2x4xf32>, vector<80x4xf32> -> vector<80x4xf32>
    %111 = arith.addf %106, %110 : vector<80x4xf32>
    %112 = vector.extract_strided_slice %96 {offsets = [10, 0], sizes = [80, 2], strides = [1, 1]} : vector<110x2xf32> to vector<80x2xf32>
    %c21 = arith.constant 21 : index
    %c0_75 = arith.constant 0 : index
    %c0_76 = arith.constant 0 : index
    %113 = vector.load %arg5[%c21, %c0_75, %c0_76] : memref<27x2x4xf32, #tpu.memory_space<vmem>>, vector<1x2x4xf32>
    %114 = vector.shape_cast %113 : vector<1x2x4xf32> to vector<2x4xf32>
    %cst_77 = arith.constant dense<0.000000e+00> : vector<80x4xf32>
    %115 = tpu.matmul %112, %114, %cst_77 {dimension_numbers = #tpu.dot_dimension_numbers<[1], [0], [0], [1], [0, 0, 1, 1], [], []>} : vector<80x2xf32>, vector<2x4xf32>, vector<80x4xf32> -> vector<80x4xf32>
    %116 = arith.addf %111, %115 : vector<80x4xf32>
    %117 = vector.extract_strided_slice %96 {offsets = [11, 0], sizes = [80, 2], strides = [1, 1]} : vector<110x2xf32> to vector<80x2xf32>
    %c22 = arith.constant 22 : index
    %c0_78 = arith.constant 0 : index
    %c0_79 = arith.constant 0 : index
    %118 = vector.load %arg5[%c22, %c0_78, %c0_79] : memref<27x2x4xf32, #tpu.memory_space<vmem>>, vector<1x2x4xf32>
    %119 = vector.shape_cast %118 : vector<1x2x4xf32> to vector<2x4xf32>
    %cst_80 = arith.constant dense<0.000000e+00> : vector<80x4xf32>
    %120 = tpu.matmul %117, %119, %cst_80 {dimension_numbers = #tpu.dot_dimension_numbers<[1], [0], [0], [1], [0, 0, 1, 1], [], []>} : vector<80x2xf32>, vector<2x4xf32>, vector<80x4xf32> -> vector<80x4xf32>
    %121 = arith.addf %116, %120 : vector<80x4xf32>
    %122 = vector.extract_strided_slice %96 {offsets = [12, 0], sizes = [80, 2], strides = [1, 1]} : vector<110x2xf32> to vector<80x2xf32>
    %c23 = arith.constant 23 : index
    %c0_81 = arith.constant 0 : index
    %c0_82 = arith.constant 0 : index
    %123 = vector.load %arg5[%c23, %c0_81, %c0_82] : memref<27x2x4xf32, #tpu.memory_space<vmem>>, vector<1x2x4xf32>
    %124 = vector.shape_cast %123 : vector<1x2x4xf32> to vector<2x4xf32>
    %cst_83 = arith.constant dense<0.000000e+00> : vector<80x4xf32>
    %125 = tpu.matmul %122, %124, %cst_83 {dimension_numbers = #tpu.dot_dimension_numbers<[1], [0], [0], [1], [0, 0, 1, 1], [], []>} : vector<80x2xf32>, vector<2x4xf32>, vector<80x4xf32> -> vector<80x4xf32>
    %126 = arith.addf %121, %125 : vector<80x4xf32>
    %127 = vector.extract_strided_slice %96 {offsets = [20, 0], sizes = [80, 2], strides = [1, 1]} : vector<110x2xf32> to vector<80x2xf32>
    %c24 = arith.constant 24 : index
    %c0_84 = arith.constant 0 : index
    %c0_85 = arith.constant 0 : index
    %128 = vector.load %arg5[%c24, %c0_84, %c0_85] : memref<27x2x4xf32, #tpu.memory_space<vmem>>, vector<1x2x4xf32>
    %129 = vector.shape_cast %128 : vector<1x2x4xf32> to vector<2x4xf32>
    %cst_86 = arith.constant dense<0.000000e+00> : vector<80x4xf32>
    %130 = tpu.matmul %127, %129, %cst_86 {dimension_numbers = #tpu.dot_dimension_numbers<[1], [0], [0], [1], [0, 0, 1, 1], [], []>} : vector<80x2xf32>, vector<2x4xf32>, vector<80x4xf32> -> vector<80x4xf32>
    %131 = arith.addf %126, %130 : vector<80x4xf32>
    %132 = vector.extract_strided_slice %96 {offsets = [21, 0], sizes = [80, 2], strides = [1, 1]} : vector<110x2xf32> to vector<80x2xf32>
    %c25 = arith.constant 25 : index
    %c0_87 = arith.constant 0 : index
    %c0_88 = arith.constant 0 : index
    %133 = vector.load %arg5[%c25, %c0_87, %c0_88] : memref<27x2x4xf32, #tpu.memory_space<vmem>>, vector<1x2x4xf32>
    %134 = vector.shape_cast %133 : vector<1x2x4xf32> to vector<2x4xf32>
    %cst_89 = arith.constant dense<0.000000e+00> : vector<80x4xf32>
    %135 = tpu.matmul %132, %134, %cst_89 {dimension_numbers = #tpu.dot_dimension_numbers<[1], [0], [0], [1], [0, 0, 1, 1], [], []>} : vector<80x2xf32>, vector<2x4xf32>, vector<80x4xf32> -> vector<80x4xf32>
    %136 = arith.addf %131, %135 : vector<80x4xf32>
    %137 = vector.extract_strided_slice %96 {offsets = [22, 0], sizes = [80, 2], strides = [1, 1]} : vector<110x2xf32> to vector<80x2xf32>
    %c26 = arith.constant 26 : index
    %c0_90 = arith.constant 0 : index
    %c0_91 = arith.constant 0 : index
    %138 = vector.load %arg5[%c26, %c0_90, %c0_91] : memref<27x2x4xf32, #tpu.memory_space<vmem>>, vector<1x2x4xf32>
    %139 = vector.shape_cast %138 : vector<1x2x4xf32> to vector<2x4xf32>
    %cst_92 = arith.constant dense<0.000000e+00> : vector<80x4xf32>
    %140 = tpu.matmul %137, %139, %cst_92 {dimension_numbers = #tpu.dot_dimension_numbers<[1], [0], [0], [1], [0, 0, 1, 1], [], []>} : vector<80x2xf32>, vector<2x4xf32>, vector<80x4xf32> -> vector<80x4xf32>
    %141 = arith.addf %136, %140 : vector<80x4xf32>
    %c0_93 = arith.constant 0 : index
    %c0_94 = arith.constant 0 : index
    %c0_95 = arith.constant 0 : index
    %c0_96 = arith.constant 0 : index
    %142 = vector.load %arg7[%c0_93, %c0_94, %c0_95, %c0_96] : memref<1x1x80x4xf32, #tpu.memory_space<vmem>>, vector<1x1x80x4xf32>
    %143 = vector.shape_cast %142 : vector<1x1x80x4xf32> to vector<80x4xf32>
    %144 = vector.shape_cast %141 : vector<80x4xf32> to vector<1x1x80x4xf32>
    tpu.vector_store %arg7[%c0_93, %c0_94, %c0_95, %c0_96], %144 {strides = array<i32>} : memref<1x1x80x4xf32, #tpu.memory_space<vmem>>, vector<1x1x80x4xf32>,
    %c0_97 = arith.constant 0 : index
    %c0_98 = arith.constant 0 : index
    %145 = vector.load %arg6[%c0_97, %c0_98] : memref<80x1xf32, #tpu.memory_space<vmem>>, vector<80x1xf32>
    %146 = vector.broadcast %145 : vector<80x1xf32> to vector<80x4xf32>
    %147 = arith.mulf %141, %146 : vector<80x4xf32>
    %cst_99 = arith.constant dense<0.000000e+00> : vector<4xf32>
    %148 = vector.multi_reduction <add>, %147, %cst_99 [0] : vector<80x4xf32> to vector<4xf32>
    %149 = vector.shape_cast %148 : vector<4xf32> to vector<1x4xf32>
    %c0_100 = arith.constant 0 : index
    %c0_101 = arith.constant 0 : index
    %c0_102 = arith.constant 0 : index
    %c0_103 = arith.constant 0 : index
    %150 = vector.load %arg8[%c0_100, %c0_101, %c0_102, %c0_103] : memref<1x1x1x4xf32, #tpu.memory_space<vmem>>, vector<1x1x1x4xf32>
    %151 = vector.shape_cast %150 : vector<1x1x1x4xf32> to vector<1x4xf32>
    %152 = vector.shape_cast %149 : vector<1x4xf32> to vector<1x1x1x4xf32>
    tpu.vector_store %arg8[%c0_100, %c0_101, %c0_102, %c0_103], %152 {strides = array<i32>} : memref<1x1x1x4xf32, #tpu.memory_space<vmem>>, vector<1x1x1x4xf32>,
    %153 = arith.mulf %147, %147 : vector<80x4xf32>
    %cst_104 = arith.constant dense<0.000000e+00> : vector<4xf32>
    %154 = vector.multi_reduction <add>, %153, %cst_104 [0] : vector<80x4xf32> to vector<4xf32>
    %155 = vector.shape_cast %154 : vector<4xf32> to vector<1x4xf32>
    %c0_105 = arith.constant 0 : index
    %c0_106 = arith.constant 0 : index
    %c0_107 = arith.constant 0 : index
    %c0_108 = arith.constant 0 : index
    %156 = vector.load %arg9[%c0_105, %c0_106, %c0_107, %c0_108] : memref<1x1x1x4xf32, #tpu.memory_space<vmem>>, vector<1x1x1x4xf32>
    %157 = vector.shape_cast %156 : vector<1x1x1x4xf32> to vector<1x4xf32>
    %158 = vector.shape_cast %155 : vector<1x4xf32> to vector<1x1x1x4xf32>
    tpu.vector_store %arg9[%c0_105, %c0_106, %c0_107, %c0_108], %158 {strides = array<i32>} : memref<1x1x1x4xf32, #tpu.memory_space<vmem>>, vector<1x1x1x4xf32>,
    return
  }
  func.func @transform_0(%arg0: i32, %arg1: i32) -> (i32, i32, i32, i32) {
    %c0_i32 = arith.constant 0 : i32
    %0 = arith.addi %arg1, %c0_i32 : i32
    %c0_i32_0 = arith.constant 0 : i32
    %c0_i32_1 = arith.constant 0 : i32
    %c0_i32_2 = arith.constant 0 : i32
    return %arg0, %0, %c0_i32_0, %c0_i32_1 : i32, i32, i32, i32
  }
  func.func @transform_1(%arg0: i32, %arg1: i32) -> (i32, i32, i32, i32) {
    %c1_i32 = arith.constant 1 : i32
    %0 = arith.addi %arg1, %c1_i32 : i32
    %c0_i32 = arith.constant 0 : i32
    %c0_i32_0 = arith.constant 0 : i32
    %c0_i32_1 = arith.constant 0 : i32
    return %arg0, %0, %c0_i32, %c0_i32_0 : i32, i32, i32, i32
  }
  func.func @transform_2(%arg0: i32, %arg1: i32) -> (i32, i32, i32, i32) {
    %c2_i32 = arith.constant 2 : i32
    %0 = arith.addi %arg1, %c2_i32 : i32
    %c0_i32 = arith.constant 0 : i32
    %c0_i32_0 = arith.constant 0 : i32
    %c0_i32_1 = arith.constant 0 : i32
    return %arg0, %0, %c0_i32, %c0_i32_0 : i32, i32, i32, i32
  }
  func.func @transform_3(%arg0: i32, %arg1: i32) -> (i32, i32, i32) {
    %c0_i32 = arith.constant 0 : i32
    %c0_i32_0 = arith.constant 0 : i32
    %c0_i32_1 = arith.constant 0 : i32
    %c0_i32_2 = arith.constant 0 : i32
    return %c0_i32, %c0_i32_0, %c0_i32_1 : i32, i32, i32
  }
  func.func @transform_4(%arg0: i32, %arg1: i32) -> (i32, i32) {
    %c0_i32 = arith.constant 0 : i32
    %c0_i32_0 = arith.constant 0 : i32
    %c0_i32_1 = arith.constant 0 : i32
    return %c0_i32, %c0_i32_0 : i32, i32
  }
  func.func @transform_5(%arg0: i32, %arg1: i32) -> (i32, i32, i32, i32) {
    %c0_i32 = arith.constant 0 : i32
    %c0_i32_0 = arith.constant 0 : i32
    %c0_i32_1 = arith.constant 0 : i32
    return %arg0, %arg1, %c0_i32, %c0_i32_0 : i32, i32, i32, i32
  }
  func.func @transform_6(%arg0: i32, %arg1: i32) -> (i32, i32, i32, i32) {
    %c0_i32 = arith.constant 0 : i32
    %c0_i32_0 = arith.constant 0 : i32
    %c0_i32_1 = arith.constant 0 : i32
    return %arg0, %arg1, %c0_i32, %c0_i32_0 : i32, i32, i32, i32
  }
  func.func @transform_7(%arg0: i32, %arg1: i32) -> (i32, i32, i32, i32) {
    %c0_i32 = arith.constant 0 : i32
    %c0_i32_0 = arith.constant 0 : i32
    %c0_i32_1 = arith.constant 0 : i32
    return %arg0, %arg1, %c0_i32, %c0_i32_0 : i32, i32, i32, i32
  }
}

module attributes {stable_mosaic.version = 11 : i64} {
  func.func @_dw_prod_kernel(%arg0: i32, %arg1: i32, %arg2: memref<1x1x10x40xf32, #tpu.memory_space<vmem>>, %arg3: memref<1x1x10x40xf32, #tpu.memory_space<vmem>>, %arg4: memref<1x1x10x40xf32, #tpu.memory_space<vmem>>, %arg5: memref<1x1x10x40xf32, #tpu.memory_space<vmem>>, %arg6: memref<1x1x10x40xf32, #tpu.memory_space<vmem>>, %arg7: memref<1x1x10x40xf32, #tpu.memory_space<vmem>>, %arg8: memref<27x32xf32, #tpu.memory_space<vmem>>, %arg9: memref<27x32xf32, #tpu.memory_space<vmem>>, %arg10: memref<1x1x8x32xf32, #tpu.memory_space<vmem>>) attributes {dimension_semantics = [#tpu.dimension_semantics<parallel>, #tpu.dimension_semantics<parallel>], iteration_bounds = array<i64: 2, 8>, scalar_prefetch = 0 : i64, scratch_operands = 0 : i64, tpu.core_type = #tpu.core_type<tc>, window_params = [{transform_indices = @transform_0, window_bounds = array<i64: 1, 1, 10, 40>}, {transform_indices = @transform_1, window_bounds = array<i64: 1, 1, 10, 40>}, {transform_indices = @transform_2, window_bounds = array<i64: 1, 1, 10, 40>}, {transform_indices = @transform_3, window_bounds = array<i64: 1, 1, 10, 40>}, {transform_indices = @transform_4, window_bounds = array<i64: 1, 1, 10, 40>}, {transform_indices = @transform_5, window_bounds = array<i64: 1, 1, 10, 40>}, {pipeline_mode = #tpu.pipeline_mode<synchronous>, transform_indices = @transform_6, window_bounds = array<i64: 27, 32>}, {pipeline_mode = #tpu.pipeline_mode<synchronous>, transform_indices = @transform_7, window_bounds = array<i64: 27, 32>}, {transform_indices = @transform_8, window_bounds = array<i64: 1, 1, 8, 32>}]} {
    %cst = arith.constant 0.000000e+00 : f32
    %0 = vector.broadcast %cst : f32 to vector<8x32xf32>
    %cst_0 = arith.constant 0.000000e+00 : f32
    %1 = vector.broadcast %cst_0 : f32 to vector<8x32xf32>
    %c0 = arith.constant 0 : index
    %c0_1 = arith.constant 0 : index
    %c0_2 = arith.constant 0 : index
    %c0_3 = arith.constant 0 : index
    %2 = vector.load %arg2[%c0, %c0_1, %c0_2, %c0_3] : memref<1x1x10x40xf32, #tpu.memory_space<vmem>>, vector<1x1x10x40xf32>
    %3 = vector.shape_cast %2 : vector<1x1x10x40xf32> to vector<10x40xf32>
    %c0_4 = arith.constant 0 : index
    %c0_5 = arith.constant 0 : index
    %c0_6 = arith.constant 0 : index
    %c0_7 = arith.constant 0 : index
    %4 = vector.load %arg5[%c0_4, %c0_5, %c0_6, %c0_7] : memref<1x1x10x40xf32, #tpu.memory_space<vmem>>, vector<1x1x10x40xf32>
    %5 = vector.shape_cast %4 : vector<1x1x10x40xf32> to vector<10x40xf32>
    %c0_8 = arith.constant 0 : index
    %c0_9 = arith.constant 0 : index
    %6 = vector.load %arg8[%c0_8, %c0_9] : memref<27x32xf32, #tpu.memory_space<vmem>>, vector<1x32xf32>
    %c0_10 = arith.constant 0 : index
    %c0_11 = arith.constant 0 : index
    %7 = vector.load %arg9[%c0_10, %c0_11] : memref<27x32xf32, #tpu.memory_space<vmem>>, vector<1x32xf32>
    %8 = vector.extract_strided_slice %3 {offsets = [0, 0], sizes = [8, 32], strides = [1, 1]} : vector<10x40xf32> to vector<8x32xf32>
    %9 = vector.broadcast %6 : vector<1x32xf32> to vector<8x32xf32>
    %10 = arith.mulf %8, %9 : vector<8x32xf32>
    %11 = arith.addf %0, %10 : vector<8x32xf32>
    %12 = vector.extract_strided_slice %5 {offsets = [0, 0], sizes = [8, 32], strides = [1, 1]} : vector<10x40xf32> to vector<8x32xf32>
    %13 = vector.broadcast %7 : vector<1x32xf32> to vector<8x32xf32>
    %14 = arith.mulf %12, %13 : vector<8x32xf32>
    %15 = arith.addf %1, %14 : vector<8x32xf32>
    %c1 = arith.constant 1 : index
    %c0_12 = arith.constant 0 : index
    %16 = vector.load %arg8[%c1, %c0_12] : memref<27x32xf32, #tpu.memory_space<vmem>>, vector<1x32xf32>
    %c1_13 = arith.constant 1 : index
    %c0_14 = arith.constant 0 : index
    %17 = vector.load %arg9[%c1_13, %c0_14] : memref<27x32xf32, #tpu.memory_space<vmem>>, vector<1x32xf32>
    %18 = vector.extract_strided_slice %3 {offsets = [0, 4], sizes = [8, 32], strides = [1, 1]} : vector<10x40xf32> to vector<8x32xf32>
    %19 = vector.broadcast %16 : vector<1x32xf32> to vector<8x32xf32>
    %20 = arith.mulf %18, %19 : vector<8x32xf32>
    %21 = arith.addf %11, %20 : vector<8x32xf32>
    %22 = vector.extract_strided_slice %5 {offsets = [0, 4], sizes = [8, 32], strides = [1, 1]} : vector<10x40xf32> to vector<8x32xf32>
    %23 = vector.broadcast %17 : vector<1x32xf32> to vector<8x32xf32>
    %24 = arith.mulf %22, %23 : vector<8x32xf32>
    %25 = arith.addf %15, %24 : vector<8x32xf32>
    %c2 = arith.constant 2 : index
    %c0_15 = arith.constant 0 : index
    %26 = vector.load %arg8[%c2, %c0_15] : memref<27x32xf32, #tpu.memory_space<vmem>>, vector<1x32xf32>
    %c2_16 = arith.constant 2 : index
    %c0_17 = arith.constant 0 : index
    %27 = vector.load %arg9[%c2_16, %c0_17] : memref<27x32xf32, #tpu.memory_space<vmem>>, vector<1x32xf32>
    %28 = vector.extract_strided_slice %3 {offsets = [0, 8], sizes = [8, 32], strides = [1, 1]} : vector<10x40xf32> to vector<8x32xf32>
    %29 = vector.broadcast %26 : vector<1x32xf32> to vector<8x32xf32>
    %30 = arith.mulf %28, %29 : vector<8x32xf32>
    %31 = arith.addf %21, %30 : vector<8x32xf32>
    %32 = vector.extract_strided_slice %5 {offsets = [0, 8], sizes = [8, 32], strides = [1, 1]} : vector<10x40xf32> to vector<8x32xf32>
    %33 = vector.broadcast %27 : vector<1x32xf32> to vector<8x32xf32>
    %34 = arith.mulf %32, %33 : vector<8x32xf32>
    %35 = arith.addf %25, %34 : vector<8x32xf32>
    %c3 = arith.constant 3 : index
    %c0_18 = arith.constant 0 : index
    %36 = vector.load %arg8[%c3, %c0_18] : memref<27x32xf32, #tpu.memory_space<vmem>>, vector<1x32xf32>
    %c3_19 = arith.constant 3 : index
    %c0_20 = arith.constant 0 : index
    %37 = vector.load %arg9[%c3_19, %c0_20] : memref<27x32xf32, #tpu.memory_space<vmem>>, vector<1x32xf32>
    %38 = vector.extract_strided_slice %3 {offsets = [1, 0], sizes = [8, 32], strides = [1, 1]} : vector<10x40xf32> to vector<8x32xf32>
    %39 = vector.broadcast %36 : vector<1x32xf32> to vector<8x32xf32>
    %40 = arith.mulf %38, %39 : vector<8x32xf32>
    %41 = arith.addf %31, %40 : vector<8x32xf32>
    %42 = vector.extract_strided_slice %5 {offsets = [1, 0], sizes = [8, 32], strides = [1, 1]} : vector<10x40xf32> to vector<8x32xf32>
    %43 = vector.broadcast %37 : vector<1x32xf32> to vector<8x32xf32>
    %44 = arith.mulf %42, %43 : vector<8x32xf32>
    %45 = arith.addf %35, %44 : vector<8x32xf32>
    %c4 = arith.constant 4 : index
    %c0_21 = arith.constant 0 : index
    %46 = vector.load %arg8[%c4, %c0_21] : memref<27x32xf32, #tpu.memory_space<vmem>>, vector<1x32xf32>
    %c4_22 = arith.constant 4 : index
    %c0_23 = arith.constant 0 : index
    %47 = vector.load %arg9[%c4_22, %c0_23] : memref<27x32xf32, #tpu.memory_space<vmem>>, vector<1x32xf32>
    %48 = vector.extract_strided_slice %3 {offsets = [1, 4], sizes = [8, 32], strides = [1, 1]} : vector<10x40xf32> to vector<8x32xf32>
    %49 = vector.broadcast %46 : vector<1x32xf32> to vector<8x32xf32>
    %50 = arith.mulf %48, %49 : vector<8x32xf32>
    %51 = arith.addf %41, %50 : vector<8x32xf32>
    %52 = vector.extract_strided_slice %5 {offsets = [1, 4], sizes = [8, 32], strides = [1, 1]} : vector<10x40xf32> to vector<8x32xf32>
    %53 = vector.broadcast %47 : vector<1x32xf32> to vector<8x32xf32>
    %54 = arith.mulf %52, %53 : vector<8x32xf32>
    %55 = arith.addf %45, %54 : vector<8x32xf32>
    %c5 = arith.constant 5 : index
    %c0_24 = arith.constant 0 : index
    %56 = vector.load %arg8[%c5, %c0_24] : memref<27x32xf32, #tpu.memory_space<vmem>>, vector<1x32xf32>
    %c5_25 = arith.constant 5 : index
    %c0_26 = arith.constant 0 : index
    %57 = vector.load %arg9[%c5_25, %c0_26] : memref<27x32xf32, #tpu.memory_space<vmem>>, vector<1x32xf32>
    %58 = vector.extract_strided_slice %3 {offsets = [1, 8], sizes = [8, 32], strides = [1, 1]} : vector<10x40xf32> to vector<8x32xf32>
    %59 = vector.broadcast %56 : vector<1x32xf32> to vector<8x32xf32>
    %60 = arith.mulf %58, %59 : vector<8x32xf32>
    %61 = arith.addf %51, %60 : vector<8x32xf32>
    %62 = vector.extract_strided_slice %5 {offsets = [1, 8], sizes = [8, 32], strides = [1, 1]} : vector<10x40xf32> to vector<8x32xf32>
    %63 = vector.broadcast %57 : vector<1x32xf32> to vector<8x32xf32>
    %64 = arith.mulf %62, %63 : vector<8x32xf32>
    %65 = arith.addf %55, %64 : vector<8x32xf32>
    %c6 = arith.constant 6 : index
    %c0_27 = arith.constant 0 : index
    %66 = vector.load %arg8[%c6, %c0_27] : memref<27x32xf32, #tpu.memory_space<vmem>>, vector<1x32xf32>
    %c6_28 = arith.constant 6 : index
    %c0_29 = arith.constant 0 : index
    %67 = vector.load %arg9[%c6_28, %c0_29] : memref<27x32xf32, #tpu.memory_space<vmem>>, vector<1x32xf32>
    %68 = vector.extract_strided_slice %3 {offsets = [2, 0], sizes = [8, 32], strides = [1, 1]} : vector<10x40xf32> to vector<8x32xf32>
    %69 = vector.broadcast %66 : vector<1x32xf32> to vector<8x32xf32>
    %70 = arith.mulf %68, %69 : vector<8x32xf32>
    %71 = arith.addf %61, %70 : vector<8x32xf32>
    %72 = vector.extract_strided_slice %5 {offsets = [2, 0], sizes = [8, 32], strides = [1, 1]} : vector<10x40xf32> to vector<8x32xf32>
    %73 = vector.broadcast %67 : vector<1x32xf32> to vector<8x32xf32>
    %74 = arith.mulf %72, %73 : vector<8x32xf32>
    %75 = arith.addf %65, %74 : vector<8x32xf32>
    %c7 = arith.constant 7 : index
    %c0_30 = arith.constant 0 : index
    %76 = vector.load %arg8[%c7, %c0_30] : memref<27x32xf32, #tpu.memory_space<vmem>>, vector<1x32xf32>
    %c7_31 = arith.constant 7 : index
    %c0_32 = arith.constant 0 : index
    %77 = vector.load %arg9[%c7_31, %c0_32] : memref<27x32xf32, #tpu.memory_space<vmem>>, vector<1x32xf32>
    %78 = vector.extract_strided_slice %3 {offsets = [2, 4], sizes = [8, 32], strides = [1, 1]} : vector<10x40xf32> to vector<8x32xf32>
    %79 = vector.broadcast %76 : vector<1x32xf32> to vector<8x32xf32>
    %80 = arith.mulf %78, %79 : vector<8x32xf32>
    %81 = arith.addf %71, %80 : vector<8x32xf32>
    %82 = vector.extract_strided_slice %5 {offsets = [2, 4], sizes = [8, 32], strides = [1, 1]} : vector<10x40xf32> to vector<8x32xf32>
    %83 = vector.broadcast %77 : vector<1x32xf32> to vector<8x32xf32>
    %84 = arith.mulf %82, %83 : vector<8x32xf32>
    %85 = arith.addf %75, %84 : vector<8x32xf32>
    %c8 = arith.constant 8 : index
    %c0_33 = arith.constant 0 : index
    %86 = vector.load %arg8[%c8, %c0_33] : memref<27x32xf32, #tpu.memory_space<vmem>>, vector<1x32xf32>
    %c8_34 = arith.constant 8 : index
    %c0_35 = arith.constant 0 : index
    %87 = vector.load %arg9[%c8_34, %c0_35] : memref<27x32xf32, #tpu.memory_space<vmem>>, vector<1x32xf32>
    %88 = vector.extract_strided_slice %3 {offsets = [2, 8], sizes = [8, 32], strides = [1, 1]} : vector<10x40xf32> to vector<8x32xf32>
    %89 = vector.broadcast %86 : vector<1x32xf32> to vector<8x32xf32>
    %90 = arith.mulf %88, %89 : vector<8x32xf32>
    %91 = arith.addf %81, %90 : vector<8x32xf32>
    %92 = vector.extract_strided_slice %5 {offsets = [2, 8], sizes = [8, 32], strides = [1, 1]} : vector<10x40xf32> to vector<8x32xf32>
    %93 = vector.broadcast %87 : vector<1x32xf32> to vector<8x32xf32>
    %94 = arith.mulf %92, %93 : vector<8x32xf32>
    %95 = arith.addf %85, %94 : vector<8x32xf32>
    %c0_36 = arith.constant 0 : index
    %c0_37 = arith.constant 0 : index
    %c0_38 = arith.constant 0 : index
    %c0_39 = arith.constant 0 : index
    %96 = vector.load %arg3[%c0_36, %c0_37, %c0_38, %c0_39] : memref<1x1x10x40xf32, #tpu.memory_space<vmem>>, vector<1x1x10x40xf32>
    %97 = vector.shape_cast %96 : vector<1x1x10x40xf32> to vector<10x40xf32>
    %c0_40 = arith.constant 0 : index
    %c0_41 = arith.constant 0 : index
    %c0_42 = arith.constant 0 : index
    %c0_43 = arith.constant 0 : index
    %98 = vector.load %arg6[%c0_40, %c0_41, %c0_42, %c0_43] : memref<1x1x10x40xf32, #tpu.memory_space<vmem>>, vector<1x1x10x40xf32>
    %99 = vector.shape_cast %98 : vector<1x1x10x40xf32> to vector<10x40xf32>
    %c9 = arith.constant 9 : index
    %c0_44 = arith.constant 0 : index
    %100 = vector.load %arg8[%c9, %c0_44] : memref<27x32xf32, #tpu.memory_space<vmem>>, vector<1x32xf32>
    %c9_45 = arith.constant 9 : index
    %c0_46 = arith.constant 0 : index
    %101 = vector.load %arg9[%c9_45, %c0_46] : memref<27x32xf32, #tpu.memory_space<vmem>>, vector<1x32xf32>
    %102 = vector.extract_strided_slice %97 {offsets = [0, 0], sizes = [8, 32], strides = [1, 1]} : vector<10x40xf32> to vector<8x32xf32>
    %103 = vector.broadcast %100 : vector<1x32xf32> to vector<8x32xf32>
    %104 = arith.mulf %102, %103 : vector<8x32xf32>
    %105 = arith.addf %91, %104 : vector<8x32xf32>
    %106 = vector.extract_strided_slice %99 {offsets = [0, 0], sizes = [8, 32], strides = [1, 1]} : vector<10x40xf32> to vector<8x32xf32>
    %107 = vector.broadcast %101 : vector<1x32xf32> to vector<8x32xf32>
    %108 = arith.mulf %106, %107 : vector<8x32xf32>
    %109 = arith.addf %95, %108 : vector<8x32xf32>
    %c10 = arith.constant 10 : index
    %c0_47 = arith.constant 0 : index
    %110 = vector.load %arg8[%c10, %c0_47] : memref<27x32xf32, #tpu.memory_space<vmem>>, vector<1x32xf32>
    %c10_48 = arith.constant 10 : index
    %c0_49 = arith.constant 0 : index
    %111 = vector.load %arg9[%c10_48, %c0_49] : memref<27x32xf32, #tpu.memory_space<vmem>>, vector<1x32xf32>
    %112 = vector.extract_strided_slice %97 {offsets = [0, 4], sizes = [8, 32], strides = [1, 1]} : vector<10x40xf32> to vector<8x32xf32>
    %113 = vector.broadcast %110 : vector<1x32xf32> to vector<8x32xf32>
    %114 = arith.mulf %112, %113 : vector<8x32xf32>
    %115 = arith.addf %105, %114 : vector<8x32xf32>
    %116 = vector.extract_strided_slice %99 {offsets = [0, 4], sizes = [8, 32], strides = [1, 1]} : vector<10x40xf32> to vector<8x32xf32>
    %117 = vector.broadcast %111 : vector<1x32xf32> to vector<8x32xf32>
    %118 = arith.mulf %116, %117 : vector<8x32xf32>
    %119 = arith.addf %109, %118 : vector<8x32xf32>
    %c11 = arith.constant 11 : index
    %c0_50 = arith.constant 0 : index
    %120 = vector.load %arg8[%c11, %c0_50] : memref<27x32xf32, #tpu.memory_space<vmem>>, vector<1x32xf32>
    %c11_51 = arith.constant 11 : index
    %c0_52 = arith.constant 0 : index
    %121 = vector.load %arg9[%c11_51, %c0_52] : memref<27x32xf32, #tpu.memory_space<vmem>>, vector<1x32xf32>
    %122 = vector.extract_strided_slice %97 {offsets = [0, 8], sizes = [8, 32], strides = [1, 1]} : vector<10x40xf32> to vector<8x32xf32>
    %123 = vector.broadcast %120 : vector<1x32xf32> to vector<8x32xf32>
    %124 = arith.mulf %122, %123 : vector<8x32xf32>
    %125 = arith.addf %115, %124 : vector<8x32xf32>
    %126 = vector.extract_strided_slice %99 {offsets = [0, 8], sizes = [8, 32], strides = [1, 1]} : vector<10x40xf32> to vector<8x32xf32>
    %127 = vector.broadcast %121 : vector<1x32xf32> to vector<8x32xf32>
    %128 = arith.mulf %126, %127 : vector<8x32xf32>
    %129 = arith.addf %119, %128 : vector<8x32xf32>
    %c12 = arith.constant 12 : index
    %c0_53 = arith.constant 0 : index
    %130 = vector.load %arg8[%c12, %c0_53] : memref<27x32xf32, #tpu.memory_space<vmem>>, vector<1x32xf32>
    %c12_54 = arith.constant 12 : index
    %c0_55 = arith.constant 0 : index
    %131 = vector.load %arg9[%c12_54, %c0_55] : memref<27x32xf32, #tpu.memory_space<vmem>>, vector<1x32xf32>
    %132 = vector.extract_strided_slice %97 {offsets = [1, 0], sizes = [8, 32], strides = [1, 1]} : vector<10x40xf32> to vector<8x32xf32>
    %133 = vector.broadcast %130 : vector<1x32xf32> to vector<8x32xf32>
    %134 = arith.mulf %132, %133 : vector<8x32xf32>
    %135 = arith.addf %125, %134 : vector<8x32xf32>
    %136 = vector.extract_strided_slice %99 {offsets = [1, 0], sizes = [8, 32], strides = [1, 1]} : vector<10x40xf32> to vector<8x32xf32>
    %137 = vector.broadcast %131 : vector<1x32xf32> to vector<8x32xf32>
    %138 = arith.mulf %136, %137 : vector<8x32xf32>
    %139 = arith.addf %129, %138 : vector<8x32xf32>
    %c13 = arith.constant 13 : index
    %c0_56 = arith.constant 0 : index
    %140 = vector.load %arg8[%c13, %c0_56] : memref<27x32xf32, #tpu.memory_space<vmem>>, vector<1x32xf32>
    %c13_57 = arith.constant 13 : index
    %c0_58 = arith.constant 0 : index
    %141 = vector.load %arg9[%c13_57, %c0_58] : memref<27x32xf32, #tpu.memory_space<vmem>>, vector<1x32xf32>
    %142 = vector.extract_strided_slice %97 {offsets = [1, 4], sizes = [8, 32], strides = [1, 1]} : vector<10x40xf32> to vector<8x32xf32>
    %143 = vector.broadcast %140 : vector<1x32xf32> to vector<8x32xf32>
    %144 = arith.mulf %142, %143 : vector<8x32xf32>
    %145 = arith.addf %135, %144 : vector<8x32xf32>
    %146 = vector.extract_strided_slice %99 {offsets = [1, 4], sizes = [8, 32], strides = [1, 1]} : vector<10x40xf32> to vector<8x32xf32>
    %147 = vector.broadcast %141 : vector<1x32xf32> to vector<8x32xf32>
    %148 = arith.mulf %146, %147 : vector<8x32xf32>
    %149 = arith.addf %139, %148 : vector<8x32xf32>
    %c14 = arith.constant 14 : index
    %c0_59 = arith.constant 0 : index
    %150 = vector.load %arg8[%c14, %c0_59] : memref<27x32xf32, #tpu.memory_space<vmem>>, vector<1x32xf32>
    %c14_60 = arith.constant 14 : index
    %c0_61 = arith.constant 0 : index
    %151 = vector.load %arg9[%c14_60, %c0_61] : memref<27x32xf32, #tpu.memory_space<vmem>>, vector<1x32xf32>
    %152 = vector.extract_strided_slice %97 {offsets = [1, 8], sizes = [8, 32], strides = [1, 1]} : vector<10x40xf32> to vector<8x32xf32>
    %153 = vector.broadcast %150 : vector<1x32xf32> to vector<8x32xf32>
    %154 = arith.mulf %152, %153 : vector<8x32xf32>
    %155 = arith.addf %145, %154 : vector<8x32xf32>
    %156 = vector.extract_strided_slice %99 {offsets = [1, 8], sizes = [8, 32], strides = [1, 1]} : vector<10x40xf32> to vector<8x32xf32>
    %157 = vector.broadcast %151 : vector<1x32xf32> to vector<8x32xf32>
    %158 = arith.mulf %156, %157 : vector<8x32xf32>
    %159 = arith.addf %149, %158 : vector<8x32xf32>
    %c15 = arith.constant 15 : index
    %c0_62 = arith.constant 0 : index
    %160 = vector.load %arg8[%c15, %c0_62] : memref<27x32xf32, #tpu.memory_space<vmem>>, vector<1x32xf32>
    %c15_63 = arith.constant 15 : index
    %c0_64 = arith.constant 0 : index
    %161 = vector.load %arg9[%c15_63, %c0_64] : memref<27x32xf32, #tpu.memory_space<vmem>>, vector<1x32xf32>
    %162 = vector.extract_strided_slice %97 {offsets = [2, 0], sizes = [8, 32], strides = [1, 1]} : vector<10x40xf32> to vector<8x32xf32>
    %163 = vector.broadcast %160 : vector<1x32xf32> to vector<8x32xf32>
    %164 = arith.mulf %162, %163 : vector<8x32xf32>
    %165 = arith.addf %155, %164 : vector<8x32xf32>
    %166 = vector.extract_strided_slice %99 {offsets = [2, 0], sizes = [8, 32], strides = [1, 1]} : vector<10x40xf32> to vector<8x32xf32>
    %167 = vector.broadcast %161 : vector<1x32xf32> to vector<8x32xf32>
    %168 = arith.mulf %166, %167 : vector<8x32xf32>
    %169 = arith.addf %159, %168 : vector<8x32xf32>
    %c16 = arith.constant 16 : index
    %c0_65 = arith.constant 0 : index
    %170 = vector.load %arg8[%c16, %c0_65] : memref<27x32xf32, #tpu.memory_space<vmem>>, vector<1x32xf32>
    %c16_66 = arith.constant 16 : index
    %c0_67 = arith.constant 0 : index
    %171 = vector.load %arg9[%c16_66, %c0_67] : memref<27x32xf32, #tpu.memory_space<vmem>>, vector<1x32xf32>
    %172 = vector.extract_strided_slice %97 {offsets = [2, 4], sizes = [8, 32], strides = [1, 1]} : vector<10x40xf32> to vector<8x32xf32>
    %173 = vector.broadcast %170 : vector<1x32xf32> to vector<8x32xf32>
    %174 = arith.mulf %172, %173 : vector<8x32xf32>
    %175 = arith.addf %165, %174 : vector<8x32xf32>
    %176 = vector.extract_strided_slice %99 {offsets = [2, 4], sizes = [8, 32], strides = [1, 1]} : vector<10x40xf32> to vector<8x32xf32>
    %177 = vector.broadcast %171 : vector<1x32xf32> to vector<8x32xf32>
    %178 = arith.mulf %176, %177 : vector<8x32xf32>
    %179 = arith.addf %169, %178 : vector<8x32xf32>
    %c17 = arith.constant 17 : index
    %c0_68 = arith.constant 0 : index
    %180 = vector.load %arg8[%c17, %c0_68] : memref<27x32xf32, #tpu.memory_space<vmem>>, vector<1x32xf32>
    %c17_69 = arith.constant 17 : index
    %c0_70 = arith.constant 0 : index
    %181 = vector.load %arg9[%c17_69, %c0_70] : memref<27x32xf32, #tpu.memory_space<vmem>>, vector<1x32xf32>
    %182 = vector.extract_strided_slice %97 {offsets = [2, 8], sizes = [8, 32], strides = [1, 1]} : vector<10x40xf32> to vector<8x32xf32>
    %183 = vector.broadcast %180 : vector<1x32xf32> to vector<8x32xf32>
    %184 = arith.mulf %182, %183 : vector<8x32xf32>
    %185 = arith.addf %175, %184 : vector<8x32xf32>
    %186 = vector.extract_strided_slice %99 {offsets = [2, 8], sizes = [8, 32], strides = [1, 1]} : vector<10x40xf32> to vector<8x32xf32>
    %187 = vector.broadcast %181 : vector<1x32xf32> to vector<8x32xf32>
    %188 = arith.mulf %186, %187 : vector<8x32xf32>
    %189 = arith.addf %179, %188 : vector<8x32xf32>
    %c0_71 = arith.constant 0 : index
    %c0_72 = arith.constant 0 : index
    %c0_73 = arith.constant 0 : index
    %c0_74 = arith.constant 0 : index
    %190 = vector.load %arg4[%c0_71, %c0_72, %c0_73, %c0_74] : memref<1x1x10x40xf32, #tpu.memory_space<vmem>>, vector<1x1x10x40xf32>
    %191 = vector.shape_cast %190 : vector<1x1x10x40xf32> to vector<10x40xf32>
    %c0_75 = arith.constant 0 : index
    %c0_76 = arith.constant 0 : index
    %c0_77 = arith.constant 0 : index
    %c0_78 = arith.constant 0 : index
    %192 = vector.load %arg7[%c0_75, %c0_76, %c0_77, %c0_78] : memref<1x1x10x40xf32, #tpu.memory_space<vmem>>, vector<1x1x10x40xf32>
    %193 = vector.shape_cast %192 : vector<1x1x10x40xf32> to vector<10x40xf32>
    %c18 = arith.constant 18 : index
    %c0_79 = arith.constant 0 : index
    %194 = vector.load %arg8[%c18, %c0_79] : memref<27x32xf32, #tpu.memory_space<vmem>>, vector<1x32xf32>
    %c18_80 = arith.constant 18 : index
    %c0_81 = arith.constant 0 : index
    %195 = vector.load %arg9[%c18_80, %c0_81] : memref<27x32xf32, #tpu.memory_space<vmem>>, vector<1x32xf32>
    %196 = vector.extract_strided_slice %191 {offsets = [0, 0], sizes = [8, 32], strides = [1, 1]} : vector<10x40xf32> to vector<8x32xf32>
    %197 = vector.broadcast %194 : vector<1x32xf32> to vector<8x32xf32>
    %198 = arith.mulf %196, %197 : vector<8x32xf32>
    %199 = arith.addf %185, %198 : vector<8x32xf32>
    %200 = vector.extract_strided_slice %193 {offsets = [0, 0], sizes = [8, 32], strides = [1, 1]} : vector<10x40xf32> to vector<8x32xf32>
    %201 = vector.broadcast %195 : vector<1x32xf32> to vector<8x32xf32>
    %202 = arith.mulf %200, %201 : vector<8x32xf32>
    %203 = arith.addf %189, %202 : vector<8x32xf32>
    %c19 = arith.constant 19 : index
    %c0_82 = arith.constant 0 : index
    %204 = vector.load %arg8[%c19, %c0_82] : memref<27x32xf32, #tpu.memory_space<vmem>>, vector<1x32xf32>
    %c19_83 = arith.constant 19 : index
    %c0_84 = arith.constant 0 : index
    %205 = vector.load %arg9[%c19_83, %c0_84] : memref<27x32xf32, #tpu.memory_space<vmem>>, vector<1x32xf32>
    %206 = vector.extract_strided_slice %191 {offsets = [0, 4], sizes = [8, 32], strides = [1, 1]} : vector<10x40xf32> to vector<8x32xf32>
    %207 = vector.broadcast %204 : vector<1x32xf32> to vector<8x32xf32>
    %208 = arith.mulf %206, %207 : vector<8x32xf32>
    %209 = arith.addf %199, %208 : vector<8x32xf32>
    %210 = vector.extract_strided_slice %193 {offsets = [0, 4], sizes = [8, 32], strides = [1, 1]} : vector<10x40xf32> to vector<8x32xf32>
    %211 = vector.broadcast %205 : vector<1x32xf32> to vector<8x32xf32>
    %212 = arith.mulf %210, %211 : vector<8x32xf32>
    %213 = arith.addf %203, %212 : vector<8x32xf32>
    %c20 = arith.constant 20 : index
    %c0_85 = arith.constant 0 : index
    %214 = vector.load %arg8[%c20, %c0_85] : memref<27x32xf32, #tpu.memory_space<vmem>>, vector<1x32xf32>
    %c20_86 = arith.constant 20 : index
    %c0_87 = arith.constant 0 : index
    %215 = vector.load %arg9[%c20_86, %c0_87] : memref<27x32xf32, #tpu.memory_space<vmem>>, vector<1x32xf32>
    %216 = vector.extract_strided_slice %191 {offsets = [0, 8], sizes = [8, 32], strides = [1, 1]} : vector<10x40xf32> to vector<8x32xf32>
    %217 = vector.broadcast %214 : vector<1x32xf32> to vector<8x32xf32>
    %218 = arith.mulf %216, %217 : vector<8x32xf32>
    %219 = arith.addf %209, %218 : vector<8x32xf32>
    %220 = vector.extract_strided_slice %193 {offsets = [0, 8], sizes = [8, 32], strides = [1, 1]} : vector<10x40xf32> to vector<8x32xf32>
    %221 = vector.broadcast %215 : vector<1x32xf32> to vector<8x32xf32>
    %222 = arith.mulf %220, %221 : vector<8x32xf32>
    %223 = arith.addf %213, %222 : vector<8x32xf32>
    %c21 = arith.constant 21 : index
    %c0_88 = arith.constant 0 : index
    %224 = vector.load %arg8[%c21, %c0_88] : memref<27x32xf32, #tpu.memory_space<vmem>>, vector<1x32xf32>
    %c21_89 = arith.constant 21 : index
    %c0_90 = arith.constant 0 : index
    %225 = vector.load %arg9[%c21_89, %c0_90] : memref<27x32xf32, #tpu.memory_space<vmem>>, vector<1x32xf32>
    %226 = vector.extract_strided_slice %191 {offsets = [1, 0], sizes = [8, 32], strides = [1, 1]} : vector<10x40xf32> to vector<8x32xf32>
    %227 = vector.broadcast %224 : vector<1x32xf32> to vector<8x32xf32>
    %228 = arith.mulf %226, %227 : vector<8x32xf32>
    %229 = arith.addf %219, %228 : vector<8x32xf32>
    %230 = vector.extract_strided_slice %193 {offsets = [1, 0], sizes = [8, 32], strides = [1, 1]} : vector<10x40xf32> to vector<8x32xf32>
    %231 = vector.broadcast %225 : vector<1x32xf32> to vector<8x32xf32>
    %232 = arith.mulf %230, %231 : vector<8x32xf32>
    %233 = arith.addf %223, %232 : vector<8x32xf32>
    %c22 = arith.constant 22 : index
    %c0_91 = arith.constant 0 : index
    %234 = vector.load %arg8[%c22, %c0_91] : memref<27x32xf32, #tpu.memory_space<vmem>>, vector<1x32xf32>
    %c22_92 = arith.constant 22 : index
    %c0_93 = arith.constant 0 : index
    %235 = vector.load %arg9[%c22_92, %c0_93] : memref<27x32xf32, #tpu.memory_space<vmem>>, vector<1x32xf32>
    %236 = vector.extract_strided_slice %191 {offsets = [1, 4], sizes = [8, 32], strides = [1, 1]} : vector<10x40xf32> to vector<8x32xf32>
    %237 = vector.broadcast %234 : vector<1x32xf32> to vector<8x32xf32>
    %238 = arith.mulf %236, %237 : vector<8x32xf32>
    %239 = arith.addf %229, %238 : vector<8x32xf32>
    %240 = vector.extract_strided_slice %193 {offsets = [1, 4], sizes = [8, 32], strides = [1, 1]} : vector<10x40xf32> to vector<8x32xf32>
    %241 = vector.broadcast %235 : vector<1x32xf32> to vector<8x32xf32>
    %242 = arith.mulf %240, %241 : vector<8x32xf32>
    %243 = arith.addf %233, %242 : vector<8x32xf32>
    %c23 = arith.constant 23 : index
    %c0_94 = arith.constant 0 : index
    %244 = vector.load %arg8[%c23, %c0_94] : memref<27x32xf32, #tpu.memory_space<vmem>>, vector<1x32xf32>
    %c23_95 = arith.constant 23 : index
    %c0_96 = arith.constant 0 : index
    %245 = vector.load %arg9[%c23_95, %c0_96] : memref<27x32xf32, #tpu.memory_space<vmem>>, vector<1x32xf32>
    %246 = vector.extract_strided_slice %191 {offsets = [1, 8], sizes = [8, 32], strides = [1, 1]} : vector<10x40xf32> to vector<8x32xf32>
    %247 = vector.broadcast %244 : vector<1x32xf32> to vector<8x32xf32>
    %248 = arith.mulf %246, %247 : vector<8x32xf32>
    %249 = arith.addf %239, %248 : vector<8x32xf32>
    %250 = vector.extract_strided_slice %193 {offsets = [1, 8], sizes = [8, 32], strides = [1, 1]} : vector<10x40xf32> to vector<8x32xf32>
    %251 = vector.broadcast %245 : vector<1x32xf32> to vector<8x32xf32>
    %252 = arith.mulf %250, %251 : vector<8x32xf32>
    %253 = arith.addf %243, %252 : vector<8x32xf32>
    %c24 = arith.constant 24 : index
    %c0_97 = arith.constant 0 : index
    %254 = vector.load %arg8[%c24, %c0_97] : memref<27x32xf32, #tpu.memory_space<vmem>>, vector<1x32xf32>
    %c24_98 = arith.constant 24 : index
    %c0_99 = arith.constant 0 : index
    %255 = vector.load %arg9[%c24_98, %c0_99] : memref<27x32xf32, #tpu.memory_space<vmem>>, vector<1x32xf32>
    %256 = vector.extract_strided_slice %191 {offsets = [2, 0], sizes = [8, 32], strides = [1, 1]} : vector<10x40xf32> to vector<8x32xf32>
    %257 = vector.broadcast %254 : vector<1x32xf32> to vector<8x32xf32>
    %258 = arith.mulf %256, %257 : vector<8x32xf32>
    %259 = arith.addf %249, %258 : vector<8x32xf32>
    %260 = vector.extract_strided_slice %193 {offsets = [2, 0], sizes = [8, 32], strides = [1, 1]} : vector<10x40xf32> to vector<8x32xf32>
    %261 = vector.broadcast %255 : vector<1x32xf32> to vector<8x32xf32>
    %262 = arith.mulf %260, %261 : vector<8x32xf32>
    %263 = arith.addf %253, %262 : vector<8x32xf32>
    %c25 = arith.constant 25 : index
    %c0_100 = arith.constant 0 : index
    %264 = vector.load %arg8[%c25, %c0_100] : memref<27x32xf32, #tpu.memory_space<vmem>>, vector<1x32xf32>
    %c25_101 = arith.constant 25 : index
    %c0_102 = arith.constant 0 : index
    %265 = vector.load %arg9[%c25_101, %c0_102] : memref<27x32xf32, #tpu.memory_space<vmem>>, vector<1x32xf32>
    %266 = vector.extract_strided_slice %191 {offsets = [2, 4], sizes = [8, 32], strides = [1, 1]} : vector<10x40xf32> to vector<8x32xf32>
    %267 = vector.broadcast %264 : vector<1x32xf32> to vector<8x32xf32>
    %268 = arith.mulf %266, %267 : vector<8x32xf32>
    %269 = arith.addf %259, %268 : vector<8x32xf32>
    %270 = vector.extract_strided_slice %193 {offsets = [2, 4], sizes = [8, 32], strides = [1, 1]} : vector<10x40xf32> to vector<8x32xf32>
    %271 = vector.broadcast %265 : vector<1x32xf32> to vector<8x32xf32>
    %272 = arith.mulf %270, %271 : vector<8x32xf32>
    %273 = arith.addf %263, %272 : vector<8x32xf32>
    %c26 = arith.constant 26 : index
    %c0_103 = arith.constant 0 : index
    %274 = vector.load %arg8[%c26, %c0_103] : memref<27x32xf32, #tpu.memory_space<vmem>>, vector<1x32xf32>
    %c26_104 = arith.constant 26 : index
    %c0_105 = arith.constant 0 : index
    %275 = vector.load %arg9[%c26_104, %c0_105] : memref<27x32xf32, #tpu.memory_space<vmem>>, vector<1x32xf32>
    %276 = vector.extract_strided_slice %191 {offsets = [2, 8], sizes = [8, 32], strides = [1, 1]} : vector<10x40xf32> to vector<8x32xf32>
    %277 = vector.broadcast %274 : vector<1x32xf32> to vector<8x32xf32>
    %278 = arith.mulf %276, %277 : vector<8x32xf32>
    %279 = arith.addf %269, %278 : vector<8x32xf32>
    %280 = vector.extract_strided_slice %193 {offsets = [2, 8], sizes = [8, 32], strides = [1, 1]} : vector<10x40xf32> to vector<8x32xf32>
    %281 = vector.broadcast %275 : vector<1x32xf32> to vector<8x32xf32>
    %282 = arith.mulf %280, %281 : vector<8x32xf32>
    %283 = arith.addf %273, %282 : vector<8x32xf32>
    %284 = arith.mulf %279, %283 : vector<8x32xf32>
    %285 = arith.mulf %284, %283 : vector<8x32xf32>
    %c0_106 = arith.constant 0 : index
    %c0_107 = arith.constant 0 : index
    %c0_108 = arith.constant 0 : index
    %c0_109 = arith.constant 0 : index
    %286 = vector.load %arg10[%c0_106, %c0_107, %c0_108, %c0_109] : memref<1x1x8x32xf32, #tpu.memory_space<vmem>>, vector<1x1x8x32xf32>
    %287 = vector.shape_cast %286 : vector<1x1x8x32xf32> to vector<8x32xf32>
    %288 = vector.shape_cast %285 : vector<8x32xf32> to vector<1x1x8x32xf32>
    tpu.vector_store %arg10[%c0_106, %c0_107, %c0_108, %c0_109], %288 {strides = array<i32>} : memref<1x1x8x32xf32, #tpu.memory_space<vmem>>, vector<1x1x8x32xf32>,
    return
  }
  func.func @transform_0(%arg0: i32, %arg1: i32) -> (i32, i32, i32, i32) {
    %c0_i32 = arith.constant 0 : i32
    %0 = arith.addi %arg1, %c0_i32 : i32
    %c0_i32_0 = arith.constant 0 : i32
    %c0_i32_1 = arith.constant 0 : i32
    %c0_i32_2 = arith.constant 0 : i32
    return %arg0, %0, %c0_i32_0, %c0_i32_1 : i32, i32, i32, i32
  }
  func.func @transform_1(%arg0: i32, %arg1: i32) -> (i32, i32, i32, i32) {
    %c1_i32 = arith.constant 1 : i32
    %0 = arith.addi %arg1, %c1_i32 : i32
    %c0_i32 = arith.constant 0 : i32
    %c0_i32_0 = arith.constant 0 : i32
    %c0_i32_1 = arith.constant 0 : i32
    return %arg0, %0, %c0_i32, %c0_i32_0 : i32, i32, i32, i32
  }
  func.func @transform_2(%arg0: i32, %arg1: i32) -> (i32, i32, i32, i32) {
    %c2_i32 = arith.constant 2 : i32
    %0 = arith.addi %arg1, %c2_i32 : i32
    %c0_i32 = arith.constant 0 : i32
    %c0_i32_0 = arith.constant 0 : i32
    %c0_i32_1 = arith.constant 0 : i32
    return %arg0, %0, %c0_i32, %c0_i32_0 : i32, i32, i32, i32
  }
  func.func @transform_3(%arg0: i32, %arg1: i32) -> (i32, i32, i32, i32) {
    %c0_i32 = arith.constant 0 : i32
    %0 = arith.addi %arg1, %c0_i32 : i32
    %c0_i32_0 = arith.constant 0 : i32
    %c0_i32_1 = arith.constant 0 : i32
    %c0_i32_2 = arith.constant 0 : i32
    return %arg0, %0, %c0_i32_0, %c0_i32_1 : i32, i32, i32, i32
  }
  func.func @transform_4(%arg0: i32, %arg1: i32) -> (i32, i32, i32, i32) {
    %c1_i32 = arith.constant 1 : i32
    %0 = arith.addi %arg1, %c1_i32 : i32
    %c0_i32 = arith.constant 0 : i32
    %c0_i32_0 = arith.constant 0 : i32
    %c0_i32_1 = arith.constant 0 : i32
    return %arg0, %0, %c0_i32, %c0_i32_0 : i32, i32, i32, i32
  }
  func.func @transform_5(%arg0: i32, %arg1: i32) -> (i32, i32, i32, i32) {
    %c2_i32 = arith.constant 2 : i32
    %0 = arith.addi %arg1, %c2_i32 : i32
    %c0_i32 = arith.constant 0 : i32
    %c0_i32_0 = arith.constant 0 : i32
    %c0_i32_1 = arith.constant 0 : i32
    return %arg0, %0, %c0_i32, %c0_i32_0 : i32, i32, i32, i32
  }
  func.func @transform_6(%arg0: i32, %arg1: i32) -> (i32, i32) {
    %c0_i32 = arith.constant 0 : i32
    %c0_i32_0 = arith.constant 0 : i32
    %c0_i32_1 = arith.constant 0 : i32
    return %c0_i32, %c0_i32_0 : i32, i32
  }
  func.func @transform_7(%arg0: i32, %arg1: i32) -> (i32, i32) {
    %c0_i32 = arith.constant 0 : i32
    %c0_i32_0 = arith.constant 0 : i32
    %c0_i32_1 = arith.constant 0 : i32
    return %c0_i32, %c0_i32_0 : i32, i32
  }
  func.func @transform_8(%arg0: i32, %arg1: i32) -> (i32, i32, i32, i32) {
    %c0_i32 = arith.constant 0 : i32
    %c0_i32_0 = arith.constant 0 : i32
    %c0_i32_1 = arith.constant 0 : i32
    return %arg0, %arg1, %c0_i32, %c0_i32_0 : i32, i32, i32, i32
  }
}

module attributes {stable_mosaic.version = 11 : i64} {
  func.func @_dense_conv_kernel(%arg0: i32, %arg1: i32, %arg2: memref<1x1x110x4xf32, #tpu.memory_space<vmem>>, %arg3: memref<1x1x110x4xf32, #tpu.memory_space<vmem>>, %arg4: memref<1x1x110x4xf32, #tpu.memory_space<vmem>>, %arg5: memref<27x4x4xf32, #tpu.memory_space<vmem>>, %arg6: memref<80x1xf32, #tpu.memory_space<vmem>>, %arg7: memref<1x1x80x4xf32, #tpu.memory_space<vmem>>, %arg8: memref<1x1x1x4xf32, #tpu.memory_space<vmem>>, %arg9: memref<1x1x1x4xf32, #tpu.memory_space<vmem>>) attributes {dimension_semantics = [#tpu.dimension_semantics<parallel>, #tpu.dimension_semantics<parallel>], iteration_bounds = array<i64: 2, 8>, scalar_prefetch = 0 : i64, scratch_operands = 0 : i64, tpu.core_type = #tpu.core_type<tc>, window_params = [{transform_indices = @transform_0, window_bounds = array<i64: 1, 1, 110, 4>}, {transform_indices = @transform_1, window_bounds = array<i64: 1, 1, 110, 4>}, {transform_indices = @transform_2, window_bounds = array<i64: 1, 1, 110, 4>}, {pipeline_mode = #tpu.pipeline_mode<synchronous>, transform_indices = @transform_3, window_bounds = array<i64: 27, 4, 4>}, {pipeline_mode = #tpu.pipeline_mode<synchronous>, transform_indices = @transform_4, window_bounds = array<i64: 80, 1>}, {transform_indices = @transform_5, window_bounds = array<i64: 1, 1, 80, 4>}, {transform_indices = @transform_6, window_bounds = array<i64: 1, 1, 1, 4>}, {transform_indices = @transform_7, window_bounds = array<i64: 1, 1, 1, 4>}]} {
    %cst = arith.constant 0.000000e+00 : f32
    %0 = vector.broadcast %cst : f32 to vector<80x4xf32>
    %c0 = arith.constant 0 : index
    %c0_0 = arith.constant 0 : index
    %c0_1 = arith.constant 0 : index
    %c0_2 = arith.constant 0 : index
    %1 = vector.load %arg2[%c0, %c0_0, %c0_1, %c0_2] : memref<1x1x110x4xf32, #tpu.memory_space<vmem>>, vector<1x1x110x4xf32>
    %2 = vector.shape_cast %1 : vector<1x1x110x4xf32> to vector<110x4xf32>
    %3 = vector.extract_strided_slice %2 {offsets = [0, 0], sizes = [80, 4], strides = [1, 1]} : vector<110x4xf32> to vector<80x4xf32>
    %c0_3 = arith.constant 0 : index
    %c0_4 = arith.constant 0 : index
    %c0_5 = arith.constant 0 : index
    %4 = vector.load %arg5[%c0_3, %c0_4, %c0_5] : memref<27x4x4xf32, #tpu.memory_space<vmem>>, vector<1x4x4xf32>
    %5 = vector.shape_cast %4 : vector<1x4x4xf32> to vector<4x4xf32>
    %cst_6 = arith.constant dense<0.000000e+00> : vector<80x4xf32>
    %6 = tpu.matmul %3, %5, %cst_6 {dimension_numbers = #tpu.dot_dimension_numbers<[1], [0], [0], [1], [0, 0, 1, 1], [], []>} : vector<80x4xf32>, vector<4x4xf32>, vector<80x4xf32> -> vector<80x4xf32>
    %7 = arith.addf %0, %6 : vector<80x4xf32>
    %8 = vector.extract_strided_slice %2 {offsets = [1, 0], sizes = [80, 4], strides = [1, 1]} : vector<110x4xf32> to vector<80x4xf32>
    %c1 = arith.constant 1 : index
    %c0_7 = arith.constant 0 : index
    %c0_8 = arith.constant 0 : index
    %9 = vector.load %arg5[%c1, %c0_7, %c0_8] : memref<27x4x4xf32, #tpu.memory_space<vmem>>, vector<1x4x4xf32>
    %10 = vector.shape_cast %9 : vector<1x4x4xf32> to vector<4x4xf32>
    %cst_9 = arith.constant dense<0.000000e+00> : vector<80x4xf32>
    %11 = tpu.matmul %8, %10, %cst_9 {dimension_numbers = #tpu.dot_dimension_numbers<[1], [0], [0], [1], [0, 0, 1, 1], [], []>} : vector<80x4xf32>, vector<4x4xf32>, vector<80x4xf32> -> vector<80x4xf32>
    %12 = arith.addf %7, %11 : vector<80x4xf32>
    %13 = vector.extract_strided_slice %2 {offsets = [2, 0], sizes = [80, 4], strides = [1, 1]} : vector<110x4xf32> to vector<80x4xf32>
    %c2 = arith.constant 2 : index
    %c0_10 = arith.constant 0 : index
    %c0_11 = arith.constant 0 : index
    %14 = vector.load %arg5[%c2, %c0_10, %c0_11] : memref<27x4x4xf32, #tpu.memory_space<vmem>>, vector<1x4x4xf32>
    %15 = vector.shape_cast %14 : vector<1x4x4xf32> to vector<4x4xf32>
    %cst_12 = arith.constant dense<0.000000e+00> : vector<80x4xf32>
    %16 = tpu.matmul %13, %15, %cst_12 {dimension_numbers = #tpu.dot_dimension_numbers<[1], [0], [0], [1], [0, 0, 1, 1], [], []>} : vector<80x4xf32>, vector<4x4xf32>, vector<80x4xf32> -> vector<80x4xf32>
    %17 = arith.addf %12, %16 : vector<80x4xf32>
    %18 = vector.extract_strided_slice %2 {offsets = [10, 0], sizes = [80, 4], strides = [1, 1]} : vector<110x4xf32> to vector<80x4xf32>
    %c3 = arith.constant 3 : index
    %c0_13 = arith.constant 0 : index
    %c0_14 = arith.constant 0 : index
    %19 = vector.load %arg5[%c3, %c0_13, %c0_14] : memref<27x4x4xf32, #tpu.memory_space<vmem>>, vector<1x4x4xf32>
    %20 = vector.shape_cast %19 : vector<1x4x4xf32> to vector<4x4xf32>
    %cst_15 = arith.constant dense<0.000000e+00> : vector<80x4xf32>
    %21 = tpu.matmul %18, %20, %cst_15 {dimension_numbers = #tpu.dot_dimension_numbers<[1], [0], [0], [1], [0, 0, 1, 1], [], []>} : vector<80x4xf32>, vector<4x4xf32>, vector<80x4xf32> -> vector<80x4xf32>
    %22 = arith.addf %17, %21 : vector<80x4xf32>
    %23 = vector.extract_strided_slice %2 {offsets = [11, 0], sizes = [80, 4], strides = [1, 1]} : vector<110x4xf32> to vector<80x4xf32>
    %c4 = arith.constant 4 : index
    %c0_16 = arith.constant 0 : index
    %c0_17 = arith.constant 0 : index
    %24 = vector.load %arg5[%c4, %c0_16, %c0_17] : memref<27x4x4xf32, #tpu.memory_space<vmem>>, vector<1x4x4xf32>
    %25 = vector.shape_cast %24 : vector<1x4x4xf32> to vector<4x4xf32>
    %cst_18 = arith.constant dense<0.000000e+00> : vector<80x4xf32>
    %26 = tpu.matmul %23, %25, %cst_18 {dimension_numbers = #tpu.dot_dimension_numbers<[1], [0], [0], [1], [0, 0, 1, 1], [], []>} : vector<80x4xf32>, vector<4x4xf32>, vector<80x4xf32> -> vector<80x4xf32>
    %27 = arith.addf %22, %26 : vector<80x4xf32>
    %28 = vector.extract_strided_slice %2 {offsets = [12, 0], sizes = [80, 4], strides = [1, 1]} : vector<110x4xf32> to vector<80x4xf32>
    %c5 = arith.constant 5 : index
    %c0_19 = arith.constant 0 : index
    %c0_20 = arith.constant 0 : index
    %29 = vector.load %arg5[%c5, %c0_19, %c0_20] : memref<27x4x4xf32, #tpu.memory_space<vmem>>, vector<1x4x4xf32>
    %30 = vector.shape_cast %29 : vector<1x4x4xf32> to vector<4x4xf32>
    %cst_21 = arith.constant dense<0.000000e+00> : vector<80x4xf32>
    %31 = tpu.matmul %28, %30, %cst_21 {dimension_numbers = #tpu.dot_dimension_numbers<[1], [0], [0], [1], [0, 0, 1, 1], [], []>} : vector<80x4xf32>, vector<4x4xf32>, vector<80x4xf32> -> vector<80x4xf32>
    %32 = arith.addf %27, %31 : vector<80x4xf32>
    %33 = vector.extract_strided_slice %2 {offsets = [20, 0], sizes = [80, 4], strides = [1, 1]} : vector<110x4xf32> to vector<80x4xf32>
    %c6 = arith.constant 6 : index
    %c0_22 = arith.constant 0 : index
    %c0_23 = arith.constant 0 : index
    %34 = vector.load %arg5[%c6, %c0_22, %c0_23] : memref<27x4x4xf32, #tpu.memory_space<vmem>>, vector<1x4x4xf32>
    %35 = vector.shape_cast %34 : vector<1x4x4xf32> to vector<4x4xf32>
    %cst_24 = arith.constant dense<0.000000e+00> : vector<80x4xf32>
    %36 = tpu.matmul %33, %35, %cst_24 {dimension_numbers = #tpu.dot_dimension_numbers<[1], [0], [0], [1], [0, 0, 1, 1], [], []>} : vector<80x4xf32>, vector<4x4xf32>, vector<80x4xf32> -> vector<80x4xf32>
    %37 = arith.addf %32, %36 : vector<80x4xf32>
    %38 = vector.extract_strided_slice %2 {offsets = [21, 0], sizes = [80, 4], strides = [1, 1]} : vector<110x4xf32> to vector<80x4xf32>
    %c7 = arith.constant 7 : index
    %c0_25 = arith.constant 0 : index
    %c0_26 = arith.constant 0 : index
    %39 = vector.load %arg5[%c7, %c0_25, %c0_26] : memref<27x4x4xf32, #tpu.memory_space<vmem>>, vector<1x4x4xf32>
    %40 = vector.shape_cast %39 : vector<1x4x4xf32> to vector<4x4xf32>
    %cst_27 = arith.constant dense<0.000000e+00> : vector<80x4xf32>
    %41 = tpu.matmul %38, %40, %cst_27 {dimension_numbers = #tpu.dot_dimension_numbers<[1], [0], [0], [1], [0, 0, 1, 1], [], []>} : vector<80x4xf32>, vector<4x4xf32>, vector<80x4xf32> -> vector<80x4xf32>
    %42 = arith.addf %37, %41 : vector<80x4xf32>
    %43 = vector.extract_strided_slice %2 {offsets = [22, 0], sizes = [80, 4], strides = [1, 1]} : vector<110x4xf32> to vector<80x4xf32>
    %c8 = arith.constant 8 : index
    %c0_28 = arith.constant 0 : index
    %c0_29 = arith.constant 0 : index
    %44 = vector.load %arg5[%c8, %c0_28, %c0_29] : memref<27x4x4xf32, #tpu.memory_space<vmem>>, vector<1x4x4xf32>
    %45 = vector.shape_cast %44 : vector<1x4x4xf32> to vector<4x4xf32>
    %cst_30 = arith.constant dense<0.000000e+00> : vector<80x4xf32>
    %46 = tpu.matmul %43, %45, %cst_30 {dimension_numbers = #tpu.dot_dimension_numbers<[1], [0], [0], [1], [0, 0, 1, 1], [], []>} : vector<80x4xf32>, vector<4x4xf32>, vector<80x4xf32> -> vector<80x4xf32>
    %47 = arith.addf %42, %46 : vector<80x4xf32>
    %c0_31 = arith.constant 0 : index
    %c0_32 = arith.constant 0 : index
    %c0_33 = arith.constant 0 : index
    %c0_34 = arith.constant 0 : index
    %48 = vector.load %arg3[%c0_31, %c0_32, %c0_33, %c0_34] : memref<1x1x110x4xf32, #tpu.memory_space<vmem>>, vector<1x1x110x4xf32>
    %49 = vector.shape_cast %48 : vector<1x1x110x4xf32> to vector<110x4xf32>
    %50 = vector.extract_strided_slice %49 {offsets = [0, 0], sizes = [80, 4], strides = [1, 1]} : vector<110x4xf32> to vector<80x4xf32>
    %c9 = arith.constant 9 : index
    %c0_35 = arith.constant 0 : index
    %c0_36 = arith.constant 0 : index
    %51 = vector.load %arg5[%c9, %c0_35, %c0_36] : memref<27x4x4xf32, #tpu.memory_space<vmem>>, vector<1x4x4xf32>
    %52 = vector.shape_cast %51 : vector<1x4x4xf32> to vector<4x4xf32>
    %cst_37 = arith.constant dense<0.000000e+00> : vector<80x4xf32>
    %53 = tpu.matmul %50, %52, %cst_37 {dimension_numbers = #tpu.dot_dimension_numbers<[1], [0], [0], [1], [0, 0, 1, 1], [], []>} : vector<80x4xf32>, vector<4x4xf32>, vector<80x4xf32> -> vector<80x4xf32>
    %54 = arith.addf %47, %53 : vector<80x4xf32>
    %55 = vector.extract_strided_slice %49 {offsets = [1, 0], sizes = [80, 4], strides = [1, 1]} : vector<110x4xf32> to vector<80x4xf32>
    %c10 = arith.constant 10 : index
    %c0_38 = arith.constant 0 : index
    %c0_39 = arith.constant 0 : index
    %56 = vector.load %arg5[%c10, %c0_38, %c0_39] : memref<27x4x4xf32, #tpu.memory_space<vmem>>, vector<1x4x4xf32>
    %57 = vector.shape_cast %56 : vector<1x4x4xf32> to vector<4x4xf32>
    %cst_40 = arith.constant dense<0.000000e+00> : vector<80x4xf32>
    %58 = tpu.matmul %55, %57, %cst_40 {dimension_numbers = #tpu.dot_dimension_numbers<[1], [0], [0], [1], [0, 0, 1, 1], [], []>} : vector<80x4xf32>, vector<4x4xf32>, vector<80x4xf32> -> vector<80x4xf32>
    %59 = arith.addf %54, %58 : vector<80x4xf32>
    %60 = vector.extract_strided_slice %49 {offsets = [2, 0], sizes = [80, 4], strides = [1, 1]} : vector<110x4xf32> to vector<80x4xf32>
    %c11 = arith.constant 11 : index
    %c0_41 = arith.constant 0 : index
    %c0_42 = arith.constant 0 : index
    %61 = vector.load %arg5[%c11, %c0_41, %c0_42] : memref<27x4x4xf32, #tpu.memory_space<vmem>>, vector<1x4x4xf32>
    %62 = vector.shape_cast %61 : vector<1x4x4xf32> to vector<4x4xf32>
    %cst_43 = arith.constant dense<0.000000e+00> : vector<80x4xf32>
    %63 = tpu.matmul %60, %62, %cst_43 {dimension_numbers = #tpu.dot_dimension_numbers<[1], [0], [0], [1], [0, 0, 1, 1], [], []>} : vector<80x4xf32>, vector<4x4xf32>, vector<80x4xf32> -> vector<80x4xf32>
    %64 = arith.addf %59, %63 : vector<80x4xf32>
    %65 = vector.extract_strided_slice %49 {offsets = [10, 0], sizes = [80, 4], strides = [1, 1]} : vector<110x4xf32> to vector<80x4xf32>
    %c12 = arith.constant 12 : index
    %c0_44 = arith.constant 0 : index
    %c0_45 = arith.constant 0 : index
    %66 = vector.load %arg5[%c12, %c0_44, %c0_45] : memref<27x4x4xf32, #tpu.memory_space<vmem>>, vector<1x4x4xf32>
    %67 = vector.shape_cast %66 : vector<1x4x4xf32> to vector<4x4xf32>
    %cst_46 = arith.constant dense<0.000000e+00> : vector<80x4xf32>
    %68 = tpu.matmul %65, %67, %cst_46 {dimension_numbers = #tpu.dot_dimension_numbers<[1], [0], [0], [1], [0, 0, 1, 1], [], []>} : vector<80x4xf32>, vector<4x4xf32>, vector<80x4xf32> -> vector<80x4xf32>
    %69 = arith.addf %64, %68 : vector<80x4xf32>
    %70 = vector.extract_strided_slice %49 {offsets = [11, 0], sizes = [80, 4], strides = [1, 1]} : vector<110x4xf32> to vector<80x4xf32>
    %c13 = arith.constant 13 : index
    %c0_47 = arith.constant 0 : index
    %c0_48 = arith.constant 0 : index
    %71 = vector.load %arg5[%c13, %c0_47, %c0_48] : memref<27x4x4xf32, #tpu.memory_space<vmem>>, vector<1x4x4xf32>
    %72 = vector.shape_cast %71 : vector<1x4x4xf32> to vector<4x4xf32>
    %cst_49 = arith.constant dense<0.000000e+00> : vector<80x4xf32>
    %73 = tpu.matmul %70, %72, %cst_49 {dimension_numbers = #tpu.dot_dimension_numbers<[1], [0], [0], [1], [0, 0, 1, 1], [], []>} : vector<80x4xf32>, vector<4x4xf32>, vector<80x4xf32> -> vector<80x4xf32>
    %74 = arith.addf %69, %73 : vector<80x4xf32>
    %75 = vector.extract_strided_slice %49 {offsets = [12, 0], sizes = [80, 4], strides = [1, 1]} : vector<110x4xf32> to vector<80x4xf32>
    %c14 = arith.constant 14 : index
    %c0_50 = arith.constant 0 : index
    %c0_51 = arith.constant 0 : index
    %76 = vector.load %arg5[%c14, %c0_50, %c0_51] : memref<27x4x4xf32, #tpu.memory_space<vmem>>, vector<1x4x4xf32>
    %77 = vector.shape_cast %76 : vector<1x4x4xf32> to vector<4x4xf32>
    %cst_52 = arith.constant dense<0.000000e+00> : vector<80x4xf32>
    %78 = tpu.matmul %75, %77, %cst_52 {dimension_numbers = #tpu.dot_dimension_numbers<[1], [0], [0], [1], [0, 0, 1, 1], [], []>} : vector<80x4xf32>, vector<4x4xf32>, vector<80x4xf32> -> vector<80x4xf32>
    %79 = arith.addf %74, %78 : vector<80x4xf32>
    %80 = vector.extract_strided_slice %49 {offsets = [20, 0], sizes = [80, 4], strides = [1, 1]} : vector<110x4xf32> to vector<80x4xf32>
    %c15 = arith.constant 15 : index
    %c0_53 = arith.constant 0 : index
    %c0_54 = arith.constant 0 : index
    %81 = vector.load %arg5[%c15, %c0_53, %c0_54] : memref<27x4x4xf32, #tpu.memory_space<vmem>>, vector<1x4x4xf32>
    %82 = vector.shape_cast %81 : vector<1x4x4xf32> to vector<4x4xf32>
    %cst_55 = arith.constant dense<0.000000e+00> : vector<80x4xf32>
    %83 = tpu.matmul %80, %82, %cst_55 {dimension_numbers = #tpu.dot_dimension_numbers<[1], [0], [0], [1], [0, 0, 1, 1], [], []>} : vector<80x4xf32>, vector<4x4xf32>, vector<80x4xf32> -> vector<80x4xf32>
    %84 = arith.addf %79, %83 : vector<80x4xf32>
    %85 = vector.extract_strided_slice %49 {offsets = [21, 0], sizes = [80, 4], strides = [1, 1]} : vector<110x4xf32> to vector<80x4xf32>
    %c16 = arith.constant 16 : index
    %c0_56 = arith.constant 0 : index
    %c0_57 = arith.constant 0 : index
    %86 = vector.load %arg5[%c16, %c0_56, %c0_57] : memref<27x4x4xf32, #tpu.memory_space<vmem>>, vector<1x4x4xf32>
    %87 = vector.shape_cast %86 : vector<1x4x4xf32> to vector<4x4xf32>
    %cst_58 = arith.constant dense<0.000000e+00> : vector<80x4xf32>
    %88 = tpu.matmul %85, %87, %cst_58 {dimension_numbers = #tpu.dot_dimension_numbers<[1], [0], [0], [1], [0, 0, 1, 1], [], []>} : vector<80x4xf32>, vector<4x4xf32>, vector<80x4xf32> -> vector<80x4xf32>
    %89 = arith.addf %84, %88 : vector<80x4xf32>
    %90 = vector.extract_strided_slice %49 {offsets = [22, 0], sizes = [80, 4], strides = [1, 1]} : vector<110x4xf32> to vector<80x4xf32>
    %c17 = arith.constant 17 : index
    %c0_59 = arith.constant 0 : index
    %c0_60 = arith.constant 0 : index
    %91 = vector.load %arg5[%c17, %c0_59, %c0_60] : memref<27x4x4xf32, #tpu.memory_space<vmem>>, vector<1x4x4xf32>
    %92 = vector.shape_cast %91 : vector<1x4x4xf32> to vector<4x4xf32>
    %cst_61 = arith.constant dense<0.000000e+00> : vector<80x4xf32>
    %93 = tpu.matmul %90, %92, %cst_61 {dimension_numbers = #tpu.dot_dimension_numbers<[1], [0], [0], [1], [0, 0, 1, 1], [], []>} : vector<80x4xf32>, vector<4x4xf32>, vector<80x4xf32> -> vector<80x4xf32>
    %94 = arith.addf %89, %93 : vector<80x4xf32>
    %c0_62 = arith.constant 0 : index
    %c0_63 = arith.constant 0 : index
    %c0_64 = arith.constant 0 : index
    %c0_65 = arith.constant 0 : index
    %95 = vector.load %arg4[%c0_62, %c0_63, %c0_64, %c0_65] : memref<1x1x110x4xf32, #tpu.memory_space<vmem>>, vector<1x1x110x4xf32>
    %96 = vector.shape_cast %95 : vector<1x1x110x4xf32> to vector<110x4xf32>
    %97 = vector.extract_strided_slice %96 {offsets = [0, 0], sizes = [80, 4], strides = [1, 1]} : vector<110x4xf32> to vector<80x4xf32>
    %c18 = arith.constant 18 : index
    %c0_66 = arith.constant 0 : index
    %c0_67 = arith.constant 0 : index
    %98 = vector.load %arg5[%c18, %c0_66, %c0_67] : memref<27x4x4xf32, #tpu.memory_space<vmem>>, vector<1x4x4xf32>
    %99 = vector.shape_cast %98 : vector<1x4x4xf32> to vector<4x4xf32>
    %cst_68 = arith.constant dense<0.000000e+00> : vector<80x4xf32>
    %100 = tpu.matmul %97, %99, %cst_68 {dimension_numbers = #tpu.dot_dimension_numbers<[1], [0], [0], [1], [0, 0, 1, 1], [], []>} : vector<80x4xf32>, vector<4x4xf32>, vector<80x4xf32> -> vector<80x4xf32>
    %101 = arith.addf %94, %100 : vector<80x4xf32>
    %102 = vector.extract_strided_slice %96 {offsets = [1, 0], sizes = [80, 4], strides = [1, 1]} : vector<110x4xf32> to vector<80x4xf32>
    %c19 = arith.constant 19 : index
    %c0_69 = arith.constant 0 : index
    %c0_70 = arith.constant 0 : index
    %103 = vector.load %arg5[%c19, %c0_69, %c0_70] : memref<27x4x4xf32, #tpu.memory_space<vmem>>, vector<1x4x4xf32>
    %104 = vector.shape_cast %103 : vector<1x4x4xf32> to vector<4x4xf32>
    %cst_71 = arith.constant dense<0.000000e+00> : vector<80x4xf32>
    %105 = tpu.matmul %102, %104, %cst_71 {dimension_numbers = #tpu.dot_dimension_numbers<[1], [0], [0], [1], [0, 0, 1, 1], [], []>} : vector<80x4xf32>, vector<4x4xf32>, vector<80x4xf32> -> vector<80x4xf32>
    %106 = arith.addf %101, %105 : vector<80x4xf32>
    %107 = vector.extract_strided_slice %96 {offsets = [2, 0], sizes = [80, 4], strides = [1, 1]} : vector<110x4xf32> to vector<80x4xf32>
    %c20 = arith.constant 20 : index
    %c0_72 = arith.constant 0 : index
    %c0_73 = arith.constant 0 : index
    %108 = vector.load %arg5[%c20, %c0_72, %c0_73] : memref<27x4x4xf32, #tpu.memory_space<vmem>>, vector<1x4x4xf32>
    %109 = vector.shape_cast %108 : vector<1x4x4xf32> to vector<4x4xf32>
    %cst_74 = arith.constant dense<0.000000e+00> : vector<80x4xf32>
    %110 = tpu.matmul %107, %109, %cst_74 {dimension_numbers = #tpu.dot_dimension_numbers<[1], [0], [0], [1], [0, 0, 1, 1], [], []>} : vector<80x4xf32>, vector<4x4xf32>, vector<80x4xf32> -> vector<80x4xf32>
    %111 = arith.addf %106, %110 : vector<80x4xf32>
    %112 = vector.extract_strided_slice %96 {offsets = [10, 0], sizes = [80, 4], strides = [1, 1]} : vector<110x4xf32> to vector<80x4xf32>
    %c21 = arith.constant 21 : index
    %c0_75 = arith.constant 0 : index
    %c0_76 = arith.constant 0 : index
    %113 = vector.load %arg5[%c21, %c0_75, %c0_76] : memref<27x4x4xf32, #tpu.memory_space<vmem>>, vector<1x4x4xf32>
    %114 = vector.shape_cast %113 : vector<1x4x4xf32> to vector<4x4xf32>
    %cst_77 = arith.constant dense<0.000000e+00> : vector<80x4xf32>
    %115 = tpu.matmul %112, %114, %cst_77 {dimension_numbers = #tpu.dot_dimension_numbers<[1], [0], [0], [1], [0, 0, 1, 1], [], []>} : vector<80x4xf32>, vector<4x4xf32>, vector<80x4xf32> -> vector<80x4xf32>
    %116 = arith.addf %111, %115 : vector<80x4xf32>
    %117 = vector.extract_strided_slice %96 {offsets = [11, 0], sizes = [80, 4], strides = [1, 1]} : vector<110x4xf32> to vector<80x4xf32>
    %c22 = arith.constant 22 : index
    %c0_78 = arith.constant 0 : index
    %c0_79 = arith.constant 0 : index
    %118 = vector.load %arg5[%c22, %c0_78, %c0_79] : memref<27x4x4xf32, #tpu.memory_space<vmem>>, vector<1x4x4xf32>
    %119 = vector.shape_cast %118 : vector<1x4x4xf32> to vector<4x4xf32>
    %cst_80 = arith.constant dense<0.000000e+00> : vector<80x4xf32>
    %120 = tpu.matmul %117, %119, %cst_80 {dimension_numbers = #tpu.dot_dimension_numbers<[1], [0], [0], [1], [0, 0, 1, 1], [], []>} : vector<80x4xf32>, vector<4x4xf32>, vector<80x4xf32> -> vector<80x4xf32>
    %121 = arith.addf %116, %120 : vector<80x4xf32>
    %122 = vector.extract_strided_slice %96 {offsets = [12, 0], sizes = [80, 4], strides = [1, 1]} : vector<110x4xf32> to vector<80x4xf32>
    %c23 = arith.constant 23 : index
    %c0_81 = arith.constant 0 : index
    %c0_82 = arith.constant 0 : index
    %123 = vector.load %arg5[%c23, %c0_81, %c0_82] : memref<27x4x4xf32, #tpu.memory_space<vmem>>, vector<1x4x4xf32>
    %124 = vector.shape_cast %123 : vector<1x4x4xf32> to vector<4x4xf32>
    %cst_83 = arith.constant dense<0.000000e+00> : vector<80x4xf32>
    %125 = tpu.matmul %122, %124, %cst_83 {dimension_numbers = #tpu.dot_dimension_numbers<[1], [0], [0], [1], [0, 0, 1, 1], [], []>} : vector<80x4xf32>, vector<4x4xf32>, vector<80x4xf32> -> vector<80x4xf32>
    %126 = arith.addf %121, %125 : vector<80x4xf32>
    %127 = vector.extract_strided_slice %96 {offsets = [20, 0], sizes = [80, 4], strides = [1, 1]} : vector<110x4xf32> to vector<80x4xf32>
    %c24 = arith.constant 24 : index
    %c0_84 = arith.constant 0 : index
    %c0_85 = arith.constant 0 : index
    %128 = vector.load %arg5[%c24, %c0_84, %c0_85] : memref<27x4x4xf32, #tpu.memory_space<vmem>>, vector<1x4x4xf32>
    %129 = vector.shape_cast %128 : vector<1x4x4xf32> to vector<4x4xf32>
    %cst_86 = arith.constant dense<0.000000e+00> : vector<80x4xf32>
    %130 = tpu.matmul %127, %129, %cst_86 {dimension_numbers = #tpu.dot_dimension_numbers<[1], [0], [0], [1], [0, 0, 1, 1], [], []>} : vector<80x4xf32>, vector<4x4xf32>, vector<80x4xf32> -> vector<80x4xf32>
    %131 = arith.addf %126, %130 : vector<80x4xf32>
    %132 = vector.extract_strided_slice %96 {offsets = [21, 0], sizes = [80, 4], strides = [1, 1]} : vector<110x4xf32> to vector<80x4xf32>
    %c25 = arith.constant 25 : index
    %c0_87 = arith.constant 0 : index
    %c0_88 = arith.constant 0 : index
    %133 = vector.load %arg5[%c25, %c0_87, %c0_88] : memref<27x4x4xf32, #tpu.memory_space<vmem>>, vector<1x4x4xf32>
    %134 = vector.shape_cast %133 : vector<1x4x4xf32> to vector<4x4xf32>
    %cst_89 = arith.constant dense<0.000000e+00> : vector<80x4xf32>
    %135 = tpu.matmul %132, %134, %cst_89 {dimension_numbers = #tpu.dot_dimension_numbers<[1], [0], [0], [1], [0, 0, 1, 1], [], []>} : vector<80x4xf32>, vector<4x4xf32>, vector<80x4xf32> -> vector<80x4xf32>
    %136 = arith.addf %131, %135 : vector<80x4xf32>
    %137 = vector.extract_strided_slice %96 {offsets = [22, 0], sizes = [80, 4], strides = [1, 1]} : vector<110x4xf32> to vector<80x4xf32>
    %c26 = arith.constant 26 : index
    %c0_90 = arith.constant 0 : index
    %c0_91 = arith.constant 0 : index
    %138 = vector.load %arg5[%c26, %c0_90, %c0_91] : memref<27x4x4xf32, #tpu.memory_space<vmem>>, vector<1x4x4xf32>
    %139 = vector.shape_cast %138 : vector<1x4x4xf32> to vector<4x4xf32>
    %cst_92 = arith.constant dense<0.000000e+00> : vector<80x4xf32>
    %140 = tpu.matmul %137, %139, %cst_92 {dimension_numbers = #tpu.dot_dimension_numbers<[1], [0], [0], [1], [0, 0, 1, 1], [], []>} : vector<80x4xf32>, vector<4x4xf32>, vector<80x4xf32> -> vector<80x4xf32>
    %141 = arith.addf %136, %140 : vector<80x4xf32>
    %c0_93 = arith.constant 0 : index
    %c0_94 = arith.constant 0 : index
    %c0_95 = arith.constant 0 : index
    %c0_96 = arith.constant 0 : index
    %142 = vector.load %arg7[%c0_93, %c0_94, %c0_95, %c0_96] : memref<1x1x80x4xf32, #tpu.memory_space<vmem>>, vector<1x1x80x4xf32>
    %143 = vector.shape_cast %142 : vector<1x1x80x4xf32> to vector<80x4xf32>
    %144 = vector.shape_cast %141 : vector<80x4xf32> to vector<1x1x80x4xf32>
    tpu.vector_store %arg7[%c0_93, %c0_94, %c0_95, %c0_96], %144 {strides = array<i32>} : memref<1x1x80x4xf32, #tpu.memory_space<vmem>>, vector<1x1x80x4xf32>,
    %c0_97 = arith.constant 0 : index
    %c0_98 = arith.constant 0 : index
    %145 = vector.load %arg6[%c0_97, %c0_98] : memref<80x1xf32, #tpu.memory_space<vmem>>, vector<80x1xf32>
    %146 = vector.broadcast %145 : vector<80x1xf32> to vector<80x4xf32>
    %147 = arith.mulf %141, %146 : vector<80x4xf32>
    %cst_99 = arith.constant dense<0.000000e+00> : vector<4xf32>
    %148 = vector.multi_reduction <add>, %147, %cst_99 [0] : vector<80x4xf32> to vector<4xf32>
    %149 = vector.shape_cast %148 : vector<4xf32> to vector<1x4xf32>
    %c0_100 = arith.constant 0 : index
    %c0_101 = arith.constant 0 : index
    %c0_102 = arith.constant 0 : index
    %c0_103 = arith.constant 0 : index
    %150 = vector.load %arg8[%c0_100, %c0_101, %c0_102, %c0_103] : memref<1x1x1x4xf32, #tpu.memory_space<vmem>>, vector<1x1x1x4xf32>
    %151 = vector.shape_cast %150 : vector<1x1x1x4xf32> to vector<1x4xf32>
    %152 = vector.shape_cast %149 : vector<1x4xf32> to vector<1x1x1x4xf32>
    tpu.vector_store %arg8[%c0_100, %c0_101, %c0_102, %c0_103], %152 {strides = array<i32>} : memref<1x1x1x4xf32, #tpu.memory_space<vmem>>, vector<1x1x1x4xf32>,
    %153 = arith.mulf %147, %147 : vector<80x4xf32>
    %cst_104 = arith.constant dense<0.000000e+00> : vector<4xf32>
    %154 = vector.multi_reduction <add>, %153, %cst_104 [0] : vector<80x4xf32> to vector<4xf32>
    %155 = vector.shape_cast %154 : vector<4xf32> to vector<1x4xf32>
    %c0_105 = arith.constant 0 : index
    %c0_106 = arith.constant 0 : index
    %c0_107 = arith.constant 0 : index
    %c0_108 = arith.constant 0 : index
    %156 = vector.load %arg9[%c0_105, %c0_106, %c0_107, %c0_108] : memref<1x1x1x4xf32, #tpu.memory_space<vmem>>, vector<1x1x1x4xf32>
    %157 = vector.shape_cast %156 : vector<1x1x1x4xf32> to vector<1x4xf32>
    %158 = vector.shape_cast %155 : vector<1x4xf32> to vector<1x1x1x4xf32>
    tpu.vector_store %arg9[%c0_105, %c0_106, %c0_107, %c0_108], %158 {strides = array<i32>} : memref<1x1x1x4xf32, #tpu.memory_space<vmem>>, vector<1x1x1x4xf32>,
    return
  }
  func.func @transform_0(%arg0: i32, %arg1: i32) -> (i32, i32, i32, i32) {
    %c0_i32 = arith.constant 0 : i32
    %0 = arith.addi %arg1, %c0_i32 : i32
    %c0_i32_0 = arith.constant 0 : i32
    %c0_i32_1 = arith.constant 0 : i32
    %c0_i32_2 = arith.constant 0 : i32
    return %arg0, %0, %c0_i32_0, %c0_i32_1 : i32, i32, i32, i32
  }
  func.func @transform_1(%arg0: i32, %arg1: i32) -> (i32, i32, i32, i32) {
    %c1_i32 = arith.constant 1 : i32
    %0 = arith.addi %arg1, %c1_i32 : i32
    %c0_i32 = arith.constant 0 : i32
    %c0_i32_0 = arith.constant 0 : i32
    %c0_i32_1 = arith.constant 0 : i32
    return %arg0, %0, %c0_i32, %c0_i32_0 : i32, i32, i32, i32
  }
  func.func @transform_2(%arg0: i32, %arg1: i32) -> (i32, i32, i32, i32) {
    %c2_i32 = arith.constant 2 : i32
    %0 = arith.addi %arg1, %c2_i32 : i32
    %c0_i32 = arith.constant 0 : i32
    %c0_i32_0 = arith.constant 0 : i32
    %c0_i32_1 = arith.constant 0 : i32
    return %arg0, %0, %c0_i32, %c0_i32_0 : i32, i32, i32, i32
  }
  func.func @transform_3(%arg0: i32, %arg1: i32) -> (i32, i32, i32) {
    %c0_i32 = arith.constant 0 : i32
    %c0_i32_0 = arith.constant 0 : i32
    %c0_i32_1 = arith.constant 0 : i32
    %c0_i32_2 = arith.constant 0 : i32
    return %c0_i32, %c0_i32_0, %c0_i32_1 : i32, i32, i32
  }
  func.func @transform_4(%arg0: i32, %arg1: i32) -> (i32, i32) {
    %c0_i32 = arith.constant 0 : i32
    %c0_i32_0 = arith.constant 0 : i32
    %c0_i32_1 = arith.constant 0 : i32
    return %c0_i32, %c0_i32_0 : i32, i32
  }
  func.func @transform_5(%arg0: i32, %arg1: i32) -> (i32, i32, i32, i32) {
    %c0_i32 = arith.constant 0 : i32
    %c0_i32_0 = arith.constant 0 : i32
    %c0_i32_1 = arith.constant 0 : i32
    return %arg0, %arg1, %c0_i32, %c0_i32_0 : i32, i32, i32, i32
  }
  func.func @transform_6(%arg0: i32, %arg1: i32) -> (i32, i32, i32, i32) {
    %c0_i32 = arith.constant 0 : i32
    %c0_i32_0 = arith.constant 0 : i32
    %c0_i32_1 = arith.constant 0 : i32
    return %arg0, %arg1, %c0_i32, %c0_i32_0 : i32, i32, i32, i32
  }
  func.func @transform_7(%arg0: i32, %arg1: i32) -> (i32, i32, i32, i32) {
    %c0_i32 = arith.constant 0 : i32
    %c0_i32_0 = arith.constant 0 : i32
    %c0_i32_1 = arith.constant 0 : i32
    return %arg0, %arg1, %c0_i32, %c0_i32_0 : i32, i32, i32, i32
  }
}

</mosaic_0001>

<llo_original>
// kernel: sdc_forward.3
$region0: #{sdc_forward.3}
  #allocation0 [shape = 'u32[]', space=smem, size = 0x4, offset = 0x4, fixed_abs, tag = 'smem constant byte address 0x4 - core index']
  #allocation1 [shape = 'u32[72,128]{1,0:T(1,128)}', space=vmem, size = 0x9000, scoped, tag = 'internal scratch']
  %s0 = inlined_call_operand.vmem [shape: f32[2,10,110,2], index: 0, kind: input, shape index: {}, may-alias: {0,1,2}]
  %s1 = inlined_call_operand.vmem [shape: f32[2,10,110,2], index: 1, kind: input, shape index: {}, may-alias: {0,1,2}]
  %s2 = inlined_call_operand.vmem [shape: f32[2,10,110,2], index: 2, kind: input, shape index: {}, may-alias: {0,1,2}]
  %s3 = inlined_call_operand.vmem [shape: f32[27,2,4], index: 3, kind: input, shape index: {}]
  %s4 = inlined_call_operand.vmem [shape: f32[80,1], index: 4, kind: input, shape index: {}]
  %s5 = inlined_call_operand.vmem [shape: f32[2,8,80,4], index: 5, kind: output, shape index: {0}]
  %s6 = inlined_call_operand.vmem [shape: f32[2,8,1,4], index: 6, kind: output, shape index: {1}]
  %s7 = inlined_call_operand.vmem [shape: f32[2,8,1,4], index: 7, kind: output, shape index: {2}]
  %8 = xla_tuple %s5, %s6, %s7
  %s9 = sld [smem:[#allocation0]]
  $region69: #{sdc_forward.3} parent=0
    _
  %s11 = ssub.s32 1, %s9
  %s12 = scalar_select 0, %s11, %s9
  loop: start=0, step=1, limit=18
  $region2: #{sdc_forward.3} parent=0 // loop_pre_header
    _
  $region3: #{sdc_forward.3} parent=0 // loop_header
    %s14 = sphi 0, %s18
    %p15 = scmp.ge.s32.totalorder %s14, 18
    %s21 = sphi 0, %s33
    %s22 = sphi 0, %s29
    %s23 = sphi 0, %s21
    %s24 = sphi 0, %s22
    %s25 = sphi 0, %s23
    %s26 = sphi 0, %s24
    %s38 = sphi 0, %s40
    %s41 = sphi 0, %s38
    %s42 = sphi 0, %s41
    %s58 = sphi 0, %s42
    %s68 = sphi 0, %s70
    %s71 = sphi 0, %s68
    %s72 = sphi 0, %s71
    %s88 = sphi 0, %s72
    %s98 = sphi 0, %s100
    %s101 = sphi 0, %s98
    %s102 = sphi 0, %s101
    %s118 = sphi 0, %s102
    %s122 = sphi 0, %s122
    %s124 = sphi 0, %s122
    %s125 = sphi 0, %s124
    %s139 = sphi 0, %s125
    %s143 = sphi 0, %s143
    %s145 = sphi 0, %s143
    %s146 = sphi 0, %s145
    %s160 = sphi 0, %s146
    %s168 = sphi 0, %s170
    %s171 = sphi 0, %s168
    %s172 = sphi 0, %s171
    %s188 = sphi 0, %s172
    %s196 = sphi 0, %s198
    %s199 = sphi 0, %s196
    %s200 = sphi 0, %s199
    %s216 = sphi 0, %s200
    %s224 = sphi 0, %s226
    %s227 = sphi 0, %s224
    %s228 = sphi 0, %s227
    %s244 = sphi 0, %s228
  $region4: #{sdc_forward.3} parent=0 // loop_header_branch
    %17 = sbr.rel (%p15) target = $region8
  $region5: #{sdc_forward.3} parent=0 // loop_body
    %s19 = ssub.s32 %s14, 1
    %s20 = ssub.s32 %s14, 2
    %s27 = sadd.s32 1, %s22
    %p28 = scmp.ge.s32.totalorder %s27, 8
    %s29 = scalar_select %p28, 0, %s27
    %s30 = sadd.s32 1, %s21
    %s31 = scalar_select %p28, %s30, %s21
    %p32 = scmp.ge.s32.totalorder %s31, 2
    %s33 = scalar_select %p32, 0, %s31
    %s34 = ssub.s32 %s21, %s33
    %s35 = ssub.s32 %s22, %s29
    %s36 = sor.u32 %s34, %s35
    %p37 = scmp.eq.s32.totalorder %s36, 0
    %s39 = sadd.s32 %s38, 1
    %s40 = scalar_select %p37, %s38, %s39
    %p43 = pneg %p37
    %p44 = scmp.eq.s32.totalorder %s14, 15
    %p45 = por %p43, %p44
    %p46 = scmp.ne.s32.totalorder %s38, %s41
    %p47 = scmp.eq.s32.totalorder %s14, 0
    %p48 = por %p46, %p47
    %p49 = scmp.ne.s32.totalorder %s38, %s41
    %p50 = scmp.eq.s32.totalorder %s19, 15
    %p51 = por %p49, %p50
    %p52 = scmp.ne.s32.totalorder %s41, %s42
    %p53 = scmp.eq.s32.totalorder %s19, 0
    %p54 = por %p52, %p53
    %p55 = scmp.ne.s32.totalorder %s41, %s42
    %p56 = scmp.eq.s32.totalorder %s20, 15
    %p57 = por %p55, %p56
    %p59 = scmp.ne.s32.totalorder %s42, %s58
    %p60 = scmp.eq.s32.totalorder %s20, 0
    %p61 = por %p59, %p60
    %s62 = sadd.s32 %s22, 1
    %s63 = sadd.s32 %s29, 1
    %s64 = ssub.s32 %s21, %s33
    %s65 = ssub.s32 %s62, %s63
    %s66 = sor.u32 %s64, %s65
    %p67 = scmp.eq.s32.totalorder %s66, 0
    %s69 = sadd.s32 %s68, 1
    %s70 = scalar_select %p67, %s68, %s69
    %p73 = pneg %p67
    %p74 = scmp.eq.s32.totalorder %s14, 15
    %p75 = por %p73, %p74
    %p76 = scmp.ne.s32.totalorder %s68, %s71
    %p77 = scmp.eq.s32.totalorder %s14, 0
    %p78 = por %p76, %p77
    %p79 = scmp.ne.s32.totalorder %s68, %s71
    %p80 = scmp.eq.s32.totalorder %s19, 15
    %p81 = por %p79, %p80
    %p82 = scmp.ne.s32.totalorder %s71, %s72
    %p83 = scmp.eq.s32.totalorder %s19, 0
    %p84 = por %p82, %p83
    %p85 = scmp.ne.s32.totalorder %s71, %s72
    %p86 = scmp.eq.s32.totalorder %s20, 15
    %p87 = por %p85, %p86
    %p89 = scmp.ne.s32.totalorder %s72, %s88
    %p90 = scmp.eq.s32.totalorder %s20, 0
    %p91 = por %p89, %p90
    %s92 = sadd.s32 %s22, 2
    %s93 = sadd.s32 %s29, 2
    %s94 = ssub.s32 %s21, %s33
    %s95 = ssub.s32 %s92, %s93
    %s96 = sor.u32 %s94, %s95
    %p97 = scmp.eq.s32.totalorder %s96, 0
    %s99 = sadd.s32 %s98, 1
    %s100 = scalar_select %p97, %s98, %s99
    %p103 = pneg %p97
    %p104 = scmp.eq.s32.totalorder %s14, 15
    %p105 = por %p103, %p104
    %p106 = scmp.ne.s32.totalorder %s98, %s101
    %p107 = scmp.eq.s32.totalorder %s14, 0
    %p108 = por %p106, %p107
    %p109 = scmp.ne.s32.totalorder %s98, %s101
    %p110 = scmp.eq.s32.totalorder %s19, 15
    %p111 = por %p109, %p110
    %p112 = scmp.ne.s32.totalorder %s101, %s102
    %p113 = scmp.eq.s32.totalorder %s19, 0
    %p114 = por %p112, %p113
    %p115 = scmp.ne.s32.totalorder %s101, %s102
    %p116 = scmp.eq.s32.totalorder %s20, 15
    %p117 = por %p115, %p116
    %p119 = scmp.ne.s32.totalorder %s102, %s118
    %p120 = scmp.eq.s32.totalorder %s20, 0
    %p121 = por %p119, %p120
    %s123 = sadd.s32 %s122, 1
    %p126 = scmp.eq.s32.totalorder %s14, 15
    %p127 = scmp.ne.s32.totalorder %s122, %s124
    %p128 = scmp.eq.s32.totalorder %s14, 0
    %p129 = por %p127, %p128
    %p130 = scmp.ne.s32.totalorder %s122, %s124
    %p131 = scmp.eq.s32.totalorder %s19, 15
    %p132 = por %p130, %p131
    %p133 = scmp.ne.s32.totalorder %s124, %s125
    %p134 = scmp.eq.s32.totalorder %s19, 0
    %p135 = por %p133, %p134
    %p136 = scmp.ne.s32.totalorder %s124, %s125
    %p137 = scmp.eq.s32.totalorder %s20, 15
    %p138 = por %p136, %p137
    %p140 = scmp.ne.s32.totalorder %s125, %s139
    %p141 = scmp.eq.s32.totalorder %s20, 0
    %p142 = por %p140, %p141
    %s144 = sadd.s32 %s143, 1
    %p147 = scmp.eq.s32.totalorder %s14, 15
    %p148 = scmp.ne.s32.totalorder %s143, %s145
    %p149 = scmp.eq.s32.totalorder %s14, 0
    %p150 = por %p148, %p149
    %p151 = scmp.ne.s32.totalorder %s143, %s145
    %p152 = scmp.eq.s32.totalorder %s19, 15
    %p153 = por %p151, %p152
    %p154 = scmp.ne.s32.totalorder %s145, %s146
    %p155 = scmp.eq.s32.totalorder %s19, 0
    %p156 = por %p154, %p155
    %p157 = scmp.ne.s32.totalorder %s145, %s146
    %p158 = scmp.eq.s32.totalorder %s20, 15
    %p159 = por %p157, %p158
    %p161 = scmp.ne.s32.totalorder %s146, %s160
    %p162 = scmp.eq.s32.totalorder %s20, 0
    %p163 = por %p161, %p162
    %s164 = ssub.s32 %s21, %s33
    %s165 = ssub.s32 %s22, %s29
    %s166 = sor.u32 %s164, %s165
    %p167 = scmp.eq.s32.totalorder %s166, 0
    %s169 = sadd.s32 %s168, 1
    %s170 = scalar_select %p167, %s168, %s169
    %p173 = pneg %p167
    %p174 = scmp.eq.s32.totalorder %s14, 15
    %p175 = por %p173, %p174
    %p176 = scmp.ne.s32.totalorder %s168, %s171
    %p177 = scmp.eq.s32.totalorder %s14, 0
    %p178 = por %p176, %p177
    %p179 = scmp.ne.s32.totalorder %s168, %s171
    %p180 = scmp.eq.s32.totalorder %s19, 15
    %p181 = por %p179, %p180
    %p182 = scmp.ne.s32.totalorder %s171, %s172
    %p183 = scmp.eq.s32.totalorder %s19, 0
    %p184 = por %p182, %p183
    %p185 = scmp.ne.s32.totalorder %s171, %s172
    %p186 = scmp.eq.s32.totalorder %s20, 15
    %p187 = por %p185, %p186
    %p189 = scmp.ne.s32.totalorder %s172, %s188
    %p190 = scmp.eq.s32.totalorder %s20, 0
    %p191 = por %p189, %p190
    %s192 = ssub.s32 %s21, %s33
    %s193 = ssub.s32 %s22, %s29
    %s194 = sor.u32 %s192, %s193
    %p195 = scmp.eq.s32.totalorder %s194, 0
    %s197 = sadd.s32 %s196, 1
    %s198 = scalar_select %p195, %s196, %s197
    %p201 = pneg %p195
    %p202 = scmp.eq.s32.totalorder %s14, 15
    %p203 = por %p201, %p202
    %p204 = scmp.ne.s32.totalorder %s196, %s199
    %p205 = scmp.eq.s32.totalorder %s14, 0
    %p206 = por %p204, %p205
    %p207 = scmp.ne.s32.totalorder %s196, %s199
    %p208 = scmp.eq.s32.totalorder %s19, 15
    %p209 = por %p207, %p208
    %p210 = scmp.ne.s32.totalorder %s199, %s200
    %p211 = scmp.eq.s32.totalorder %s19, 0
    %p212 = por %p210, %p211
    %p213 = scmp.ne.s32.totalorder %s199, %s200
    %p214 = scmp.eq.s32.totalorder %s20, 15
    %p215 = por %p213, %p214
    %p217 = scmp.ne.s32.totalorder %s200, %s216
    %p218 = scmp.eq.s32.totalorder %s20, 0
    %p219 = por %p217, %p218
    %s220 = ssub.s32 %s21, %s33
    %s221 = ssub.s32 %s22, %s29
    %s222 = sor.u32 %s220, %s221
    %p223 = scmp.eq.s32.totalorder %s222, 0
    %s225 = sadd.s32 %s224, 1
    %s226 = scalar_select %p223, %s224, %s225
    %p229 = pneg %p223
    %p230 = scmp.eq.s32.totalorder %s14, 15
    %p231 = por %p229, %p230
    %p232 = scmp.ne.s32.totalorder %s224, %s227
    %p233 = scmp.eq.s32.totalorder %s14, 0
    %p234 = por %p232, %p233
    %p235 = scmp.ne.s32.totalorder %s224, %s227
    %p236 = scmp.eq.s32.totalorder %s19, 15
    %p237 = por %p235, %p236
    %p238 = scmp.ne.s32.totalorder %s227, %s228
    %p239 = scmp.eq.s32.totalorder %s19, 0
    %p240 = por %p238, %p239
    %p241 = scmp.ne.s32.totalorder %s227, %s228
    %p242 = scmp.eq.s32.totalorder %s20, 15
    %p243 = por %p241, %p242
    %p245 = scmp.ne.s32.totalorder %s228, %s244
    %p246 = scmp.eq.s32.totalorder %s20, 0
    %p247 = por %p245, %p246
    %p248 = scmp.le.s32.totalorder 1, %s14
    %p249 = scmp.lt.s32.totalorder %s14, 17
    %p250 = pnand %p248, %p249
    %p251 = pneg %p250
    // Predicated region
    $region9: #{sdc_forward.3} parent=5 // pred_check
      _
    $region10: #{sdc_forward.3} parent=5 // pred_check_branch
      %253 = sbr.rel (%p250) target = $region12
    $region11: #{sdc_forward.3} parent=5 // pred_region
      %s254 = ssub.s32 %s14, 1
      // Predicated region
      $region13: #{sdc_forward.3} parent=11 // pred_check
        %p255 = pneg %p135
      $region14: #{sdc_forward.3} parent=11 // pred_check_branch
        %257 = sbr.rel (%p255) target = $region16
      $region15: #{sdc_forward.3} parent=11 // pred_region
        _
      $region16: #{sdc_forward.3} parent=11 // pred_fallthru
        _
      // Predicated region
      $region17: #{sdc_forward.3} parent=11 // pred_check
        %p258 = pneg %p156
      $region18: #{sdc_forward.3} parent=11 // pred_check_branch
        %260 = sbr.rel (%p258) target = $region20
      $region19: #{sdc_forward.3} parent=11 // pred_region
        _
      $region20: #{sdc_forward.3} parent=11 // pred_fallthru
        _
    $region12: #{sdc_forward.3} parent=5 // pred_fallthru
      _
    %p261 = scmp.lt.s32.totalorder %s14, 16
    // Predicated region
    $region21: #{sdc_forward.3} parent=5 // pred_check
      %p262 = pneg %p261
    $region22: #{sdc_forward.3} parent=5 // pred_check_branch
      %264 = sbr.rel (%p262) target = $region24
    $region23: #{sdc_forward.3} parent=5 // pred_region
      // Predicated region
      $region25: #{sdc_forward.3} parent=23 // pred_check
        %p265 = pneg %p48
      $region26: #{sdc_forward.3} parent=23 // pred_check_branch
        %267 = sbr.rel (%p265) target = $region28
      $region27: #{sdc_forward.3} parent=23 // pred_region
        %p268 = scmp.lt.s32.totalorder %s21, 1
        %s269 = scalar_select %p268, %s21, 1
        %p270 = scmp.lt.s32.totalorder %s22, 9
        %s271 = scalar_select %p270, %s22, 9
        %s272 = smul.addr %s271, 14
        %s273 = smul.addr %s269, 140
        %s274 = sadd.s32 %s272, %s273
        %s275 = smul.addr %s274, 8
        %s276 = scalar_lea.vmem %s0, %s275
      $region28: #{sdc_forward.3} parent=23 // pred_fallthru
        _
      // Predicated region
      $region29: #{sdc_forward.3} parent=23 // pred_check
        %p277 = pneg %p78
      $region30: #{sdc_forward.3} parent=23 // pred_check_branch
        %279 = sbr.rel (%p277) target = $region32
      $region31: #{sdc_forward.3} parent=23 // pred_region
        %s280 = sadd.s32 %s22, 1
        %p281 = scmp.lt.s32.totalorder %s21, 1
        %s282 = scalar_select %p281, %s21, 1
        %p283 = scmp.lt.s32.totalorder %s280, 9
        %s284 = scalar_select %p283, %s280, 9
        %s285 = smul.addr %s284, 14
        %s286 = smul.addr %s282, 140
        %s287 = sadd.s32 %s285, %s286
        %s288 = smul.addr %s287, 8
        %s289 = scalar_lea.vmem %s1, %s288
        %s290 = sadd.s32 %s22, 1
      $region32: #{sdc_forward.3} parent=23 // pred_fallthru
        _
      // Predicated region
      $region33: #{sdc_forward.3} parent=23 // pred_check
        %p291 = pneg %p108
      $region34: #{sdc_forward.3} parent=23 // pred_check_branch
        %293 = sbr.rel (%p291) target = $region36
      $region35: #{sdc_forward.3} parent=23 // pred_region
        %s294 = sadd.s32 %s22, 2
        %p295 = scmp.lt.s32.totalorder %s21, 1
        %s296 = scalar_select %p295, %s21, 1
        %p297 = scmp.lt.s32.totalorder %s294, 9
        %s298 = scalar_select %p297, %s294, 9
        %s299 = smul.addr %s298, 14
        %s300 = smul.addr %s296, 140
        %s301 = sadd.s32 %s299, %s300
        %s302 = smul.addr %s301, 8
        %s303 = scalar_lea.vmem %s2, %s302
        %s304 = sadd.s32 %s22, 2
      $region36: #{sdc_forward.3} parent=23 // pred_fallthru
        _
    $region24: #{sdc_forward.3} parent=5 // pred_fallthru
      _
    %p305 = scmp.le.s32.totalorder 1, %s14
    %p306 = scmp.lt.s32.totalorder %s14, 17
    %p307 = pnand %p305, %p306
    %p308 = pneg %p307
    // Predicated region
    $region37: #{sdc_forward.3} parent=5 // pred_check
      _
    $region38: #{sdc_forward.3} parent=5 // pred_check_branch
      %310 = sbr.rel (%p307) target = $region40
    $region39: #{sdc_forward.3} parent=5 // pred_region
      %s311 = ssub.s32 %s14, 1
      %p312 = scmp.lt.s32.totalorder %s23, 1
      %s313 = scalar_select %p312, %s23, 1
      %p314 = scmp.lt.s32.totalorder %s24, 9
      %s315 = scalar_select %p314, %s24, 9
      %s316 = smul.addr %s315, 14
      %s317 = smul.addr %s313, 140
      %s318 = sadd.s32 %s316, %s317
      %s319 = smul.addr %s318, 8
      %s320 = scalar_lea.vmem %s0, %s319
      %p321 = pneg %p54
      %p322 = pneg %p51
      %s323 = sadd.s32 %s24, 1
      %p324 = scmp.lt.s32.totalorder %s23, 1
      %s325 = scalar_select %p324, %s23, 1
      %p326 = scmp.lt.s32.totalorder %s323, 9
      %s327 = scalar_select %p326, %s323, 9
      %s328 = smul.addr %s327, 14
      %s329 = smul.addr %s325, 140
      %s330 = sadd.s32 %s328, %s329
      %s331 = smul.addr %s330, 8
      %s332 = scalar_lea.vmem %s1, %s331
      %p333 = pneg %p84
      %p334 = pneg %p81
      %s335 = sadd.s32 %s24, 2
      %p336 = scmp.lt.s32.totalorder %s23, 1
      %s337 = scalar_select %p336, %s23, 1
      %p338 = scmp.lt.s32.totalorder %s335, 9
      %s339 = scalar_select %p338, %s335, 9
      %s340 = smul.addr %s339, 14
      %s341 = smul.addr %s337, 140
      %s342 = sadd.s32 %s340, %s341
      %s343 = smul.addr %s342, 8
      %s344 = scalar_lea.vmem %s2, %s343
      %p345 = pneg %p114
      %p346 = pneg %p111
      %p347 = pneg %p135
      %p348 = pneg %p132
      %p349 = pneg %p156
      %p350 = pneg %p153
      %p351 = pneg %p184
      %p352 = pneg %p181
      %p353 = scmp.lt.s32.totalorder %s23, 1
      %s354 = scalar_select %p353, %s23, 1
      %p355 = scmp.lt.s32.totalorder %s24, 7
      %s356 = scalar_select %p355, %s24, 7
      %s357 = smul.addr %s356, 10
      %s358 = smul.addr %s354, 80
      %s359 = sadd.s32 %s357, %s358
      %s360 = smul.addr %s359, 8
      %s361 = scalar_lea.vmem %s5, %s360
      %p362 = pneg %p212
      %p363 = pneg %p209
      %p364 = scmp.lt.s32.totalorder %s23, 1
      %s365 = scalar_select %p364, %s23, 1
      %p366 = scmp.lt.s32.totalorder %s24, 7
      %s367 = scalar_select %p366, %s24, 7
      %s368 = smul.addr %s365, 8
      %s369 = sadd.s32 %s367, %s368
      %s370 = scalar_lea.vmem %s6, %s369
      %p371 = pneg %p240
      %p372 = pneg %p237
      %p373 = scmp.lt.s32.totalorder %s23, 1
      %s374 = scalar_select %p373, %s23, 1
      %p375 = scmp.lt.s32.totalorder %s24, 7
      %s376 = scalar_select %p375, %s24, 7
      %s377 = smul.addr %s374, 8
      %s378 = sadd.s32 %s376, %s377
      %s379 = scalar_lea.vmem %s7, %s378
      %p380 = scmp.lt.s32.totalorder %s23, 1
      %s381 = scalar_select %p380, %s23, 1
      %p382 = scmp.lt.s32.totalorder %s24, 9
      %s383 = scalar_select %p382, %s24, 9
      %s384 = smul.addr %s383, 14
      %s385 = smul.addr %s381, 140
      %s386 = sadd.s32 %s384, %s385
      %s387 = smul.addr %s386, 8
      %s388 = scalar_lea.vmem %s0, %s387
      %s389 = sadd.s32 %s24, 1
      %p390 = scmp.lt.s32.totalorder %s23, 1
      %s391 = scalar_select %p390, %s23, 1
      %p392 = scmp.lt.s32.totalorder %s389, 9
      %s393 = scalar_select %p392, %s389, 9
      %s394 = smul.addr %s393, 14
      %s395 = smul.addr %s391, 140
      %s396 = sadd.s32 %s394, %s395
      %s397 = smul.addr %s396, 8
      %s398 = scalar_lea.vmem %s1, %s397
      %s399 = sadd.s32 %s24, 1
      %s400 = sadd.s32 %s24, 2
      %p401 = scmp.lt.s32.totalorder %s23, 1
      %s402 = scalar_select %p401, %s23, 1
      %p403 = scmp.lt.s32.totalorder %s400, 9
      %s404 = scalar_select %p403, %s400, 9
      %s405 = smul.addr %s404, 14
      %s406 = smul.addr %s402, 140
      %s407 = sadd.s32 %s405, %s406
      %s408 = smul.addr %s407, 8
      %s409 = scalar_lea.vmem %s2, %s408
      %s410 = sadd.s32 %s24, 2
      %p411 = scmp.lt.s32.totalorder %s23, 1
      %s412 = scalar_select %p411, %s23, 1
      %p413 = scmp.lt.s32.totalorder %s24, 7
      %s414 = scalar_select %p413, %s24, 7
      %s415 = smul.addr %s414, 10
      %s416 = smul.addr %s412, 80
      %s417 = sadd.s32 %s415, %s416
      %s418 = smul.addr %s417, 8
      %s419 = scalar_lea.vmem %s5, %s418
      %p420 = scmp.lt.s32.totalorder %s23, 1
      %s421 = scalar_select %p420, %s23, 1
      %p422 = scmp.lt.s32.totalorder %s24, 7
      %s423 = scalar_select %p422, %s24, 7
      %s424 = smul.addr %s421, 8
      %s425 = sadd.s32 %s423, %s424
      %s426 = scalar_lea.vmem %s6, %s425
      %p427 = scmp.lt.s32.totalorder %s23, 1
      %s428 = scalar_select %p427, %s23, 1
      %p429 = scmp.lt.s32.totalorder %s24, 7
      %s430 = scalar_select %p429, %s24, 7
      %s431 = smul.addr %s428, 8
      %s432 = sadd.s32 %s430, %s431
      %s433 = scalar_lea.vmem %s7, %s432
      %v434 = vld [vmem:[%s388] sm:$0xff]
      %v435 = vld [vmem:[%s388 + $0x8] sm:$0xff]
      %v436 = vld [vmem:[%s388 + $0x10] sm:$0xff]
      %v437 = vld [vmem:[%s388 + $0x18] sm:$0xff]
      %v438 = vld [vmem:[%s388 + $0x20] sm:$0xff]
      %v439 = vld [vmem:[%s388 + $0x28] sm:$0xff]
      %v440 = vld [vmem:[%s388 + $0x30] sm:$0xff]
      %v441 = vld [vmem:[%s388 + $0x38] sm:$0xff]
      %v442 = vld [vmem:[%s388 + $0x40] sm:$0xff]
      %v443 = vld [vmem:[%s388 + $0x48] sm:$0xff]
      %v444 = vld [vmem:[%s388 + $0x50] sm:$0xff]
      %v445 = vld [vmem:[%s388 + $0x58] sm:$0xff]
      %v446 = vld [vmem:[%s388 + $0x60] sm:$0xff]
      %v447 = vld [vmem:[%s3] sm:$0x3]
      %s448 = scalar_lea.vmem %s3, 2
      %v449 = vld [vmem:[%s448] sm:$0x3]
      %vm461 = vcmask 1046528
      %v462 = vrot.slane %v434, 1
      %v463 = vrot.slane %v435, 1
      %v464 = vsel %vm461, %v462, %v463
      %v465 = vrot.slane %v436, 1
      %v466 = vsel %vm461, %v463, %v465
      %v467 = vrot.slane %v437, 1
      %v468 = vsel %vm461, %v465, %v467
      %v469 = vrot.slane %v438, 1
      %v470 = vsel %vm461, %v467, %v469
      %v471 = vrot.slane %v439, 1
      %v472 = vsel %vm461, %v469, %v471
      %v473 = vrot.slane %v440, 1
      %v474 = vsel %vm461, %v471, %v473
      %v475 = vrot.slane %v441, 1
      %v476 = vsel %vm461, %v473, %v475
      %v477 = vrot.slane %v442, 1
      %v478 = vsel %vm461, %v475, %v477
      %v479 = vrot.slane %v443, 1
      %v480 = vsel %vm461, %v477, %v479
      %v481 = vrot.slane %v444, 1
      %v482 = vsel %vm461, %v479, %v481
      %vm483 = vcmask 15360
      %v484 = vsel %vm483, %v464, 0
      %v486 = vsel %vm483, %v466, 0
      %v488 = vsel %vm483, %v468, 0
      %v490 = vsel %vm483, %v470, 0
      %v492 = vsel %vm483, %v472, 0
      %v494 = vsel %vm483, %v474, 0
      %v496 = vsel %vm483, %v476, 0
      %v498 = vsel %vm483, %v478, 0
      %v500 = vsel %vm483, %v480, 0
      %v502 = vsel %vm483, %v482, 0
      %vm504 = vcmask 1041408
      %v506 = vsel %vm504, %v449, 0
      %508 = vmatpush.msra.mxu0 0.0
      %509 = vmatpush.msra.mxu0 0.0
      %510 = vmatpush.msra.mxu0 0.0
      %511 = vmatpush.msra.mxu0 0.0
      %512 = vmatpush.msra.mxu0 0.0
      %513 = vmatpush.msra.mxu0 0.0
      %514 = vmatpush.msra.mxu0 0.0
      %515 = vmatpush.msra.mxu0 0.0
      %516 = vmatpush.msra.mxu0 0.0
      %517 = vmatpush.msra.mxu0 0.0
      %518 = vmatpush.msra.mxu0 0.0
      %519 = vmatpush.msra.mxu0 0.0
      %520 = vmatpush.msra.mxu0 0.0
      %521 = vmatpush.msra.mxu0 0.0
      %522 = vmatpush.msra.mxu0 0.0
      %523 = vmatpush.msra.mxu0 %v506
      %524 = vmatmul.f32.gmra.mxu0 %v484
      %v525 = vpop.f32.mrf.mxu0
      %v526 = vadd.f32 0.0, %v525
      %527 = vmatmul.f32.gmra.mxu0 %v486
      %v528 = vpop.f32.mrf.mxu0
      %v529 = vadd.f32 0.0, %v528
      %530 = vmatmul.f32.gmra.mxu0 %v488
      %v531 = vpop.f32.mrf.mxu0
      %v532 = vadd.f32 0.0, %v531
      %533 = vmatmul.f32.gmra.mxu0 %v490
      %v534 = vpop.f32.mrf.mxu0
      %v535 = vadd.f32 0.0, %v534
      %536 = vmatmul.f32.gmra.mxu0 %v492
      %v537 = vpop.f32.mrf.mxu0
      %v538 = vadd.f32 0.0, %v537
      %539 = vmatmul.f32.gmra.mxu0 %v494
      %v540 = vpop.f32.mrf.mxu0
      %v541 = vadd.f32 0.0, %v540
      %542 = vmatmul.f32.gmra.mxu0 %v496
      %v543 = vpop.f32.mrf.mxu0
      %v544 = vadd.f32 0.0, %v543
      %545 = vmatmul.f32.gmra.mxu0 %v498
      %v546 = vpop.f32.mrf.mxu0
      %v547 = vadd.f32 0.0, %v546
      %548 = vmatmul.f32.gmra.mxu0 %v500
      %v549 = vpop.f32.mrf.mxu0
      %v550 = vadd.f32 0.0, %v549
      %551 = vmatmul.f32.gmra.mxu0 %v502
      %v552 = vpop.f32.mrf.mxu0
      %v553 = vadd.f32 0.0, %v552
      %554 = vdwg.mxu0
      %v555 = vsel %vm483, %v434, 0
      %v557 = vsel %vm483, %v435, 0
      %v559 = vsel %vm483, %v436, 0
      %v561 = vsel %vm483, %v437, 0
      %v563 = vsel %vm483, %v438, 0
      %v565 = vsel %vm483, %v439, 0
      %v567 = vsel %vm483, %v440, 0
      %v569 = vsel %vm483, %v441, 0
      %v571 = vsel %vm483, %v442, 0
      %v573 = vsel %vm483, %v443, 0
      %v576 = vsel %vm504, %v447, 0
      %578 = vmatpush.msra.mxu0 0.0
      %579 = vmatpush.msra.mxu0 0.0
      %580 = vmatpush.msra.mxu0 0.0
      %581 = vmatpush.msra.mxu0 0.0
      %582 = vmatpush.msra.mxu0 0.0
      %583 = vmatpush.msra.mxu0 0.0
      %584 = vmatpush.msra.mxu0 0.0
      %585 = vmatpush.msra.mxu0 0.0
      %586 = vmatpush.msra.mxu0 0.0
      %587 = vmatpush.msra.mxu0 0.0
      %588 = vmatpush.msra.mxu0 0.0
      %589 = vmatpush.msra.mxu0 0.0
      %590 = vmatpush.msra.mxu0 0.0
      %591 = vmatpush.msra.mxu0 0.0
      %592 = vmatpush.msra.mxu0 0.0
      %593 = vmatpush.msra.mxu0 %v576
      %594 = vmatmul.f32.gmra.mxu0 %v555
      %v595 = vpop.f32.mrf.mxu0
      %v596 = vadd.f32 %v526, %v595
      %597 = vmatmul.f32.gmra.mxu0 %v557
      %v598 = vpop.f32.mrf.mxu0
      %v599 = vadd.f32 %v529, %v598
      %600 = vmatmul.f32.gmra.mxu0 %v559
      %v601 = vpop.f32.mrf.mxu0
      %v602 = vadd.f32 %v532, %v601
      %603 = vmatmul.f32.gmra.mxu0 %v561
      %v604 = vpop.f32.mrf.mxu0
      %v605 = vadd.f32 %v535, %v604
      %606 = vmatmul.f32.gmra.mxu0 %v563
      %v607 = vpop.f32.mrf.mxu0
      %v608 = vadd.f32 %v538, %v607
      %609 = vmatmul.f32.gmra.mxu0 %v565
      %v610 = vpop.f32.mrf.mxu0
      %v611 = vadd.f32 %v541, %v610
      %612 = vmatmul.f32.gmra.mxu0 %v567
      %v613 = vpop.f32.mrf.mxu0
      %v614 = vadd.f32 %v544, %v613
      %615 = vmatmul.f32.gmra.mxu0 %v569
      %v616 = vpop.f32.mrf.mxu0
      %v617 = vadd.f32 %v547, %v616
      %618 = vmatmul.f32.gmra.mxu0 %v571
      %v619 = vpop.f32.mrf.mxu0
      %v620 = vadd.f32 %v550, %v619
      %621 = vmatmul.f32.gmra.mxu0 %v573
      %v622 = vpop.f32.mrf.mxu0
      %v623 = vadd.f32 %v553, %v622
      %624 = vdwg.mxu0
      %s625 = scalar_lea.vmem %s3, 4
      %v626 = vld [vmem:[%s625] sm:$0x3]
      %vm627 = vcmask 1045504
      %v628 = vrot.slane %v434, 2
      %v629 = vrot.slane %v435, 2
      %v630 = vsel %vm627, %v628, %v629
      %v631 = vrot.slane %v436, 2
      %v632 = vsel %vm627, %v629, %v631
      %v633 = vrot.slane %v437, 2
      %v634 = vsel %vm627, %v631, %v633
      %v635 = vrot.slane %v438, 2
      %v636 = vsel %vm627, %v633, %v635
      %v637 = vrot.slane %v439, 2
      %v638 = vsel %vm627, %v635, %v637
      %v639 = vrot.slane %v440, 2
      %v640 = vsel %vm627, %v637, %v639
      %v641 = vrot.slane %v441, 2
      %v642 = vsel %vm627, %v639, %v641
      %v643 = vrot.slane %v442, 2
      %v644 = vsel %vm627, %v641, %v643
      %v645 = vrot.slane %v443, 2
      %v646 = vsel %vm627, %v643, %v645
      %v647 = vrot.slane %v444, 2
      %v648 = vsel %vm627, %v645, %v647
      %v649 = vsel %vm483, %v630, 0
      %v651 = vsel %vm483, %v632, 0
      %v653 = vsel %vm483, %v634, 0
      %v655 = vsel %vm483, %v636, 0
      %v657 = vsel %vm483, %v638, 0
      %v659 = vsel %vm483, %v640, 0
      %v661 = vsel %vm483, %v642, 0
      %v663 = vsel %vm483, %v644, 0
      %v665 = vsel %vm483, %v646, 0
      %v667 = vsel %vm483, %v648, 0
      %v670 = vsel %vm504, %v626, 0
      %672 = vmatpush.msra.mxu0 0.0
      %673 = vmatpush.msra.mxu0 0.0
      %674 = vmatpush.msra.mxu0 0.0
      %675 = vmatpush.msra.mxu0 0.0
      %676 = vmatpush.msra.mxu0 0.0
      %677 = vmatpush.msra.mxu0 0.0
      %678 = vmatpush.msra.mxu0 0.0
      %679 = vmatpush.msra.mxu0 0.0
      %680 = vmatpush.msra.mxu0 0.0
      %681 = vmatpush.msra.mxu0 0.0
      %682 = vmatpush.msra.mxu0 0.0
      %683 = vmatpush.msra.mxu0 0.0
      %684 = vmatpush.msra.mxu0 0.0
      %685 = vmatpush.msra.mxu0 0.0
      %686 = vmatpush.msra.mxu0 0.0
      %687 = vmatpush.msra.mxu0 %v670
      %688 = vmatmul.f32.gmra.mxu0 %v649
      %v689 = vpop.f32.mrf.mxu0
      %v690 = vadd.f32 0.0, %v689
      %691 = vmatmul.f32.gmra.mxu0 %v651
      %v692 = vpop.f32.mrf.mxu0
      %v693 = vadd.f32 0.0, %v692
      %694 = vmatmul.f32.gmra.mxu0 %v653
      %v695 = vpop.f32.mrf.mxu0
      %v696 = vadd.f32 0.0, %v695
      %697 = vmatmul.f32.gmra.mxu0 %v655
      %v698 = vpop.f32.mrf.mxu0
      %v699 = vadd.f32 0.0, %v698
      %700 = vmatmul.f32.gmra.mxu0 %v657
      %v701 = vpop.f32.mrf.mxu0
      %v702 = vadd.f32 0.0, %v701
      %703 = vmatmul.f32.gmra.mxu0 %v659
      %v704 = vpop.f32.mrf.mxu0
      %v705 = vadd.f32 0.0, %v704
      %706 = vmatmul.f32.gmra.mxu0 %v661
      %v707 = vpop.f32.mrf.mxu0
      %v708 = vadd.f32 0.0, %v707
      %709 = vmatmul.f32.gmra.mxu0 %v663
      %v710 = vpop.f32.mrf.mxu0
      %v711 = vadd.f32 0.0, %v710
      %712 = vmatmul.f32.gmra.mxu0 %v665
      %v713 = vpop.f32.mrf.mxu0
      %v714 = vadd.f32 0.0, %v713
      %715 = vmatmul.f32.gmra.mxu0 %v667
      %v716 = vpop.f32.mrf.mxu0
      %v717 = vadd.f32 0.0, %v716
      %718 = vdwg.mxu0
      %v719 = vadd.f32 %v596, %v690
      %v720 = vadd.f32 %v599, %v693
      %v721 = vadd.f32 %v602, %v696
      %v722 = vadd.f32 %v605, %v699
      %v723 = vadd.f32 %v608, %v702
      %v724 = vadd.f32 %v611, %v705
      %v725 = vadd.f32 %v614, %v708
      %v726 = vadd.f32 %v617, %v711
      %v727 = vadd.f32 %v620, %v714
      %v728 = vadd.f32 %v623, %v717
      %s729 = scalar_lea.vmem %s3, 6
      %v730 = vld [vmem:[%s729] sm:$0x3]
      %v732 = vrot.slane %v445, 2
      %v733 = vsel %vm627, %v647, %v732
      %v734 = vsel %vm483, %v733, 0
      %v737 = vsel %vm504, %v730, 0
      %739 = vmatpush.msra.mxu0 0.0
      %740 = vmatpush.msra.mxu0 0.0
      %741 = vmatpush.msra.mxu0 0.0
      %742 = vmatpush.msra.mxu0 0.0
      %743 = vmatpush.msra.mxu0 0.0
      %744 = vmatpush.msra.mxu0 0.0
      %745 = vmatpush.msra.mxu0 0.0
      %746 = vmatpush.msra.mxu0 0.0
      %747 = vmatpush.msra.mxu0 0.0
      %748 = vmatpush.msra.mxu0 0.0
      %749 = vmatpush.msra.mxu0 0.0
      %750 = vmatpush.msra.mxu0 0.0
      %751 = vmatpush.msra.mxu0 0.0
      %752 = vmatpush.msra.mxu0 0.0
      %753 = vmatpush.msra.mxu0 0.0
      %754 = vmatpush.msra.mxu0 %v737
      %755 = vmatmul.f32.gmra.mxu0 %v651
      %v756 = vpop.f32.mrf.mxu0
      %v757 = vadd.f32 0.0, %v756
      %758 = vmatmul.f32.gmra.mxu0 %v653
      %v759 = vpop.f32.mrf.mxu0
      %v760 = vadd.f32 0.0, %v759
      %761 = vmatmul.f32.gmra.mxu0 %v655
      %v762 = vpop.f32.mrf.mxu0
      %v763 = vadd.f32 0.0, %v762
      %764 = vmatmul.f32.gmra.mxu0 %v657
      %v765 = vpop.f32.mrf.mxu0
      %v766 = vadd.f32 0.0, %v765
      %767 = vmatmul.f32.gmra.mxu0 %v659
      %v768 = vpop.f32.mrf.mxu0
      %v769 = vadd.f32 0.0, %v768
      %770 = vmatmul.f32.gmra.mxu0 %v661
      %v771 = vpop.f32.mrf.mxu0
      %v772 = vadd.f32 0.0, %v771
      %773 = vmatmul.f32.gmra.mxu0 %v663
      %v774 = vpop.f32.mrf.mxu0
      %v775 = vadd.f32 0.0, %v774
      %776 = vmatmul.f32.gmra.mxu0 %v665
      %v777 = vpop.f32.mrf.mxu0
      %v778 = vadd.f32 0.0, %v777
      %779 = vmatmul.f32.gmra.mxu0 %v667
      %v780 = vpop.f32.mrf.mxu0
      %v781 = vadd.f32 0.0, %v780
      %782 = vmatmul.f32.gmra.mxu0 %v734
      %v783 = vpop.f32.mrf.mxu0
      %v784 = vadd.f32 0.0, %v783
      %785 = vdwg.mxu0
      %v786 = vadd.f32 %v719, %v757
      %v787 = vadd.f32 %v720, %v760
      %v788 = vadd.f32 %v721, %v763
      %v789 = vadd.f32 %v722, %v766
      %v790 = vadd.f32 %v723, %v769
      %v791 = vadd.f32 %v724, %v772
      %v792 = vadd.f32 %v725, %v775
      %v793 = vadd.f32 %v726, %v778
      %v794 = vadd.f32 %v727, %v781
      %v795 = vadd.f32 %v728, %v784
      %s796 = scalar_lea.vmem %s3, 8
      %v797 = vld [vmem:[%s796] sm:$0x3]
      %vm798 = vcmask 1044480
      %v799 = vrot.slane %v435, 3
      %v800 = vrot.slane %v436, 3
      %v801 = vsel %vm798, %v799, %v800
      %v802 = vrot.slane %v437, 3
      %v803 = vsel %vm798, %v800, %v802
      %v804 = vrot.slane %v438, 3
      %v805 = vsel %vm798, %v802, %v804
      %v806 = vrot.slane %v439, 3
      %v807 = vsel %vm798, %v804, %v806
      %v808 = vrot.slane %v440, 3
      %v809 = vsel %vm798, %v806, %v808
      %v810 = vrot.slane %v441, 3
      %v811 = vsel %vm798, %v808, %v810
      %v812 = vrot.slane %v442, 3
      %v813 = vsel %vm798, %v810, %v812
      %v814 = vrot.slane %v443, 3
      %v815 = vsel %vm798, %v812, %v814
      %v816 = vrot.slane %v444, 3
      %v817 = vsel %vm798, %v814, %v816
      %v818 = vrot.slane %v445, 3
      %v819 = vsel %vm798, %v816, %v818
      %v820 = vsel %vm483, %v801, 0
      %v822 = vsel %vm483, %v803, 0
      %v824 = vsel %vm483, %v805, 0
      %v826 = vsel %vm483, %v807, 0
      %v828 = vsel %vm483, %v809, 0
      %v830 = vsel %vm483, %v811, 0
      %v832 = vsel %vm483, %v813, 0
      %v834 = vsel %vm483, %v815, 0
      %v836 = vsel %vm483, %v817, 0
      %v838 = vsel %vm483, %v819, 0
      %v841 = vsel %vm504, %v797, 0
      %843 = vmatpush.msra.mxu0 0.0
      %844 = vmatpush.msra.mxu0 0.0
      %845 = vmatpush.msra.mxu0 0.0
      %846 = vmatpush.msra.mxu0 0.0
      %847 = vmatpush.msra.mxu0 0.0
      %848 = vmatpush.msra.mxu0 0.0
      %849 = vmatpush.msra.mxu0 0.0
      %850 = vmatpush.msra.mxu0 0.0
      %851 = vmatpush.msra.mxu0 0.0
      %852 = vmatpush.msra.mxu0 0.0
      %853 = vmatpush.msra.mxu0 0.0
      %854 = vmatpush.msra.mxu0 0.0
      %855 = vmatpush.msra.mxu0 0.0
      %856 = vmatpush.msra.mxu0 0.0
      %857 = vmatpush.msra.mxu0 0.0
      %858 = vmatpush.msra.mxu0 %v841
      %859 = vmatmul.f32.gmra.mxu0 %v820
      %v860 = vpop.f32.mrf.mxu0
      %v861 = vadd.f32 0.0, %v860
      %862 = vmatmul.f32.gmra.mxu0 %v822
      %v863 = vpop.f32.mrf.mxu0
      %v864 = vadd.f32 0.0, %v863
      %865 = vmatmul.f32.gmra.mxu0 %v824
      %v866 = vpop.f32.mrf.mxu0
      %v867 = vadd.f32 0.0, %v866
      %868 = vmatmul.f32.gmra.mxu0 %v826
      %v869 = vpop.f32.mrf.mxu0
      %v870 = vadd.f32 0.0, %v869
      %871 = vmatmul.f32.gmra.mxu0 %v828
      %v872 = vpop.f32.mrf.mxu0
      %v873 = vadd.f32 0.0, %v872
      %874 = vmatmul.f32.gmra.mxu0 %v830
      %v875 = vpop.f32.mrf.mxu0
      %v876 = vadd.f32 0.0, %v875
      %877 = vmatmul.f32.gmra.mxu0 %v832
      %v878 = vpop.f32.mrf.mxu0
      %v879 = vadd.f32 0.0, %v878
      %880 = vmatmul.f32.gmra.mxu0 %v834
      %v881 = vpop.f32.mrf.mxu0
      %v882 = vadd.f32 0.0, %v881
      %883 = vmatmul.f32.gmra.mxu0 %v836
      %v884 = vpop.f32.mrf.mxu0
      %v885 = vadd.f32 0.0, %v884
      %886 = vmatmul.f32.gmra.mxu0 %v838
      %v887 = vpop.f32.mrf.mxu0
      %v888 = vadd.f32 0.0, %v887
      %889 = vdwg.mxu0
      %v890 = vadd.f32 %v786, %v861
      %v891 = vadd.f32 %v787, %v864
      %v892 = vadd.f32 %v788, %v867
      %v893 = vadd.f32 %v789, %v870
      %v894 = vadd.f32 %v790, %v873
      %v895 = vadd.f32 %v791, %v876
      %v896 = vadd.f32 %v792, %v879
      %v897 = vadd.f32 %v793, %v882
      %v898 = vadd.f32 %v794, %v885
      %v899 = vadd.f32 %v795, %v888
      %s900 = scalar_lea.vmem %s3, 10
      %v901 = vld [vmem:[%s900] sm:$0x3]
      %vm902 = vcmask 1043456
      %v903 = vrot.slane %v435, 4
      %v904 = vrot.slane %v436, 4
      %v905 = vsel %vm902, %v903, %v904
      %v906 = vrot.slane %v437, 4
      %v907 = vsel %vm902, %v904, %v906
      %v908 = vrot.slane %v438, 4
      %v909 = vsel %vm902, %v906, %v908
      %v910 = vrot.slane %v439, 4
      %v911 = vsel %vm902, %v908, %v910
      %v912 = vrot.slane %v440, 4
      %v913 = vsel %vm902, %v910, %v912
      %v914 = vrot.slane %v441, 4
      %v915 = vsel %vm902, %v912, %v914
      %v916 = vrot.slane %v442, 4
      %v917 = vsel %vm902, %v914, %v916
      %v918 = vrot.slane %v443, 4
      %v919 = vsel %vm902, %v916, %v918
      %v920 = vrot.slane %v444, 4
      %v921 = vsel %vm902, %v918, %v920
      %v922 = vrot.slane %v445, 4
      %v923 = vsel %vm902, %v920, %v922
      %v924 = vsel %vm483, %v905, 0
      %v926 = vsel %vm483, %v907, 0
      %v928 = vsel %vm483, %v909, 0
      %v930 = vsel %vm483, %v911, 0
      %v932 = vsel %vm483, %v913, 0
      %v934 = vsel %vm483, %v915, 0
      %v936 = vsel %vm483, %v917, 0
      %v938 = vsel %vm483, %v919, 0
      %v940 = vsel %vm483, %v921, 0
      %v942 = vsel %vm483, %v923, 0
      %v945 = vsel %vm504, %v901, 0
      %947 = vmatpush.msra.mxu0 0.0
      %948 = vmatpush.msra.mxu0 0.0
      %949 = vmatpush.msra.mxu0 0.0
      %950 = vmatpush.msra.mxu0 0.0
      %951 = vmatpush.msra.mxu0 0.0
      %952 = vmatpush.msra.mxu0 0.0
      %953 = vmatpush.msra.mxu0 0.0
      %954 = vmatpush.msra.mxu0 0.0
      %955 = vmatpush.msra.mxu0 0.0
      %956 = vmatpush.msra.mxu0 0.0
      %957 = vmatpush.msra.mxu0 0.0
      %958 = vmatpush.msra.mxu0 0.0
      %959 = vmatpush.msra.mxu0 0.0
      %960 = vmatpush.msra.mxu0 0.0
      %961 = vmatpush.msra.mxu0 0.0
      %962 = vmatpush.msra.mxu0 %v945
      %963 = vmatmul.f32.gmra.mxu0 %v924
      %v964 = vpop.f32.mrf.mxu0
      %v965 = vadd.f32 0.0, %v964
      %966 = vmatmul.f32.gmra.mxu0 %v926
      %v967 = vpop.f32.mrf.mxu0
      %v968 = vadd.f32 0.0, %v967
      %969 = vmatmul.f32.gmra.mxu0 %v928
      %v970 = vpop.f32.mrf.mxu0
      %v971 = vadd.f32 0.0, %v970
      %972 = vmatmul.f32.gmra.mxu0 %v930
      %v973 = vpop.f32.mrf.mxu0
      %v974 = vadd.f32 0.0, %v973
      %975 = vmatmul.f32.gmra.mxu0 %v932
      %v976 = vpop.f32.mrf.mxu0
      %v977 = vadd.f32 0.0, %v976
      %978 = vmatmul.f32.gmra.mxu0 %v934
      %v979 = vpop.f32.mrf.mxu0
      %v980 = vadd.f32 0.0, %v979
      %981 = vmatmul.f32.gmra.mxu0 %v936
      %v982 = vpop.f32.mrf.mxu0
      %v983 = vadd.f32 0.0, %v982
      %984 = vmatmul.f32.gmra.mxu0 %v938
      %v985 = vpop.f32.mrf.mxu0
      %v986 = vadd.f32 0.0, %v985
      %987 = vmatmul.f32.gmra.mxu0 %v940
      %v988 = vpop.f32.mrf.mxu0
      %v989 = vadd.f32 0.0, %v988
      %990 = vmatmul.f32.gmra.mxu0 %v942
      %v991 = vpop.f32.mrf.mxu0
      %v992 = vadd.f32 0.0, %v991
      %993 = vdwg.mxu0
      %v994 = vadd.f32 %v890, %v965
      %v995 = vadd.f32 %v891, %v968
      %v996 = vadd.f32 %v892, %v971
      %v997 = vadd.f32 %v893, %v974
      %v998 = vadd.f32 %v894, %v977
      %v999 = vadd.f32 %v895, %v980
      %v1000 = vadd.f32 %v896, %v983
      %v1001 = vadd.f32 %v897, %v986
      %v1002 = vadd.f32 %v898, %v989
      %v1003 = vadd.f32 %v899, %v992
      %s1004 = scalar_lea.vmem %s3, 12
      %v1005 = vld [vmem:[%s1004] sm:$0x3]
      %v1007 = vrot.slane %v446, 4
      %v1008 = vsel %vm902, %v922, %v1007
      %v1009 = vsel %vm483, %v1008, 0
      %v1012 = vsel %vm504, %v1005, 0
      %1014 = vmatpush.msra.mxu0 0.0
      %1015 = vmatpush.msra.mxu0 0.0
      %1016 = vmatpush.msra.mxu0 0.0
      %1017 = vmatpush.msra.mxu0 0.0
      %1018 = vmatpush.msra.mxu0 0.0
      %1019 = vmatpush.msra.mxu0 0.0
      %1020 = vmatpush.msra.mxu0 0.0
      %1021 = vmatpush.msra.mxu0 0.0
      %1022 = vmatpush.msra.mxu0 0.0
      %1023 = vmatpush.msra.mxu0 0.0
      %1024 = vmatpush.msra.mxu0 0.0
      %1025 = vmatpush.msra.mxu0 0.0
      %1026 = vmatpush.msra.mxu0 0.0
      %1027 = vmatpush.msra.mxu0 0.0
      %1028 = vmatpush.msra.mxu0 0.0
      %1029 = vmatpush.msra.mxu0 %v1012
      %1030 = vmatmul.f32.gmra.mxu0 %v926
      %v1031 = vpop.f32.mrf.mxu0
      %v1032 = vadd.f32 0.0, %v1031
      %1033 = vmatmul.f32.gmra.mxu0 %v928
      %v1034 = vpop.f32.mrf.mxu0
      %v1035 = vadd.f32 0.0, %v1034
      %1036 = vmatmul.f32.gmra.mxu0 %v930
      %v1037 = vpop.f32.mrf.mxu0
      %v1038 = vadd.f32 0.0, %v1037
      %1039 = vmatmul.f32.gmra.mxu0 %v932
      %v1040 = vpop.f32.mrf.mxu0
      %v1041 = vadd.f32 0.0, %v1040
      %1042 = vmatmul.f32.gmra.mxu0 %v934
      %v1043 = vpop.f32.mrf.mxu0
      %v1044 = vadd.f32 0.0, %v1043
      %1045 = vmatmul.f32.gmra.mxu0 %v936
      %v1046 = vpop.f32.mrf.mxu0
      %v1047 = vadd.f32 0.0, %v1046
      %1048 = vmatmul.f32.gmra.mxu0 %v938
      %v1049 = vpop.f32.mrf.mxu0
      %v1050 = vadd.f32 0.0, %v1049
      %1051 = vmatmul.f32.gmra.mxu0 %v940
      %v1052 = vpop.f32.mrf.mxu0
      %v1053 = vadd.f32 0.0, %v1052
      %1054 = vmatmul.f32.gmra.mxu0 %v942
      %v1055 = vpop.f32.mrf.mxu0
      %v1056 = vadd.f32 0.0, %v1055
      %1057 = vmatmul.f32.gmra.mxu0 %v1009
      %v1058 = vpop.f32.mrf.mxu0
      %v1059 = vadd.f32 0.0, %v1058
      %1060 = vdwg.mxu0
      %v1061 = vadd.f32 %v994, %v1032
      %v1062 = vadd.f32 %v995, %v1035
      %v1063 = vadd.f32 %v996, %v1038
      %v1064 = vadd.f32 %v997, %v1041
      %v1065 = vadd.f32 %v998, %v1044
      %v1066 = vadd.f32 %v999, %v1047
      %v1067 = vadd.f32 %v1000, %v1050
      %v1068 = vadd.f32 %v1001, %v1053
      %v1069 = vadd.f32 %v1002, %v1056
      %v1070 = vadd.f32 %v1003, %v1059
      %s1071 = scalar_lea.vmem %s3, 14
      %v1072 = vld [vmem:[%s1071] sm:$0x3]
      %vm1073 = vcmask 1042432
      %v1074 = vrot.slane %v436, 5
      %v1075 = vrot.slane %v437, 5
      %v1076 = vsel %vm1073, %v1074, %v1075
      %v1077 = vrot.slane %v438, 5
      %v1078 = vsel %vm1073, %v1075, %v1077
      %v1079 = vrot.slane %v439, 5
      %v1080 = vsel %vm1073, %v1077, %v1079
      %v1081 = vrot.slane %v440, 5
      %v1082 = vsel %vm1073, %v1079, %v1081
      %v1083 = vrot.slane %v441, 5
      %v1084 = vsel %vm1073, %v1081, %v1083
      %v1085 = vrot.slane %v442, 5
      %v1086 = vsel %vm1073, %v1083, %v1085
      %v1087 = vrot.slane %v443, 5
      %v1088 = vsel %vm1073, %v1085, %v1087
      %v1089 = vrot.slane %v444, 5
      %v1090 = vsel %vm1073, %v1087, %v1089
      %v1091 = vrot.slane %v445, 5
      %v1092 = vsel %vm1073, %v1089, %v1091
      %v1093 = vrot.slane %v446, 5
      %v1094 = vsel %vm1073, %v1091, %v1093
      %v1095 = vsel %vm483, %v1076, 0
      %v1097 = vsel %vm483, %v1078, 0
      %v1099 = vsel %vm483, %v1080, 0
      %v1101 = vsel %vm483, %v1082, 0
      %v1103 = vsel %vm483, %v1084, 0
      %v1105 = vsel %vm483, %v1086, 0
      %v1107 = vsel %vm483, %v1088, 0
      %v1109 = vsel %vm483, %v1090, 0
      %v1111 = vsel %vm483, %v1092, 0
      %v1113 = vsel %vm483, %v1094, 0
      %v1116 = vsel %vm504, %v1072, 0
      %1118 = vmatpush.msra.mxu0 0.0
      %1119 = vmatpush.msra.mxu0 0.0
      %1120 = vmatpush.msra.mxu0 0.0
      %1121 = vmatpush.msra.mxu0 0.0
      %1122 = vmatpush.msra.mxu0 0.0
      %1123 = vmatpush.msra.mxu0 0.0
      %1124 = vmatpush.msra.mxu0 0.0
      %1125 = vmatpush.msra.mxu0 0.0
      %1126 = vmatpush.msra.mxu0 0.0
      %1127 = vmatpush.msra.mxu0 0.0
      %1128 = vmatpush.msra.mxu0 0.0
      %1129 = vmatpush.msra.mxu0 0.0
      %1130 = vmatpush.msra.mxu0 0.0
      %1131 = vmatpush.msra.mxu0 0.0
      %1132 = vmatpush.msra.mxu0 0.0
      %1133 = vmatpush.msra.mxu0 %v1116
      %1134 = vmatmul.f32.gmra.mxu0 %v1095
      %v1135 = vpop.f32.mrf.mxu0
      %v1136 = vadd.f32 0.0, %v1135
      %1137 = vmatmul.f32.gmra.mxu0 %v1097
      %v1138 = vpop.f32.mrf.mxu0
      %v1139 = vadd.f32 0.0, %v1138
      %1140 = vmatmul.f32.gmra.mxu0 %v1099
      %v1141 = vpop.f32.mrf.mxu0
      %v1142 = vadd.f32 0.0, %v1141
      %1143 = vmatmul.f32.gmra.mxu0 %v1101
      %v1144 = vpop.f32.mrf.mxu0
      %v1145 = vadd.f32 0.0, %v1144
      %1146 = vmatmul.f32.gmra.mxu0 %v1103
      %v1147 = vpop.f32.mrf.mxu0
      %v1148 = vadd.f32 0.0, %v1147
      %1149 = vmatmul.f32.gmra.mxu0 %v1105
      %v1150 = vpop.f32.mrf.mxu0
      %v1151 = vadd.f32 0.0, %v1150
      %1152 = vmatmul.f32.gmra.mxu0 %v1107
      %v1153 = vpop.f32.mrf.mxu0
      %v1154 = vadd.f32 0.0, %v1153
      %1155 = vmatmul.f32.gmra.mxu0 %v1109
      %v1156 = vpop.f32.mrf.mxu0
      %v1157 = vadd.f32 0.0, %v1156
      %1158 = vmatmul.f32.gmra.mxu0 %v1111
      %v1159 = vpop.f32.mrf.mxu0
      %v1160 = vadd.f32 0.0, %v1159
      %1161 = vmatmul.f32.gmra.mxu0 %v1113
      %v1162 = vpop.f32.mrf.mxu0
      %v1163 = vadd.f32 0.0, %v1162
      %1164 = vdwg.mxu0
      %v1165 = vadd.f32 %v1061, %v1136
      %v1166 = vadd.f32 %v1062, %v1139
      %v1167 = vadd.f32 %v1063, %v1142
      %v1168 = vadd.f32 %v1064, %v1145
      %v1169 = vadd.f32 %v1065, %v1148
      %v1170 = vadd.f32 %v1066, %v1151
      %v1171 = vadd.f32 %v1067, %v1154
      %v1172 = vadd.f32 %v1068, %v1157
      %v1173 = vadd.f32 %v1069, %v1160
      %v1174 = vadd.f32 %v1070, %v1163
      %s1175 = scalar_lea.vmem %s3, 16
      %v1176 = vld [vmem:[%s1175] sm:$0x3]
      %v1177 = vrot.slane %v436, 6
      %v1178 = vrot.slane %v437, 6
      %v1179 = vsel %vm504, %v1177, %v1178
      %v1180 = vrot.slane %v438, 6
      %v1181 = vsel %vm504, %v1178, %v1180
      %v1182 = vrot.slane %v439, 6
      %v1183 = vsel %vm504, %v1180, %v1182
      %v1184 = vrot.slane %v440, 6
      %v1185 = vsel %vm504, %v1182, %v1184
      %v1186 = vrot.slane %v441, 6
      %v1187 = vsel %vm504, %v1184, %v1186
      %v1188 = vrot.slane %v442, 6
      %v1189 = vsel %vm504, %v1186, %v1188
      %v1190 = vrot.slane %v443, 6
      %v1191 = vsel %vm504, %v1188, %v1190
      %v1192 = vrot.slane %v444, 6
      %v1193 = vsel %vm504, %v1190, %v1192
      %v1194 = vrot.slane %v445, 6
      %v1195 = vsel %vm504, %v1192, %v1194
      %v1196 = vrot.slane %v446, 6
      %v1197 = vsel %vm504, %v1194, %v1196
      %v1198 = vsel %vm483, %v1179, 0
      %v1200 = vsel %vm483, %v1181, 0
      %v1202 = vsel %vm483, %v1183, 0
      %v1204 = vsel %vm483, %v1185, 0
      %v1206 = vsel %vm483, %v1187, 0
      %v1208 = vsel %vm483, %v1189, 0
      %v1210 = vsel %vm483, %v1191, 0
      %v1212 = vsel %vm483, %v1193, 0
      %v1214 = vsel %vm483, %v1195, 0
      %v1216 = vsel %vm483, %v1197, 0
      %v1219 = vsel %vm504, %v1176, 0
      %1221 = vmatpush.msra.mxu0 0.0
      %1222 = vmatpush.msra.mxu0 0.0
      %1223 = vmatpush.msra.mxu0 0.0
      %1224 = vmatpush.msra.mxu0 0.0
      %1225 = vmatpush.msra.mxu0 0.0
      %1226 = vmatpush.msra.mxu0 0.0
      %1227 = vmatpush.msra.mxu0 0.0
      %1228 = vmatpush.msra.mxu0 0.0
      %1229 = vmatpush.msra.mxu0 0.0
      %1230 = vmatpush.msra.mxu0 0.0
      %1231 = vmatpush.msra.mxu0 0.0
      %1232 = vmatpush.msra.mxu0 0.0
      %1233 = vmatpush.msra.mxu0 0.0
      %1234 = vmatpush.msra.mxu0 0.0
      %1235 = vmatpush.msra.mxu0 0.0
      %1236 = vmatpush.msra.mxu0 %v1219
      %1237 = vmatmul.f32.gmra.mxu0 %v1198
      %v1238 = vpop.f32.mrf.mxu0
      %v1239 = vadd.f32 0.0, %v1238
      %1240 = vmatmul.f32.gmra.mxu0 %v1200
      %v1241 = vpop.f32.mrf.mxu0
      %v1242 = vadd.f32 0.0, %v1241
      %1243 = vmatmul.f32.gmra.mxu0 %v1202
      %v1244 = vpop.f32.mrf.mxu0
      %v1245 = vadd.f32 0.0, %v1244
      %1246 = vmatmul.f32.gmra.mxu0 %v1204
      %v1247 = vpop.f32.mrf.mxu0
      %v1248 = vadd.f32 0.0, %v1247
      %1249 = vmatmul.f32.gmra.mxu0 %v1206
      %v1250 = vpop.f32.mrf.mxu0
      %v1251 = vadd.f32 0.0, %v1250
      %1252 = vmatmul.f32.gmra.mxu0 %v1208
      %v1253 = vpop.f32.mrf.mxu0
      %v1254 = vadd.f32 0.0, %v1253
      %1255 = vmatmul.f32.gmra.mxu0 %v1210
      %v1256 = vpop.f32.mrf.mxu0
      %v1257 = vadd.f32 0.0, %v1256
      %1258 = vmatmul.f32.gmra.mxu0 %v1212
      %v1259 = vpop.f32.mrf.mxu0
      %v1260 = vadd.f32 0.0, %v1259
      %1261 = vmatmul.f32.gmra.mxu0 %v1214
      %v1262 = vpop.f32.mrf.mxu0
      %v1263 = vadd.f32 0.0, %v1262
      %1264 = vmatmul.f32.gmra.mxu0 %v1216
      %v1265 = vpop.f32.mrf.mxu0
      %v1266 = vadd.f32 0.0, %v1265
      %1267 = vdwg.mxu0
      %v1268 = vadd.f32 %v1165, %v1239
      %v1269 = vadd.f32 %v1166, %v1242
      %v1270 = vadd.f32 %v1167, %v1245
      %v1271 = vadd.f32 %v1168, %v1248
      %v1272 = vadd.f32 %v1169, %v1251
      %v1273 = vadd.f32 %v1170, %v1254
      %v1274 = vadd.f32 %v1171, %v1257
      %v1275 = vadd.f32 %v1172, %v1260
      %v1276 = vadd.f32 %v1173, %v1263
      %v1277 = vadd.f32 %v1174, %v1266
      %v1278 = vld [vmem:[%s398] sm:$0xff]
      %v1279 = vld [vmem:[%s398 + $0x8] sm:$0xff]
      %v1280 = vld [vmem:[%s398 + $0x10] sm:$0xff]
      %v1281 = vld [vmem:[%s398 + $0x18] sm:$0xff]
      %v1282 = vld [vmem:[%s398 + $0x20] sm:$0xff]
      %v1283 = vld [vmem:[%s398 + $0x28] sm:$0xff]
      %v1284 = vld [vmem:[%s398 + $0x30] sm:$0xff]
      %v1285 = vld [vmem:[%s398 + $0x38] sm:$0xff]
      %v1286 = vld [vmem:[%s398 + $0x40] sm:$0xff]
      %v1287 = vld [vmem:[%s398 + $0x48] sm:$0xff]
      %v1288 = vld [vmem:[%s398 + $0x50] sm:$0xff]
      %v1289 = vld [vmem:[%s398 + $0x58] sm:$0xff]
      %v1290 = vld [vmem:[%s398 + $0x60] sm:$0xff]
      %s1291 = scalar_lea.vmem %s3, 18
      %v1292 = vld [vmem:[%s1291] sm:$0x3]
      %v1294 = vsel %vm483, %v1278, 0
      %v1297 = vsel %vm483, %v1279, 0
      %v1300 = vsel %vm483, %v1280, 0
      %v1303 = vsel %vm483, %v1281, 0
      %v1306 = vsel %vm483, %v1282, 0
      %v1309 = vsel %vm483, %v1283, 0
      %v1312 = vsel %vm483, %v1284, 0
      %v1315 = vsel %vm483, %v1285, 0
      %v1318 = vsel %vm483, %v1286, 0
      %v1321 = vsel %vm483, %v1287, 0
      %v1324 = vsel %vm504, %v1292, 0
      %1326 = vmatpush.msra.mxu0 0.0
      %1327 = vmatpush.msra.mxu0 0.0
      %1328 = vmatpush.msra.mxu0 0.0
      %1329 = vmatpush.msra.mxu0 0.0
      %1330 = vmatpush.msra.mxu0 0.0
      %1331 = vmatpush.msra.mxu0 0.0
      %1332 = vmatpush.msra.mxu0 0.0
      %1333 = vmatpush.msra.mxu0 0.0
      %1334 = vmatpush.msra.mxu0 0.0
      %1335 = vmatpush.msra.mxu0 0.0
      %1336 = vmatpush.msra.mxu0 0.0
      %1337 = vmatpush.msra.mxu0 0.0
      %1338 = vmatpush.msra.mxu0 0.0
      %1339 = vmatpush.msra.mxu0 0.0
      %1340 = vmatpush.msra.mxu0 0.0
      %1341 = vmatpush.msra.mxu0 %v1324
      %1342 = vmatmul.f32.gmra.mxu0 %v1294
      %v1343 = vpop.f32.mrf.mxu0
      %v1344 = vadd.f32 0.0, %v1343
      %1345 = vmatmul.f32.gmra.mxu0 %v1297
      %v1346 = vpop.f32.mrf.mxu0
      %v1347 = vadd.f32 0.0, %v1346
      %1348 = vmatmul.f32.gmra.mxu0 %v1300
      %v1349 = vpop.f32.mrf.mxu0
      %v1350 = vadd.f32 0.0, %v1349
      %1351 = vmatmul.f32.gmra.mxu0 %v1303
      %v1352 = vpop.f32.mrf.mxu0
      %v1353 = vadd.f32 0.0, %v1352
      %1354 = vmatmul.f32.gmra.mxu0 %v1306
      %v1355 = vpop.f32.mrf.mxu0
      %v1356 = vadd.f32 0.0, %v1355
      %1357 = vmatmul.f32.gmra.mxu0 %v1309
      %v1358 = vpop.f32.mrf.mxu0
      %v1359 = vadd.f32 0.0, %v1358
      %1360 = vmatmul.f32.gmra.mxu0 %v1312
      %v1361 = vpop.f32.mrf.mxu0
      %v1362 = vadd.f32 0.0, %v1361
      %1363 = vmatmul.f32.gmra.mxu0 %v1315
      %v1364 = vpop.f32.mrf.mxu0
      %v1365 = vadd.f32 0.0, %v1364
      %1366 = vmatmul.f32.gmra.mxu0 %v1318
      %v1367 = vpop.f32.mrf.mxu0
      %v1368 = vadd.f32 0.0, %v1367
      %1369 = vmatmul.f32.gmra.mxu0 %v1321
      %v1370 = vpop.f32.mrf.mxu0
      %v1371 = vadd.f32 0.0, %v1370
      %1372 = vdwg.mxu0
      %v1373 = vadd.f32 %v1268, %v1344
      %v1374 = vadd.f32 %v1269, %v1347
      %v1375 = vadd.f32 %v1270, %v1350
      %v1376 = vadd.f32 %v1271, %v1353
      %v1377 = vadd.f32 %v1272, %v1356
      %v1378 = vadd.f32 %v1273, %v1359
      %v1379 = vadd.f32 %v1274, %v1362
      %v1380 = vadd.f32 %v1275, %v1365
      %v1381 = vadd.f32 %v1276, %v1368
      %v1382 = vadd.f32 %v1277, %v1371
      %s1383 = scalar_lea.vmem %s3, 20
      %v1384 = vld [vmem:[%s1383] sm:$0x3]
      %v1386 = vrot.slane %v1278, 1
      %v1387 = vrot.slane %v1279, 1
      %v1388 = vsel %vm461, %v1386, %v1387
      %v1389 = vrot.slane %v1280, 1
      %v1390 = vsel %vm461, %v1387, %v1389
      %v1391 = vrot.slane %v1281, 1
      %v1392 = vsel %vm461, %v1389, %v1391
      %v1393 = vrot.slane %v1282, 1
      %v1394 = vsel %vm461, %v1391, %v1393
      %v1395 = vrot.slane %v1283, 1
      %v1396 = vsel %vm461, %v1393, %v1395
      %v1397 = vrot.slane %v1284, 1
      %v1398 = vsel %vm461, %v1395, %v1397
      %v1399 = vrot.slane %v1285, 1
      %v1400 = vsel %vm461, %v1397, %v1399
      %v1401 = vrot.slane %v1286, 1
      %v1402 = vsel %vm461, %v1399, %v1401
      %v1403 = vrot.slane %v1287, 1
      %v1404 = vsel %vm461, %v1401, %v1403
      %v1405 = vrot.slane %v1288, 1
      %v1406 = vsel %vm461, %v1403, %v1405
      %v1407 = vsel %vm483, %v1388, 0
      %v1409 = vsel %vm483, %v1390, 0
      %v1411 = vsel %vm483, %v1392, 0
      %v1413 = vsel %vm483, %v1394, 0
      %v1415 = vsel %vm483, %v1396, 0
      %v1417 = vsel %vm483, %v1398, 0
      %v1419 = vsel %vm483, %v1400, 0
      %v1421 = vsel %vm483, %v1402, 0
      %v1423 = vsel %vm483, %v1404, 0
      %v1425 = vsel %vm483, %v1406, 0
      %v1428 = vsel %vm504, %v1384, 0
      %1430 = vmatpush.msra.mxu0 0.0
      %1431 = vmatpush.msra.mxu0 0.0
      %1432 = vmatpush.msra.mxu0 0.0
      %1433 = vmatpush.msra.mxu0 0.0
      %1434 = vmatpush.msra.mxu0 0.0
      %1435 = vmatpush.msra.mxu0 0.0
      %1436 = vmatpush.msra.mxu0 0.0
      %1437 = vmatpush.msra.mxu0 0.0
      %1438 = vmatpush.msra.mxu0 0.0
      %1439 = vmatpush.msra.mxu0 0.0
      %1440 = vmatpush.msra.mxu0 0.0
      %1441 = vmatpush.msra.mxu0 0.0
      %1442 = vmatpush.msra.mxu0 0.0
      %1443 = vmatpush.msra.mxu0 0.0
      %1444 = vmatpush.msra.mxu0 0.0
      %1445 = vmatpush.msra.mxu0 %v1428
      %1446 = vmatmul.f32.gmra.mxu0 %v1407
      %v1447 = vpop.f32.mrf.mxu0
      %v1448 = vadd.f32 0.0, %v1447
      %1449 = vmatmul.f32.gmra.mxu0 %v1409
      %v1450 = vpop.f32.mrf.mxu0
      %v1451 = vadd.f32 0.0, %v1450
      %1452 = vmatmul.f32.gmra.mxu0 %v1411
      %v1453 = vpop.f32.mrf.mxu0
      %v1454 = vadd.f32 0.0, %v1453
      %1455 = vmatmul.f32.gmra.mxu0 %v1413
      %v1456 = vpop.f32.mrf.mxu0
      %v1457 = vadd.f32 0.0, %v1456
      %1458 = vmatmul.f32.gmra.mxu0 %v1415
      %v1459 = vpop.f32.mrf.mxu0
      %v1460 = vadd.f32 0.0, %v1459
      %1461 = vmatmul.f32.gmra.mxu0 %v1417
      %v1462 = vpop.f32.mrf.mxu0
      %v1463 = vadd.f32 0.0, %v1462
      %1464 = vmatmul.f32.gmra.mxu0 %v1419
      %v1465 = vpop.f32.mrf.mxu0
      %v1466 = vadd.f32 0.0, %v1465
      %1467 = vmatmul.f32.gmra.mxu0 %v1421
      %v1468 = vpop.f32.mrf.mxu0
      %v1469 = vadd.f32 0.0, %v1468
      %1470 = vmatmul.f32.gmra.mxu0 %v1423
      %v1471 = vpop.f32.mrf.mxu0
      %v1472 = vadd.f32 0.0, %v1471
      %1473 = vmatmul.f32.gmra.mxu0 %v1425
      %v1474 = vpop.f32.mrf.mxu0
      %v1475 = vadd.f32 0.0, %v1474
      %1476 = vdwg.mxu0
      %v1477 = vadd.f32 %v1373, %v1448
      %v1478 = vadd.f32 %v1374, %v1451
      %v1479 = vadd.f32 %v1375, %v1454
      %v1480 = vadd.f32 %v1376, %v1457
      %v1481 = vadd.f32 %v1377, %v1460
      %v1482 = vadd.f32 %v1378, %v1463
      %v1483 = vadd.f32 %v1379, %v1466
      %v1484 = vadd.f32 %v1380, %v1469
      %v1485 = vadd.f32 %v1381, %v1472
      %v1486 = vadd.f32 %v1382, %v1475
      %s1487 = scalar_lea.vmem %s3, 22
      %v1488 = vld [vmem:[%s1487] sm:$0x3]
      %v1489 = vrot.slane %v1278, 2
      %v1490 = vrot.slane %v1279, 2
      %v1491 = vsel %vm627, %v1489, %v1490
      %v1492 = vrot.slane %v1280, 2
      %v1493 = vsel %vm627, %v1490, %v1492
      %v1494 = vrot.slane %v1281, 2
      %v1495 = vsel %vm627, %v1492, %v1494
      %v1496 = vrot.slane %v1282, 2
      %v1497 = vsel %vm627, %v1494, %v1496
      %v1498 = vrot.slane %v1283, 2
      %v1499 = vsel %vm627, %v1496, %v1498
      %v1500 = vrot.slane %v1284, 2
      %v1501 = vsel %vm627, %v1498, %v1500
      %v1502 = vrot.slane %v1285, 2
      %v1503 = vsel %vm627, %v1500, %v1502
      %v1504 = vrot.slane %v1286, 2
      %v1505 = vsel %vm627, %v1502, %v1504
      %v1506 = vrot.slane %v1287, 2
      %v1507 = vsel %vm627, %v1504, %v1506
      %v1508 = vrot.slane %v1288, 2
      %v1509 = vsel %vm627, %v1506, %v1508
      %v1510 = vsel %vm483, %v1491, 0
      %v1512 = vsel %vm483, %v1493, 0
      %v1514 = vsel %vm483, %v1495, 0
      %v1516 = vsel %vm483, %v1497, 0
      %v1518 = vsel %vm483, %v1499, 0
      %v1520 = vsel %vm483, %v1501, 0
      %v1522 = vsel %vm483, %v1503, 0
      %v1524 = vsel %vm483, %v1505, 0
      %v1526 = vsel %vm483, %v1507, 0
      %v1528 = vsel %vm483, %v1509, 0
      %v1531 = vsel %vm504, %v1488, 0
      %1533 = vmatpush.msra.mxu0 0.0
      %1534 = vmatpush.msra.mxu0 0.0
      %1535 = vmatpush.msra.mxu0 0.0
      %1536 = vmatpush.msra.mxu0 0.0
      %1537 = vmatpush.msra.mxu0 0.0
      %1538 = vmatpush.msra.mxu0 0.0
      %1539 = vmatpush.msra.mxu0 0.0
      %1540 = vmatpush.msra.mxu0 0.0
      %1541 = vmatpush.msra.mxu0 0.0
      %1542 = vmatpush.msra.mxu0 0.0
      %1543 = vmatpush.msra.mxu0 0.0
      %1544 = vmatpush.msra.mxu0 0.0
      %1545 = vmatpush.msra.mxu0 0.0
      %1546 = vmatpush.msra.mxu0 0.0
      %1547 = vmatpush.msra.mxu0 0.0
      %1548 = vmatpush.msra.mxu0 %v1531
      %1549 = vmatmul.f32.gmra.mxu0 %v1510
      %v1550 = vpop.f32.mrf.mxu0
      %v1551 = vadd.f32 0.0, %v1550
      %1552 = vmatmul.f32.gmra.mxu0 %v1512
      %v1553 = vpop.f32.mrf.mxu0
      %v1554 = vadd.f32 0.0, %v1553
      %1555 = vmatmul.f32.gmra.mxu0 %v1514
      %v1556 = vpop.f32.mrf.mxu0
      %v1557 = vadd.f32 0.0, %v1556
      %1558 = vmatmul.f32.gmra.mxu0 %v1516
      %v1559 = vpop.f32.mrf.mxu0
      %v1560 = vadd.f32 0.0, %v1559
      %1561 = vmatmul.f32.gmra.mxu0 %v1518
      %v1562 = vpop.f32.mrf.mxu0
      %v1563 = vadd.f32 0.0, %v1562
      %1564 = vmatmul.f32.gmra.mxu0 %v1520
      %v1565 = vpop.f32.mrf.mxu0
      %v1566 = vadd.f32 0.0, %v1565
      %1567 = vmatmul.f32.gmra.mxu0 %v1522
      %v1568 = vpop.f32.mrf.mxu0
      %v1569 = vadd.f32 0.0, %v1568
      %1570 = vmatmul.f32.gmra.mxu0 %v1524
      %v1571 = vpop.f32.mrf.mxu0
      %v1572 = vadd.f32 0.0, %v1571
      %1573 = vmatmul.f32.gmra.mxu0 %v1526
      %v1574 = vpop.f32.mrf.mxu0
      %v1575 = vadd.f32 0.0, %v1574
      %1576 = vmatmul.f32.gmra.mxu0 %v1528
      %v1577 = vpop.f32.mrf.mxu0
      %v1578 = vadd.f32 0.0, %v1577
      %1579 = vdwg.mxu0
      %v1580 = vadd.f32 %v1477, %v1551
      %v1581 = vadd.f32 %v1478, %v1554
      %v1582 = vadd.f32 %v1479, %v1557
      %v1583 = vadd.f32 %v1480, %v1560
      %v1584 = vadd.f32 %v1481, %v1563
      %v1585 = vadd.f32 %v1482, %v1566
      %v1586 = vadd.f32 %v1483, %v1569
      %v1587 = vadd.f32 %v1484, %v1572
      %v1588 = vadd.f32 %v1485, %v1575
      %v1589 = vadd.f32 %v1486, %v1578
      %s1590 = scalar_lea.vmem %s3, 24
      %v1591 = vld [vmem:[%s1590] sm:$0x3]
      %v1593 = vrot.slane %v1289, 2
      %v1594 = vsel %vm627, %v1508, %v1593
      %v1595 = vsel %vm483, %v1594, 0
      %v1598 = vsel %vm504, %v1591, 0
      %1600 = vmatpush.msra.mxu0 0.0
      %1601 = vmatpush.msra.mxu0 0.0
      %1602 = vmatpush.msra.mxu0 0.0
      %1603 = vmatpush.msra.mxu0 0.0
      %1604 = vmatpush.msra.mxu0 0.0
      %1605 = vmatpush.msra.mxu0 0.0
      %1606 = vmatpush.msra.mxu0 0.0
      %1607 = vmatpush.msra.mxu0 0.0
      %1608 = vmatpush.msra.mxu0 0.0
      %1609 = vmatpush.msra.mxu0 0.0
      %1610 = vmatpush.msra.mxu0 0.0
      %1611 = vmatpush.msra.mxu0 0.0
      %1612 = vmatpush.msra.mxu0 0.0
      %1613 = vmatpush.msra.mxu0 0.0
      %1614 = vmatpush.msra.mxu0 0.0
      %1615 = vmatpush.msra.mxu0 %v1598
      %1616 = vmatmul.f32.gmra.mxu0 %v1512
      %v1617 = vpop.f32.mrf.mxu0
      %v1618 = vadd.f32 0.0, %v1617
      %1619 = vmatmul.f32.gmra.mxu0 %v1514
      %v1620 = vpop.f32.mrf.mxu0
      %v1621 = vadd.f32 0.0, %v1620
      %1622 = vmatmul.f32.gmra.mxu0 %v1516
      %v1623 = vpop.f32.mrf.mxu0
      %v1624 = vadd.f32 0.0, %v1623
      %1625 = vmatmul.f32.gmra.mxu0 %v1518
      %v1626 = vpop.f32.mrf.mxu0
      %v1627 = vadd.f32 0.0, %v1626
      %1628 = vmatmul.f32.gmra.mxu0 %v1520
      %v1629 = vpop.f32.mrf.mxu0
      %v1630 = vadd.f32 0.0, %v1629
      %1631 = vmatmul.f32.gmra.mxu0 %v1522
      %v1632 = vpop.f32.mrf.mxu0
      %v1633 = vadd.f32 0.0, %v1632
      %1634 = vmatmul.f32.gmra.mxu0 %v1524
      %v1635 = vpop.f32.mrf.mxu0
      %v1636 = vadd.f32 0.0, %v1635
      %1637 = vmatmul.f32.gmra.mxu0 %v1526
      %v1638 = vpop.f32.mrf.mxu0
      %v1639 = vadd.f32 0.0, %v1638
      %1640 = vmatmul.f32.gmra.mxu0 %v1528
      %v1641 = vpop.f32.mrf.mxu0
      %v1642 = vadd.f32 0.0, %v1641
      %1643 = vmatmul.f32.gmra.mxu0 %v1595
      %v1644 = vpop.f32.mrf.mxu0
      %v1645 = vadd.f32 0.0, %v1644
      %1646 = vdwg.mxu0
      %v1647 = vadd.f32 %v1580, %v1618
      %v1648 = vadd.f32 %v1581, %v1621
      %v1649 = vadd.f32 %v1582, %v1624
      %v1650 = vadd.f32 %v1583, %v1627
      %v1651 = vadd.f32 %v1584, %v1630
      %v1652 = vadd.f32 %v1585, %v1633
      %v1653 = vadd.f32 %v1586, %v1636
      %v1654 = vadd.f32 %v1587, %v1639
      %v1655 = vadd.f32 %v1588, %v1642
      %v1656 = vadd.f32 %v1589, %v1645
      %s1657 = scalar_lea.vmem %s3, 26
      %v1658 = vld [vmem:[%s1657] sm:$0x3]
      %v1659 = vrot.slane %v1279, 3
      %v1660 = vrot.slane %v1280, 3
      %v1661 = vsel %vm798, %v1659, %v1660
      %v1662 = vrot.slane %v1281, 3
      %v1663 = vsel %vm798, %v1660, %v1662
      %v1664 = vrot.slane %v1282, 3
      %v1665 = vsel %vm798, %v1662, %v1664
      %v1666 = vrot.slane %v1283, 3
      %v1667 = vsel %vm798, %v1664, %v1666
      %v1668 = vrot.slane %v1284, 3
      %v1669 = vsel %vm798, %v1666, %v1668
      %v1670 = vrot.slane %v1285, 3
      %v1671 = vsel %vm798, %v1668, %v1670
      %v1672 = vrot.slane %v1286, 3
      %v1673 = vsel %vm798, %v1670, %v1672
      %v1674 = vrot.slane %v1287, 3
      %v1675 = vsel %vm798, %v1672, %v1674
      %v1676 = vrot.slane %v1288, 3
      %v1677 = vsel %vm798, %v1674, %v1676
      %v1678 = vrot.slane %v1289, 3
      %v1679 = vsel %vm798, %v1676, %v1678
      %v1680 = vsel %vm483, %v1661, 0
      %v1682 = vsel %vm483, %v1663, 0
      %v1684 = vsel %vm483, %v1665, 0
      %v1686 = vsel %vm483, %v1667, 0
      %v1688 = vsel %vm483, %v1669, 0
      %v1690 = vsel %vm483, %v1671, 0
      %v1692 = vsel %vm483, %v1673, 0
      %v1694 = vsel %vm483, %v1675, 0
      %v1696 = vsel %vm483, %v1677, 0
      %v1698 = vsel %vm483, %v1679, 0
      %v1701 = vsel %vm504, %v1658, 0
      %1703 = vmatpush.msra.mxu0 0.0
      %1704 = vmatpush.msra.mxu0 0.0
      %1705 = vmatpush.msra.mxu0 0.0
      %1706 = vmatpush.msra.mxu0 0.0
      %1707 = vmatpush.msra.mxu0 0.0
      %1708 = vmatpush.msra.mxu0 0.0
      %1709 = vmatpush.msra.mxu0 0.0
      %1710 = vmatpush.msra.mxu0 0.0
      %1711 = vmatpush.msra.mxu0 0.0
      %1712 = vmatpush.msra.mxu0 0.0
      %1713 = vmatpush.msra.mxu0 0.0
      %1714 = vmatpush.msra.mxu0 0.0
      %1715 = vmatpush.msra.mxu0 0.0
      %1716 = vmatpush.msra.mxu0 0.0
      %1717 = vmatpush.msra.mxu0 0.0
      %1718 = vmatpush.msra.mxu0 %v1701
      %1719 = vmatmul.f32.gmra.mxu0 %v1680
      %v1720 = vpop.f32.mrf.mxu0
      %v1721 = vadd.f32 0.0, %v1720
      %1722 = vmatmul.f32.gmra.mxu0 %v1682
      %v1723 = vpop.f32.mrf.mxu0
      %v1724 = vadd.f32 0.0, %v1723
      %1725 = vmatmul.f32.gmra.mxu0 %v1684
      %v1726 = vpop.f32.mrf.mxu0
      %v1727 = vadd.f32 0.0, %v1726
      %1728 = vmatmul.f32.gmra.mxu0 %v1686
      %v1729 = vpop.f32.mrf.mxu0
      %v1730 = vadd.f32 0.0, %v1729
      %1731 = vmatmul.f32.gmra.mxu0 %v1688
      %v1732 = vpop.f32.mrf.mxu0
      %v1733 = vadd.f32 0.0, %v1732
      %1734 = vmatmul.f32.gmra.mxu0 %v1690
      %v1735 = vpop.f32.mrf.mxu0
      %v1736 = vadd.f32 0.0, %v1735
      %1737 = vmatmul.f32.gmra.mxu0 %v1692
      %v1738 = vpop.f32.mrf.mxu0
      %v1739 = vadd.f32 0.0, %v1738
      %1740 = vmatmul.f32.gmra.mxu0 %v1694
      %v1741 = vpop.f32.mrf.mxu0
      %v1742 = vadd.f32 0.0, %v1741
      %1743 = vmatmul.f32.gmra.mxu0 %v1696
      %v1744 = vpop.f32.mrf.mxu0
      %v1745 = vadd.f32 0.0, %v1744
      %1746 = vmatmul.f32.gmra.mxu0 %v1698
      %v1747 = vpop.f32.mrf.mxu0
      %v1748 = vadd.f32 0.0, %v1747
      %1749 = vdwg.mxu0
      %v1750 = vadd.f32 %v1647, %v1721
      %v1751 = vadd.f32 %v1648, %v1724
      %v1752 = vadd.f32 %v1649, %v1727
      %v1753 = vadd.f32 %v1650, %v1730
      %v1754 = vadd.f32 %v1651, %v1733
      %v1755 = vadd.f32 %v1652, %v1736
      %v1756 = vadd.f32 %v1653, %v1739
      %v1757 = vadd.f32 %v1654, %v1742
      %v1758 = vadd.f32 %v1655, %v1745
      %v1759 = vadd.f32 %v1656, %v1748
      %s1760 = scalar_lea.vmem %s3, 28
      %v1761 = vld [vmem:[%s1760] sm:$0x3]
      %v1762 = vrot.slane %v1279, 4
      %v1763 = vrot.slane %v1280, 4
      %v1764 = vsel %vm902, %v1762, %v1763
      %v1765 = vrot.slane %v1281, 4
      %v1766 = vsel %vm902, %v1763, %v1765
      %v1767 = vrot.slane %v1282, 4
      %v1768 = vsel %vm902, %v1765, %v1767
      %v1769 = vrot.slane %v1283, 4
      %v1770 = vsel %vm902, %v1767, %v1769
      %v1771 = vrot.slane %v1284, 4
      %v1772 = vsel %vm902, %v1769, %v1771
      %v1773 = vrot.slane %v1285, 4
      %v1774 = vsel %vm902, %v1771, %v1773
      %v1775 = vrot.slane %v1286, 4
      %v1776 = vsel %vm902, %v1773, %v1775
      %v1777 = vrot.slane %v1287, 4
      %v1778 = vsel %vm902, %v1775, %v1777
      %v1779 = vrot.slane %v1288, 4
      %v1780 = vsel %vm902, %v1777, %v1779
      %v1781 = vrot.slane %v1289, 4
      %v1782 = vsel %vm902, %v1779, %v1781
      %v1783 = vsel %vm483, %v1764, 0
      %v1785 = vsel %vm483, %v1766, 0
      %v1787 = vsel %vm483, %v1768, 0
      %v1789 = vsel %vm483, %v1770, 0
      %v1791 = vsel %vm483, %v1772, 0
      %v1793 = vsel %vm483, %v1774, 0
      %v1795 = vsel %vm483, %v1776, 0
      %v1797 = vsel %vm483, %v1778, 0
      %v1799 = vsel %vm483, %v1780, 0
      %v1801 = vsel %vm483, %v1782, 0
      %v1804 = vsel %vm504, %v1761, 0
      %1806 = vmatpush.msra.mxu0 0.0
      %1807 = vmatpush.msra.mxu0 0.0
      %1808 = vmatpush.msra.mxu0 0.0
      %1809 = vmatpush.msra.mxu0 0.0
      %1810 = vmatpush.msra.mxu0 0.0
      %1811 = vmatpush.msra.mxu0 0.0
      %1812 = vmatpush.msra.mxu0 0.0
      %1813 = vmatpush.msra.mxu0 0.0
      %1814 = vmatpush.msra.mxu0 0.0
      %1815 = vmatpush.msra.mxu0 0.0
      %1816 = vmatpush.msra.mxu0 0.0
      %1817 = vmatpush.msra.mxu0 0.0
      %1818 = vmatpush.msra.mxu0 0.0
      %1819 = vmatpush.msra.mxu0 0.0
      %1820 = vmatpush.msra.mxu0 0.0
      %1821 = vmatpush.msra.mxu0 %v1804
      %1822 = vmatmul.f32.gmra.mxu0 %v1783
      %v1823 = vpop.f32.mrf.mxu0
      %v1824 = vadd.f32 0.0, %v1823
      %1825 = vmatmul.f32.gmra.mxu0 %v1785
      %v1826 = vpop.f32.mrf.mxu0
      %v1827 = vadd.f32 0.0, %v1826
      %1828 = vmatmul.f32.gmra.mxu0 %v1787
      %v1829 = vpop.f32.mrf.mxu0
      %v1830 = vadd.f32 0.0, %v1829
      %1831 = vmatmul.f32.gmra.mxu0 %v1789
      %v1832 = vpop.f32.mrf.mxu0
      %v1833 = vadd.f32 0.0, %v1832
      %1834 = vmatmul.f32.gmra.mxu0 %v1791
      %v1835 = vpop.f32.mrf.mxu0
      %v1836 = vadd.f32 0.0, %v1835
      %1837 = vmatmul.f32.gmra.mxu0 %v1793
      %v1838 = vpop.f32.mrf.mxu0
      %v1839 = vadd.f32 0.0, %v1838
      %1840 = vmatmul.f32.gmra.mxu0 %v1795
      %v1841 = vpop.f32.mrf.mxu0
      %v1842 = vadd.f32 0.0, %v1841
      %1843 = vmatmul.f32.gmra.mxu0 %v1797
      %v1844 = vpop.f32.mrf.mxu0
      %v1845 = vadd.f32 0.0, %v1844
      %1846 = vmatmul.f32.gmra.mxu0 %v1799
      %v1847 = vpop.f32.mrf.mxu0
      %v1848 = vadd.f32 0.0, %v1847
      %1849 = vmatmul.f32.gmra.mxu0 %v1801
      %v1850 = vpop.f32.mrf.mxu0
      %v1851 = vadd.f32 0.0, %v1850
      %1852 = vdwg.mxu0
      %v1853 = vadd.f32 %v1750, %v1824
      %v1854 = vadd.f32 %v1751, %v1827
      %v1855 = vadd.f32 %v1752, %v1830
      %v1856 = vadd.f32 %v1753, %v1833
      %v1857 = vadd.f32 %v1754, %v1836
      %v1858 = vadd.f32 %v1755, %v1839
      %v1859 = vadd.f32 %v1756, %v1842
      %v1860 = vadd.f32 %v1757, %v1845
      %v1861 = vadd.f32 %v1758, %v1848
      %v1862 = vadd.f32 %v1759, %v1851
      %s1863 = scalar_lea.vmem %s3, 30
      %v1864 = vld [vmem:[%s1863] sm:$0x3]
      %v1866 = vrot.slane %v1290, 4
      %v1867 = vsel %vm902, %v1781, %v1866
      %v1868 = vsel %vm483, %v1867, 0
      %v1871 = vsel %vm504, %v1864, 0
      %1873 = vmatpush.msra.mxu0 0.0
      %1874 = vmatpush.msra.mxu0 0.0
      %1875 = vmatpush.msra.mxu0 0.0
      %1876 = vmatpush.msra.mxu0 0.0
      %1877 = vmatpush.msra.mxu0 0.0
      %1878 = vmatpush.msra.mxu0 0.0
      %1879 = vmatpush.msra.mxu0 0.0
      %1880 = vmatpush.msra.mxu0 0.0
      %1881 = vmatpush.msra.mxu0 0.0
      %1882 = vmatpush.msra.mxu0 0.0
      %1883 = vmatpush.msra.mxu0 0.0
      %1884 = vmatpush.msra.mxu0 0.0
      %1885 = vmatpush.msra.mxu0 0.0
      %1886 = vmatpush.msra.mxu0 0.0
      %1887 = vmatpush.msra.mxu0 0.0
      %1888 = vmatpush.msra.mxu0 %v1871
      %1889 = vmatmul.f32.gmra.mxu0 %v1785
      %v1890 = vpop.f32.mrf.mxu0
      %v1891 = vadd.f32 0.0, %v1890
      %1892 = vmatmul.f32.gmra.mxu0 %v1787
      %v1893 = vpop.f32.mrf.mxu0
      %v1894 = vadd.f32 0.0, %v1893
      %1895 = vmatmul.f32.gmra.mxu0 %v1789
      %v1896 = vpop.f32.mrf.mxu0
      %v1897 = vadd.f32 0.0, %v1896
      %1898 = vmatmul.f32.gmra.mxu0 %v1791
      %v1899 = vpop.f32.mrf.mxu0
      %v1900 = vadd.f32 0.0, %v1899
      %1901 = vmatmul.f32.gmra.mxu0 %v1793
      %v1902 = vpop.f32.mrf.mxu0
      %v1903 = vadd.f32 0.0, %v1902
      %1904 = vmatmul.f32.gmra.mxu0 %v1795
      %v1905 = vpop.f32.mrf.mxu0
      %v1906 = vadd.f32 0.0, %v1905
      %1907 = vmatmul.f32.gmra.mxu0 %v1797
      %v1908 = vpop.f32.mrf.mxu0
      %v1909 = vadd.f32 0.0, %v1908
      %1910 = vmatmul.f32.gmra.mxu0 %v1799
      %v1911 = vpop.f32.mrf.mxu0
      %v1912 = vadd.f32 0.0, %v1911
      %1913 = vmatmul.f32.gmra.mxu0 %v1801
      %v1914 = vpop.f32.mrf.mxu0
      %v1915 = vadd.f32 0.0, %v1914
      %1916 = vmatmul.f32.gmra.mxu0 %v1868
      %v1917 = vpop.f32.mrf.mxu0
      %v1918 = vadd.f32 0.0, %v1917
      %1919 = vdwg.mxu0
      %v1920 = vadd.f32 %v1853, %v1891
      %v1921 = vadd.f32 %v1854, %v1894
      %v1922 = vadd.f32 %v1855, %v1897
      %v1923 = vadd.f32 %v1856, %v1900
      %v1924 = vadd.f32 %v1857, %v1903
      %v1925 = vadd.f32 %v1858, %v1906
      %v1926 = vadd.f32 %v1859, %v1909
      %v1927 = vadd.f32 %v1860, %v1912
      %v1928 = vadd.f32 %v1861, %v1915
      %v1929 = vadd.f32 %v1862, %v1918
      %s1930 = scalar_lea.vmem %s3, 32
      %v1931 = vld [vmem:[%s1930] sm:$0x3]
      %v1932 = vrot.slane %v1280, 5
      %v1933 = vrot.slane %v1281, 5
      %v1934 = vsel %vm1073, %v1932, %v1933
      %v1935 = vrot.slane %v1282, 5
      %v1936 = vsel %vm1073, %v1933, %v1935
      %v1937 = vrot.slane %v1283, 5
      %v1938 = vsel %vm1073, %v1935, %v1937
      %v1939 = vrot.slane %v1284, 5
      %v1940 = vsel %vm1073, %v1937, %v1939
      %v1941 = vrot.slane %v1285, 5
      %v1942 = vsel %vm1073, %v1939, %v1941
      %v1943 = vrot.slane %v1286, 5
      %v1944 = vsel %vm1073, %v1941, %v1943
      %v1945 = vrot.slane %v1287, 5
      %v1946 = vsel %vm1073, %v1943, %v1945
      %v1947 = vrot.slane %v1288, 5
      %v1948 = vsel %vm1073, %v1945, %v1947
      %v1949 = vrot.slane %v1289, 5
      %v1950 = vsel %vm1073, %v1947, %v1949
      %v1951 = vrot.slane %v1290, 5
      %v1952 = vsel %vm1073, %v1949, %v1951
      %v1953 = vsel %vm483, %v1934, 0
      %v1955 = vsel %vm483, %v1936, 0
      %v1957 = vsel %vm483, %v1938, 0
      %v1959 = vsel %vm483, %v1940, 0
      %v1961 = vsel %vm483, %v1942, 0
      %v1963 = vsel %vm483, %v1944, 0
      %v1965 = vsel %vm483, %v1946, 0
      %v1967 = vsel %vm483, %v1948, 0
      %v1969 = vsel %vm483, %v1950, 0
      %v1971 = vsel %vm483, %v1952, 0
      %v1974 = vsel %vm504, %v1931, 0
      %1976 = vmatpush.msra.mxu0 0.0
      %1977 = vmatpush.msra.mxu0 0.0
      %1978 = vmatpush.msra.mxu0 0.0
      %1979 = vmatpush.msra.mxu0 0.0
      %1980 = vmatpush.msra.mxu0 0.0
      %1981 = vmatpush.msra.mxu0 0.0
      %1982 = vmatpush.msra.mxu0 0.0
      %1983 = vmatpush.msra.mxu0 0.0
      %1984 = vmatpush.msra.mxu0 0.0
      %1985 = vmatpush.msra.mxu0 0.0
      %1986 = vmatpush.msra.mxu0 0.0
      %1987 = vmatpush.msra.mxu0 0.0
      %1988 = vmatpush.msra.mxu0 0.0
      %1989 = vmatpush.msra.mxu0 0.0
      %1990 = vmatpush.msra.mxu0 0.0
      %1991 = vmatpush.msra.mxu0 %v1974
      %1992 = vmatmul.f32.gmra.mxu0 %v1953
      %v1993 = vpop.f32.mrf.mxu0
      %v1994 = vadd.f32 0.0, %v1993
      %1995 = vmatmul.f32.gmra.mxu0 %v1955
      %v1996 = vpop.f32.mrf.mxu0
      %v1997 = vadd.f32 0.0, %v1996
      %1998 = vmatmul.f32.gmra.mxu0 %v1957
      %v1999 = vpop.f32.mrf.mxu0
      %v2000 = vadd.f32 0.0, %v1999
      %2001 = vmatmul.f32.gmra.mxu0 %v1959
      %v2002 = vpop.f32.mrf.mxu0
      %v2003 = vadd.f32 0.0, %v2002
      %2004 = vmatmul.f32.gmra.mxu0 %v1961
      %v2005 = vpop.f32.mrf.mxu0
      %v2006 = vadd.f32 0.0, %v2005
      %2007 = vmatmul.f32.gmra.mxu0 %v1963
      %v2008 = vpop.f32.mrf.mxu0
      %v2009 = vadd.f32 0.0, %v2008
      %2010 = vmatmul.f32.gmra.mxu0 %v1965
      %v2011 = vpop.f32.mrf.mxu0
      %v2012 = vadd.f32 0.0, %v2011
      %2013 = vmatmul.f32.gmra.mxu0 %v1967
      %v2014 = vpop.f32.mrf.mxu0
      %v2015 = vadd.f32 0.0, %v2014
      %2016 = vmatmul.f32.gmra.mxu0 %v1969
      %v2017 = vpop.f32.mrf.mxu0
      %v2018 = vadd.f32 0.0, %v2017
      %2019 = vmatmul.f32.gmra.mxu0 %v1971
      %v2020 = vpop.f32.mrf.mxu0
      %v2021 = vadd.f32 0.0, %v2020
      %2022 = vdwg.mxu0
      %v2023 = vadd.f32 %v1920, %v1994
      %v2024 = vadd.f32 %v1921, %v1997
      %v2025 = vadd.f32 %v1922, %v2000
      %v2026 = vadd.f32 %v1923, %v2003
      %v2027 = vadd.f32 %v1924, %v2006
      %v2028 = vadd.f32 %v1925, %v2009
      %v2029 = vadd.f32 %v1926, %v2012
      %v2030 = vadd.f32 %v1927, %v2015
      %v2031 = vadd.f32 %v1928, %v2018
      %v2032 = vadd.f32 %v1929, %v2021
      %s2033 = scalar_lea.vmem %s3, 34
      %v2034 = vld [vmem:[%s2033] sm:$0x3]
      %v2035 = vrot.slane %v1280, 6
      %v2036 = vrot.slane %v1281, 6
      %v2037 = vsel %vm504, %v2035, %v2036
      %v2038 = vrot.slane %v1282, 6
      %v2039 = vsel %vm504, %v2036, %v2038
      %v2040 = vrot.slane %v1283, 6
      %v2041 = vsel %vm504, %v2038, %v2040
      %v2042 = vrot.slane %v1284, 6
      %v2043 = vsel %vm504, %v2040, %v2042
      %v2044 = vrot.slane %v1285, 6
      %v2045 = vsel %vm504, %v2042, %v2044
      %v2046 = vrot.slane %v1286, 6
      %v2047 = vsel %vm504, %v2044, %v2046
      %v2048 = vrot.slane %v1287, 6
      %v2049 = vsel %vm504, %v2046, %v2048
      %v2050 = vrot.slane %v1288, 6
      %v2051 = vsel %vm504, %v2048, %v2050
      %v2052 = vrot.slane %v1289, 6
      %v2053 = vsel %vm504, %v2050, %v2052
      %v2054 = vrot.slane %v1290, 6
      %v2055 = vsel %vm504, %v2052, %v2054
      %v2056 = vsel %vm483, %v2037, 0
      %v2058 = vsel %vm483, %v2039, 0
      %v2060 = vsel %vm483, %v2041, 0
      %v2062 = vsel %vm483, %v2043, 0
      %v2064 = vsel %vm483, %v2045, 0
      %v2066 = vsel %vm483, %v2047, 0
      %v2068 = vsel %vm483, %v2049, 0
      %v2070 = vsel %vm483, %v2051, 0
      %v2072 = vsel %vm483, %v2053, 0
      %v2074 = vsel %vm483, %v2055, 0
      %v2077 = vsel %vm504, %v2034, 0
      %2079 = vmatpush.msra.mxu0 0.0
      %2080 = vmatpush.msra.mxu0 0.0
      %2081 = vmatpush.msra.mxu0 0.0
      %2082 = vmatpush.msra.mxu0 0.0
      %2083 = vmatpush.msra.mxu0 0.0
      %2084 = vmatpush.msra.mxu0 0.0
      %2085 = vmatpush.msra.mxu0 0.0
      %2086 = vmatpush.msra.mxu0 0.0
      %2087 = vmatpush.msra.mxu0 0.0
      %2088 = vmatpush.msra.mxu0 0.0
      %2089 = vmatpush.msra.mxu0 0.0
      %2090 = vmatpush.msra.mxu0 0.0
      %2091 = vmatpush.msra.mxu0 0.0
      %2092 = vmatpush.msra.mxu0 0.0
      %2093 = vmatpush.msra.mxu0 0.0
      %2094 = vmatpush.msra.mxu0 %v2077
      %2095 = vmatmul.f32.gmra.mxu0 %v2056
      %v2096 = vpop.f32.mrf.mxu0
      %v2097 = vadd.f32 0.0, %v2096
      %2098 = vmatmul.f32.gmra.mxu0 %v2058
      %v2099 = vpop.f32.mrf.mxu0
      %v2100 = vadd.f32 0.0, %v2099
      %2101 = vmatmul.f32.gmra.mxu0 %v2060
      %v2102 = vpop.f32.mrf.mxu0
      %v2103 = vadd.f32 0.0, %v2102
      %2104 = vmatmul.f32.gmra.mxu0 %v2062
      %v2105 = vpop.f32.mrf.mxu0
      %v2106 = vadd.f32 0.0, %v2105
      %2107 = vmatmul.f32.gmra.mxu0 %v2064
      %v2108 = vpop.f32.mrf.mxu0
      %v2109 = vadd.f32 0.0, %v2108
      %2110 = vmatmul.f32.gmra.mxu0 %v2066
      %v2111 = vpop.f32.mrf.mxu0
      %v2112 = vadd.f32 0.0, %v2111
      %2113 = vmatmul.f32.gmra.mxu0 %v2068
      %v2114 = vpop.f32.mrf.mxu0
      %v2115 = vadd.f32 0.0, %v2114
      %2116 = vmatmul.f32.gmra.mxu0 %v2070
      %v2117 = vpop.f32.mrf.mxu0
      %v2118 = vadd.f32 0.0, %v2117
      %2119 = vmatmul.f32.gmra.mxu0 %v2072
      %v2120 = vpop.f32.mrf.mxu0
      %v2121 = vadd.f32 0.0, %v2120
      %2122 = vmatmul.f32.gmra.mxu0 %v2074
      %v2123 = vpop.f32.mrf.mxu0
      %v2124 = vadd.f32 0.0, %v2123
      %2125 = vdwg.mxu0
      %v2126 = vadd.f32 %v2023, %v2097
      %v2127 = vadd.f32 %v2024, %v2100
      %v2128 = vadd.f32 %v2025, %v2103
      %v2129 = vadd.f32 %v2026, %v2106
      %v2130 = vadd.f32 %v2027, %v2109
      %v2131 = vadd.f32 %v2028, %v2112
      %v2132 = vadd.f32 %v2029, %v2115
      %v2133 = vadd.f32 %v2030, %v2118
      %v2134 = vadd.f32 %v2031, %v2121
      %v2135 = vadd.f32 %v2032, %v2124
      %v2136 = vld [vmem:[%s409] sm:$0xff]
      %v2137 = vld [vmem:[%s409 + $0x8] sm:$0xff]
      %v2138 = vld [vmem:[%s409 + $0x10] sm:$0xff]
      %v2139 = vld [vmem:[%s409 + $0x18] sm:$0xff]
      %v2140 = vld [vmem:[%s409 + $0x20] sm:$0xff]
      %v2141 = vld [vmem:[%s409 + $0x28] sm:$0xff]
      %v2142 = vld [vmem:[%s409 + $0x30] sm:$0xff]
      %v2143 = vld [vmem:[%s409 + $0x38] sm:$0xff]
      %v2144 = vld [vmem:[%s409 + $0x40] sm:$0xff]
      %v2145 = vld [vmem:[%s409 + $0x48] sm:$0xff]
      %v2146 = vld [vmem:[%s409 + $0x50] sm:$0xff]
      %v2147 = vld [vmem:[%s409 + $0x58] sm:$0xff]
      %v2148 = vld [vmem:[%s409 + $0x60] sm:$0xff]
      %s2149 = scalar_lea.vmem %s3, 36
      %v2150 = vld [vmem:[%s2149] sm:$0x3]
      %v2152 = vsel %vm483, %v2136, 0
      %v2155 = vsel %vm483, %v2137, 0
      %v2158 = vsel %vm483, %v2138, 0
      %v2161 = vsel %vm483, %v2139, 0
      %v2164 = vsel %vm483, %v2140, 0
      %v2167 = vsel %vm483, %v2141, 0
      %v2170 = vsel %vm483, %v2142, 0
      %v2173 = vsel %vm483, %v2143, 0
      %v2176 = vsel %vm483, %v2144, 0
      %v2179 = vsel %vm483, %v2145, 0
      %v2182 = vsel %vm504, %v2150, 0
      %2184 = vmatpush.msra.mxu0 0.0
      %2185 = vmatpush.msra.mxu0 0.0
      %2186 = vmatpush.msra.mxu0 0.0
      %2187 = vmatpush.msra.mxu0 0.0
      %2188 = vmatpush.msra.mxu0 0.0
      %2189 = vmatpush.msra.mxu0 0.0
      %2190 = vmatpush.msra.mxu0 0.0
      %2191 = vmatpush.msra.mxu0 0.0
      %2192 = vmatpush.msra.mxu0 0.0
      %2193 = vmatpush.msra.mxu0 0.0
      %2194 = vmatpush.msra.mxu0 0.0
      %2195 = vmatpush.msra.mxu0 0.0
      %2196 = vmatpush.msra.mxu0 0.0
      %2197 = vmatpush.msra.mxu0 0.0
      %2198 = vmatpush.msra.mxu0 0.0
      %2199 = vmatpush.msra.mxu0 %v2182
      %2200 = vmatmul.f32.gmra.mxu0 %v2152
      %v2201 = vpop.f32.mrf.mxu0
      %v2202 = vadd.f32 0.0, %v2201
      %2203 = vmatmul.f32.gmra.mxu0 %v2155
      %v2204 = vpop.f32.mrf.mxu0
      %v2205 = vadd.f32 0.0, %v2204
      %2206 = vmatmul.f32.gmra.mxu0 %v2158
      %v2207 = vpop.f32.mrf.mxu0
      %v2208 = vadd.f32 0.0, %v2207
      %2209 = vmatmul.f32.gmra.mxu0 %v2161
      %v2210 = vpop.f32.mrf.mxu0
      %v2211 = vadd.f32 0.0, %v2210
      %2212 = vmatmul.f32.gmra.mxu0 %v2164
      %v2213 = vpop.f32.mrf.mxu0
      %v2214 = vadd.f32 0.0, %v2213
      %2215 = vmatmul.f32.gmra.mxu0 %v2167
      %v2216 = vpop.f32.mrf.mxu0
      %v2217 = vadd.f32 0.0, %v2216
      %2218 = vmatmul.f32.gmra.mxu0 %v2170
      %v2219 = vpop.f32.mrf.mxu0
      %v2220 = vadd.f32 0.0, %v2219
      %2221 = vmatmul.f32.gmra.mxu0 %v2173
      %v2222 = vpop.f32.mrf.mxu0
      %v2223 = vadd.f32 0.0, %v2222
      %2224 = vmatmul.f32.gmra.mxu0 %v2176
      %v2225 = vpop.f32.mrf.mxu0
      %v2226 = vadd.f32 0.0, %v2225
      %2227 = vmatmul.f32.gmra.mxu0 %v2179
      %v2228 = vpop.f32.mrf.mxu0
      %v2229 = vadd.f32 0.0, %v2228
      %2230 = vdwg.mxu0
      %v2231 = vadd.f32 %v2126, %v2202
      %v2232 = vadd.f32 %v2127, %v2205
      %v2233 = vadd.f32 %v2128, %v2208
      %v2234 = vadd.f32 %v2129, %v2211
      %v2235 = vadd.f32 %v2130, %v2214
      %v2236 = vadd.f32 %v2131, %v2217
      %v2237 = vadd.f32 %v2132, %v2220
      %v2238 = vadd.f32 %v2133, %v2223
      %v2239 = vadd.f32 %v2134, %v2226
      %v2240 = vadd.f32 %v2135, %v2229
      %s2241 = scalar_lea.vmem %s3, 38
      %v2242 = vld [vmem:[%s2241] sm:$0x3]
      %v2244 = vrot.slane %v2136, 1
      %v2245 = vrot.slane %v2137, 1
      %v2246 = vsel %vm461, %v2244, %v2245
      %v2247 = vrot.slane %v2138, 1
      %v2248 = vsel %vm461, %v2245, %v2247
      %v2249 = vrot.slane %v2139, 1
      %v2250 = vsel %vm461, %v2247, %v2249
      %v2251 = vrot.slane %v2140, 1
      %v2252 = vsel %vm461, %v2249, %v2251
      %v2253 = vrot.slane %v2141, 1
      %v2254 = vsel %vm461, %v2251, %v2253
      %v2255 = vrot.slane %v2142, 1
      %v2256 = vsel %vm461, %v2253, %v2255
      %v2257 = vrot.slane %v2143, 1
      %v2258 = vsel %vm461, %v2255, %v2257
      %v2259 = vrot.slane %v2144, 1
      %v2260 = vsel %vm461, %v2257, %v2259
      %v2261 = vrot.slane %v2145, 1
      %v2262 = vsel %vm461, %v2259, %v2261
      %v2263 = vrot.slane %v2146, 1
      %v2264 = vsel %vm461, %v2261, %v2263
      %v2265 = vsel %vm483, %v2246, 0
      %v2267 = vsel %vm483, %v2248, 0
      %v2269 = vsel %vm483, %v2250, 0
      %v2271 = vsel %vm483, %v2252, 0
      %v2273 = vsel %vm483, %v2254, 0
      %v2275 = vsel %vm483, %v2256, 0
      %v2277 = vsel %vm483, %v2258, 0
      %v2279 = vsel %vm483, %v2260, 0
      %v2281 = vsel %vm483, %v2262, 0
      %v2283 = vsel %vm483, %v2264, 0
      %v2286 = vsel %vm504, %v2242, 0
      %2288 = vmatpush.msra.mxu0 0.0
      %2289 = vmatpush.msra.mxu0 0.0
      %2290 = vmatpush.msra.mxu0 0.0
      %2291 = vmatpush.msra.mxu0 0.0
      %2292 = vmatpush.msra.mxu0 0.0
      %2293 = vmatpush.msra.mxu0 0.0
      %2294 = vmatpush.msra.mxu0 0.0
      %2295 = vmatpush.msra.mxu0 0.0
      %2296 = vmatpush.msra.mxu0 0.0
      %2297 = vmatpush.msra.mxu0 0.0
      %2298 = vmatpush.msra.mxu0 0.0
      %2299 = vmatpush.msra.mxu0 0.0
      %2300 = vmatpush.msra.mxu0 0.0
      %2301 = vmatpush.msra.mxu0 0.0
      %2302 = vmatpush.msra.mxu0 0.0
      %2303 = vmatpush.msra.mxu0 %v2286
      %2304 = vmatmul.f32.gmra.mxu0 %v2265
      %v2305 = vpop.f32.mrf.mxu0
      %v2306 = vadd.f32 0.0, %v2305
      %2307 = vmatmul.f32.gmra.mxu0 %v2267
      %v2308 = vpop.f32.mrf.mxu0
      %v2309 = vadd.f32 0.0, %v2308
      %2310 = vmatmul.f32.gmra.mxu0 %v2269
      %v2311 = vpop.f32.mrf.mxu0
      %v2312 = vadd.f32 0.0, %v2311
      %2313 = vmatmul.f32.gmra.mxu0 %v2271
      %v2314 = vpop.f32.mrf.mxu0
      %v2315 = vadd.f32 0.0, %v2314
      %2316 = vmatmul.f32.gmra.mxu0 %v2273
      %v2317 = vpop.f32.mrf.mxu0
      %v2318 = vadd.f32 0.0, %v2317
      %2319 = vmatmul.f32.gmra.mxu0 %v2275
      %v2320 = vpop.f32.mrf.mxu0
      %v2321 = vadd.f32 0.0, %v2320
      %2322 = vmatmul.f32.gmra.mxu0 %v2277
      %v2323 = vpop.f32.mrf.mxu0
      %v2324 = vadd.f32 0.0, %v2323
      %2325 = vmatmul.f32.gmra.mxu0 %v2279
      %v2326 = vpop.f32.mrf.mxu0
      %v2327 = vadd.f32 0.0, %v2326
      %2328 = vmatmul.f32.gmra.mxu0 %v2281
      %v2329 = vpop.f32.mrf.mxu0
      %v2330 = vadd.f32 0.0, %v2329
      %2331 = vmatmul.f32.gmra.mxu0 %v2283
      %v2332 = vpop.f32.mrf.mxu0
      %v2333 = vadd.f32 0.0, %v2332
      %2334 = vdwg.mxu0
      %v2335 = vadd.f32 %v2231, %v2306
      %v2336 = vadd.f32 %v2232, %v2309
      %v2337 = vadd.f32 %v2233, %v2312
      %v2338 = vadd.f32 %v2234, %v2315
      %v2339 = vadd.f32 %v2235, %v2318
      %v2340 = vadd.f32 %v2236, %v2321
      %v2341 = vadd.f32 %v2237, %v2324
      %v2342 = vadd.f32 %v2238, %v2327
      %v2343 = vadd.f32 %v2239, %v2330
      %v2344 = vadd.f32 %v2240, %v2333
      %s2345 = scalar_lea.vmem %s3, 40
      %v2346 = vld [vmem:[%s2345] sm:$0x3]
      %v2347 = vrot.slane %v2136, 2
      %v2348 = vrot.slane %v2137, 2
      %v2349 = vsel %vm627, %v2347, %v2348
      %v2350 = vrot.slane %v2138, 2
      %v2351 = vsel %vm627, %v2348, %v2350
      %v2352 = vrot.slane %v2139, 2
      %v2353 = vsel %vm627, %v2350, %v2352
      %v2354 = vrot.slane %v2140, 2
      %v2355 = vsel %vm627, %v2352, %v2354
      %v2356 = vrot.slane %v2141, 2
      %v2357 = vsel %vm627, %v2354, %v2356
      %v2358 = vrot.slane %v2142, 2
      %v2359 = vsel %vm627, %v2356, %v2358
      %v2360 = vrot.slane %v2143, 2
      %v2361 = vsel %vm627, %v2358, %v2360
      %v2362 = vrot.slane %v2144, 2
      %v2363 = vsel %vm627, %v2360, %v2362
      %v2364 = vrot.slane %v2145, 2
      %v2365 = vsel %vm627, %v2362, %v2364
      %v2366 = vrot.slane %v2146, 2
      %v2367 = vsel %vm627, %v2364, %v2366
      %v2368 = vsel %vm483, %v2349, 0
      %v2370 = vsel %vm483, %v2351, 0
      %v2372 = vsel %vm483, %v2353, 0
      %v2374 = vsel %vm483, %v2355, 0
      %v2376 = vsel %vm483, %v2357, 0
      %v2378 = vsel %vm483, %v2359, 0
      %v2380 = vsel %vm483, %v2361, 0
      %v2382 = vsel %vm483, %v2363, 0
      %v2384 = vsel %vm483, %v2365, 0
      %v2386 = vsel %vm483, %v2367, 0
      %v2389 = vsel %vm504, %v2346, 0
      %2391 = vmatpush.msra.mxu0 0.0
      %2392 = vmatpush.msra.mxu0 0.0
      %2393 = vmatpush.msra.mxu0 0.0
      %2394 = vmatpush.msra.mxu0 0.0
      %2395 = vmatpush.msra.mxu0 0.0
      %2396 = vmatpush.msra.mxu0 0.0
      %2397 = vmatpush.msra.mxu0 0.0
      %2398 = vmatpush.msra.mxu0 0.0
      %2399 = vmatpush.msra.mxu0 0.0
      %2400 = vmatpush.msra.mxu0 0.0
      %2401 = vmatpush.msra.mxu0 0.0
      %2402 = vmatpush.msra.mxu0 0.0
      %2403 = vmatpush.msra.mxu0 0.0
      %2404 = vmatpush.msra.mxu0 0.0
      %2405 = vmatpush.msra.mxu0 0.0
      %2406 = vmatpush.msra.mxu0 %v2389
      %2407 = vmatmul.f32.gmra.mxu0 %v2368
      %v2408 = vpop.f32.mrf.mxu0
      %v2409 = vadd.f32 0.0, %v2408
      %2410 = vmatmul.f32.gmra.mxu0 %v2370
      %v2411 = vpop.f32.mrf.mxu0
      %v2412 = vadd.f32 0.0, %v2411
      %2413 = vmatmul.f32.gmra.mxu0 %v2372
      %v2414 = vpop.f32.mrf.mxu0
      %v2415 = vadd.f32 0.0, %v2414
      %2416 = vmatmul.f32.gmra.mxu0 %v2374
      %v2417 = vpop.f32.mrf.mxu0
      %v2418 = vadd.f32 0.0, %v2417
      %2419 = vmatmul.f32.gmra.mxu0 %v2376
      %v2420 = vpop.f32.mrf.mxu0
      %v2421 = vadd.f32 0.0, %v2420
      %2422 = vmatmul.f32.gmra.mxu0 %v2378
      %v2423 = vpop.f32.mrf.mxu0
      %v2424 = vadd.f32 0.0, %v2423
      %2425 = vmatmul.f32.gmra.mxu0 %v2380
      %v2426 = vpop.f32.mrf.mxu0
      %v2427 = vadd.f32 0.0, %v2426
      %2428 = vmatmul.f32.gmra.mxu0 %v2382
      %v2429 = vpop.f32.mrf.mxu0
      %v2430 = vadd.f32 0.0, %v2429
      %2431 = vmatmul.f32.gmra.mxu0 %v2384
      %v2432 = vpop.f32.mrf.mxu0
      %v2433 = vadd.f32 0.0, %v2432
      %2434 = vmatmul.f32.gmra.mxu0 %v2386
      %v2435 = vpop.f32.mrf.mxu0
      %v2436 = vadd.f32 0.0, %v2435
      %2437 = vdwg.mxu0
      %v2438 = vadd.f32 %v2335, %v2409
      %v2439 = vadd.f32 %v2336, %v2412
      %v2440 = vadd.f32 %v2337, %v2415
      %v2441 = vadd.f32 %v2338, %v2418
      %v2442 = vadd.f32 %v2339, %v2421
      %v2443 = vadd.f32 %v2340, %v2424
      %v2444 = vadd.f32 %v2341, %v2427
      %v2445 = vadd.f32 %v2342, %v2430
      %v2446 = vadd.f32 %v2343, %v2433
      %v2447 = vadd.f32 %v2344, %v2436
      %s2448 = scalar_lea.vmem %s3, 42
      %v2449 = vld [vmem:[%s2448] sm:$0x3]
      %v2451 = vrot.slane %v2147, 2
      %v2452 = vsel %vm627, %v2366, %v2451
      %v2453 = vsel %vm483, %v2452, 0
      %v2456 = vsel %vm504, %v2449, 0
      %2458 = vmatpush.msra.mxu0 0.0
      %2459 = vmatpush.msra.mxu0 0.0
      %2460 = vmatpush.msra.mxu0 0.0
      %2461 = vmatpush.msra.mxu0 0.0
      %2462 = vmatpush.msra.mxu0 0.0
      %2463 = vmatpush.msra.mxu0 0.0
      %2464 = vmatpush.msra.mxu0 0.0
      %2465 = vmatpush.msra.mxu0 0.0
      %2466 = vmatpush.msra.mxu0 0.0
      %2467 = vmatpush.msra.mxu0 0.0
      %2468 = vmatpush.msra.mxu0 0.0
      %2469 = vmatpush.msra.mxu0 0.0
      %2470 = vmatpush.msra.mxu0 0.0
      %2471 = vmatpush.msra.mxu0 0.0
      %2472 = vmatpush.msra.mxu0 0.0
      %2473 = vmatpush.msra.mxu0 %v2456
      %2474 = vmatmul.f32.gmra.mxu0 %v2370
      %v2475 = vpop.f32.mrf.mxu0
      %v2476 = vadd.f32 0.0, %v2475
      %2477 = vmatmul.f32.gmra.mxu0 %v2372
      %v2478 = vpop.f32.mrf.mxu0
      %v2479 = vadd.f32 0.0, %v2478
      %2480 = vmatmul.f32.gmra.mxu0 %v2374
      %v2481 = vpop.f32.mrf.mxu0
      %v2482 = vadd.f32 0.0, %v2481
      %2483 = vmatmul.f32.gmra.mxu0 %v2376
      %v2484 = vpop.f32.mrf.mxu0
      %v2485 = vadd.f32 0.0, %v2484
      %2486 = vmatmul.f32.gmra.mxu0 %v2378
      %v2487 = vpop.f32.mrf.mxu0
      %v2488 = vadd.f32 0.0, %v2487
      %2489 = vmatmul.f32.gmra.mxu0 %v2380
      %v2490 = vpop.f32.mrf.mxu0
      %v2491 = vadd.f32 0.0, %v2490
      %2492 = vmatmul.f32.gmra.mxu0 %v2382
      %v2493 = vpop.f32.mrf.mxu0
      %v2494 = vadd.f32 0.0, %v2493
      %2495 = vmatmul.f32.gmra.mxu0 %v2384
      %v2496 = vpop.f32.mrf.mxu0
      %v2497 = vadd.f32 0.0, %v2496
      %2498 = vmatmul.f32.gmra.mxu0 %v2386
      %v2499 = vpop.f32.mrf.mxu0
      %v2500 = vadd.f32 0.0, %v2499
      %2501 = vmatmul.f32.gmra.mxu0 %v2453
      %v2502 = vpop.f32.mrf.mxu0
      %v2503 = vadd.f32 0.0, %v2502
      %2504 = vdwg.mxu0
      %v2505 = vadd.f32 %v2438, %v2476
      %v2506 = vadd.f32 %v2439, %v2479
      %v2507 = vadd.f32 %v2440, %v2482
      %v2508 = vadd.f32 %v2441, %v2485
      %v2509 = vadd.f32 %v2442, %v2488
      %v2510 = vadd.f32 %v2443, %v2491
      %v2511 = vadd.f32 %v2444, %v2494
      %v2512 = vadd.f32 %v2445, %v2497
      %v2513 = vadd.f32 %v2446, %v2500
      %v2514 = vadd.f32 %v2447, %v2503
      %s2515 = scalar_lea.vmem %s3, 44
      %v2516 = vld [vmem:[%s2515] sm:$0x3]
      %v2517 = vrot.slane %v2137, 3
      %v2518 = vrot.slane %v2138, 3
      %v2519 = vsel %vm798, %v2517, %v2518
      %v2520 = vrot.slane %v2139, 3
      %v2521 = vsel %vm798, %v2518, %v2520
      %v2522 = vrot.slane %v2140, 3
      %v2523 = vsel %vm798, %v2520, %v2522
      %v2524 = vrot.slane %v2141, 3
      %v2525 = vsel %vm798, %v2522, %v2524
      %v2526 = vrot.slane %v2142, 3
      %v2527 = vsel %vm798, %v2524, %v2526
      %v2528 = vrot.slane %v2143, 3
      %v2529 = vsel %vm798, %v2526, %v2528
      %v2530 = vrot.slane %v2144, 3
      %v2531 = vsel %vm798, %v2528, %v2530
      %v2532 = vrot.slane %v2145, 3
      %v2533 = vsel %vm798, %v2530, %v2532
      %v2534 = vrot.slane %v2146, 3
      %v2535 = vsel %vm798, %v2532, %v2534
      %v2536 = vrot.slane %v2147, 3
      %v2537 = vsel %vm798, %v2534, %v2536
      %v2538 = vsel %vm483, %v2519, 0
      %v2540 = vsel %vm483, %v2521, 0
      %v2542 = vsel %vm483, %v2523, 0
      %v2544 = vsel %vm483, %v2525, 0
      %v2546 = vsel %vm483, %v2527, 0
      %v2548 = vsel %vm483, %v2529, 0
      %v2550 = vsel %vm483, %v2531, 0
      %v2552 = vsel %vm483, %v2533, 0
      %v2554 = vsel %vm483, %v2535, 0
      %v2556 = vsel %vm483, %v2537, 0
      %v2559 = vsel %vm504, %v2516, 0
      %2561 = vmatpush.msra.mxu0 0.0
      %2562 = vmatpush.msra.mxu0 0.0
      %2563 = vmatpush.msra.mxu0 0.0
      %2564 = vmatpush.msra.mxu0 0.0
      %2565 = vmatpush.msra.mxu0 0.0
      %2566 = vmatpush.msra.mxu0 0.0
      %2567 = vmatpush.msra.mxu0 0.0
      %2568 = vmatpush.msra.mxu0 0.0
      %2569 = vmatpush.msra.mxu0 0.0
      %2570 = vmatpush.msra.mxu0 0.0
      %2571 = vmatpush.msra.mxu0 0.0
      %2572 = vmatpush.msra.mxu0 0.0
      %2573 = vmatpush.msra.mxu0 0.0
      %2574 = vmatpush.msra.mxu0 0.0
      %2575 = vmatpush.msra.mxu0 0.0
      %2576 = vmatpush.msra.mxu0 %v2559
      %2577 = vmatmul.f32.gmra.mxu0 %v2538
      %v2578 = vpop.f32.mrf.mxu0
      %v2579 = vadd.f32 0.0, %v2578
      %2580 = vmatmul.f32.gmra.mxu0 %v2540
      %v2581 = vpop.f32.mrf.mxu0
      %v2582 = vadd.f32 0.0, %v2581
      %2583 = vmatmul.f32.gmra.mxu0 %v2542
      %v2584 = vpop.f32.mrf.mxu0
      %v2585 = vadd.f32 0.0, %v2584
      %2586 = vmatmul.f32.gmra.mxu0 %v2544
      %v2587 = vpop.f32.mrf.mxu0
      %v2588 = vadd.f32 0.0, %v2587
      %2589 = vmatmul.f32.gmra.mxu0 %v2546
      %v2590 = vpop.f32.mrf.mxu0
      %v2591 = vadd.f32 0.0, %v2590
      %2592 = vmatmul.f32.gmra.mxu0 %v2548
      %v2593 = vpop.f32.mrf.mxu0
      %v2594 = vadd.f32 0.0, %v2593
      %2595 = vmatmul.f32.gmra.mxu0 %v2550
      %v2596 = vpop.f32.mrf.mxu0
      %v2597 = vadd.f32 0.0, %v2596
      %2598 = vmatmul.f32.gmra.mxu0 %v2552
      %v2599 = vpop.f32.mrf.mxu0
      %v2600 = vadd.f32 0.0, %v2599
      %2601 = vmatmul.f32.gmra.mxu0 %v2554
      %v2602 = vpop.f32.mrf.mxu0
      %v2603 = vadd.f32 0.0, %v2602
      %2604 = vmatmul.f32.gmra.mxu0 %v2556
      %v2605 = vpop.f32.mrf.mxu0
      %v2606 = vadd.f32 0.0, %v2605
      %2607 = vdwg.mxu0
      %v2608 = vadd.f32 %v2505, %v2579
      %v2609 = vadd.f32 %v2506, %v2582
      %v2610 = vadd.f32 %v2507, %v2585
      %v2611 = vadd.f32 %v2508, %v2588
      %v2612 = vadd.f32 %v2509, %v2591
      %v2613 = vadd.f32 %v2510, %v2594
      %v2614 = vadd.f32 %v2511, %v2597
      %v2615 = vadd.f32 %v2512, %v2600
      %v2616 = vadd.f32 %v2513, %v2603
      %v2617 = vadd.f32 %v2514, %v2606
      %s2618 = scalar_lea.vmem %s3, 46
      %v2619 = vld [vmem:[%s2618] sm:$0x3]
      %v2620 = vrot.slane %v2137, 4
      %v2621 = vrot.slane %v2138, 4
      %v2622 = vsel %vm902, %v2620, %v2621
      %v2623 = vrot.slane %v2139, 4
      %v2624 = vsel %vm902, %v2621, %v2623
      %v2625 = vrot.slane %v2140, 4
      %v2626 = vsel %vm902, %v2623, %v2625
      %v2627 = vrot.slane %v2141, 4
      %v2628 = vsel %vm902, %v2625, %v2627
      %v2629 = vrot.slane %v2142, 4
      %v2630 = vsel %vm902, %v2627, %v2629
      %v2631 = vrot.slane %v2143, 4
      %v2632 = vsel %vm902, %v2629, %v2631
      %v2633 = vrot.slane %v2144, 4
      %v2634 = vsel %vm902, %v2631, %v2633
      %v2635 = vrot.slane %v2145, 4
      %v2636 = vsel %vm902, %v2633, %v2635
      %v2637 = vrot.slane %v2146, 4
      %v2638 = vsel %vm902, %v2635, %v2637
      %v2639 = vrot.slane %v2147, 4
      %v2640 = vsel %vm902, %v2637, %v2639
      %v2641 = vsel %vm483, %v2622, 0
      %v2643 = vsel %vm483, %v2624, 0
      %v2645 = vsel %vm483, %v2626, 0
      %v2647 = vsel %vm483, %v2628, 0
      %v2649 = vsel %vm483, %v2630, 0
      %v2651 = vsel %vm483, %v2632, 0
      %v2653 = vsel %vm483, %v2634, 0
      %v2655 = vsel %vm483, %v2636, 0
      %v2657 = vsel %vm483, %v2638, 0
      %v2659 = vsel %vm483, %v2640, 0
      %v2662 = vsel %vm504, %v2619, 0
      %2664 = vmatpush.msra.mxu0 0.0
      %2665 = vmatpush.msra.mxu0 0.0
      %2666 = vmatpush.msra.mxu0 0.0
      %2667 = vmatpush.msra.mxu0 0.0
      %2668 = vmatpush.msra.mxu0 0.0
      %2669 = vmatpush.msra.mxu0 0.0
      %2670 = vmatpush.msra.mxu0 0.0
      %2671 = vmatpush.msra.mxu0 0.0
      %2672 = vmatpush.msra.mxu0 0.0
      %2673 = vmatpush.msra.mxu0 0.0
      %2674 = vmatpush.msra.mxu0 0.0
      %2675 = vmatpush.msra.mxu0 0.0
      %2676 = vmatpush.msra.mxu0 0.0
      %2677 = vmatpush.msra.mxu0 0.0
      %2678 = vmatpush.msra.mxu0 0.0
      %2679 = vmatpush.msra.mxu0 %v2662
      %2680 = vmatmul.f32.gmra.mxu0 %v2641
      %v2681 = vpop.f32.mrf.mxu0
      %v2682 = vadd.f32 0.0, %v2681
      %2683 = vmatmul.f32.gmra.mxu0 %v2643
      %v2684 = vpop.f32.mrf.mxu0
      %v2685 = vadd.f32 0.0, %v2684
      %2686 = vmatmul.f32.gmra.mxu0 %v2645
      %v2687 = vpop.f32.mrf.mxu0
      %v2688 = vadd.f32 0.0, %v2687
      %2689 = vmatmul.f32.gmra.mxu0 %v2647
      %v2690 = vpop.f32.mrf.mxu0
      %v2691 = vadd.f32 0.0, %v2690
      %2692 = vmatmul.f32.gmra.mxu0 %v2649
      %v2693 = vpop.f32.mrf.mxu0
      %v2694 = vadd.f32 0.0, %v2693
      %2695 = vmatmul.f32.gmra.mxu0 %v2651
      %v2696 = vpop.f32.mrf.mxu0
      %v2697 = vadd.f32 0.0, %v2696
      %2698 = vmatmul.f32.gmra.mxu0 %v2653
      %v2699 = vpop.f32.mrf.mxu0
      %v2700 = vadd.f32 0.0, %v2699
      %2701 = vmatmul.f32.gmra.mxu0 %v2655
      %v2702 = vpop.f32.mrf.mxu0
      %v2703 = vadd.f32 0.0, %v2702
      %2704 = vmatmul.f32.gmra.mxu0 %v2657
      %v2705 = vpop.f32.mrf.mxu0
      %v2706 = vadd.f32 0.0, %v2705
      %2707 = vmatmul.f32.gmra.mxu0 %v2659
      %v2708 = vpop.f32.mrf.mxu0
      %v2709 = vadd.f32 0.0, %v2708
      %2710 = vdwg.mxu0
      %v2711 = vadd.f32 %v2608, %v2682
      %v2712 = vadd.f32 %v2609, %v2685
      %v2713 = vadd.f32 %v2610, %v2688
      %v2714 = vadd.f32 %v2611, %v2691
      %v2715 = vadd.f32 %v2612, %v2694
      %v2716 = vadd.f32 %v2613, %v2697
      %v2717 = vadd.f32 %v2614, %v2700
      %v2718 = vadd.f32 %v2615, %v2703
      %v2719 = vadd.f32 %v2616, %v2706
      %v2720 = vadd.f32 %v2617, %v2709
      %s2721 = scalar_lea.vmem %s3, 48
      %v2722 = vld [vmem:[%s2721] sm:$0x3]
      %v2724 = vrot.slane %v2148, 4
      %v2725 = vsel %vm902, %v2639, %v2724
      %v2726 = vsel %vm483, %v2725, 0
      %v2729 = vsel %vm504, %v2722, 0
      %2731 = vmatpush.msra.mxu0 0.0
      %2732 = vmatpush.msra.mxu0 0.0
      %2733 = vmatpush.msra.mxu0 0.0
      %2734 = vmatpush.msra.mxu0 0.0
      %2735 = vmatpush.msra.mxu0 0.0
      %2736 = vmatpush.msra.mxu0 0.0
      %2737 = vmatpush.msra.mxu0 0.0
      %2738 = vmatpush.msra.mxu0 0.0
      %2739 = vmatpush.msra.mxu0 0.0
      %2740 = vmatpush.msra.mxu0 0.0
      %2741 = vmatpush.msra.mxu0 0.0
      %2742 = vmatpush.msra.mxu0 0.0
      %2743 = vmatpush.msra.mxu0 0.0
      %2744 = vmatpush.msra.mxu0 0.0
      %2745 = vmatpush.msra.mxu0 0.0
      %2746 = vmatpush.msra.mxu0 %v2729
      %2747 = vmatmul.f32.gmra.mxu0 %v2643
      %v2748 = vpop.f32.mrf.mxu0
      %v2749 = vadd.f32 0.0, %v2748
      %2750 = vmatmul.f32.gmra.mxu0 %v2645
      %v2751 = vpop.f32.mrf.mxu0
      %v2752 = vadd.f32 0.0, %v2751
      %2753 = vmatmul.f32.gmra.mxu0 %v2647
      %v2754 = vpop.f32.mrf.mxu0
      %v2755 = vadd.f32 0.0, %v2754
      %2756 = vmatmul.f32.gmra.mxu0 %v2649
      %v2757 = vpop.f32.mrf.mxu0
      %v2758 = vadd.f32 0.0, %v2757
      %2759 = vmatmul.f32.gmra.mxu0 %v2651
      %v2760 = vpop.f32.mrf.mxu0
      %v2761 = vadd.f32 0.0, %v2760
      %2762 = vmatmul.f32.gmra.mxu0 %v2653
      %v2763 = vpop.f32.mrf.mxu0
      %v2764 = vadd.f32 0.0, %v2763
      %2765 = vmatmul.f32.gmra.mxu0 %v2655
      %v2766 = vpop.f32.mrf.mxu0
      %v2767 = vadd.f32 0.0, %v2766
      %2768 = vmatmul.f32.gmra.mxu0 %v2657
      %v2769 = vpop.f32.mrf.mxu0
      %v2770 = vadd.f32 0.0, %v2769
      %2771 = vmatmul.f32.gmra.mxu0 %v2659
      %v2772 = vpop.f32.mrf.mxu0
      %v2773 = vadd.f32 0.0, %v2772
      %2774 = vmatmul.f32.gmra.mxu0 %v2726
      %v2775 = vpop.f32.mrf.mxu0
      %v2776 = vadd.f32 0.0, %v2775
      %2777 = vdwg.mxu0
      %v2778 = vadd.f32 %v2711, %v2749
      %v2779 = vadd.f32 %v2712, %v2752
      %v2780 = vadd.f32 %v2713, %v2755
      %v2781 = vadd.f32 %v2714, %v2758
      %v2782 = vadd.f32 %v2715, %v2761
      %v2783 = vadd.f32 %v2716, %v2764
      %v2784 = vadd.f32 %v2717, %v2767
      %v2785 = vadd.f32 %v2718, %v2770
      %v2786 = vadd.f32 %v2719, %v2773
      %v2787 = vadd.f32 %v2720, %v2776
      %s2788 = scalar_lea.vmem %s3, 50
      %v2789 = vld [vmem:[%s2788] sm:$0x3]
      %v2790 = vrot.slane %v2138, 5
      %v2791 = vrot.slane %v2139, 5
      %v2792 = vsel %vm1073, %v2790, %v2791
      %v2793 = vrot.slane %v2140, 5
      %v2794 = vsel %vm1073, %v2791, %v2793
      %v2795 = vrot.slane %v2141, 5
      %v2796 = vsel %vm1073, %v2793, %v2795
      %v2797 = vrot.slane %v2142, 5
      %v2798 = vsel %vm1073, %v2795, %v2797
      %v2799 = vrot.slane %v2143, 5
      %v2800 = vsel %vm1073, %v2797, %v2799
      %v2801 = vrot.slane %v2144, 5
      %v2802 = vsel %vm1073, %v2799, %v2801
      %v2803 = vrot.slane %v2145, 5
      %v2804 = vsel %vm1073, %v2801, %v2803
      %v2805 = vrot.slane %v2146, 5
      %v2806 = vsel %vm1073, %v2803, %v2805
      %v2807 = vrot.slane %v2147, 5
      %v2808 = vsel %vm1073, %v2805, %v2807
      %v2809 = vrot.slane %v2148, 5
      %v2810 = vsel %vm1073, %v2807, %v2809
      %v2811 = vsel %vm483, %v2792, 0
      %v2813 = vsel %vm483, %v2794, 0
      %v2815 = vsel %vm483, %v2796, 0
      %v2817 = vsel %vm483, %v2798, 0
      %v2819 = vsel %vm483, %v2800, 0
      %v2821 = vsel %vm483, %v2802, 0
      %v2823 = vsel %vm483, %v2804, 0
      %v2825 = vsel %vm483, %v2806, 0
      %v2827 = vsel %vm483, %v2808, 0
      %v2829 = vsel %vm483, %v2810, 0
      %v2832 = vsel %vm504, %v2789, 0
      %2834 = vmatpush.msra.mxu0 0.0
      %2835 = vmatpush.msra.mxu0 0.0
      %2836 = vmatpush.msra.mxu0 0.0
      %2837 = vmatpush.msra.mxu0 0.0
      %2838 = vmatpush.msra.mxu0 0.0
      %2839 = vmatpush.msra.mxu0 0.0
      %2840 = vmatpush.msra.mxu0 0.0
      %2841 = vmatpush.msra.mxu0 0.0
      %2842 = vmatpush.msra.mxu0 0.0
      %2843 = vmatpush.msra.mxu0 0.0
      %2844 = vmatpush.msra.mxu0 0.0
      %2845 = vmatpush.msra.mxu0 0.0
      %2846 = vmatpush.msra.mxu0 0.0
      %2847 = vmatpush.msra.mxu0 0.0
      %2848 = vmatpush.msra.mxu0 0.0
      %2849 = vmatpush.msra.mxu0 %v2832
      %2850 = vmatmul.f32.gmra.mxu0 %v2811
      %v2851 = vpop.f32.mrf.mxu0
      %v2852 = vadd.f32 0.0, %v2851
      %2853 = vmatmul.f32.gmra.mxu0 %v2813
      %v2854 = vpop.f32.mrf.mxu0
      %v2855 = vadd.f32 0.0, %v2854
      %2856 = vmatmul.f32.gmra.mxu0 %v2815
      %v2857 = vpop.f32.mrf.mxu0
      %v2858 = vadd.f32 0.0, %v2857
      %2859 = vmatmul.f32.gmra.mxu0 %v2817
      %v2860 = vpop.f32.mrf.mxu0
      %v2861 = vadd.f32 0.0, %v2860
      %2862 = vmatmul.f32.gmra.mxu0 %v2819
      %v2863 = vpop.f32.mrf.mxu0
      %v2864 = vadd.f32 0.0, %v2863
      %2865 = vmatmul.f32.gmra.mxu0 %v2821
      %v2866 = vpop.f32.mrf.mxu0
      %v2867 = vadd.f32 0.0, %v2866
      %2868 = vmatmul.f32.gmra.mxu0 %v2823
      %v2869 = vpop.f32.mrf.mxu0
      %v2870 = vadd.f32 0.0, %v2869
      %2871 = vmatmul.f32.gmra.mxu0 %v2825
      %v2872 = vpop.f32.mrf.mxu0
      %v2873 = vadd.f32 0.0, %v2872
      %2874 = vmatmul.f32.gmra.mxu0 %v2827
      %v2875 = vpop.f32.mrf.mxu0
      %v2876 = vadd.f32 0.0, %v2875
      %2877 = vmatmul.f32.gmra.mxu0 %v2829
      %v2878 = vpop.f32.mrf.mxu0
      %v2879 = vadd.f32 0.0, %v2878
      %2880 = vdwg.mxu0
      %v2881 = vadd.f32 %v2778, %v2852
      %v2882 = vadd.f32 %v2779, %v2855
      %v2883 = vadd.f32 %v2780, %v2858
      %v2884 = vadd.f32 %v2781, %v2861
      %v2885 = vadd.f32 %v2782, %v2864
      %v2886 = vadd.f32 %v2783, %v2867
      %v2887 = vadd.f32 %v2784, %v2870
      %v2888 = vadd.f32 %v2785, %v2873
      %v2889 = vadd.f32 %v2786, %v2876
      %v2890 = vadd.f32 %v2787, %v2879
      %s2891 = scalar_lea.vmem %s3, 52
      %v2892 = vld [vmem:[%s2891] sm:$0x3]
      %v2893 = vrot.slane %v2138, 6
      %v2894 = vrot.slane %v2139, 6
      %v2895 = vsel %vm504, %v2893, %v2894
      %v2896 = vrot.slane %v2140, 6
      %v2897 = vsel %vm504, %v2894, %v2896
      %v2898 = vrot.slane %v2141, 6
      %v2899 = vsel %vm504, %v2896, %v2898
      %v2900 = vrot.slane %v2142, 6
      %v2901 = vsel %vm504, %v2898, %v2900
      %v2902 = vrot.slane %v2143, 6
      %v2903 = vsel %vm504, %v2900, %v2902
      %v2904 = vrot.slane %v2144, 6
      %v2905 = vsel %vm504, %v2902, %v2904
      %v2906 = vrot.slane %v2145, 6
      %v2907 = vsel %vm504, %v2904, %v2906
      %v2908 = vrot.slane %v2146, 6
      %v2909 = vsel %vm504, %v2906, %v2908
      %v2910 = vrot.slane %v2147, 6
      %v2911 = vsel %vm504, %v2908, %v2910
      %v2912 = vrot.slane %v2148, 6
      %v2913 = vsel %vm504, %v2910, %v2912
      %v2914 = vsel %vm483, %v2895, 0
      %v2916 = vsel %vm483, %v2897, 0
      %v2918 = vsel %vm483, %v2899, 0
      %v2920 = vsel %vm483, %v2901, 0
      %v2922 = vsel %vm483, %v2903, 0
      %v2924 = vsel %vm483, %v2905, 0
      %v2926 = vsel %vm483, %v2907, 0
      %v2928 = vsel %vm483, %v2909, 0
      %v2930 = vsel %vm483, %v2911, 0
      %v2932 = vsel %vm483, %v2913, 0
      %v2935 = vsel %vm504, %v2892, 0
      %2937 = vmatpush.msra.mxu0 0.0
      %2938 = vmatpush.msra.mxu0 0.0
      %2939 = vmatpush.msra.mxu0 0.0
      %2940 = vmatpush.msra.mxu0 0.0
      %2941 = vmatpush.msra.mxu0 0.0
      %2942 = vmatpush.msra.mxu0 0.0
      %2943 = vmatpush.msra.mxu0 0.0
      %2944 = vmatpush.msra.mxu0 0.0
      %2945 = vmatpush.msra.mxu0 0.0
      %2946 = vmatpush.msra.mxu0 0.0
      %2947 = vmatpush.msra.mxu0 0.0
      %2948 = vmatpush.msra.mxu0 0.0
      %2949 = vmatpush.msra.mxu0 0.0
      %2950 = vmatpush.msra.mxu0 0.0
      %2951 = vmatpush.msra.mxu0 0.0
      %2952 = vmatpush.msra.mxu0 %v2935
      %2953 = vmatmul.f32.gmra.mxu0 %v2914
      %v2954 = vpop.f32.mrf.mxu0
      %v2955 = vadd.f32 0.0, %v2954
      %2956 = vmatmul.f32.gmra.mxu0 %v2916
      %v2957 = vpop.f32.mrf.mxu0
      %v2958 = vadd.f32 0.0, %v2957
      %2959 = vmatmul.f32.gmra.mxu0 %v2918
      %v2960 = vpop.f32.mrf.mxu0
      %v2961 = vadd.f32 0.0, %v2960
      %2962 = vmatmul.f32.gmra.mxu0 %v2920
      %v2963 = vpop.f32.mrf.mxu0
      %v2964 = vadd.f32 0.0, %v2963
      %2965 = vmatmul.f32.gmra.mxu0 %v2922
      %v2966 = vpop.f32.mrf.mxu0
      %v2967 = vadd.f32 0.0, %v2966
      %2968 = vmatmul.f32.gmra.mxu0 %v2924
      %v2969 = vpop.f32.mrf.mxu0
      %v2970 = vadd.f32 0.0, %v2969
      %2971 = vmatmul.f32.gmra.mxu0 %v2926
      %v2972 = vpop.f32.mrf.mxu0
      %v2973 = vadd.f32 0.0, %v2972
      %2974 = vmatmul.f32.gmra.mxu0 %v2928
      %v2975 = vpop.f32.mrf.mxu0
      %v2976 = vadd.f32 0.0, %v2975
      %2977 = vmatmul.f32.gmra.mxu0 %v2930
      %v2978 = vpop.f32.mrf.mxu0
      %v2979 = vadd.f32 0.0, %v2978
      %2980 = vmatmul.f32.gmra.mxu0 %v2932
      %v2981 = vpop.f32.mrf.mxu0
      %v2982 = vadd.f32 0.0, %v2981
      %2983 = vdwg.mxu0
      %v2984 = vadd.f32 %v2881, %v2955
      %v2985 = vadd.f32 %v2882, %v2958
      %v2986 = vadd.f32 %v2883, %v2961
      %v2987 = vadd.f32 %v2884, %v2964
      %v2988 = vadd.f32 %v2885, %v2967
      %v2989 = vadd.f32 %v2886, %v2970
      %v2990 = vadd.f32 %v2887, %v2973
      %v2991 = vadd.f32 %v2888, %v2976
      %v2992 = vadd.f32 %v2889, %v2979
      %v2993 = vadd.f32 %v2890, %v2982
      %vm2994 = vcmask 31744
      %2995 = vst.msk [vmem:[%s419] sm:$0xff] %vm2994, %v2984
      %2996 = vst.msk [vmem:[%s419 + $0x8] sm:$0xff] %vm2994, %v2985
      %2997 = vst.msk [vmem:[%s419 + $0x10] sm:$0xff] %vm2994, %v2986
      %2998 = vst.msk [vmem:[%s419 + $0x18] sm:$0xff] %vm2994, %v2987
      %2999 = vst.msk [vmem:[%s419 + $0x20] sm:$0xff] %vm2994, %v2988
      %3000 = vst.msk [vmem:[%s419 + $0x28] sm:$0xff] %vm2994, %v2989
      %3001 = vst.msk [vmem:[%s419 + $0x30] sm:$0xff] %vm2994, %v2990
      %3002 = vst.msk [vmem:[%s419 + $0x38] sm:$0xff] %vm2994, %v2991
      %3003 = vst.msk [vmem:[%s419 + $0x40] sm:$0xff] %vm2994, %v2992
      %3004 = vst.msk [vmem:[%s419 + $0x48] sm:$0xff] %vm2994, %v2993
      %v3005 = vld [vmem:[%s4] sm:$0xff]
      %v3006 = vld [vmem:[%s4 + $0x8] sm:$0xff]
      %v3007 = vld [vmem:[%s4 + $0x10] sm:$0xff]
      %v3008 = vld [vmem:[%s4 + $0x18] sm:$0xff]
      %v3009 = vld [vmem:[%s4 + $0x20] sm:$0xff]
      %v3010 = vld [vmem:[%s4 + $0x28] sm:$0xff]
      %v3011 = vld [vmem:[%s4 + $0x30] sm:$0xff]
      %v3012 = vld [vmem:[%s4 + $0x38] sm:$0xff]
      %v3013 = vld [vmem:[%s4 + $0x40] sm:$0xff]
      %v3014 = vld [vmem:[%s4 + $0x48] sm:$0xff]
      %3016 = vset.pattern.permute.xlu0 0
      %3017 = vperm.xlu0 %3016, %v3005
      %v3018 = vpop.permute.xlu0 %3017
      %3021 = vset.pattern.permute.xlu0 0
      %3022 = vperm.xlu0 %3021, %v3006
      %v3023 = vpop.permute.xlu0 %3022
      %3026 = vset.pattern.permute.xlu0 0
      %3027 = vperm.xlu0 %3026, %v3007
      %v3028 = vpop.permute.xlu0 %3027
      %3031 = vset.pattern.permute.xlu0 0
      %3032 = vperm.xlu0 %3031, %v3008
      %v3033 = vpop.permute.xlu0 %3032
      %3036 = vset.pattern.permute.xlu0 0
      %3037 = vperm.xlu0 %3036, %v3009
      %v3038 = vpop.permute.xlu0 %3037
      %3041 = vset.pattern.permute.xlu0 0
      %3042 = vperm.xlu0 %3041, %v3010
      %v3043 = vpop.permute.xlu0 %3042
      %3046 = vset.pattern.permute.xlu0 0
      %3047 = vperm.xlu0 %3046, %v3011
      %v3048 = vpop.permute.xlu0 %3047
      %3051 = vset.pattern.permute.xlu0 0
      %3052 = vperm.xlu0 %3051, %v3012
      %v3053 = vpop.permute.xlu0 %3052
      %3056 = vset.pattern.permute.xlu0 0
      %3057 = vperm.xlu0 %3056, %v3013
      %v3058 = vpop.permute.xlu0 %3057
      %3061 = vset.pattern.permute.xlu0 0
      %3062 = vperm.xlu0 %3061, %v3014
      %v3063 = vpop.permute.xlu0 %3062
      %v3065 = vmul.f32 %v2984, %v3018
      %v3066 = vmul.f32 %v2985, %v3023
      %v3067 = vmul.f32 %v2986, %v3028
      %v3068 = vmul.f32 %v2987, %v3033
      %v3069 = vmul.f32 %v2988, %v3038
      %v3070 = vmul.f32 %v2989, %v3043
      %v3071 = vmul.f32 %v2990, %v3048
      %v3072 = vmul.f32 %v2991, %v3053
      %v3073 = vmul.f32 %v2992, %v3058
      %v3074 = vmul.f32 %v2993, %v3063
      %v3075 = vsel %vm2994, %v3065, 0.0
      %v3076 = vsel %vm2994, %v3066, 0.0
      %v3077 = vadd.f32 %v3075, %v3076
      %v3078 = vsel %vm2994, %v3067, 0.0
      %v3079 = vadd.f32 %v3077, %v3078
      %v3080 = vsel %vm2994, %v3068, 0.0
      %v3081 = vadd.f32 %v3079, %v3080
      %v3082 = vsel %vm2994, %v3069, 0.0
      %v3083 = vadd.f32 %v3081, %v3082
      %v3084 = vsel %vm2994, %v3070, 0.0
      %v3085 = vadd.f32 %v3083, %v3084
      %v3086 = vsel %vm2994, %v3071, 0.0
      %v3087 = vadd.f32 %v3085, %v3086
      %v3088 = vsel %vm2994, %v3072, 0.0
      %v3089 = vadd.f32 %v3087, %v3088
      %v3090 = vsel %vm2994, %v3073, 0.0
      %v3091 = vadd.f32 %v3089, %v3090
      %v3092 = vsel %vm2994, %v3074, 0.0
      %v3093 = vadd.f32 %v3091, %v3092
      %v3094 = vrot.slane %v3093, 4
      %v3095 = vadd.f32 %v3093, %v3094
      %v3096 = vrot.slane %v3095, 2
      %v3097 = vadd.f32 %v3095, %v3096
      %v3098 = vrot.slane %v3097, 1
      %v3099 = vadd.f32 %v3097, %v3098
      %vm3100 = vcmask 24576
      %3101 = vst.msk [vmem:[%s426] sm:$0x1] %vm3100, %v3099
      %v3102 = vmul.f32 %v3065, %v3065
      %v3103 = vmul.f32 %v3066, %v3066
      %v3104 = vmul.f32 %v3067, %v3067
      %v3105 = vmul.f32 %v3068, %v3068
      %v3106 = vmul.f32 %v3069, %v3069
      %v3107 = vmul.f32 %v3070, %v3070
      %v3108 = vmul.f32 %v3071, %v3071
      %v3109 = vmul.f32 %v3072, %v3072
      %v3110 = vmul.f32 %v3073, %v3073
      %v3111 = vmul.f32 %v3074, %v3074
      %v3112 = vsel %vm2994, %v3102, 0.0
      %v3113 = vsel %vm2994, %v3103, 0.0
      %v3114 = vadd.f32 %v3112, %v3113
      %v3115 = vsel %vm2994, %v3104, 0.0
      %v3116 = vadd.f32 %v3114, %v3115
      %v3117 = vsel %vm2994, %v3105, 0.0
      %v3118 = vadd.f32 %v3116, %v3117
      %v3119 = vsel %vm2994, %v3106, 0.0
      %v3120 = vadd.f32 %v3118, %v3119
      %v3121 = vsel %vm2994, %v3107, 0.0
      %v3122 = vadd.f32 %v3120, %v3121
      %v3123 = vsel %vm2994, %v3108, 0.0
      %v3124 = vadd.f32 %v3122, %v3123
      %v3125 = vsel %vm2994, %v3109, 0.0
      %v3126 = vadd.f32 %v3124, %v3125
      %v3127 = vsel %vm2994, %v3110, 0.0
      %v3128 = vadd.f32 %v3126, %v3127
      %v3129 = vsel %vm2994, %v3111, 0.0
      %v3130 = vadd.f32 %v3128, %v3129
      %v3131 = vrot.slane %v3130, 4
      %v3132 = vadd.f32 %v3130, %v3131
      %v3133 = vrot.slane %v3132, 2
      %v3134 = vadd.f32 %v3132, %v3133
      %v3135 = vrot.slane %v3134, 1
      %v3136 = vadd.f32 %v3134, %v3135
      %3137 = vst.msk [vmem:[%s433] sm:$0x1] %vm3100, %v3136
      %p3138 = scmp.lt.s32.totalorder %s23, 1
      %s3139 = scalar_select %p3138, %s23, 1
      %p3140 = scmp.lt.s32.totalorder %s24, 7
      %s3141 = scalar_select %p3140, %s24, 7
      %s3142 = smul.addr %s3141, 10
      %s3143 = smul.addr %s3139, 80
      %s3144 = sadd.s32 %s3142, %s3143
      %s3145 = smul.addr %s3144, 8
      %s3146 = scalar_lea.vmem %s5, %s3145
      %p3147 = scmp.lt.s32.totalorder %s23, 1
      %s3148 = scalar_select %p3147, %s23, 1
      %p3149 = scmp.lt.s32.totalorder %s24, 7
      %s3150 = scalar_select %p3149, %s24, 7
      %s3151 = smul.addr %s3148, 8
      %s3152 = sadd.s32 %s3150, %s3151
      %s3153 = scalar_lea.vmem %s6, %s3152
      %p3154 = scmp.lt.s32.totalorder %s23, 1
      %s3155 = scalar_select %p3154, %s23, 1
      %p3156 = scmp.lt.s32.totalorder %s24, 7
      %s3157 = scalar_select %p3156, %s24, 7
      %s3158 = smul.addr %s3155, 8
      %s3159 = sadd.s32 %s3157, %s3158
      %s3160 = scalar_lea.vmem %s7, %s3159
      // Predicated region
      $region41: #{sdc_forward.3} parent=39 // pred_check
        %p3161 = pneg %p181
      $region42: #{sdc_forward.3} parent=39 // pred_check_branch
        %3163 = sbr.rel (%p3161) target = $region44
      $region43: #{sdc_forward.3} parent=39 // pred_region
        _
      $region44: #{sdc_forward.3} parent=39 // pred_fallthru
        _
      // Predicated region
      $region45: #{sdc_forward.3} parent=39 // pred_check
        %p3164 = pneg %p209
      $region46: #{sdc_forward.3} parent=39 // pred_check_branch
        %3166 = sbr.rel (%p3164) target = $region48
      $region47: #{sdc_forward.3} parent=39 // pred_region
        _
      $region48: #{sdc_forward.3} parent=39 // pred_fallthru
        _
      // Predicated region
      $region49: #{sdc_forward.3} parent=39 // pred_check
        %p3167 = pneg %p237
      $region50: #{sdc_forward.3} parent=39 // pred_check_branch
        %3169 = sbr.rel (%p3167) target = $region52
      $region51: #{sdc_forward.3} parent=39 // pred_region
        _
      $region52: #{sdc_forward.3} parent=39 // pred_fallthru
        _
    $region40: #{sdc_forward.3} parent=5 // pred_fallthru
      _
    %p3170 = scmp.le.s32.totalorder 2, %s14
    // Predicated region
    $region53: #{sdc_forward.3} parent=5 // pred_check
      %p3171 = pneg %p3170
    $region54: #{sdc_forward.3} parent=5 // pred_check_branch
      %3173 = sbr.rel (%p3171) target = $region56
    $region55: #{sdc_forward.3} parent=5 // pred_region
      %s3174 = ssub.s32 %s14, 2
      // Predicated region
      $region57: #{sdc_forward.3} parent=55 // pred_check
        %p3175 = pneg %p187
      $region58: #{sdc_forward.3} parent=55 // pred_check_branch
        %3177 = sbr.rel (%p3175) target = $region60
      $region59: #{sdc_forward.3} parent=55 // pred_region
        %p3178 = scmp.lt.s32.totalorder %s25, 1
        %s3179 = scalar_select %p3178, %s25, 1
        %p3180 = scmp.lt.s32.totalorder %s26, 7
        %s3181 = scalar_select %p3180, %s26, 7
        %s3182 = smul.addr %s3181, 10
        %s3183 = smul.addr %s3179, 80
        %s3184 = sadd.s32 %s3182, %s3183
        %s3185 = smul.addr %s3184, 8
        %s3186 = scalar_lea.vmem %s5, %s3185
      $region60: #{sdc_forward.3} parent=55 // pred_fallthru
        _
      // Predicated region
      $region61: #{sdc_forward.3} parent=55 // pred_check
        %p3187 = pneg %p215
      $region62: #{sdc_forward.3} parent=55 // pred_check_branch
        %3189 = sbr.rel (%p3187) target = $region64
      $region63: #{sdc_forward.3} parent=55 // pred_region
        %p3190 = scmp.lt.s32.totalorder %s25, 1
        %s3191 = scalar_select %p3190, %s25, 1
        %p3192 = scmp.lt.s32.totalorder %s26, 7
        %s3193 = scalar_select %p3192, %s26, 7
        %s3194 = smul.addr %s3191, 8
        %s3195 = sadd.s32 %s3193, %s3194
        %s3196 = scalar_lea.vmem %s6, %s3195
      $region64: #{sdc_forward.3} parent=55 // pred_fallthru
        _
      // Predicated region
      $region65: #{sdc_forward.3} parent=55 // pred_check
        %p3197 = pneg %p243
      $region66: #{sdc_forward.3} parent=55 // pred_check_branch
        %3199 = sbr.rel (%p3197) target = $region68
      $region67: #{sdc_forward.3} parent=55 // pred_region
        %p3200 = scmp.lt.s32.totalorder %s25, 1
        %s3201 = scalar_select %p3200, %s25, 1
        %p3202 = scmp.lt.s32.totalorder %s26, 7
        %s3203 = scalar_select %p3202, %s26, 7
        %s3204 = smul.addr %s3201, 8
        %s3205 = sadd.s32 %s3203, %s3204
        %s3206 = scalar_lea.vmem %s7, %s3205
      $region68: #{sdc_forward.3} parent=55 // pred_fallthru
        _
    $region56: #{sdc_forward.3} parent=5 // pred_fallthru
      _
  $region6: #{sdc_forward.3} parent=0 // loop_footer
    %s18 = sadd.s32 1, %s14
  $region7: #{sdc_forward.3} parent=0 // loop_footer_branch
    %13 = sbr.rel target = $region3
  $region8: #{sdc_forward.3} parent=0 // loop_exit
    _

// kernel: sdc_forward.4
$region0: #{sdc_forward.4}
  #allocation0 [shape = 'u32[]', space=smem, size = 0x4, offset = 0x4, fixed_abs, tag = 'smem constant byte address 0x4 - core index']
  #allocation1 [shape = 'u32[72,128]{1,0:T(1,128)}', space=vmem, size = 0x9000, scoped, tag = 'internal scratch']
  %s0 = inlined_call_operand.vmem [shape: f32[2,10,10,40], index: 0, kind: input, shape index: {}, may-alias: {0,1,2}]
  %s1 = inlined_call_operand.vmem [shape: f32[2,10,10,40], index: 1, kind: input, shape index: {}, may-alias: {0,1,2}]
  %s2 = inlined_call_operand.vmem [shape: f32[2,10,10,40], index: 2, kind: input, shape index: {}, may-alias: {0,1,2}]
  %s3 = inlined_call_operand.vmem [shape: f32[2,10,10,40], index: 3, kind: input, shape index: {}, may-alias: {3,4,5}]
  %s4 = inlined_call_operand.vmem [shape: f32[2,10,10,40], index: 4, kind: input, shape index: {}, may-alias: {3,4,5}]
  %s5 = inlined_call_operand.vmem [shape: f32[2,10,10,40], index: 5, kind: input, shape index: {}, may-alias: {3,4,5}]
  %s6 = inlined_call_operand.vmem [shape: f32[27,32], index: 6, kind: input, shape index: {}]
  %s7 = inlined_call_operand.vmem [shape: f32[27,32], index: 7, kind: input, shape index: {}]
  %s8 = inlined_call_operand.vmem [shape: f32[2,8,8,32], index: 8, kind: output, shape index: {}]
  %s9 = sld [smem:[#allocation0]]
  $region65: #{sdc_forward.4} parent=0
    _
  %s11 = ssub.s32 1, %s9
  %s12 = scalar_select 0, %s11, %s9
  loop: start=0, step=1, limit=18
  $region2: #{sdc_forward.4} parent=0 // loop_pre_header
    _
  $region3: #{sdc_forward.4} parent=0 // loop_header
    %s14 = sphi 0, %s18
    %p15 = scmp.ge.s32.totalorder %s14, 18
    %s21 = sphi 0, %s33
    %s22 = sphi 0, %s29
    %s23 = sphi 0, %s21
    %s24 = sphi 0, %s22
    %s25 = sphi 0, %s23
    %s26 = sphi 0, %s24
    %s38 = sphi 0, %s40
    %s41 = sphi 0, %s38
    %s42 = sphi 0, %s41
    %s58 = sphi 0, %s42
    %s68 = sphi 0, %s70
    %s71 = sphi 0, %s68
    %s72 = sphi 0, %s71
    %s88 = sphi 0, %s72
    %s98 = sphi 0, %s100
    %s101 = sphi 0, %s98
    %s102 = sphi 0, %s101
    %s118 = sphi 0, %s102
    %s126 = sphi 0, %s128
    %s129 = sphi 0, %s126
    %s130 = sphi 0, %s129
    %s146 = sphi 0, %s130
    %s156 = sphi 0, %s158
    %s159 = sphi 0, %s156
    %s160 = sphi 0, %s159
    %s176 = sphi 0, %s160
    %s186 = sphi 0, %s188
    %s189 = sphi 0, %s186
    %s190 = sphi 0, %s189
    %s206 = sphi 0, %s190
    %s210 = sphi 0, %s210
    %s212 = sphi 0, %s210
    %s213 = sphi 0, %s212
    %s227 = sphi 0, %s213
    %s231 = sphi 0, %s231
    %s233 = sphi 0, %s231
    %s234 = sphi 0, %s233
    %s248 = sphi 0, %s234
    %s256 = sphi 0, %s258
    %s259 = sphi 0, %s256
    %s260 = sphi 0, %s259
    %s276 = sphi 0, %s260
  $region4: #{sdc_forward.4} parent=0 // loop_header_branch
    %17 = sbr.rel (%p15) target = $region8
  $region5: #{sdc_forward.4} parent=0 // loop_body
    %s19 = ssub.s32 %s14, 1
    %s20 = ssub.s32 %s14, 2
    %s27 = sadd.s32 1, %s22
    %p28 = scmp.ge.s32.totalorder %s27, 8
    %s29 = scalar_select %p28, 0, %s27
    %s30 = sadd.s32 1, %s21
    %s31 = scalar_select %p28, %s30, %s21
    %p32 = scmp.ge.s32.totalorder %s31, 2
    %s33 = scalar_select %p32, 0, %s31
    %s34 = ssub.s32 %s21, %s33
    %s35 = ssub.s32 %s22, %s29
    %s36 = sor.u32 %s34, %s35
    %p37 = scmp.eq.s32.totalorder %s36, 0
    %s39 = sadd.s32 %s38, 1
    %s40 = scalar_select %p37, %s38, %s39
    %p43 = pneg %p37
    %p44 = scmp.eq.s32.totalorder %s14, 15
    %p45 = por %p43, %p44
    %p46 = scmp.ne.s32.totalorder %s38, %s41
    %p47 = scmp.eq.s32.totalorder %s14, 0
    %p48 = por %p46, %p47
    %p49 = scmp.ne.s32.totalorder %s38, %s41
    %p50 = scmp.eq.s32.totalorder %s19, 15
    %p51 = por %p49, %p50
    %p52 = scmp.ne.s32.totalorder %s41, %s42
    %p53 = scmp.eq.s32.totalorder %s19, 0
    %p54 = por %p52, %p53
    %p55 = scmp.ne.s32.totalorder %s41, %s42
    %p56 = scmp.eq.s32.totalorder %s20, 15
    %p57 = por %p55, %p56
    %p59 = scmp.ne.s32.totalorder %s42, %s58
    %p60 = scmp.eq.s32.totalorder %s20, 0
    %p61 = por %p59, %p60
    %s62 = sadd.s32 %s22, 1
    %s63 = sadd.s32 %s29, 1
    %s64 = ssub.s32 %s21, %s33
    %s65 = ssub.s32 %s62, %s63
    %s66 = sor.u32 %s64, %s65
    %p67 = scmp.eq.s32.totalorder %s66, 0
    %s69 = sadd.s32 %s68, 1
    %s70 = scalar_select %p67, %s68, %s69
    %p73 = pneg %p67
    %p74 = scmp.eq.s32.totalorder %s14, 15
    %p75 = por %p73, %p74
    %p76 = scmp.ne.s32.totalorder %s68, %s71
    %p77 = scmp.eq.s32.totalorder %s14, 0
    %p78 = por %p76, %p77
    %p79 = scmp.ne.s32.totalorder %s68, %s71
    %p80 = scmp.eq.s32.totalorder %s19, 15
    %p81 = por %p79, %p80
    %p82 = scmp.ne.s32.totalorder %s71, %s72
    %p83 = scmp.eq.s32.totalorder %s19, 0
    %p84 = por %p82, %p83
    %p85 = scmp.ne.s32.totalorder %s71, %s72
    %p86 = scmp.eq.s32.totalorder %s20, 15
    %p87 = por %p85, %p86
    %p89 = scmp.ne.s32.totalorder %s72, %s88
    %p90 = scmp.eq.s32.totalorder %s20, 0
    %p91 = por %p89, %p90
    %s92 = sadd.s32 %s22, 2
    %s93 = sadd.s32 %s29, 2
    %s94 = ssub.s32 %s21, %s33
    %s95 = ssub.s32 %s92, %s93
    %s96 = sor.u32 %s94, %s95
    %p97 = scmp.eq.s32.totalorder %s96, 0
    %s99 = sadd.s32 %s98, 1
    %s100 = scalar_select %p97, %s98, %s99
    %p103 = pneg %p97
    %p104 = scmp.eq.s32.totalorder %s14, 15
    %p105 = por %p103, %p104
    %p106 = scmp.ne.s32.totalorder %s98, %s101
    %p107 = scmp.eq.s32.totalorder %s14, 0
    %p108 = por %p106, %p107
    %p109 = scmp.ne.s32.totalorder %s98, %s101
    %p110 = scmp.eq.s32.totalorder %s19, 15
    %p111 = por %p109, %p110
    %p112 = scmp.ne.s32.totalorder %s101, %s102
    %p113 = scmp.eq.s32.totalorder %s19, 0
    %p114 = por %p112, %p113
    %p115 = scmp.ne.s32.totalorder %s101, %s102
    %p116 = scmp.eq.s32.totalorder %s20, 15
    %p117 = por %p115, %p116
    %p119 = scmp.ne.s32.totalorder %s102, %s118
    %p120 = scmp.eq.s32.totalorder %s20, 0
    %p121 = por %p119, %p120
    %s122 = ssub.s32 %s21, %s33
    %s123 = ssub.s32 %s22, %s29
    %s124 = sor.u32 %s122, %s123
    %p125 = scmp.eq.s32.totalorder %s124, 0
    %s127 = sadd.s32 %s126, 1
    %s128 = scalar_select %p125, %s126, %s127
    %p131 = pneg %p125
    %p132 = scmp.eq.s32.totalorder %s14, 15
    %p133 = por %p131, %p132
    %p134 = scmp.ne.s32.totalorder %s126, %s129
    %p135 = scmp.eq.s32.totalorder %s14, 0
    %p136 = por %p134, %p135
    %p137 = scmp.ne.s32.totalorder %s126, %s129
    %p138 = scmp.eq.s32.totalorder %s19, 15
    %p139 = por %p137, %p138
    %p140 = scmp.ne.s32.totalorder %s129, %s130
    %p141 = scmp.eq.s32.totalorder %s19, 0
    %p142 = por %p140, %p141
    %p143 = scmp.ne.s32.totalorder %s129, %s130
    %p144 = scmp.eq.s32.totalorder %s20, 15
    %p145 = por %p143, %p144
    %p147 = scmp.ne.s32.totalorder %s130, %s146
    %p148 = scmp.eq.s32.totalorder %s20, 0
    %p149 = por %p147, %p148
    %s150 = sadd.s32 %s22, 1
    %s151 = sadd.s32 %s29, 1
    %s152 = ssub.s32 %s21, %s33
    %s153 = ssub.s32 %s150, %s151
    %s154 = sor.u32 %s152, %s153
    %p155 = scmp.eq.s32.totalorder %s154, 0
    %s157 = sadd.s32 %s156, 1
    %s158 = scalar_select %p155, %s156, %s157
    %p161 = pneg %p155
    %p162 = scmp.eq.s32.totalorder %s14, 15
    %p163 = por %p161, %p162
    %p164 = scmp.ne.s32.totalorder %s156, %s159
    %p165 = scmp.eq.s32.totalorder %s14, 0
    %p166 = por %p164, %p165
    %p167 = scmp.ne.s32.totalorder %s156, %s159
    %p168 = scmp.eq.s32.totalorder %s19, 15
    %p169 = por %p167, %p168
    %p170 = scmp.ne.s32.totalorder %s159, %s160
    %p171 = scmp.eq.s32.totalorder %s19, 0
    %p172 = por %p170, %p171
    %p173 = scmp.ne.s32.totalorder %s159, %s160
    %p174 = scmp.eq.s32.totalorder %s20, 15
    %p175 = por %p173, %p174
    %p177 = scmp.ne.s32.totalorder %s160, %s176
    %p178 = scmp.eq.s32.totalorder %s20, 0
    %p179 = por %p177, %p178
    %s180 = sadd.s32 %s22, 2
    %s181 = sadd.s32 %s29, 2
    %s182 = ssub.s32 %s21, %s33
    %s183 = ssub.s32 %s180, %s181
    %s184 = sor.u32 %s182, %s183
    %p185 = scmp.eq.s32.totalorder %s184, 0
    %s187 = sadd.s32 %s186, 1
    %s188 = scalar_select %p185, %s186, %s187
    %p191 = pneg %p185
    %p192 = scmp.eq.s32.totalorder %s14, 15
    %p193 = por %p191, %p192
    %p194 = scmp.ne.s32.totalorder %s186, %s189
    %p195 = scmp.eq.s32.totalorder %s14, 0
    %p196 = por %p194, %p195
    %p197 = scmp.ne.s32.totalorder %s186, %s189
    %p198 = scmp.eq.s32.totalorder %s19, 15
    %p199 = por %p197, %p198
    %p200 = scmp.ne.s32.totalorder %s189, %s190
    %p201 = scmp.eq.s32.totalorder %s19, 0
    %p202 = por %p200, %p201
    %p203 = scmp.ne.s32.totalorder %s189, %s190
    %p204 = scmp.eq.s32.totalorder %s20, 15
    %p205 = por %p203, %p204
    %p207 = scmp.ne.s32.totalorder %s190, %s206
    %p208 = scmp.eq.s32.totalorder %s20, 0
    %p209 = por %p207, %p208
    %s211 = sadd.s32 %s210, 1
    %p214 = scmp.eq.s32.totalorder %s14, 15
    %p215 = scmp.ne.s32.totalorder %s210, %s212
    %p216 = scmp.eq.s32.totalorder %s14, 0
    %p217 = por %p215, %p216
    %p218 = scmp.ne.s32.totalorder %s210, %s212
    %p219 = scmp.eq.s32.totalorder %s19, 15
    %p220 = por %p218, %p219
    %p221 = scmp.ne.s32.totalorder %s212, %s213
    %p222 = scmp.eq.s32.totalorder %s19, 0
    %p223 = por %p221, %p222
    %p224 = scmp.ne.s32.totalorder %s212, %s213
    %p225 = scmp.eq.s32.totalorder %s20, 15
    %p226 = por %p224, %p225
    %p228 = scmp.ne.s32.totalorder %s213, %s227
    %p229 = scmp.eq.s32.totalorder %s20, 0
    %p230 = por %p228, %p229
    %s232 = sadd.s32 %s231, 1
    %p235 = scmp.eq.s32.totalorder %s14, 15
    %p236 = scmp.ne.s32.totalorder %s231, %s233
    %p237 = scmp.eq.s32.totalorder %s14, 0
    %p238 = por %p236, %p237
    %p239 = scmp.ne.s32.totalorder %s231, %s233
    %p240 = scmp.eq.s32.totalorder %s19, 15
    %p241 = por %p239, %p240
    %p242 = scmp.ne.s32.totalorder %s233, %s234
    %p243 = scmp.eq.s32.totalorder %s19, 0
    %p244 = por %p242, %p243
    %p245 = scmp.ne.s32.totalorder %s233, %s234
    %p246 = scmp.eq.s32.totalorder %s20, 15
    %p247 = por %p245, %p246
    %p249 = scmp.ne.s32.totalorder %s234, %s248
    %p250 = scmp.eq.s32.totalorder %s20, 0
    %p251 = por %p249, %p250
    %s252 = ssub.s32 %s21, %s33
    %s253 = ssub.s32 %s22, %s29
    %s254 = sor.u32 %s252, %s253
    %p255 = scmp.eq.s32.totalorder %s254, 0
    %s257 = sadd.s32 %s256, 1
    %s258 = scalar_select %p255, %s256, %s257
    %p261 = pneg %p255
    %p262 = scmp.eq.s32.totalorder %s14, 15
    %p263 = por %p261, %p262
    %p264 = scmp.ne.s32.totalorder %s256, %s259
    %p265 = scmp.eq.s32.totalorder %s14, 0
    %p266 = por %p264, %p265
    %p267 = scmp.ne.s32.totalorder %s256, %s259
    %p268 = scmp.eq.s32.totalorder %s19, 15
    %p269 = por %p267, %p268
    %p270 = scmp.ne.s32.totalorder %s259, %s260
    %p271 = scmp.eq.s32.totalorder %s19, 0
    %p272 = por %p270, %p271
    %p273 = scmp.ne.s32.totalorder %s259, %s260
    %p274 = scmp.eq.s32.totalorder %s20, 15
    %p275 = por %p273, %p274
    %p277 = scmp.ne.s32.totalorder %s260, %s276
    %p278 = scmp.eq.s32.totalorder %s20, 0
    %p279 = por %p277, %p278
    %p280 = scmp.le.s32.totalorder 1, %s14
    %p281 = scmp.lt.s32.totalorder %s14, 17
    %p282 = pnand %p280, %p281
    %p283 = pneg %p282
    // Predicated region
    $region9: #{sdc_forward.4} parent=5 // pred_check
      _
    $region10: #{sdc_forward.4} parent=5 // pred_check_branch
      %285 = sbr.rel (%p282) target = $region12
    $region11: #{sdc_forward.4} parent=5 // pred_region
      %s286 = ssub.s32 %s14, 1
      // Predicated region
      $region13: #{sdc_forward.4} parent=11 // pred_check
        %p287 = pneg %p223
      $region14: #{sdc_forward.4} parent=11 // pred_check_branch
        %289 = sbr.rel (%p287) target = $region16
      $region15: #{sdc_forward.4} parent=11 // pred_region
        _
      $region16: #{sdc_forward.4} parent=11 // pred_fallthru
        _
      // Predicated region
      $region17: #{sdc_forward.4} parent=11 // pred_check
        %p290 = pneg %p244
      $region18: #{sdc_forward.4} parent=11 // pred_check_branch
        %292 = sbr.rel (%p290) target = $region20
      $region19: #{sdc_forward.4} parent=11 // pred_region
        _
      $region20: #{sdc_forward.4} parent=11 // pred_fallthru
        _
    $region12: #{sdc_forward.4} parent=5 // pred_fallthru
      _
    %p293 = scmp.lt.s32.totalorder %s14, 16
    // Predicated region
    $region21: #{sdc_forward.4} parent=5 // pred_check
      %p294 = pneg %p293
    $region22: #{sdc_forward.4} parent=5 // pred_check_branch
      %296 = sbr.rel (%p294) target = $region24
    $region23: #{sdc_forward.4} parent=5 // pred_region
      // Predicated region
      $region25: #{sdc_forward.4} parent=23 // pred_check
        %p297 = pneg %p48
      $region26: #{sdc_forward.4} parent=23 // pred_check_branch
        %299 = sbr.rel (%p297) target = $region28
      $region27: #{sdc_forward.4} parent=23 // pred_region
        %p300 = scmp.lt.s32.totalorder %s21, 1
        %s301 = scalar_select %p300, %s21, 1
        %p302 = scmp.lt.s32.totalorder %s22, 9
        %s303 = scalar_select %p302, %s22, 9
        %s304 = smul.addr %s303, 2
        %s305 = smul.addr %s301, 20
        %s306 = sadd.s32 %s304, %s305
        %s307 = smul.addr %s306, 8
        %s308 = scalar_lea.vmem %s0, %s307
      $region28: #{sdc_forward.4} parent=23 // pred_fallthru
        _
      // Predicated region
      $region29: #{sdc_forward.4} parent=23 // pred_check
        %p309 = pneg %p78
      $region30: #{sdc_forward.4} parent=23 // pred_check_branch
        %311 = sbr.rel (%p309) target = $region32
      $region31: #{sdc_forward.4} parent=23 // pred_region
        %s312 = sadd.s32 %s22, 1
        %p313 = scmp.lt.s32.totalorder %s21, 1
        %s314 = scalar_select %p313, %s21, 1
        %p315 = scmp.lt.s32.totalorder %s312, 9
        %s316 = scalar_select %p315, %s312, 9
        %s317 = smul.addr %s316, 2
        %s318 = smul.addr %s314, 20
        %s319 = sadd.s32 %s317, %s318
        %s320 = smul.addr %s319, 8
        %s321 = scalar_lea.vmem %s1, %s320
        %s322 = sadd.s32 %s22, 1
      $region32: #{sdc_forward.4} parent=23 // pred_fallthru
        _
      // Predicated region
      $region33: #{sdc_forward.4} parent=23 // pred_check
        %p323 = pneg %p108
      $region34: #{sdc_forward.4} parent=23 // pred_check_branch
        %325 = sbr.rel (%p323) target = $region36
      $region35: #{sdc_forward.4} parent=23 // pred_region
        %s326 = sadd.s32 %s22, 2
        %p327 = scmp.lt.s32.totalorder %s21, 1
        %s328 = scalar_select %p327, %s21, 1
        %p329 = scmp.lt.s32.totalorder %s326, 9
        %s330 = scalar_select %p329, %s326, 9
        %s331 = smul.addr %s330, 2
        %s332 = smul.addr %s328, 20
        %s333 = sadd.s32 %s331, %s332
        %s334 = smul.addr %s333, 8
        %s335 = scalar_lea.vmem %s2, %s334
        %s336 = sadd.s32 %s22, 2
      $region36: #{sdc_forward.4} parent=23 // pred_fallthru
        _
      // Predicated region
      $region37: #{sdc_forward.4} parent=23 // pred_check
        %p337 = pneg %p136
      $region38: #{sdc_forward.4} parent=23 // pred_check_branch
        %339 = sbr.rel (%p337) target = $region40
      $region39: #{sdc_forward.4} parent=23 // pred_region
        %p340 = scmp.lt.s32.totalorder %s21, 1
        %s341 = scalar_select %p340, %s21, 1
        %p342 = scmp.lt.s32.totalorder %s22, 9
        %s343 = scalar_select %p342, %s22, 9
        %s344 = smul.addr %s343, 2
        %s345 = smul.addr %s341, 20
        %s346 = sadd.s32 %s344, %s345
        %s347 = smul.addr %s346, 8
        %s348 = scalar_lea.vmem %s3, %s347
      $region40: #{sdc_forward.4} parent=23 // pred_fallthru
        _
      // Predicated region
      $region41: #{sdc_forward.4} parent=23 // pred_check
        %p349 = pneg %p166
      $region42: #{sdc_forward.4} parent=23 // pred_check_branch
        %351 = sbr.rel (%p349) target = $region44
      $region43: #{sdc_forward.4} parent=23 // pred_region
        %s352 = sadd.s32 %s22, 1
        %p353 = scmp.lt.s32.totalorder %s21, 1
        %s354 = scalar_select %p353, %s21, 1
        %p355 = scmp.lt.s32.totalorder %s352, 9
        %s356 = scalar_select %p355, %s352, 9
        %s357 = smul.addr %s356, 2
        %s358 = smul.addr %s354, 20
        %s359 = sadd.s32 %s357, %s358
        %s360 = smul.addr %s359, 8
        %s361 = scalar_lea.vmem %s4, %s360
        %s362 = sadd.s32 %s22, 1
      $region44: #{sdc_forward.4} parent=23 // pred_fallthru
        _
      // Predicated region
      $region45: #{sdc_forward.4} parent=23 // pred_check
        %p363 = pneg %p196
      $region46: #{sdc_forward.4} parent=23 // pred_check_branch
        %365 = sbr.rel (%p363) target = $region48
      $region47: #{sdc_forward.4} parent=23 // pred_region
        %s366 = sadd.s32 %s22, 2
        %p367 = scmp.lt.s32.totalorder %s21, 1
        %s368 = scalar_select %p367, %s21, 1
        %p369 = scmp.lt.s32.totalorder %s366, 9
        %s370 = scalar_select %p369, %s366, 9
        %s371 = smul.addr %s370, 2
        %s372 = smul.addr %s368, 20
        %s373 = sadd.s32 %s371, %s372
        %s374 = smul.addr %s373, 8
        %s375 = scalar_lea.vmem %s5, %s374
        %s376 = sadd.s32 %s22, 2
      $region48: #{sdc_forward.4} parent=23 // pred_fallthru
        _
    $region24: #{sdc_forward.4} parent=5 // pred_fallthru
      _
    %p377 = scmp.le.s32.totalorder 1, %s14
    %p378 = scmp.lt.s32.totalorder %s14, 17
    %p379 = pnand %p377, %p378
    %p380 = pneg %p379
    // Predicated region
    $region49: #{sdc_forward.4} parent=5 // pred_check
      _
    $region50: #{sdc_forward.4} parent=5 // pred_check_branch
      %382 = sbr.rel (%p379) target = $region52
    $region51: #{sdc_forward.4} parent=5 // pred_region
      %s383 = ssub.s32 %s14, 1
      %p384 = scmp.lt.s32.totalorder %s23, 1
      %s385 = scalar_select %p384, %s23, 1
      %p386 = scmp.lt.s32.totalorder %s24, 9
      %s387 = scalar_select %p386, %s24, 9
      %s388 = smul.addr %s387, 2
      %s389 = smul.addr %s385, 20
      %s390 = sadd.s32 %s388, %s389
      %s391 = smul.addr %s390, 8
      %s392 = scalar_lea.vmem %s0, %s391
      %p393 = pneg %p54
      %p394 = pneg %p51
      %s395 = sadd.s32 %s24, 1
      %p396 = scmp.lt.s32.totalorder %s23, 1
      %s397 = scalar_select %p396, %s23, 1
      %p398 = scmp.lt.s32.totalorder %s395, 9
      %s399 = scalar_select %p398, %s395, 9
      %s400 = smul.addr %s399, 2
      %s401 = smul.addr %s397, 20
      %s402 = sadd.s32 %s400, %s401
      %s403 = smul.addr %s402, 8
      %s404 = scalar_lea.vmem %s1, %s403
      %p405 = pneg %p84
      %p406 = pneg %p81
      %s407 = sadd.s32 %s24, 2
      %p408 = scmp.lt.s32.totalorder %s23, 1
      %s409 = scalar_select %p408, %s23, 1
      %p410 = scmp.lt.s32.totalorder %s407, 9
      %s411 = scalar_select %p410, %s407, 9
      %s412 = smul.addr %s411, 2
      %s413 = smul.addr %s409, 20
      %s414 = sadd.s32 %s412, %s413
      %s415 = smul.addr %s414, 8
      %s416 = scalar_lea.vmem %s2, %s415
      %p417 = pneg %p114
      %p418 = pneg %p111
      %p419 = scmp.lt.s32.totalorder %s23, 1
      %s420 = scalar_select %p419, %s23, 1
      %p421 = scmp.lt.s32.totalorder %s24, 9
      %s422 = scalar_select %p421, %s24, 9
      %s423 = smul.addr %s422, 2
      %s424 = smul.addr %s420, 20
      %s425 = sadd.s32 %s423, %s424
      %s426 = smul.addr %s425, 8
      %s427 = scalar_lea.vmem %s3, %s426
      %p428 = pneg %p142
      %p429 = pneg %p139
      %s430 = sadd.s32 %s24, 1
      %p431 = scmp.lt.s32.totalorder %s23, 1
      %s432 = scalar_select %p431, %s23, 1
      %p433 = scmp.lt.s32.totalorder %s430, 9
      %s434 = scalar_select %p433, %s430, 9
      %s435 = smul.addr %s434, 2
      %s436 = smul.addr %s432, 20
      %s437 = sadd.s32 %s435, %s436
      %s438 = smul.addr %s437, 8
      %s439 = scalar_lea.vmem %s4, %s438
      %p440 = pneg %p172
      %p441 = pneg %p169
      %s442 = sadd.s32 %s24, 2
      %p443 = scmp.lt.s32.totalorder %s23, 1
      %s444 = scalar_select %p443, %s23, 1
      %p445 = scmp.lt.s32.totalorder %s442, 9
      %s446 = scalar_select %p445, %s442, 9
      %s447 = smul.addr %s446, 2
      %s448 = smul.addr %s444, 20
      %s449 = sadd.s32 %s447, %s448
      %s450 = smul.addr %s449, 8
      %s451 = scalar_lea.vmem %s5, %s450
      %p452 = pneg %p202
      %p453 = pneg %p199
      %p454 = pneg %p223
      %p455 = pneg %p220
      %p456 = pneg %p244
      %p457 = pneg %p241
      %p458 = pneg %p272
      %p459 = pneg %p269
      %p460 = scmp.lt.s32.totalorder %s23, 1
      %s461 = scalar_select %p460, %s23, 1
      %p462 = scmp.lt.s32.totalorder %s24, 7
      %s463 = scalar_select %p462, %s24, 7
      %s464 = smul.addr %s461, 8
      %s465 = sadd.s32 %s463, %s464
      %s466 = smul.addr %s465, 8
      %s467 = scalar_lea.vmem %s8, %s466
      %p468 = scmp.lt.s32.totalorder %s23, 1
      %s469 = scalar_select %p468, %s23, 1
      %p470 = scmp.lt.s32.totalorder %s24, 9
      %s471 = scalar_select %p470, %s24, 9
      %s472 = smul.addr %s471, 2
      %s473 = smul.addr %s469, 20
      %s474 = sadd.s32 %s472, %s473
      %s475 = smul.addr %s474, 8
      %s476 = scalar_lea.vmem %s0, %s475
      %s477 = sadd.s32 %s24, 1
      %p478 = scmp.lt.s32.totalorder %s23, 1
      %s479 = scalar_select %p478, %s23, 1
      %p480 = scmp.lt.s32.totalorder %s477, 9
      %s481 = scalar_select %p480, %s477, 9
      %s482 = smul.addr %s481, 2
      %s483 = smul.addr %s479, 20
      %s484 = sadd.s32 %s482, %s483
      %s485 = smul.addr %s484, 8
      %s486 = scalar_lea.vmem %s1, %s485
      %s487 = sadd.s32 %s24, 1
      %s488 = sadd.s32 %s24, 2
      %p489 = scmp.lt.s32.totalorder %s23, 1
      %s490 = scalar_select %p489, %s23, 1
      %p491 = scmp.lt.s32.totalorder %s488, 9
      %s492 = scalar_select %p491, %s488, 9
      %s493 = smul.addr %s492, 2
      %s494 = smul.addr %s490, 20
      %s495 = sadd.s32 %s493, %s494
      %s496 = smul.addr %s495, 8
      %s497 = scalar_lea.vmem %s2, %s496
      %s498 = sadd.s32 %s24, 2
      %p499 = scmp.lt.s32.totalorder %s23, 1
      %s500 = scalar_select %p499, %s23, 1
      %p501 = scmp.lt.s32.totalorder %s24, 9
      %s502 = scalar_select %p501, %s24, 9
      %s503 = smul.addr %s502, 2
      %s504 = smul.addr %s500, 20
      %s505 = sadd.s32 %s503, %s504
      %s506 = smul.addr %s505, 8
      %s507 = scalar_lea.vmem %s3, %s506
      %s508 = sadd.s32 %s24, 1
      %p509 = scmp.lt.s32.totalorder %s23, 1
      %s510 = scalar_select %p509, %s23, 1
      %p511 = scmp.lt.s32.totalorder %s508, 9
      %s512 = scalar_select %p511, %s508, 9
      %s513 = smul.addr %s512, 2
      %s514 = smul.addr %s510, 20
      %s515 = sadd.s32 %s513, %s514
      %s516 = smul.addr %s515, 8
      %s517 = scalar_lea.vmem %s4, %s516
      %s518 = sadd.s32 %s24, 1
      %s519 = sadd.s32 %s24, 2
      %p520 = scmp.lt.s32.totalorder %s23, 1
      %s521 = scalar_select %p520, %s23, 1
      %p522 = scmp.lt.s32.totalorder %s519, 9
      %s523 = scalar_select %p522, %s519, 9
      %s524 = smul.addr %s523, 2
      %s525 = smul.addr %s521, 20
      %s526 = sadd.s32 %s524, %s525
      %s527 = smul.addr %s526, 8
      %s528 = scalar_lea.vmem %s5, %s527
      %s529 = sadd.s32 %s24, 2
      %p530 = scmp.lt.s32.totalorder %s23, 1
      %s531 = scalar_select %p530, %s23, 1
      %p532 = scmp.lt.s32.totalorder %s24, 7
      %s533 = scalar_select %p532, %s24, 7
      %s534 = smul.addr %s531, 8
      %s535 = sadd.s32 %s533, %s534
      %s536 = smul.addr %s535, 8
      %s537 = scalar_lea.vmem %s8, %s536
      %v538 = vld [vmem:[%s476] sm:$0xff]
      %v539 = vld [vmem:[%s476 + $0x8] sm:$0x3]
      %v540 = vld [vmem:[%s507] sm:$0xff]
      %v541 = vld [vmem:[%s507 + $0x8] sm:$0x3]
      %v542 = vld [vmem:[%s6] sm:$0x1]
      %v543 = vld [vmem:[%s7] sm:$0x1]
      %v544 = vperm.slane %v542, 0
      %v545 = vmul.f32 %v538, %v544
      %v546 = vadd.f32 %v545, 0.0
      %v547 = vperm.slane %v543, 0
      %v548 = vmul.f32 %v540, %v547
      %v549 = vadd.f32 %v548, 0.0
      %v550 = vld [vmem:[%s6 + $0x1] sm:$0x1]
      %v551 = vld [vmem:[%s7 + $0x1] sm:$0x1]
      %v552 = vperm.slane %v550, 0
      %554 = vrot.lane.b32.xlu0 %v552, 4
      %v555 = vpop.permute.xlu0 %554
      %v557 = vmul.f32 %v538, %v555
      %559 = vrot.lane.b32.xlu0 %v557, 124
      %v560 = vpop.permute.xlu0 %559
      %v562 = vadd.f32 %v546, %v560
      %v563 = vperm.slane %v551, 0
      %565 = vrot.lane.b32.xlu0 %v563, 4
      %v566 = vpop.permute.xlu0 %565
      %v568 = vmul.f32 %v540, %v566
      %570 = vrot.lane.b32.xlu0 %v568, 124
      %v571 = vpop.permute.xlu0 %570
      %v573 = vadd.f32 %v549, %v571
      %v574 = vld [vmem:[%s6 + $0x2] sm:$0x1]
      %v575 = vld [vmem:[%s7 + $0x2] sm:$0x1]
      %v576 = vperm.slane %v574, 0
      %578 = vrot.lane.b32.xlu0 %v576, 8
      %v579 = vpop.permute.xlu0 %578
      %v581 = vmul.f32 %v538, %v579
      %583 = vrot.lane.b32.xlu0 %v581, 120
      %v584 = vpop.permute.xlu0 %583
      %v586 = vadd.f32 %v562, %v584
      %v587 = vperm.slane %v575, 0
      %589 = vrot.lane.b32.xlu0 %v587, 8
      %v590 = vpop.permute.xlu0 %589
      %v592 = vmul.f32 %v540, %v590
      %594 = vrot.lane.b32.xlu0 %v592, 120
      %v595 = vpop.permute.xlu0 %594
      %v597 = vadd.f32 %v573, %v595
      %v598 = vld [vmem:[%s6 + $0x3] sm:$0x1]
      %v599 = vld [vmem:[%s7 + $0x3] sm:$0x1]
      %v600 = vperm.slane %v598, 0
      %v601 = vmul.f32 %v538, %v600
      %v602 = vmul.f32 %v539, %v600
      %vm605 = vcmask 1046528
      %v606 = vrot.slane %v601, 1
      %v607 = vrot.slane %v602, 1
      %v608 = vsel %vm605, %v606, %v607
      %v610 = vadd.f32 %v586, %v608
      %v611 = vperm.slane %v599, 0
      %v612 = vmul.f32 %v540, %v611
      %v613 = vmul.f32 %v541, %v611
      %v616 = vrot.slane %v612, 1
      %v617 = vrot.slane %v613, 1
      %v618 = vsel %vm605, %v616, %v617
      %v620 = vadd.f32 %v597, %v618
      %v621 = vld [vmem:[%s6 + $0x4] sm:$0x1]
      %v622 = vld [vmem:[%s7 + $0x4] sm:$0x1]
      %v623 = vperm.slane %v621, 0
      %625 = vrot.lane.b32.xlu0 %v623, 4
      %v626 = vpop.permute.xlu0 %625
      %v628 = vmul.f32 %v538, %v626
      %v629 = vmul.f32 %v539, %v626
      %v632 = vrot.slane %v628, 1
      %v633 = vrot.slane %v629, 1
      %v634 = vsel %vm605, %v632, %v633
      %635 = vrot.lane.b32.xlu0 %v634, 124
      %v636 = vpop.permute.xlu0 %635
      %v638 = vadd.f32 %v610, %v636
      %v639 = vperm.slane %v622, 0
      %641 = vrot.lane.b32.xlu0 %v639, 4
      %v642 = vpop.permute.xlu0 %641
      %v644 = vmul.f32 %v540, %v642
      %v645 = vmul.f32 %v541, %v642
      %v648 = vrot.slane %v644, 1
      %v649 = vrot.slane %v645, 1
      %v650 = vsel %vm605, %v648, %v649
      %651 = vrot.lane.b32.xlu0 %v650, 124
      %v652 = vpop.permute.xlu0 %651
      %v654 = vadd.f32 %v620, %v652
      %v655 = vld [vmem:[%s6 + $0x5] sm:$0x1]
      %v656 = vld [vmem:[%s7 + $0x5] sm:$0x1]
      %v657 = vperm.slane %v655, 0
      %659 = vrot.lane.b32.xlu0 %v657, 8
      %v660 = vpop.permute.xlu0 %659
      %v662 = vmul.f32 %v538, %v660
      %v663 = vmul.f32 %v539, %v660
      %v666 = vrot.slane %v662, 1
      %v667 = vrot.slane %v663, 1
      %v668 = vsel %vm605, %v666, %v667
      %669 = vrot.lane.b32.xlu0 %v668, 120
      %v670 = vpop.permute.xlu0 %669
      %v672 = vadd.f32 %v638, %v670
      %v673 = vperm.slane %v656, 0
      %675 = vrot.lane.b32.xlu0 %v673, 8
      %v676 = vpop.permute.xlu0 %675
      %v678 = vmul.f32 %v540, %v676
      %v679 = vmul.f32 %v541, %v676
      %v682 = vrot.slane %v678, 1
      %v683 = vrot.slane %v679, 1
      %v684 = vsel %vm605, %v682, %v683
      %685 = vrot.lane.b32.xlu0 %v684, 120
      %v686 = vpop.permute.xlu0 %685
      %v688 = vadd.f32 %v654, %v686
      %v689 = vld [vmem:[%s6 + $0x6] sm:$0x1]
      %v690 = vld [vmem:[%s7 + $0x6] sm:$0x1]
      %v691 = vperm.slane %v689, 0
      %v692 = vmul.f32 %v538, %v691
      %v693 = vmul.f32 %v539, %v691
      %vm696 = vcmask 1045504
      %v697 = vrot.slane %v692, 2
      %v698 = vrot.slane %v693, 2
      %v699 = vsel %vm696, %v697, %v698
      %v701 = vadd.f32 %v672, %v699
      %v702 = vperm.slane %v690, 0
      %v703 = vmul.f32 %v540, %v702
      %v704 = vmul.f32 %v541, %v702
      %v707 = vrot.slane %v703, 2
      %v708 = vrot.slane %v704, 2
      %v709 = vsel %vm696, %v707, %v708
      %v711 = vadd.f32 %v688, %v709
      %v712 = vld [vmem:[%s6 + $0x7] sm:$0x1]
      %v713 = vld [vmem:[%s7 + $0x7] sm:$0x1]
      %v714 = vperm.slane %v712, 0
      %716 = vrot.lane.b32.xlu0 %v714, 4
      %v717 = vpop.permute.xlu0 %716
      %v719 = vmul.f32 %v538, %v717
      %v720 = vmul.f32 %v539, %v717
      %v723 = vrot.slane %v719, 2
      %v724 = vrot.slane %v720, 2
      %v725 = vsel %vm696, %v723, %v724
      %726 = vrot.lane.b32.xlu0 %v725, 124
      %v727 = vpop.permute.xlu0 %726
      %v729 = vadd.f32 %v701, %v727
      %v730 = vperm.slane %v713, 0
      %732 = vrot.lane.b32.xlu0 %v730, 4
      %v733 = vpop.permute.xlu0 %732
      %v735 = vmul.f32 %v540, %v733
      %v736 = vmul.f32 %v541, %v733
      %v739 = vrot.slane %v735, 2
      %v740 = vrot.slane %v736, 2
      %v741 = vsel %vm696, %v739, %v740
      %742 = vrot.lane.b32.xlu0 %v741, 124
      %v743 = vpop.permute.xlu0 %742
      %v745 = vadd.f32 %v711, %v743
      %v746 = vld [vmem:[%s6 + $0x8] sm:$0x1]
      %v747 = vld [vmem:[%s7 + $0x8] sm:$0x1]
      %v748 = vperm.slane %v746, 0
      %750 = vrot.lane.b32.xlu0 %v748, 8
      %v751 = vpop.permute.xlu0 %750
      %v753 = vmul.f32 %v538, %v751
      %v754 = vmul.f32 %v539, %v751
      %v757 = vrot.slane %v753, 2
      %v758 = vrot.slane %v754, 2
      %v759 = vsel %vm696, %v757, %v758
      %760 = vrot.lane.b32.xlu0 %v759, 120
      %v761 = vpop.permute.xlu0 %760
      %v763 = vadd.f32 %v729, %v761
      %v764 = vperm.slane %v747, 0
      %766 = vrot.lane.b32.xlu0 %v764, 8
      %v767 = vpop.permute.xlu0 %766
      %v769 = vmul.f32 %v540, %v767
      %v770 = vmul.f32 %v541, %v767
      %v773 = vrot.slane %v769, 2
      %v774 = vrot.slane %v770, 2
      %v775 = vsel %vm696, %v773, %v774
      %776 = vrot.lane.b32.xlu0 %v775, 120
      %v777 = vpop.permute.xlu0 %776
      %v779 = vadd.f32 %v745, %v777
      %v780 = vld [vmem:[%s486] sm:$0xff]
      %v781 = vld [vmem:[%s486 + $0x8] sm:$0x3]
      %v782 = vld [vmem:[%s517] sm:$0xff]
      %v783 = vld [vmem:[%s517 + $0x8] sm:$0x3]
      %v784 = vld [vmem:[%s6 + $0x9] sm:$0x1]
      %v785 = vld [vmem:[%s7 + $0x9] sm:$0x1]
      %v786 = vperm.slane %v784, 0
      %v787 = vmul.f32 %v780, %v786
      %v788 = vadd.f32 %v763, %v787
      %v789 = vperm.slane %v785, 0
      %v790 = vmul.f32 %v782, %v789
      %v791 = vadd.f32 %v779, %v790
      %v792 = vld [vmem:[%s6 + $0xa] sm:$0x1]
      %v793 = vld [vmem:[%s7 + $0xa] sm:$0x1]
      %v794 = vperm.slane %v792, 0
      %796 = vrot.lane.b32.xlu0 %v794, 4
      %v797 = vpop.permute.xlu0 %796
      %v799 = vmul.f32 %v780, %v797
      %801 = vrot.lane.b32.xlu0 %v799, 124
      %v802 = vpop.permute.xlu0 %801
      %v804 = vadd.f32 %v788, %v802
      %v805 = vperm.slane %v793, 0
      %807 = vrot.lane.b32.xlu0 %v805, 4
      %v808 = vpop.permute.xlu0 %807
      %v810 = vmul.f32 %v782, %v808
      %812 = vrot.lane.b32.xlu0 %v810, 124
      %v813 = vpop.permute.xlu0 %812
      %v815 = vadd.f32 %v791, %v813
      %v816 = vld [vmem:[%s6 + $0xb] sm:$0x1]
      %v817 = vld [vmem:[%s7 + $0xb] sm:$0x1]
      %v818 = vperm.slane %v816, 0
      %820 = vrot.lane.b32.xlu0 %v818, 8
      %v821 = vpop.permute.xlu0 %820
      %v823 = vmul.f32 %v780, %v821
      %825 = vrot.lane.b32.xlu0 %v823, 120
      %v826 = vpop.permute.xlu0 %825
      %v828 = vadd.f32 %v804, %v826
      %v829 = vperm.slane %v817, 0
      %831 = vrot.lane.b32.xlu0 %v829, 8
      %v832 = vpop.permute.xlu0 %831
      %v834 = vmul.f32 %v782, %v832
      %836 = vrot.lane.b32.xlu0 %v834, 120
      %v837 = vpop.permute.xlu0 %836
      %v839 = vadd.f32 %v815, %v837
      %v840 = vld [vmem:[%s6 + $0xc] sm:$0x1]
      %v841 = vld [vmem:[%s7 + $0xc] sm:$0x1]
      %v842 = vperm.slane %v840, 0
      %v843 = vmul.f32 %v780, %v842
      %v844 = vmul.f32 %v781, %v842
      %v847 = vrot.slane %v843, 1
      %v848 = vrot.slane %v844, 1
      %v849 = vsel %vm605, %v847, %v848
      %v851 = vadd.f32 %v828, %v849
      %v852 = vperm.slane %v841, 0
      %v853 = vmul.f32 %v782, %v852
      %v854 = vmul.f32 %v783, %v852
      %v857 = vrot.slane %v853, 1
      %v858 = vrot.slane %v854, 1
      %v859 = vsel %vm605, %v857, %v858
      %v861 = vadd.f32 %v839, %v859
      %v862 = vld [vmem:[%s6 + $0xd] sm:$0x1]
      %v863 = vld [vmem:[%s7 + $0xd] sm:$0x1]
      %v864 = vperm.slane %v862, 0
      %866 = vrot.lane.b32.xlu0 %v864, 4
      %v867 = vpop.permute.xlu0 %866
      %v869 = vmul.f32 %v780, %v867
      %v870 = vmul.f32 %v781, %v867
      %v873 = vrot.slane %v869, 1
      %v874 = vrot.slane %v870, 1
      %v875 = vsel %vm605, %v873, %v874
      %876 = vrot.lane.b32.xlu0 %v875, 124
      %v877 = vpop.permute.xlu0 %876
      %v879 = vadd.f32 %v851, %v877
      %v880 = vperm.slane %v863, 0
      %882 = vrot.lane.b32.xlu0 %v880, 4
      %v883 = vpop.permute.xlu0 %882
      %v885 = vmul.f32 %v782, %v883
      %v886 = vmul.f32 %v783, %v883
      %v889 = vrot.slane %v885, 1
      %v890 = vrot.slane %v886, 1
      %v891 = vsel %vm605, %v889, %v890
      %892 = vrot.lane.b32.xlu0 %v891, 124
      %v893 = vpop.permute.xlu0 %892
      %v895 = vadd.f32 %v861, %v893
      %v896 = vld [vmem:[%s6 + $0xe] sm:$0x1]
      %v897 = vld [vmem:[%s7 + $0xe] sm:$0x1]
      %v898 = vperm.slane %v896, 0
      %900 = vrot.lane.b32.xlu0 %v898, 8
      %v901 = vpop.permute.xlu0 %900
      %v903 = vmul.f32 %v780, %v901
      %v904 = vmul.f32 %v781, %v901
      %v907 = vrot.slane %v903, 1
      %v908 = vrot.slane %v904, 1
      %v909 = vsel %vm605, %v907, %v908
      %910 = vrot.lane.b32.xlu0 %v909, 120
      %v911 = vpop.permute.xlu0 %910
      %v913 = vadd.f32 %v879, %v911
      %v914 = vperm.slane %v897, 0
      %916 = vrot.lane.b32.xlu0 %v914, 8
      %v917 = vpop.permute.xlu0 %916
      %v919 = vmul.f32 %v782, %v917
      %v920 = vmul.f32 %v783, %v917
      %v923 = vrot.slane %v919, 1
      %v924 = vrot.slane %v920, 1
      %v925 = vsel %vm605, %v923, %v924
      %926 = vrot.lane.b32.xlu0 %v925, 120
      %v927 = vpop.permute.xlu0 %926
      %v929 = vadd.f32 %v895, %v927
      %v930 = vld [vmem:[%s6 + $0xf] sm:$0x1]
      %v931 = vld [vmem:[%s7 + $0xf] sm:$0x1]
      %v932 = vperm.slane %v930, 0
      %v933 = vmul.f32 %v780, %v932
      %v934 = vmul.f32 %v781, %v932
      %v937 = vrot.slane %v933, 2
      %v938 = vrot.slane %v934, 2
      %v939 = vsel %vm696, %v937, %v938
      %v941 = vadd.f32 %v913, %v939
      %v942 = vperm.slane %v931, 0
      %v943 = vmul.f32 %v782, %v942
      %v944 = vmul.f32 %v783, %v942
      %v947 = vrot.slane %v943, 2
      %v948 = vrot.slane %v944, 2
      %v949 = vsel %vm696, %v947, %v948
      %v951 = vadd.f32 %v929, %v949
      %v952 = vld [vmem:[%s6 + $0x10] sm:$0x1]
      %v953 = vld [vmem:[%s7 + $0x10] sm:$0x1]
      %v954 = vperm.slane %v952, 0
      %956 = vrot.lane.b32.xlu0 %v954, 4
      %v957 = vpop.permute.xlu0 %956
      %v959 = vmul.f32 %v780, %v957
      %v960 = vmul.f32 %v781, %v957
      %v963 = vrot.slane %v959, 2
      %v964 = vrot.slane %v960, 2
      %v965 = vsel %vm696, %v963, %v964
      %966 = vrot.lane.b32.xlu0 %v965, 124
      %v967 = vpop.permute.xlu0 %966
      %v969 = vadd.f32 %v941, %v967
      %v970 = vperm.slane %v953, 0
      %972 = vrot.lane.b32.xlu0 %v970, 4
      %v973 = vpop.permute.xlu0 %972
      %v975 = vmul.f32 %v782, %v973
      %v976 = vmul.f32 %v783, %v973
      %v979 = vrot.slane %v975, 2
      %v980 = vrot.slane %v976, 2
      %v981 = vsel %vm696, %v979, %v980
      %982 = vrot.lane.b32.xlu0 %v981, 124
      %v983 = vpop.permute.xlu0 %982
      %v985 = vadd.f32 %v951, %v983
      %v986 = vld [vmem:[%s6 + $0x11] sm:$0x1]
      %v987 = vld [vmem:[%s7 + $0x11] sm:$0x1]
      %v988 = vperm.slane %v986, 0
      %990 = vrot.lane.b32.xlu0 %v988, 8
      %v991 = vpop.permute.xlu0 %990
      %v993 = vmul.f32 %v780, %v991
      %v994 = vmul.f32 %v781, %v991
      %v997 = vrot.slane %v993, 2
      %v998 = vrot.slane %v994, 2
      %v999 = vsel %vm696, %v997, %v998
      %1000 = vrot.lane.b32.xlu0 %v999, 120
      %v1001 = vpop.permute.xlu0 %1000
      %v1003 = vadd.f32 %v969, %v1001
      %v1004 = vperm.slane %v987, 0
      %1006 = vrot.lane.b32.xlu0 %v1004, 8
      %v1007 = vpop.permute.xlu0 %1006
      %v1009 = vmul.f32 %v782, %v1007
      %v1010 = vmul.f32 %v783, %v1007
      %v1013 = vrot.slane %v1009, 2
      %v1014 = vrot.slane %v1010, 2
      %v1015 = vsel %vm696, %v1013, %v1014
      %1016 = vrot.lane.b32.xlu0 %v1015, 120
      %v1017 = vpop.permute.xlu0 %1016
      %v1019 = vadd.f32 %v985, %v1017
      %v1020 = vld [vmem:[%s497] sm:$0xff]
      %v1021 = vld [vmem:[%s497 + $0x8] sm:$0x3]
      %v1022 = vld [vmem:[%s528] sm:$0xff]
      %v1023 = vld [vmem:[%s528 + $0x8] sm:$0x3]
      %v1024 = vld [vmem:[%s6 + $0x12] sm:$0x1]
      %v1025 = vld [vmem:[%s7 + $0x12] sm:$0x1]
      %v1026 = vperm.slane %v1024, 0
      %v1027 = vmul.f32 %v1020, %v1026
      %v1028 = vadd.f32 %v1003, %v1027
      %v1029 = vperm.slane %v1025, 0
      %v1030 = vmul.f32 %v1022, %v1029
      %v1031 = vadd.f32 %v1019, %v1030
      %v1032 = vld [vmem:[%s6 + $0x13] sm:$0x1]
      %v1033 = vld [vmem:[%s7 + $0x13] sm:$0x1]
      %v1034 = vperm.slane %v1032, 0
      %1036 = vrot.lane.b32.xlu0 %v1034, 4
      %v1037 = vpop.permute.xlu0 %1036
      %v1039 = vmul.f32 %v1020, %v1037
      %1041 = vrot.lane.b32.xlu0 %v1039, 124
      %v1042 = vpop.permute.xlu0 %1041
      %v1044 = vadd.f32 %v1028, %v1042
      %v1045 = vperm.slane %v1033, 0
      %1047 = vrot.lane.b32.xlu0 %v1045, 4
      %v1048 = vpop.permute.xlu0 %1047
      %v1050 = vmul.f32 %v1022, %v1048
      %1052 = vrot.lane.b32.xlu0 %v1050, 124
      %v1053 = vpop.permute.xlu0 %1052
      %v1055 = vadd.f32 %v1031, %v1053
      %v1056 = vld [vmem:[%s6 + $0x14] sm:$0x1]
      %v1057 = vld [vmem:[%s7 + $0x14] sm:$0x1]
      %v1058 = vperm.slane %v1056, 0
      %1060 = vrot.lane.b32.xlu0 %v1058, 8
      %v1061 = vpop.permute.xlu0 %1060
      %v1063 = vmul.f32 %v1020, %v1061
      %1065 = vrot.lane.b32.xlu0 %v1063, 120
      %v1066 = vpop.permute.xlu0 %1065
      %v1068 = vadd.f32 %v1044, %v1066
      %v1069 = vperm.slane %v1057, 0
      %1071 = vrot.lane.b32.xlu0 %v1069, 8
      %v1072 = vpop.permute.xlu0 %1071
      %v1074 = vmul.f32 %v1022, %v1072
      %1076 = vrot.lane.b32.xlu0 %v1074, 120
      %v1077 = vpop.permute.xlu0 %1076
      %v1079 = vadd.f32 %v1055, %v1077
      %v1080 = vld [vmem:[%s6 + $0x15] sm:$0x1]
      %v1081 = vld [vmem:[%s7 + $0x15] sm:$0x1]
      %v1082 = vperm.slane %v1080, 0
      %v1083 = vmul.f32 %v1020, %v1082
      %v1084 = vmul.f32 %v1021, %v1082
      %v1087 = vrot.slane %v1083, 1
      %v1088 = vrot.slane %v1084, 1
      %v1089 = vsel %vm605, %v1087, %v1088
      %v1091 = vadd.f32 %v1068, %v1089
      %v1092 = vperm.slane %v1081, 0
      %v1093 = vmul.f32 %v1022, %v1092
      %v1094 = vmul.f32 %v1023, %v1092
      %v1097 = vrot.slane %v1093, 1
      %v1098 = vrot.slane %v1094, 1
      %v1099 = vsel %vm605, %v1097, %v1098
      %v1101 = vadd.f32 %v1079, %v1099
      %v1102 = vld [vmem:[%s6 + $0x16] sm:$0x1]
      %v1103 = vld [vmem:[%s7 + $0x16] sm:$0x1]
      %v1104 = vperm.slane %v1102, 0
      %1106 = vrot.lane.b32.xlu0 %v1104, 4
      %v1107 = vpop.permute.xlu0 %1106
      %v1109 = vmul.f32 %v1020, %v1107
      %v1110 = vmul.f32 %v1021, %v1107
      %v1113 = vrot.slane %v1109, 1
      %v1114 = vrot.slane %v1110, 1
      %v1115 = vsel %vm605, %v1113, %v1114
      %1116 = vrot.lane.b32.xlu0 %v1115, 124
      %v1117 = vpop.permute.xlu0 %1116
      %v1119 = vadd.f32 %v1091, %v1117
      %v1120 = vperm.slane %v1103, 0
      %1122 = vrot.lane.b32.xlu0 %v1120, 4
      %v1123 = vpop.permute.xlu0 %1122
      %v1125 = vmul.f32 %v1022, %v1123
      %v1126 = vmul.f32 %v1023, %v1123
      %v1129 = vrot.slane %v1125, 1
      %v1130 = vrot.slane %v1126, 1
      %v1131 = vsel %vm605, %v1129, %v1130
      %1132 = vrot.lane.b32.xlu0 %v1131, 124
      %v1133 = vpop.permute.xlu0 %1132
      %v1135 = vadd.f32 %v1101, %v1133
      %v1136 = vld [vmem:[%s6 + $0x17] sm:$0x1]
      %v1137 = vld [vmem:[%s7 + $0x17] sm:$0x1]
      %v1138 = vperm.slane %v1136, 0
      %1140 = vrot.lane.b32.xlu0 %v1138, 8
      %v1141 = vpop.permute.xlu0 %1140
      %v1143 = vmul.f32 %v1020, %v1141
      %v1144 = vmul.f32 %v1021, %v1141
      %v1147 = vrot.slane %v1143, 1
      %v1148 = vrot.slane %v1144, 1
      %v1149 = vsel %vm605, %v1147, %v1148
      %1150 = vrot.lane.b32.xlu0 %v1149, 120
      %v1151 = vpop.permute.xlu0 %1150
      %v1153 = vadd.f32 %v1119, %v1151
      %v1154 = vperm.slane %v1137, 0
      %1156 = vrot.lane.b32.xlu0 %v1154, 8
      %v1157 = vpop.permute.xlu0 %1156
      %v1159 = vmul.f32 %v1022, %v1157
      %v1160 = vmul.f32 %v1023, %v1157
      %v1163 = vrot.slane %v1159, 1
      %v1164 = vrot.slane %v1160, 1
      %v1165 = vsel %vm605, %v1163, %v1164
      %1166 = vrot.lane.b32.xlu0 %v1165, 120
      %v1167 = vpop.permute.xlu0 %1166
      %v1169 = vadd.f32 %v1135, %v1167
      %v1170 = vld [vmem:[%s6 + $0x18] sm:$0x1]
      %v1171 = vld [vmem:[%s7 + $0x18] sm:$0x1]
      %v1172 = vperm.slane %v1170, 0
      %v1173 = vmul.f32 %v1020, %v1172
      %v1174 = vmul.f32 %v1021, %v1172
      %v1177 = vrot.slane %v1173, 2
      %v1178 = vrot.slane %v1174, 2
      %v1179 = vsel %vm696, %v1177, %v1178
      %v1181 = vadd.f32 %v1153, %v1179
      %v1182 = vperm.slane %v1171, 0
      %v1183 = vmul.f32 %v1022, %v1182
      %v1184 = vmul.f32 %v1023, %v1182
      %v1187 = vrot.slane %v1183, 2
      %v1188 = vrot.slane %v1184, 2
      %v1189 = vsel %vm696, %v1187, %v1188
      %v1191 = vadd.f32 %v1169, %v1189
      %v1192 = vld [vmem:[%s6 + $0x19] sm:$0x1]
      %v1193 = vld [vmem:[%s7 + $0x19] sm:$0x1]
      %v1194 = vperm.slane %v1192, 0
      %1196 = vrot.lane.b32.xlu0 %v1194, 4
      %v1197 = vpop.permute.xlu0 %1196
      %v1199 = vmul.f32 %v1020, %v1197
      %v1200 = vmul.f32 %v1021, %v1197
      %v1203 = vrot.slane %v1199, 2
      %v1204 = vrot.slane %v1200, 2
      %v1205 = vsel %vm696, %v1203, %v1204
      %1206 = vrot.lane.b32.xlu0 %v1205, 124
      %v1207 = vpop.permute.xlu0 %1206
      %v1209 = vadd.f32 %v1181, %v1207
      %v1210 = vperm.slane %v1193, 0
      %1212 = vrot.lane.b32.xlu0 %v1210, 4
      %v1213 = vpop.permute.xlu0 %1212
      %v1215 = vmul.f32 %v1022, %v1213
      %v1216 = vmul.f32 %v1023, %v1213
      %v1219 = vrot.slane %v1215, 2
      %v1220 = vrot.slane %v1216, 2
      %v1221 = vsel %vm696, %v1219, %v1220
      %1222 = vrot.lane.b32.xlu0 %v1221, 124
      %v1223 = vpop.permute.xlu0 %1222
      %v1225 = vadd.f32 %v1191, %v1223
      %v1226 = vld [vmem:[%s6 + $0x1a] sm:$0x1]
      %v1227 = vld [vmem:[%s7 + $0x1a] sm:$0x1]
      %v1228 = vperm.slane %v1226, 0
      %1230 = vrot.lane.b32.xlu0 %v1228, 8
      %v1231 = vpop.permute.xlu0 %1230
      %v1233 = vmul.f32 %v1020, %v1231
      %v1234 = vmul.f32 %v1021, %v1231
      %v1237 = vrot.slane %v1233, 2
      %v1238 = vrot.slane %v1234, 2
      %v1239 = vsel %vm696, %v1237, %v1238
      %1240 = vrot.lane.b32.xlu0 %v1239, 120
      %v1241 = vpop.permute.xlu0 %1240
      %v1243 = vadd.f32 %v1209, %v1241
      %v1244 = vperm.slane %v1227, 0
      %1246 = vrot.lane.b32.xlu0 %v1244, 8
      %v1247 = vpop.permute.xlu0 %1246
      %v1249 = vmul.f32 %v1022, %v1247
      %v1250 = vmul.f32 %v1023, %v1247
      %v1253 = vrot.slane %v1249, 2
      %v1254 = vrot.slane %v1250, 2
      %v1255 = vsel %vm696, %v1253, %v1254
      %1256 = vrot.lane.b32.xlu0 %v1255, 120
      %v1257 = vpop.permute.xlu0 %1256
      %v1259 = vadd.f32 %v1225, %v1257
      %v1260 = vmul.f32 %v1243, %v1259
      %v1261 = vmul.f32 %v1260, %v1259
      %vm1262 = vcmask 261120
      %1263 = vst.msk [vmem:[%s537] sm:$0xff] %vm1262, %v1261
      %p1264 = scmp.lt.s32.totalorder %s23, 1
      %s1265 = scalar_select %p1264, %s23, 1
      %p1266 = scmp.lt.s32.totalorder %s24, 7
      %s1267 = scalar_select %p1266, %s24, 7
      %s1268 = smul.addr %s1265, 8
      %s1269 = sadd.s32 %s1267, %s1268
      %s1270 = smul.addr %s1269, 8
      %s1271 = scalar_lea.vmem %s8, %s1270
      // Predicated region
      $region53: #{sdc_forward.4} parent=51 // pred_check
        %p1272 = pneg %p269
      $region54: #{sdc_forward.4} parent=51 // pred_check_branch
        %1274 = sbr.rel (%p1272) target = $region56
      $region55: #{sdc_forward.4} parent=51 // pred_region
        _
      $region56: #{sdc_forward.4} parent=51 // pred_fallthru
        _
    $region52: #{sdc_forward.4} parent=5 // pred_fallthru
      _
    %p1275 = scmp.le.s32.totalorder 2, %s14
    // Predicated region
    $region57: #{sdc_forward.4} parent=5 // pred_check
      %p1276 = pneg %p1275
    $region58: #{sdc_forward.4} parent=5 // pred_check_branch
      %1278 = sbr.rel (%p1276) target = $region60
    $region59: #{sdc_forward.4} parent=5 // pred_region
      %s1279 = ssub.s32 %s14, 2
      // Predicated region
      $region61: #{sdc_forward.4} parent=59 // pred_check
        %p1280 = pneg %p275
      $region62: #{sdc_forward.4} parent=59 // pred_check_branch
        %1282 = sbr.rel (%p1280) target = $region64
      $region63: #{sdc_forward.4} parent=59 // pred_region
        %p1283 = scmp.lt.s32.totalorder %s25, 1
        %s1284 = scalar_select %p1283, %s25, 1
        %p1285 = scmp.lt.s32.totalorder %s26, 7
        %s1286 = scalar_select %p1285, %s26, 7
        %s1287 = smul.addr %s1284, 8
        %s1288 = sadd.s32 %s1286, %s1287
        %s1289 = smul.addr %s1288, 8
        %s1290 = scalar_lea.vmem %s8, %s1289
      $region64: #{sdc_forward.4} parent=59 // pred_fallthru
        _
    $region60: #{sdc_forward.4} parent=5 // pred_fallthru
      _
  $region6: #{sdc_forward.4} parent=0 // loop_footer
    %s18 = sadd.s32 1, %s14
  $region7: #{sdc_forward.4} parent=0 // loop_footer_branch
    %13 = sbr.rel target = $region3
  $region8: #{sdc_forward.4} parent=0 // loop_exit
    _

// kernel: sdc_forward.5
$region0: #{sdc_forward.5}
  #allocation0 [shape = 'u32[]', space=smem, size = 0x4, offset = 0x4, fixed_abs, tag = 'smem constant byte address 0x4 - core index']
  #allocation1 [shape = 'u32[72,128]{1,0:T(1,128)}', space=vmem, size = 0x9000, scoped, tag = 'internal scratch']
  %s0 = inlined_call_operand.vmem [shape: f32[2,10,110,4], index: 0, kind: input, shape index: {}, may-alias: {0,1,2}]
  %s1 = inlined_call_operand.vmem [shape: f32[2,10,110,4], index: 1, kind: input, shape index: {}, may-alias: {0,1,2}]
  %s2 = inlined_call_operand.vmem [shape: f32[2,10,110,4], index: 2, kind: input, shape index: {}, may-alias: {0,1,2}]
  %s3 = inlined_call_operand.vmem [shape: f32[27,4,4], index: 3, kind: input, shape index: {}]
  %s4 = inlined_call_operand.vmem [shape: f32[80,1], index: 4, kind: input, shape index: {}]
  %s5 = inlined_call_operand.vmem [shape: f32[2,8,80,4], index: 5, kind: output, shape index: {0}]
  %s6 = inlined_call_operand.hbm [shape: f32[2,8,1,4], index: 6, kind: output, shape index: {1}]
  %s7 = inlined_call_operand.hbm [shape: f32[2,8,1,4], index: 7, kind: output, shape index: {2}]
  %8 = xla_tuple %s5, %s6, %s7
  %s9 = sld [smem:[#allocation0]]
  $region69: #{sdc_forward.5} parent=0
    _
  %s11 = ssub.s32 1, %s9
  %s12 = scalar_select 0, %s11, %s9
  $region1: #{sdc_forward.5} parent=0
    #allocation2 [shape = 'u8[1024]{0}', space=vmem, size = 0x400, scoped, tag = 'output window, operand 1']
    #allocation3 [shape = 's32[2]{0}', space=sflag, size = 0x8, scoped, tag = 'scoped memory for sdc_forward.5']
    #allocation4 [shape = 'u8[1024]{0}', space=vmem, size = 0x400, scoped, tag = 'output window, operand 2']
    #allocation5 [shape = 's32[2]{0}', space=sflag, size = 0x8, scoped, tag = 'scoped memory for sdc_forward.5']
    %13 = vsyncpa [#allocation3], 0
    %s14 = scalar_lea.sflag [#allocation3], 1
    %15 = vsyncpa %s14, 0
    %16 = vsyncpa [#allocation5], 0
    %s17 = scalar_lea.sflag [#allocation5], 1
    %18 = vsyncpa %s17, 0
    loop: start=0, step=1, limit=18
    $region2: #{sdc_forward.5} parent=1 // loop_pre_header
      _
    $region3: #{sdc_forward.5} parent=1 // loop_header
      %s20 = sphi 0, %s24
      %p21 = scmp.ge.s32.totalorder %s20, 18
      %s27 = sphi 0, %s39
      %s28 = sphi 0, %s35
      %s29 = sphi 0, %s27
      %s30 = sphi 0, %s28
      %s31 = sphi 0, %s29
      %s32 = sphi 0, %s30
      %s44 = sphi 0, %s46
      %s47 = sphi 0, %s44
      %s48 = sphi 0, %s47
      %s64 = sphi 0, %s48
      %s74 = sphi 0, %s76
      %s77 = sphi 0, %s74
      %s78 = sphi 0, %s77
      %s94 = sphi 0, %s78
      %s104 = sphi 0, %s106
      %s107 = sphi 0, %s104
      %s108 = sphi 0, %s107
      %s124 = sphi 0, %s108
      %s128 = sphi 0, %s128
      %s130 = sphi 0, %s128
      %s131 = sphi 0, %s130
      %s145 = sphi 0, %s131
      %s149 = sphi 0, %s149
      %s151 = sphi 0, %s149
      %s152 = sphi 0, %s151
      %s166 = sphi 0, %s152
      %s174 = sphi 0, %s176
      %s177 = sphi 0, %s174
      %s178 = sphi 0, %s177
      %s194 = sphi 0, %s178
      %s202 = sphi 0, %s204
      %s205 = sphi 0, %s202
      %s206 = sphi 0, %s205
      %s222 = sphi 0, %s206
      %s230 = sphi 0, %s232
      %s233 = sphi 0, %s230
      %s234 = sphi 0, %s233
      %s250 = sphi 0, %s234
    $region4: #{sdc_forward.5} parent=1 // loop_header_branch
      %23 = sbr.rel (%p21) target = $region8
    $region5: #{sdc_forward.5} parent=1 // loop_body
      %s25 = ssub.s32 %s20, 1
      %s26 = ssub.s32 %s20, 2
      %s33 = sadd.s32 1, %s28
      %p34 = scmp.ge.s32.totalorder %s33, 8
      %s35 = scalar_select %p34, 0, %s33
      %s36 = sadd.s32 1, %s27
      %s37 = scalar_select %p34, %s36, %s27
      %p38 = scmp.ge.s32.totalorder %s37, 2
      %s39 = scalar_select %p38, 0, %s37
      %s40 = ssub.s32 %s27, %s39
      %s41 = ssub.s32 %s28, %s35
      %s42 = sor.u32 %s40, %s41
      %p43 = scmp.eq.s32.totalorder %s42, 0
      %s45 = sadd.s32 %s44, 1
      %s46 = scalar_select %p43, %s44, %s45
      %p49 = pneg %p43
      %p50 = scmp.eq.s32.totalorder %s20, 15
      %p51 = por %p49, %p50
      %p52 = scmp.ne.s32.totalorder %s44, %s47
      %p53 = scmp.eq.s32.totalorder %s20, 0
      %p54 = por %p52, %p53
      %p55 = scmp.ne.s32.totalorder %s44, %s47
      %p56 = scmp.eq.s32.totalorder %s25, 15
      %p57 = por %p55, %p56
      %p58 = scmp.ne.s32.totalorder %s47, %s48
      %p59 = scmp.eq.s32.totalorder %s25, 0
      %p60 = por %p58, %p59
      %p61 = scmp.ne.s32.totalorder %s47, %s48
      %p62 = scmp.eq.s32.totalorder %s26, 15
      %p63 = por %p61, %p62
      %p65 = scmp.ne.s32.totalorder %s48, %s64
      %p66 = scmp.eq.s32.totalorder %s26, 0
      %p67 = por %p65, %p66
      %s68 = sadd.s32 %s28, 1
      %s69 = sadd.s32 %s35, 1
      %s70 = ssub.s32 %s27, %s39
      %s71 = ssub.s32 %s68, %s69
      %s72 = sor.u32 %s70, %s71
      %p73 = scmp.eq.s32.totalorder %s72, 0
      %s75 = sadd.s32 %s74, 1
      %s76 = scalar_select %p73, %s74, %s75
      %p79 = pneg %p73
      %p80 = scmp.eq.s32.totalorder %s20, 15
      %p81 = por %p79, %p80
      %p82 = scmp.ne.s32.totalorder %s74, %s77
      %p83 = scmp.eq.s32.totalorder %s20, 0
      %p84 = por %p82, %p83
      %p85 = scmp.ne.s32.totalorder %s74, %s77
      %p86 = scmp.eq.s32.totalorder %s25, 15
      %p87 = por %p85, %p86
      %p88 = scmp.ne.s32.totalorder %s77, %s78
      %p89 = scmp.eq.s32.totalorder %s25, 0
      %p90 = por %p88, %p89
      %p91 = scmp.ne.s32.totalorder %s77, %s78
      %p92 = scmp.eq.s32.totalorder %s26, 15
      %p93 = por %p91, %p92
      %p95 = scmp.ne.s32.totalorder %s78, %s94
      %p96 = scmp.eq.s32.totalorder %s26, 0
      %p97 = por %p95, %p96
      %s98 = sadd.s32 %s28, 2
      %s99 = sadd.s32 %s35, 2
      %s100 = ssub.s32 %s27, %s39
      %s101 = ssub.s32 %s98, %s99
      %s102 = sor.u32 %s100, %s101
      %p103 = scmp.eq.s32.totalorder %s102, 0
      %s105 = sadd.s32 %s104, 1
      %s106 = scalar_select %p103, %s104, %s105
      %p109 = pneg %p103
      %p110 = scmp.eq.s32.totalorder %s20, 15
      %p111 = por %p109, %p110
      %p112 = scmp.ne.s32.totalorder %s104, %s107
      %p113 = scmp.eq.s32.totalorder %s20, 0
      %p114 = por %p112, %p113
      %p115 = scmp.ne.s32.totalorder %s104, %s107
      %p116 = scmp.eq.s32.totalorder %s25, 15
      %p117 = por %p115, %p116
      %p118 = scmp.ne.s32.totalorder %s107, %s108
      %p119 = scmp.eq.s32.totalorder %s25, 0
      %p120 = por %p118, %p119
      %p121 = scmp.ne.s32.totalorder %s107, %s108
      %p122 = scmp.eq.s32.totalorder %s26, 15
      %p123 = por %p121, %p122
      %p125 = scmp.ne.s32.totalorder %s108, %s124
      %p126 = scmp.eq.s32.totalorder %s26, 0
      %p127 = por %p125, %p126
      %s129 = sadd.s32 %s128, 1
      %p132 = scmp.eq.s32.totalorder %s20, 15
      %p133 = scmp.ne.s32.totalorder %s128, %s130
      %p134 = scmp.eq.s32.totalorder %s20, 0
      %p135 = por %p133, %p134
      %p136 = scmp.ne.s32.totalorder %s128, %s130
      %p137 = scmp.eq.s32.totalorder %s25, 15
      %p138 = por %p136, %p137
      %p139 = scmp.ne.s32.totalorder %s130, %s131
      %p140 = scmp.eq.s32.totalorder %s25, 0
      %p141 = por %p139, %p140
      %p142 = scmp.ne.s32.totalorder %s130, %s131
      %p143 = scmp.eq.s32.totalorder %s26, 15
      %p144 = por %p142, %p143
      %p146 = scmp.ne.s32.totalorder %s131, %s145
      %p147 = scmp.eq.s32.totalorder %s26, 0
      %p148 = por %p146, %p147
      %s150 = sadd.s32 %s149, 1
      %p153 = scmp.eq.s32.totalorder %s20, 15
      %p154 = scmp.ne.s32.totalorder %s149, %s151
      %p155 = scmp.eq.s32.totalorder %s20, 0
      %p156 = por %p154, %p155
      %p157 = scmp.ne.s32.totalorder %s149, %s151
      %p158 = scmp.eq.s32.totalorder %s25, 15
      %p159 = por %p157, %p158
      %p160 = scmp.ne.s32.totalorder %s151, %s152
      %p161 = scmp.eq.s32.totalorder %s25, 0
      %p162 = por %p160, %p161
      %p163 = scmp.ne.s32.totalorder %s151, %s152
      %p164 = scmp.eq.s32.totalorder %s26, 15
      %p165 = por %p163, %p164
      %p167 = scmp.ne.s32.totalorder %s152, %s166
      %p168 = scmp.eq.s32.totalorder %s26, 0
      %p169 = por %p167, %p168
      %s170 = ssub.s32 %s27, %s39
      %s171 = ssub.s32 %s28, %s35
      %s172 = sor.u32 %s170, %s171
      %p173 = scmp.eq.s32.totalorder %s172, 0
      %s175 = sadd.s32 %s174, 1
      %s176 = scalar_select %p173, %s174, %s175
      %p179 = pneg %p173
      %p180 = scmp.eq.s32.totalorder %s20, 15
      %p181 = por %p179, %p180
      %p182 = scmp.ne.s32.totalorder %s174, %s177
      %p183 = scmp.eq.s32.totalorder %s20, 0
      %p184 = por %p182, %p183
      %p185 = scmp.ne.s32.totalorder %s174, %s177
      %p186 = scmp.eq.s32.totalorder %s25, 15
      %p187 = por %p185, %p186
      %p188 = scmp.ne.s32.totalorder %s177, %s178
      %p189 = scmp.eq.s32.totalorder %s25, 0
      %p190 = por %p188, %p189
      %p191 = scmp.ne.s32.totalorder %s177, %s178
      %p192 = scmp.eq.s32.totalorder %s26, 15
      %p193 = por %p191, %p192
      %p195 = scmp.ne.s32.totalorder %s178, %s194
      %p196 = scmp.eq.s32.totalorder %s26, 0
      %p197 = por %p195, %p196
      %s198 = ssub.s32 %s27, %s39
      %s199 = ssub.s32 %s28, %s35
      %s200 = sor.u32 %s198, %s199
      %p201 = scmp.eq.s32.totalorder %s200, 0
      %s203 = sadd.s32 %s202, 1
      %s204 = scalar_select %p201, %s202, %s203
      %p207 = pneg %p201
      %p208 = scmp.eq.s32.totalorder %s20, 15
      %p209 = por %p207, %p208
      %p210 = scmp.ne.s32.totalorder %s202, %s205
      %p211 = scmp.eq.s32.totalorder %s20, 0
      %p212 = por %p210, %p211
      %p213 = scmp.ne.s32.totalorder %s202, %s205
      %p214 = scmp.eq.s32.totalorder %s25, 15
      %p215 = por %p213, %p214
      %p216 = scmp.ne.s32.totalorder %s205, %s206
      %p217 = scmp.eq.s32.totalorder %s25, 0
      %p218 = por %p216, %p217
      %p219 = scmp.ne.s32.totalorder %s205, %s206
      %p220 = scmp.eq.s32.totalorder %s26, 15
      %p221 = por %p219, %p220
      %p223 = scmp.ne.s32.totalorder %s206, %s222
      %p224 = scmp.eq.s32.totalorder %s26, 0
      %p225 = por %p223, %p224
      %s226 = ssub.s32 %s27, %s39
      %s227 = ssub.s32 %s28, %s35
      %s228 = sor.u32 %s226, %s227
      %p229 = scmp.eq.s32.totalorder %s228, 0
      %s231 = sadd.s32 %s230, 1
      %s232 = scalar_select %p229, %s230, %s231
      %p235 = pneg %p229
      %p236 = scmp.eq.s32.totalorder %s20, 15
      %p237 = por %p235, %p236
      %p238 = scmp.ne.s32.totalorder %s230, %s233
      %p239 = scmp.eq.s32.totalorder %s20, 0
      %p240 = por %p238, %p239
      %p241 = scmp.ne.s32.totalorder %s230, %s233
      %p242 = scmp.eq.s32.totalorder %s25, 15
      %p243 = por %p241, %p242
      %p244 = scmp.ne.s32.totalorder %s233, %s234
      %p245 = scmp.eq.s32.totalorder %s25, 0
      %p246 = por %p244, %p245
      %p247 = scmp.ne.s32.totalorder %s233, %s234
      %p248 = scmp.eq.s32.totalorder %s26, 15
      %p249 = por %p247, %p248
      %p251 = scmp.ne.s32.totalorder %s234, %s250
      %p252 = scmp.eq.s32.totalorder %s26, 0
      %p253 = por %p251, %p252
      %p254 = scmp.le.s32.totalorder 1, %s20
      %p255 = scmp.lt.s32.totalorder %s20, 17
      %p256 = pnand %p254, %p255
      %p257 = pneg %p256
      // Predicated region
      $region9: #{sdc_forward.5} parent=5 // pred_check
        _
      $region10: #{sdc_forward.5} parent=5 // pred_check_branch
        %259 = sbr.rel (%p256) target = $region12
      $region11: #{sdc_forward.5} parent=5 // pred_region
        %s260 = ssub.s32 %s20, 1
        // Predicated region
        $region13: #{sdc_forward.5} parent=11 // pred_check
          %p261 = pneg %p141
        $region14: #{sdc_forward.5} parent=11 // pred_check_branch
          %263 = sbr.rel (%p261) target = $region16
        $region15: #{sdc_forward.5} parent=11 // pred_region
          _
        $region16: #{sdc_forward.5} parent=11 // pred_fallthru
          _
        // Predicated region
        $region17: #{sdc_forward.5} parent=11 // pred_check
          %p264 = pneg %p162
        $region18: #{sdc_forward.5} parent=11 // pred_check_branch
          %266 = sbr.rel (%p264) target = $region20
        $region19: #{sdc_forward.5} parent=11 // pred_region
          _
        $region20: #{sdc_forward.5} parent=11 // pred_fallthru
          _
      $region12: #{sdc_forward.5} parent=5 // pred_fallthru
        _
      %p267 = scmp.lt.s32.totalorder %s20, 16
      // Predicated region
      $region21: #{sdc_forward.5} parent=5 // pred_check
        %p268 = pneg %p267
      $region22: #{sdc_forward.5} parent=5 // pred_check_branch
        %270 = sbr.rel (%p268) target = $region24
      $region23: #{sdc_forward.5} parent=5 // pred_region
        // Predicated region
        $region25: #{sdc_forward.5} parent=23 // pred_check
          %p271 = pneg %p54
        $region26: #{sdc_forward.5} parent=23 // pred_check_branch
          %273 = sbr.rel (%p271) target = $region28
        $region27: #{sdc_forward.5} parent=23 // pred_region
          %p274 = scmp.lt.s32.totalorder %s27, 1
          %s275 = scalar_select %p274, %s27, 1
          %p276 = scmp.lt.s32.totalorder %s28, 9
          %s277 = scalar_select %p276, %s28, 9
          %s278 = smul.addr %s277, 14
          %s279 = smul.addr %s275, 140
          %s280 = sadd.s32 %s278, %s279
          %s281 = smul.addr %s280, 8
          %s282 = scalar_lea.vmem %s0, %s281
        $region28: #{sdc_forward.5} parent=23 // pred_fallthru
          _
        // Predicated region
        $region29: #{sdc_forward.5} parent=23 // pred_check
          %p283 = pneg %p84
        $region30: #{sdc_forward.5} parent=23 // pred_check_branch
          %285 = sbr.rel (%p283) target = $region32
        $region31: #{sdc_forward.5} parent=23 // pred_region
          %s286 = sadd.s32 %s28, 1
          %p287 = scmp.lt.s32.totalorder %s27, 1
          %s288 = scalar_select %p287, %s27, 1
          %p289 = scmp.lt.s32.totalorder %s286, 9
          %s290 = scalar_select %p289, %s286, 9
          %s291 = smul.addr %s290, 14
          %s292 = smul.addr %s288, 140
          %s293 = sadd.s32 %s291, %s292
          %s294 = smul.addr %s293, 8
          %s295 = scalar_lea.vmem %s1, %s294
          %s296 = sadd.s32 %s28, 1
        $region32: #{sdc_forward.5} parent=23 // pred_fallthru
          _
        // Predicated region
        $region33: #{sdc_forward.5} parent=23 // pred_check
          %p297 = pneg %p114
        $region34: #{sdc_forward.5} parent=23 // pred_check_branch
          %299 = sbr.rel (%p297) target = $region36
        $region35: #{sdc_forward.5} parent=23 // pred_region
          %s300 = sadd.s32 %s28, 2
          %p301 = scmp.lt.s32.totalorder %s27, 1
          %s302 = scalar_select %p301, %s27, 1
          %p303 = scmp.lt.s32.totalorder %s300, 9
          %s304 = scalar_select %p303, %s300, 9
          %s305 = smul.addr %s304, 14
          %s306 = smul.addr %s302, 140
          %s307 = sadd.s32 %s305, %s306
          %s308 = smul.addr %s307, 8
          %s309 = scalar_lea.vmem %s2, %s308
          %s310 = sadd.s32 %s28, 2
        $region36: #{sdc_forward.5} parent=23 // pred_fallthru
          _
      $region24: #{sdc_forward.5} parent=5 // pred_fallthru
        _
      %p311 = scmp.le.s32.totalorder 1, %s20
      %p312 = scmp.lt.s32.totalorder %s20, 17
      %p313 = pnand %p311, %p312
      %p314 = pneg %p313
      // Predicated region
      $region37: #{sdc_forward.5} parent=5 // pred_check
        _
      $region38: #{sdc_forward.5} parent=5 // pred_check_branch
        %316 = sbr.rel (%p313) target = $region40
      $region39: #{sdc_forward.5} parent=5 // pred_region
        %s317 = ssub.s32 %s20, 1
        %p318 = scmp.lt.s32.totalorder %s29, 1
        %s319 = scalar_select %p318, %s29, 1
        %p320 = scmp.lt.s32.totalorder %s30, 9
        %s321 = scalar_select %p320, %s30, 9
        %s322 = smul.addr %s321, 14
        %s323 = smul.addr %s319, 140
        %s324 = sadd.s32 %s322, %s323
        %s325 = smul.addr %s324, 8
        %s326 = scalar_lea.vmem %s0, %s325
        %p327 = pneg %p60
        %p328 = pneg %p57
        %s329 = sadd.s32 %s30, 1
        %p330 = scmp.lt.s32.totalorder %s29, 1
        %s331 = scalar_select %p330, %s29, 1
        %p332 = scmp.lt.s32.totalorder %s329, 9
        %s333 = scalar_select %p332, %s329, 9
        %s334 = smul.addr %s333, 14
        %s335 = smul.addr %s331, 140
        %s336 = sadd.s32 %s334, %s335
        %s337 = smul.addr %s336, 8
        %s338 = scalar_lea.vmem %s1, %s337
        %p339 = pneg %p90
        %p340 = pneg %p87
        %s341 = sadd.s32 %s30, 2
        %p342 = scmp.lt.s32.totalorder %s29, 1
        %s343 = scalar_select %p342, %s29, 1
        %p344 = scmp.lt.s32.totalorder %s341, 9
        %s345 = scalar_select %p344, %s341, 9
        %s346 = smul.addr %s345, 14
        %s347 = smul.addr %s343, 140
        %s348 = sadd.s32 %s346, %s347
        %s349 = smul.addr %s348, 8
        %s350 = scalar_lea.vmem %s2, %s349
        %p351 = pneg %p120
        %p352 = pneg %p117
        %p353 = pneg %p141
        %p354 = pneg %p138
        %p355 = pneg %p162
        %p356 = pneg %p159
        %p357 = pneg %p190
        %p358 = pneg %p187
        %p359 = scmp.lt.s32.totalorder %s29, 1
        %s360 = scalar_select %p359, %s29, 1
        %p361 = scmp.lt.s32.totalorder %s30, 7
        %s362 = scalar_select %p361, %s30, 7
        %s363 = smul.addr %s362, 10
        %s364 = smul.addr %s360, 80
        %s365 = sadd.s32 %s363, %s364
        %s366 = smul.addr %s365, 8
        %s367 = scalar_lea.vmem %s5, %s366
        %p368 = pneg %p218
        %p369 = pneg %p215
        %s370 = sand.u32 %s205, 1
        %s371 = scalar_lea.sflag [#allocation3], %s370
        %s372 = sand.u32 %s205, 1
        %s373 = scalar_lea.vmem [#allocation2], %s372
        %p374 = pneg %p246
        %p375 = pneg %p243
        %s376 = sand.u32 %s233, 1
        %s377 = scalar_lea.sflag [#allocation5], %s376
        %s378 = sand.u32 %s233, 1
        %s379 = scalar_lea.vmem [#allocation4], %s378
        %p380 = scmp.lt.s32.totalorder %s29, 1
        %s381 = scalar_select %p380, %s29, 1
        %p382 = scmp.lt.s32.totalorder %s30, 9
        %s383 = scalar_select %p382, %s30, 9
        %s384 = smul.addr %s383, 14
        %s385 = smul.addr %s381, 140
        %s386 = sadd.s32 %s384, %s385
        %s387 = smul.addr %s386, 8
        %s388 = scalar_lea.vmem %s0, %s387
        %s389 = sadd.s32 %s30, 1
        %p390 = scmp.lt.s32.totalorder %s29, 1
        %s391 = scalar_select %p390, %s29, 1
        %p392 = scmp.lt.s32.totalorder %s389, 9
        %s393 = scalar_select %p392, %s389, 9
        %s394 = smul.addr %s393, 14
        %s395 = smul.addr %s391, 140
        %s396 = sadd.s32 %s394, %s395
        %s397 = smul.addr %s396, 8
        %s398 = scalar_lea.vmem %s1, %s397
        %s399 = sadd.s32 %s30, 1
        %s400 = sadd.s32 %s30, 2
        %p401 = scmp.lt.s32.totalorder %s29, 1
        %s402 = scalar_select %p401, %s29, 1
        %p403 = scmp.lt.s32.totalorder %s400, 9
        %s404 = scalar_select %p403, %s400, 9
        %s405 = smul.addr %s404, 14
        %s406 = smul.addr %s402, 140
        %s407 = sadd.s32 %s405, %s406
        %s408 = smul.addr %s407, 8
        %s409 = scalar_lea.vmem %s2, %s408
        %s410 = sadd.s32 %s30, 2
        %p411 = scmp.lt.s32.totalorder %s29, 1
        %s412 = scalar_select %p411, %s29, 1
        %p413 = scmp.lt.s32.totalorder %s30, 7
        %s414 = scalar_select %p413, %s30, 7
        %s415 = smul.addr %s414, 10
        %s416 = smul.addr %s412, 80
        %s417 = sadd.s32 %s415, %s416
        %s418 = smul.addr %s417, 8
        %s419 = scalar_lea.vmem %s5, %s418
        %v420 = vld [vmem:[%s388] sm:$0xff]
        %v421 = vld [vmem:[%s388 + $0x8] sm:$0xff]
        %v422 = vld [vmem:[%s388 + $0x10] sm:$0xff]
        %v423 = vld [vmem:[%s388 + $0x18] sm:$0xff]
        %v424 = vld [vmem:[%s388 + $0x20] sm:$0xff]
        %v425 = vld [vmem:[%s388 + $0x28] sm:$0xff]
        %v426 = vld [vmem:[%s388 + $0x30] sm:$0xff]
        %v427 = vld [vmem:[%s388 + $0x38] sm:$0xff]
        %v428 = vld [vmem:[%s388 + $0x40] sm:$0xff]
        %v429 = vld [vmem:[%s388 + $0x48] sm:$0xff]
        %v430 = vld [vmem:[%s388 + $0x50] sm:$0xff]
        %v431 = vld [vmem:[%s388 + $0x58] sm:$0xff]
        %v432 = vld [vmem:[%s388 + $0x60] sm:$0xff]
        %v433 = vld [vmem:[%s3] sm:$0xf]
        %s434 = scalar_lea.vmem %s3, 4
        %v435 = vld [vmem:[%s434] sm:$0xf]
        %vm447 = vcmask 1046528
        %v448 = vrot.slane %v420, 1
        %v449 = vrot.slane %v421, 1
        %v450 = vsel %vm447, %v448, %v449
        %v451 = vrot.slane %v422, 1
        %v452 = vsel %vm447, %v449, %v451
        %v453 = vrot.slane %v423, 1
        %v454 = vsel %vm447, %v451, %v453
        %v455 = vrot.slane %v424, 1
        %v456 = vsel %vm447, %v453, %v455
        %v457 = vrot.slane %v425, 1
        %v458 = vsel %vm447, %v455, %v457
        %v459 = vrot.slane %v426, 1
        %v460 = vsel %vm447, %v457, %v459
        %v461 = vrot.slane %v427, 1
        %v462 = vsel %vm447, %v459, %v461
        %v463 = vrot.slane %v428, 1
        %v464 = vsel %vm447, %v461, %v463
        %v465 = vrot.slane %v429, 1
        %v466 = vsel %vm447, %v463, %v465
        %v467 = vrot.slane %v430, 1
        %v468 = vsel %vm447, %v465, %v467
        %vm469 = vcmask 31744
        %v470 = vsel %vm469, %v450, 0
        %v472 = vsel %vm469, %v452, 0
        %v474 = vsel %vm469, %v454, 0
        %v476 = vsel %vm469, %v456, 0
        %v478 = vsel %vm469, %v458, 0
        %v480 = vsel %vm469, %v460, 0
        %v482 = vsel %vm469, %v462, 0
        %v484 = vsel %vm469, %v464, 0
        %v486 = vsel %vm469, %v466, 0
        %v488 = vsel %vm469, %v468, 0
        %vm490 = vcmask 1043456
        %v492 = vsel %vm490, %v435, 0
        %494 = vmatpush.msra.mxu0 0.0
        %495 = vmatpush.msra.mxu0 0.0
        %496 = vmatpush.msra.mxu0 0.0
        %497 = vmatpush.msra.mxu0 0.0
        %498 = vmatpush.msra.mxu0 0.0
        %499 = vmatpush.msra.mxu0 0.0
        %500 = vmatpush.msra.mxu0 0.0
        %501 = vmatpush.msra.mxu0 0.0
        %502 = vmatpush.msra.mxu0 0.0
        %503 = vmatpush.msra.mxu0 0.0
        %504 = vmatpush.msra.mxu0 0.0
        %505 = vmatpush.msra.mxu0 0.0
        %506 = vmatpush.msra.mxu0 0.0
        %507 = vmatpush.msra.mxu0 0.0
        %508 = vmatpush.msra.mxu0 0.0
        %509 = vmatpush.msra.mxu0 %v492
        %510 = vmatmul.f32.gmra.mxu0 %v470
        %v511 = vpop.f32.mrf.mxu0
        %v512 = vadd.f32 0.0, %v511
        %513 = vmatmul.f32.gmra.mxu0 %v472
        %v514 = vpop.f32.mrf.mxu0
        %v515 = vadd.f32 0.0, %v514
        %516 = vmatmul.f32.gmra.mxu0 %v474
        %v517 = vpop.f32.mrf.mxu0
        %v518 = vadd.f32 0.0, %v517
        %519 = vmatmul.f32.gmra.mxu0 %v476
        %v520 = vpop.f32.mrf.mxu0
        %v521 = vadd.f32 0.0, %v520
        %522 = vmatmul.f32.gmra.mxu0 %v478
        %v523 = vpop.f32.mrf.mxu0
        %v524 = vadd.f32 0.0, %v523
        %525 = vmatmul.f32.gmra.mxu0 %v480
        %v526 = vpop.f32.mrf.mxu0
        %v527 = vadd.f32 0.0, %v526
        %528 = vmatmul.f32.gmra.mxu0 %v482
        %v529 = vpop.f32.mrf.mxu0
        %v530 = vadd.f32 0.0, %v529
        %531 = vmatmul.f32.gmra.mxu0 %v484
        %v532 = vpop.f32.mrf.mxu0
        %v533 = vadd.f32 0.0, %v532
        %534 = vmatmul.f32.gmra.mxu0 %v486
        %v535 = vpop.f32.mrf.mxu0
        %v536 = vadd.f32 0.0, %v535
        %537 = vmatmul.f32.gmra.mxu0 %v488
        %v538 = vpop.f32.mrf.mxu0
        %v539 = vadd.f32 0.0, %v538
        %540 = vdwg.mxu0
        %v541 = vsel %vm469, %v420, 0
        %v543 = vsel %vm469, %v421, 0
        %v545 = vsel %vm469, %v422, 0
        %v547 = vsel %vm469, %v423, 0
        %v549 = vsel %vm469, %v424, 0
        %v551 = vsel %vm469, %v425, 0
        %v553 = vsel %vm469, %v426, 0
        %v555 = vsel %vm469, %v427, 0
        %v557 = vsel %vm469, %v428, 0
        %v559 = vsel %vm469, %v429, 0
        %v562 = vsel %vm490, %v433, 0
        %564 = vmatpush.msra.mxu0 0.0
        %565 = vmatpush.msra.mxu0 0.0
        %566 = vmatpush.msra.mxu0 0.0
        %567 = vmatpush.msra.mxu0 0.0
        %568 = vmatpush.msra.mxu0 0.0
        %569 = vmatpush.msra.mxu0 0.0
        %570 = vmatpush.msra.mxu0 0.0
        %571 = vmatpush.msra.mxu0 0.0
        %572 = vmatpush.msra.mxu0 0.0
        %573 = vmatpush.msra.mxu0 0.0
        %574 = vmatpush.msra.mxu0 0.0
        %575 = vmatpush.msra.mxu0 0.0
        %576 = vmatpush.msra.mxu0 0.0
        %577 = vmatpush.msra.mxu0 0.0
        %578 = vmatpush.msra.mxu0 0.0
        %579 = vmatpush.msra.mxu0 %v562
        %580 = vmatmul.f32.gmra.mxu0 %v541
        %v581 = vpop.f32.mrf.mxu0
        %v582 = vadd.f32 %v512, %v581
        %583 = vmatmul.f32.gmra.mxu0 %v543
        %v584 = vpop.f32.mrf.mxu0
        %v585 = vadd.f32 %v515, %v584
        %586 = vmatmul.f32.gmra.mxu0 %v545
        %v587 = vpop.f32.mrf.mxu0
        %v588 = vadd.f32 %v518, %v587
        %589 = vmatmul.f32.gmra.mxu0 %v547
        %v590 = vpop.f32.mrf.mxu0
        %v591 = vadd.f32 %v521, %v590
        %592 = vmatmul.f32.gmra.mxu0 %v549
        %v593 = vpop.f32.mrf.mxu0
        %v594 = vadd.f32 %v524, %v593
        %595 = vmatmul.f32.gmra.mxu0 %v551
        %v596 = vpop.f32.mrf.mxu0
        %v597 = vadd.f32 %v527, %v596
        %598 = vmatmul.f32.gmra.mxu0 %v553
        %v599 = vpop.f32.mrf.mxu0
        %v600 = vadd.f32 %v530, %v599
        %601 = vmatmul.f32.gmra.mxu0 %v555
        %v602 = vpop.f32.mrf.mxu0
        %v603 = vadd.f32 %v533, %v602
        %604 = vmatmul.f32.gmra.mxu0 %v557
        %v605 = vpop.f32.mrf.mxu0
        %v606 = vadd.f32 %v536, %v605
        %607 = vmatmul.f32.gmra.mxu0 %v559
        %v608 = vpop.f32.mrf.mxu0
        %v609 = vadd.f32 %v539, %v608
        %610 = vdwg.mxu0
        %s611 = scalar_lea.vmem %s3, 8
        %v612 = vld [vmem:[%s611] sm:$0xf]
        %vm613 = vcmask 1045504
        %v614 = vrot.slane %v420, 2
        %v615 = vrot.slane %v421, 2
        %v616 = vsel %vm613, %v614, %v615
        %v617 = vrot.slane %v422, 2
        %v618 = vsel %vm613, %v615, %v617
        %v619 = vrot.slane %v423, 2
        %v620 = vsel %vm613, %v617, %v619
        %v621 = vrot.slane %v424, 2
        %v622 = vsel %vm613, %v619, %v621
        %v623 = vrot.slane %v425, 2
        %v624 = vsel %vm613, %v621, %v623
        %v625 = vrot.slane %v426, 2
        %v626 = vsel %vm613, %v623, %v625
        %v627 = vrot.slane %v427, 2
        %v628 = vsel %vm613, %v625, %v627
        %v629 = vrot.slane %v428, 2
        %v630 = vsel %vm613, %v627, %v629
        %v631 = vrot.slane %v429, 2
        %v632 = vsel %vm613, %v629, %v631
        %v633 = vrot.slane %v430, 2
        %v634 = vsel %vm613, %v631, %v633
        %v635 = vsel %vm469, %v616, 0
        %v637 = vsel %vm469, %v618, 0
        %v639 = vsel %vm469, %v620, 0
        %v641 = vsel %vm469, %v622, 0
        %v643 = vsel %vm469, %v624, 0
        %v645 = vsel %vm469, %v626, 0
        %v647 = vsel %vm469, %v628, 0
        %v649 = vsel %vm469, %v630, 0
        %v651 = vsel %vm469, %v632, 0
        %v653 = vsel %vm469, %v634, 0
        %v656 = vsel %vm490, %v612, 0
        %658 = vmatpush.msra.mxu0 0.0
        %659 = vmatpush.msra.mxu0 0.0
        %660 = vmatpush.msra.mxu0 0.0
        %661 = vmatpush.msra.mxu0 0.0
        %662 = vmatpush.msra.mxu0 0.0
        %663 = vmatpush.msra.mxu0 0.0
        %664 = vmatpush.msra.mxu0 0.0
        %665 = vmatpush.msra.mxu0 0.0
        %666 = vmatpush.msra.mxu0 0.0
        %667 = vmatpush.msra.mxu0 0.0
        %668 = vmatpush.msra.mxu0 0.0
        %669 = vmatpush.msra.mxu0 0.0
        %670 = vmatpush.msra.mxu0 0.0
        %671 = vmatpush.msra.mxu0 0.0
        %672 = vmatpush.msra.mxu0 0.0
        %673 = vmatpush.msra.mxu0 %v656
        %674 = vmatmul.f32.gmra.mxu0 %v635
        %v675 = vpop.f32.mrf.mxu0
        %v676 = vadd.f32 0.0, %v675
        %677 = vmatmul.f32.gmra.mxu0 %v637
        %v678 = vpop.f32.mrf.mxu0
        %v679 = vadd.f32 0.0, %v678
        %680 = vmatmul.f32.gmra.mxu0 %v639
        %v681 = vpop.f32.mrf.mxu0
        %v682 = vadd.f32 0.0, %v681
        %683 = vmatmul.f32.gmra.mxu0 %v641
        %v684 = vpop.f32.mrf.mxu0
        %v685 = vadd.f32 0.0, %v684
        %686 = vmatmul.f32.gmra.mxu0 %v643
        %v687 = vpop.f32.mrf.mxu0
        %v688 = vadd.f32 0.0, %v687
        %689 = vmatmul.f32.gmra.mxu0 %v645
        %v690 = vpop.f32.mrf.mxu0
        %v691 = vadd.f32 0.0, %v690
        %692 = vmatmul.f32.gmra.mxu0 %v647
        %v693 = vpop.f32.mrf.mxu0
        %v694 = vadd.f32 0.0, %v693
        %695 = vmatmul.f32.gmra.mxu0 %v649
        %v696 = vpop.f32.mrf.mxu0
        %v697 = vadd.f32 0.0, %v696
        %698 = vmatmul.f32.gmra.mxu0 %v651
        %v699 = vpop.f32.mrf.mxu0
        %v700 = vadd.f32 0.0, %v699
        %701 = vmatmul.f32.gmra.mxu0 %v653
        %v702 = vpop.f32.mrf.mxu0
        %v703 = vadd.f32 0.0, %v702
        %704 = vdwg.mxu0
        %v705 = vadd.f32 %v582, %v676
        %v706 = vadd.f32 %v585, %v679
        %v707 = vadd.f32 %v588, %v682
        %v708 = vadd.f32 %v591, %v685
        %v709 = vadd.f32 %v594, %v688
        %v710 = vadd.f32 %v597, %v691
        %v711 = vadd.f32 %v600, %v694
        %v712 = vadd.f32 %v603, %v697
        %v713 = vadd.f32 %v606, %v700
        %v714 = vadd.f32 %v609, %v703
        %s715 = scalar_lea.vmem %s3, 12
        %v716 = vld [vmem:[%s715] sm:$0xf]
        %v718 = vrot.slane %v431, 2
        %v719 = vsel %vm613, %v633, %v718
        %v720 = vsel %vm469, %v719, 0
        %v723 = vsel %vm490, %v716, 0
        %725 = vmatpush.msra.mxu0 0.0
        %726 = vmatpush.msra.mxu0 0.0
        %727 = vmatpush.msra.mxu0 0.0
        %728 = vmatpush.msra.mxu0 0.0
        %729 = vmatpush.msra.mxu0 0.0
        %730 = vmatpush.msra.mxu0 0.0
        %731 = vmatpush.msra.mxu0 0.0
        %732 = vmatpush.msra.mxu0 0.0
        %733 = vmatpush.msra.mxu0 0.0
        %734 = vmatpush.msra.mxu0 0.0
        %735 = vmatpush.msra.mxu0 0.0
        %736 = vmatpush.msra.mxu0 0.0
        %737 = vmatpush.msra.mxu0 0.0
        %738 = vmatpush.msra.mxu0 0.0
        %739 = vmatpush.msra.mxu0 0.0
        %740 = vmatpush.msra.mxu0 %v723
        %741 = vmatmul.f32.gmra.mxu0 %v637
        %v742 = vpop.f32.mrf.mxu0
        %v743 = vadd.f32 0.0, %v742
        %744 = vmatmul.f32.gmra.mxu0 %v639
        %v745 = vpop.f32.mrf.mxu0
        %v746 = vadd.f32 0.0, %v745
        %747 = vmatmul.f32.gmra.mxu0 %v641
        %v748 = vpop.f32.mrf.mxu0
        %v749 = vadd.f32 0.0, %v748
        %750 = vmatmul.f32.gmra.mxu0 %v643
        %v751 = vpop.f32.mrf.mxu0
        %v752 = vadd.f32 0.0, %v751
        %753 = vmatmul.f32.gmra.mxu0 %v645
        %v754 = vpop.f32.mrf.mxu0
        %v755 = vadd.f32 0.0, %v754
        %756 = vmatmul.f32.gmra.mxu0 %v647
        %v757 = vpop.f32.mrf.mxu0
        %v758 = vadd.f32 0.0, %v757
        %759 = vmatmul.f32.gmra.mxu0 %v649
        %v760 = vpop.f32.mrf.mxu0
        %v761 = vadd.f32 0.0, %v760
        %762 = vmatmul.f32.gmra.mxu0 %v651
        %v763 = vpop.f32.mrf.mxu0
        %v764 = vadd.f32 0.0, %v763
        %765 = vmatmul.f32.gmra.mxu0 %v653
        %v766 = vpop.f32.mrf.mxu0
        %v767 = vadd.f32 0.0, %v766
        %768 = vmatmul.f32.gmra.mxu0 %v720
        %v769 = vpop.f32.mrf.mxu0
        %v770 = vadd.f32 0.0, %v769
        %771 = vdwg.mxu0
        %v772 = vadd.f32 %v705, %v743
        %v773 = vadd.f32 %v706, %v746
        %v774 = vadd.f32 %v707, %v749
        %v775 = vadd.f32 %v708, %v752
        %v776 = vadd.f32 %v709, %v755
        %v777 = vadd.f32 %v710, %v758
        %v778 = vadd.f32 %v711, %v761
        %v779 = vadd.f32 %v712, %v764
        %v780 = vadd.f32 %v713, %v767
        %v781 = vadd.f32 %v714, %v770
        %s782 = scalar_lea.vmem %s3, 16
        %v783 = vld [vmem:[%s782] sm:$0xf]
        %vm784 = vcmask 1044480
        %v785 = vrot.slane %v421, 3
        %v786 = vrot.slane %v422, 3
        %v787 = vsel %vm784, %v785, %v786
        %v788 = vrot.slane %v423, 3
        %v789 = vsel %vm784, %v786, %v788
        %v790 = vrot.slane %v424, 3
        %v791 = vsel %vm784, %v788, %v790
        %v792 = vrot.slane %v425, 3
        %v793 = vsel %vm784, %v790, %v792
        %v794 = vrot.slane %v426, 3
        %v795 = vsel %vm784, %v792, %v794
        %v796 = vrot.slane %v427, 3
        %v797 = vsel %vm784, %v794, %v796
        %v798 = vrot.slane %v428, 3
        %v799 = vsel %vm784, %v796, %v798
        %v800 = vrot.slane %v429, 3
        %v801 = vsel %vm784, %v798, %v800
        %v802 = vrot.slane %v430, 3
        %v803 = vsel %vm784, %v800, %v802
        %v804 = vrot.slane %v431, 3
        %v805 = vsel %vm784, %v802, %v804
        %v806 = vsel %vm469, %v787, 0
        %v808 = vsel %vm469, %v789, 0
        %v810 = vsel %vm469, %v791, 0
        %v812 = vsel %vm469, %v793, 0
        %v814 = vsel %vm469, %v795, 0
        %v816 = vsel %vm469, %v797, 0
        %v818 = vsel %vm469, %v799, 0
        %v820 = vsel %vm469, %v801, 0
        %v822 = vsel %vm469, %v803, 0
        %v824 = vsel %vm469, %v805, 0
        %v827 = vsel %vm490, %v783, 0
        %829 = vmatpush.msra.mxu0 0.0
        %830 = vmatpush.msra.mxu0 0.0
        %831 = vmatpush.msra.mxu0 0.0
        %832 = vmatpush.msra.mxu0 0.0
        %833 = vmatpush.msra.mxu0 0.0
        %834 = vmatpush.msra.mxu0 0.0
        %835 = vmatpush.msra.mxu0 0.0
        %836 = vmatpush.msra.mxu0 0.0
        %837 = vmatpush.msra.mxu0 0.0
        %838 = vmatpush.msra.mxu0 0.0
        %839 = vmatpush.msra.mxu0 0.0
        %840 = vmatpush.msra.mxu0 0.0
        %841 = vmatpush.msra.mxu0 0.0
        %842 = vmatpush.msra.mxu0 0.0
        %843 = vmatpush.msra.mxu0 0.0
        %844 = vmatpush.msra.mxu0 %v827
        %845 = vmatmul.f32.gmra.mxu0 %v806
        %v846 = vpop.f32.mrf.mxu0
        %v847 = vadd.f32 0.0, %v846
        %848 = vmatmul.f32.gmra.mxu0 %v808
        %v849 = vpop.f32.mrf.mxu0
        %v850 = vadd.f32 0.0, %v849
        %851 = vmatmul.f32.gmra.mxu0 %v810
        %v852 = vpop.f32.mrf.mxu0
        %v853 = vadd.f32 0.0, %v852
        %854 = vmatmul.f32.gmra.mxu0 %v812
        %v855 = vpop.f32.mrf.mxu0
        %v856 = vadd.f32 0.0, %v855
        %857 = vmatmul.f32.gmra.mxu0 %v814
        %v858 = vpop.f32.mrf.mxu0
        %v859 = vadd.f32 0.0, %v858
        %860 = vmatmul.f32.gmra.mxu0 %v816
        %v861 = vpop.f32.mrf.mxu0
        %v862 = vadd.f32 0.0, %v861
        %863 = vmatmul.f32.gmra.mxu0 %v818
        %v864 = vpop.f32.mrf.mxu0
        %v865 = vadd.f32 0.0, %v864
        %866 = vmatmul.f32.gmra.mxu0 %v820
        %v867 = vpop.f32.mrf.mxu0
        %v868 = vadd.f32 0.0, %v867
        %869 = vmatmul.f32.gmra.mxu0 %v822
        %v870 = vpop.f32.mrf.mxu0
        %v871 = vadd.f32 0.0, %v870
        %872 = vmatmul.f32.gmra.mxu0 %v824
        %v873 = vpop.f32.mrf.mxu0
        %v874 = vadd.f32 0.0, %v873
        %875 = vdwg.mxu0
        %v876 = vadd.f32 %v772, %v847
        %v877 = vadd.f32 %v773, %v850
        %v878 = vadd.f32 %v774, %v853
        %v879 = vadd.f32 %v775, %v856
        %v880 = vadd.f32 %v776, %v859
        %v881 = vadd.f32 %v777, %v862
        %v882 = vadd.f32 %v778, %v865
        %v883 = vadd.f32 %v779, %v868
        %v884 = vadd.f32 %v780, %v871
        %v885 = vadd.f32 %v781, %v874
        %s886 = scalar_lea.vmem %s3, 20
        %v887 = vld [vmem:[%s886] sm:$0xf]
        %v888 = vrot.slane %v421, 4
        %v889 = vrot.slane %v422, 4
        %v890 = vsel %vm490, %v888, %v889
        %v891 = vrot.slane %v423, 4
        %v892 = vsel %vm490, %v889, %v891
        %v893 = vrot.slane %v424, 4
        %v894 = vsel %vm490, %v891, %v893
        %v895 = vrot.slane %v425, 4
        %v896 = vsel %vm490, %v893, %v895
        %v897 = vrot.slane %v426, 4
        %v898 = vsel %vm490, %v895, %v897
        %v899 = vrot.slane %v427, 4
        %v900 = vsel %vm490, %v897, %v899
        %v901 = vrot.slane %v428, 4
        %v902 = vsel %vm490, %v899, %v901
        %v903 = vrot.slane %v429, 4
        %v904 = vsel %vm490, %v901, %v903
        %v905 = vrot.slane %v430, 4
        %v906 = vsel %vm490, %v903, %v905
        %v907 = vrot.slane %v431, 4
        %v908 = vsel %vm490, %v905, %v907
        %v909 = vsel %vm469, %v890, 0
        %v911 = vsel %vm469, %v892, 0
        %v913 = vsel %vm469, %v894, 0
        %v915 = vsel %vm469, %v896, 0
        %v917 = vsel %vm469, %v898, 0
        %v919 = vsel %vm469, %v900, 0
        %v921 = vsel %vm469, %v902, 0
        %v923 = vsel %vm469, %v904, 0
        %v925 = vsel %vm469, %v906, 0
        %v927 = vsel %vm469, %v908, 0
        %v930 = vsel %vm490, %v887, 0
        %932 = vmatpush.msra.mxu0 0.0
        %933 = vmatpush.msra.mxu0 0.0
        %934 = vmatpush.msra.mxu0 0.0
        %935 = vmatpush.msra.mxu0 0.0
        %936 = vmatpush.msra.mxu0 0.0
        %937 = vmatpush.msra.mxu0 0.0
        %938 = vmatpush.msra.mxu0 0.0
        %939 = vmatpush.msra.mxu0 0.0
        %940 = vmatpush.msra.mxu0 0.0
        %941 = vmatpush.msra.mxu0 0.0
        %942 = vmatpush.msra.mxu0 0.0
        %943 = vmatpush.msra.mxu0 0.0
        %944 = vmatpush.msra.mxu0 0.0
        %945 = vmatpush.msra.mxu0 0.0
        %946 = vmatpush.msra.mxu0 0.0
        %947 = vmatpush.msra.mxu0 %v930
        %948 = vmatmul.f32.gmra.mxu0 %v909
        %v949 = vpop.f32.mrf.mxu0
        %v950 = vadd.f32 0.0, %v949
        %951 = vmatmul.f32.gmra.mxu0 %v911
        %v952 = vpop.f32.mrf.mxu0
        %v953 = vadd.f32 0.0, %v952
        %954 = vmatmul.f32.gmra.mxu0 %v913
        %v955 = vpop.f32.mrf.mxu0
        %v956 = vadd.f32 0.0, %v955
        %957 = vmatmul.f32.gmra.mxu0 %v915
        %v958 = vpop.f32.mrf.mxu0
        %v959 = vadd.f32 0.0, %v958
        %960 = vmatmul.f32.gmra.mxu0 %v917
        %v961 = vpop.f32.mrf.mxu0
        %v962 = vadd.f32 0.0, %v961
        %963 = vmatmul.f32.gmra.mxu0 %v919
        %v964 = vpop.f32.mrf.mxu0
        %v965 = vadd.f32 0.0, %v964
        %966 = vmatmul.f32.gmra.mxu0 %v921
        %v967 = vpop.f32.mrf.mxu0
        %v968 = vadd.f32 0.0, %v967
        %969 = vmatmul.f32.gmra.mxu0 %v923
        %v970 = vpop.f32.mrf.mxu0
        %v971 = vadd.f32 0.0, %v970
        %972 = vmatmul.f32.gmra.mxu0 %v925
        %v973 = vpop.f32.mrf.mxu0
        %v974 = vadd.f32 0.0, %v973
        %975 = vmatmul.f32.gmra.mxu0 %v927
        %v976 = vpop.f32.mrf.mxu0
        %v977 = vadd.f32 0.0, %v976
        %978 = vdwg.mxu0
        %v979 = vadd.f32 %v876, %v950
        %v980 = vadd.f32 %v877, %v953
        %v981 = vadd.f32 %v878, %v956
        %v982 = vadd.f32 %v879, %v959
        %v983 = vadd.f32 %v880, %v962
        %v984 = vadd.f32 %v881, %v965
        %v985 = vadd.f32 %v882, %v968
        %v986 = vadd.f32 %v883, %v971
        %v987 = vadd.f32 %v884, %v974
        %v988 = vadd.f32 %v885, %v977
        %s989 = scalar_lea.vmem %s3, 24
        %v990 = vld [vmem:[%s989] sm:$0xf]
        %v992 = vrot.slane %v432, 4
        %v993 = vsel %vm490, %v907, %v992
        %v994 = vsel %vm469, %v993, 0
        %v997 = vsel %vm490, %v990, 0
        %999 = vmatpush.msra.mxu0 0.0
        %1000 = vmatpush.msra.mxu0 0.0
        %1001 = vmatpush.msra.mxu0 0.0
        %1002 = vmatpush.msra.mxu0 0.0
        %1003 = vmatpush.msra.mxu0 0.0
        %1004 = vmatpush.msra.mxu0 0.0
        %1005 = vmatpush.msra.mxu0 0.0
        %1006 = vmatpush.msra.mxu0 0.0
        %1007 = vmatpush.msra.mxu0 0.0
        %1008 = vmatpush.msra.mxu0 0.0
        %1009 = vmatpush.msra.mxu0 0.0
        %1010 = vmatpush.msra.mxu0 0.0
        %1011 = vmatpush.msra.mxu0 0.0
        %1012 = vmatpush.msra.mxu0 0.0
        %1013 = vmatpush.msra.mxu0 0.0
        %1014 = vmatpush.msra.mxu0 %v997
        %1015 = vmatmul.f32.gmra.mxu0 %v911
        %v1016 = vpop.f32.mrf.mxu0
        %v1017 = vadd.f32 0.0, %v1016
        %1018 = vmatmul.f32.gmra.mxu0 %v913
        %v1019 = vpop.f32.mrf.mxu0
        %v1020 = vadd.f32 0.0, %v1019
        %1021 = vmatmul.f32.gmra.mxu0 %v915
        %v1022 = vpop.f32.mrf.mxu0
        %v1023 = vadd.f32 0.0, %v1022
        %1024 = vmatmul.f32.gmra.mxu0 %v917
        %v1025 = vpop.f32.mrf.mxu0
        %v1026 = vadd.f32 0.0, %v1025
        %1027 = vmatmul.f32.gmra.mxu0 %v919
        %v1028 = vpop.f32.mrf.mxu0
        %v1029 = vadd.f32 0.0, %v1028
        %1030 = vmatmul.f32.gmra.mxu0 %v921
        %v1031 = vpop.f32.mrf.mxu0
        %v1032 = vadd.f32 0.0, %v1031
        %1033 = vmatmul.f32.gmra.mxu0 %v923
        %v1034 = vpop.f32.mrf.mxu0
        %v1035 = vadd.f32 0.0, %v1034
        %1036 = vmatmul.f32.gmra.mxu0 %v925
        %v1037 = vpop.f32.mrf.mxu0
        %v1038 = vadd.f32 0.0, %v1037
        %1039 = vmatmul.f32.gmra.mxu0 %v927
        %v1040 = vpop.f32.mrf.mxu0
        %v1041 = vadd.f32 0.0, %v1040
        %1042 = vmatmul.f32.gmra.mxu0 %v994
        %v1043 = vpop.f32.mrf.mxu0
        %v1044 = vadd.f32 0.0, %v1043
        %1045 = vdwg.mxu0
        %v1046 = vadd.f32 %v979, %v1017
        %v1047 = vadd.f32 %v980, %v1020
        %v1048 = vadd.f32 %v981, %v1023
        %v1049 = vadd.f32 %v982, %v1026
        %v1050 = vadd.f32 %v983, %v1029
        %v1051 = vadd.f32 %v984, %v1032
        %v1052 = vadd.f32 %v985, %v1035
        %v1053 = vadd.f32 %v986, %v1038
        %v1054 = vadd.f32 %v987, %v1041
        %v1055 = vadd.f32 %v988, %v1044
        %s1056 = scalar_lea.vmem %s3, 28
        %v1057 = vld [vmem:[%s1056] sm:$0xf]
        %vm1058 = vcmask 1042432
        %v1059 = vrot.slane %v422, 5
        %v1060 = vrot.slane %v423, 5
        %v1061 = vsel %vm1058, %v1059, %v1060
        %v1062 = vrot.slane %v424, 5
        %v1063 = vsel %vm1058, %v1060, %v1062
        %v1064 = vrot.slane %v425, 5
        %v1065 = vsel %vm1058, %v1062, %v1064
        %v1066 = vrot.slane %v426, 5
        %v1067 = vsel %vm1058, %v1064, %v1066
        %v1068 = vrot.slane %v427, 5
        %v1069 = vsel %vm1058, %v1066, %v1068
        %v1070 = vrot.slane %v428, 5
        %v1071 = vsel %vm1058, %v1068, %v1070
        %v1072 = vrot.slane %v429, 5
        %v1073 = vsel %vm1058, %v1070, %v1072
        %v1074 = vrot.slane %v430, 5
        %v1075 = vsel %vm1058, %v1072, %v1074
        %v1076 = vrot.slane %v431, 5
        %v1077 = vsel %vm1058, %v1074, %v1076
        %v1078 = vrot.slane %v432, 5
        %v1079 = vsel %vm1058, %v1076, %v1078
        %v1080 = vsel %vm469, %v1061, 0
        %v1082 = vsel %vm469, %v1063, 0
        %v1084 = vsel %vm469, %v1065, 0
        %v1086 = vsel %vm469, %v1067, 0
        %v1088 = vsel %vm469, %v1069, 0
        %v1090 = vsel %vm469, %v1071, 0
        %v1092 = vsel %vm469, %v1073, 0
        %v1094 = vsel %vm469, %v1075, 0
        %v1096 = vsel %vm469, %v1077, 0
        %v1098 = vsel %vm469, %v1079, 0
        %v1101 = vsel %vm490, %v1057, 0
        %1103 = vmatpush.msra.mxu0 0.0
        %1104 = vmatpush.msra.mxu0 0.0
        %1105 = vmatpush.msra.mxu0 0.0
        %1106 = vmatpush.msra.mxu0 0.0
        %1107 = vmatpush.msra.mxu0 0.0
        %1108 = vmatpush.msra.mxu0 0.0
        %1109 = vmatpush.msra.mxu0 0.0
        %1110 = vmatpush.msra.mxu0 0.0
        %1111 = vmatpush.msra.mxu0 0.0
        %1112 = vmatpush.msra.mxu0 0.0
        %1113 = vmatpush.msra.mxu0 0.0
        %1114 = vmatpush.msra.mxu0 0.0
        %1115 = vmatpush.msra.mxu0 0.0
        %1116 = vmatpush.msra.mxu0 0.0
        %1117 = vmatpush.msra.mxu0 0.0
        %1118 = vmatpush.msra.mxu0 %v1101
        %1119 = vmatmul.f32.gmra.mxu0 %v1080
        %v1120 = vpop.f32.mrf.mxu0
        %v1121 = vadd.f32 0.0, %v1120
        %1122 = vmatmul.f32.gmra.mxu0 %v1082
        %v1123 = vpop.f32.mrf.mxu0
        %v1124 = vadd.f32 0.0, %v1123
        %1125 = vmatmul.f32.gmra.mxu0 %v1084
        %v1126 = vpop.f32.mrf.mxu0
        %v1127 = vadd.f32 0.0, %v1126
        %1128 = vmatmul.f32.gmra.mxu0 %v1086
        %v1129 = vpop.f32.mrf.mxu0
        %v1130 = vadd.f32 0.0, %v1129
        %1131 = vmatmul.f32.gmra.mxu0 %v1088
        %v1132 = vpop.f32.mrf.mxu0
        %v1133 = vadd.f32 0.0, %v1132
        %1134 = vmatmul.f32.gmra.mxu0 %v1090
        %v1135 = vpop.f32.mrf.mxu0
        %v1136 = vadd.f32 0.0, %v1135
        %1137 = vmatmul.f32.gmra.mxu0 %v1092
        %v1138 = vpop.f32.mrf.mxu0
        %v1139 = vadd.f32 0.0, %v1138
        %1140 = vmatmul.f32.gmra.mxu0 %v1094
        %v1141 = vpop.f32.mrf.mxu0
        %v1142 = vadd.f32 0.0, %v1141
        %1143 = vmatmul.f32.gmra.mxu0 %v1096
        %v1144 = vpop.f32.mrf.mxu0
        %v1145 = vadd.f32 0.0, %v1144
        %1146 = vmatmul.f32.gmra.mxu0 %v1098
        %v1147 = vpop.f32.mrf.mxu0
        %v1148 = vadd.f32 0.0, %v1147
        %1149 = vdwg.mxu0
        %v1150 = vadd.f32 %v1046, %v1121
        %v1151 = vadd.f32 %v1047, %v1124
        %v1152 = vadd.f32 %v1048, %v1127
        %v1153 = vadd.f32 %v1049, %v1130
        %v1154 = vadd.f32 %v1050, %v1133
        %v1155 = vadd.f32 %v1051, %v1136
        %v1156 = vadd.f32 %v1052, %v1139
        %v1157 = vadd.f32 %v1053, %v1142
        %v1158 = vadd.f32 %v1054, %v1145
        %v1159 = vadd.f32 %v1055, %v1148
        %s1160 = scalar_lea.vmem %s3, 32
        %v1161 = vld [vmem:[%s1160] sm:$0xf]
        %vm1162 = vcmask 1041408
        %v1163 = vrot.slane %v422, 6
        %v1164 = vrot.slane %v423, 6
        %v1165 = vsel %vm1162, %v1163, %v1164
        %v1166 = vrot.slane %v424, 6
        %v1167 = vsel %vm1162, %v1164, %v1166
        %v1168 = vrot.slane %v425, 6
        %v1169 = vsel %vm1162, %v1166, %v1168
        %v1170 = vrot.slane %v426, 6
        %v1171 = vsel %vm1162, %v1168, %v1170
        %v1172 = vrot.slane %v427, 6
        %v1173 = vsel %vm1162, %v1170, %v1172
        %v1174 = vrot.slane %v428, 6
        %v1175 = vsel %vm1162, %v1172, %v1174
        %v1176 = vrot.slane %v429, 6
        %v1177 = vsel %vm1162, %v1174, %v1176
        %v1178 = vrot.slane %v430, 6
        %v1179 = vsel %vm1162, %v1176, %v1178
        %v1180 = vrot.slane %v431, 6
        %v1181 = vsel %vm1162, %v1178, %v1180
        %v1182 = vrot.slane %v432, 6
        %v1183 = vsel %vm1162, %v1180, %v1182
        %v1184 = vsel %vm469, %v1165, 0
        %v1186 = vsel %vm469, %v1167, 0
        %v1188 = vsel %vm469, %v1169, 0
        %v1190 = vsel %vm469, %v1171, 0
        %v1192 = vsel %vm469, %v1173, 0
        %v1194 = vsel %vm469, %v1175, 0
        %v1196 = vsel %vm469, %v1177, 0
        %v1198 = vsel %vm469, %v1179, 0
        %v1200 = vsel %vm469, %v1181, 0
        %v1202 = vsel %vm469, %v1183, 0
        %v1205 = vsel %vm490, %v1161, 0
        %1207 = vmatpush.msra.mxu0 0.0
        %1208 = vmatpush.msra.mxu0 0.0
        %1209 = vmatpush.msra.mxu0 0.0
        %1210 = vmatpush.msra.mxu0 0.0
        %1211 = vmatpush.msra.mxu0 0.0
        %1212 = vmatpush.msra.mxu0 0.0
        %1213 = vmatpush.msra.mxu0 0.0
        %1214 = vmatpush.msra.mxu0 0.0
        %1215 = vmatpush.msra.mxu0 0.0
        %1216 = vmatpush.msra.mxu0 0.0
        %1217 = vmatpush.msra.mxu0 0.0
        %1218 = vmatpush.msra.mxu0 0.0
        %1219 = vmatpush.msra.mxu0 0.0
        %1220 = vmatpush.msra.mxu0 0.0
        %1221 = vmatpush.msra.mxu0 0.0
        %1222 = vmatpush.msra.mxu0 %v1205
        %1223 = vmatmul.f32.gmra.mxu0 %v1184
        %v1224 = vpop.f32.mrf.mxu0
        %v1225 = vadd.f32 0.0, %v1224
        %1226 = vmatmul.f32.gmra.mxu0 %v1186
        %v1227 = vpop.f32.mrf.mxu0
        %v1228 = vadd.f32 0.0, %v1227
        %1229 = vmatmul.f32.gmra.mxu0 %v1188
        %v1230 = vpop.f32.mrf.mxu0
        %v1231 = vadd.f32 0.0, %v1230
        %1232 = vmatmul.f32.gmra.mxu0 %v1190
        %v1233 = vpop.f32.mrf.mxu0
        %v1234 = vadd.f32 0.0, %v1233
        %1235 = vmatmul.f32.gmra.mxu0 %v1192
        %v1236 = vpop.f32.mrf.mxu0
        %v1237 = vadd.f32 0.0, %v1236
        %1238 = vmatmul.f32.gmra.mxu0 %v1194
        %v1239 = vpop.f32.mrf.mxu0
        %v1240 = vadd.f32 0.0, %v1239
        %1241 = vmatmul.f32.gmra.mxu0 %v1196
        %v1242 = vpop.f32.mrf.mxu0
        %v1243 = vadd.f32 0.0, %v1242
        %1244 = vmatmul.f32.gmra.mxu0 %v1198
        %v1245 = vpop.f32.mrf.mxu0
        %v1246 = vadd.f32 0.0, %v1245
        %1247 = vmatmul.f32.gmra.mxu0 %v1200
        %v1248 = vpop.f32.mrf.mxu0
        %v1249 = vadd.f32 0.0, %v1248
        %1250 = vmatmul.f32.gmra.mxu0 %v1202
        %v1251 = vpop.f32.mrf.mxu0
        %v1252 = vadd.f32 0.0, %v1251
        %1253 = vdwg.mxu0
        %v1254 = vadd.f32 %v1150, %v1225
        %v1255 = vadd.f32 %v1151, %v1228
        %v1256 = vadd.f32 %v1152, %v1231
        %v1257 = vadd.f32 %v1153, %v1234
        %v1258 = vadd.f32 %v1154, %v1237
        %v1259 = vadd.f32 %v1155, %v1240
        %v1260 = vadd.f32 %v1156, %v1243
        %v1261 = vadd.f32 %v1157, %v1246
        %v1262 = vadd.f32 %v1158, %v1249
        %v1263 = vadd.f32 %v1159, %v1252
        %v1264 = vld [vmem:[%s398] sm:$0xff]
        %v1265 = vld [vmem:[%s398 + $0x8] sm:$0xff]
        %v1266 = vld [vmem:[%s398 + $0x10] sm:$0xff]
        %v1267 = vld [vmem:[%s398 + $0x18] sm:$0xff]
        %v1268 = vld [vmem:[%s398 + $0x20] sm:$0xff]
        %v1269 = vld [vmem:[%s398 + $0x28] sm:$0xff]
        %v1270 = vld [vmem:[%s398 + $0x30] sm:$0xff]
        %v1271 = vld [vmem:[%s398 + $0x38] sm:$0xff]
        %v1272 = vld [vmem:[%s398 + $0x40] sm:$0xff]
        %v1273 = vld [vmem:[%s398 + $0x48] sm:$0xff]
        %v1274 = vld [vmem:[%s398 + $0x50] sm:$0xff]
        %v1275 = vld [vmem:[%s398 + $0x58] sm:$0xff]
        %v1276 = vld [vmem:[%s398 + $0x60] sm:$0xff]
        %s1277 = scalar_lea.vmem %s3, 36
        %v1278 = vld [vmem:[%s1277] sm:$0xf]
        %v1280 = vsel %vm469, %v1264, 0
        %v1283 = vsel %vm469, %v1265, 0
        %v1286 = vsel %vm469, %v1266, 0
        %v1289 = vsel %vm469, %v1267, 0
        %v1292 = vsel %vm469, %v1268, 0
        %v1295 = vsel %vm469, %v1269, 0
        %v1298 = vsel %vm469, %v1270, 0
        %v1301 = vsel %vm469, %v1271, 0
        %v1304 = vsel %vm469, %v1272, 0
        %v1307 = vsel %vm469, %v1273, 0
        %v1310 = vsel %vm490, %v1278, 0
        %1312 = vmatpush.msra.mxu0 0.0
        %1313 = vmatpush.msra.mxu0 0.0
        %1314 = vmatpush.msra.mxu0 0.0
        %1315 = vmatpush.msra.mxu0 0.0
        %1316 = vmatpush.msra.mxu0 0.0
        %1317 = vmatpush.msra.mxu0 0.0
        %1318 = vmatpush.msra.mxu0 0.0
        %1319 = vmatpush.msra.mxu0 0.0
        %1320 = vmatpush.msra.mxu0 0.0
        %1321 = vmatpush.msra.mxu0 0.0
        %1322 = vmatpush.msra.mxu0 0.0
        %1323 = vmatpush.msra.mxu0 0.0
        %1324 = vmatpush.msra.mxu0 0.0
        %1325 = vmatpush.msra.mxu0 0.0
        %1326 = vmatpush.msra.mxu0 0.0
        %1327 = vmatpush.msra.mxu0 %v1310
        %1328 = vmatmul.f32.gmra.mxu0 %v1280
        %v1329 = vpop.f32.mrf.mxu0
        %v1330 = vadd.f32 0.0, %v1329
        %1331 = vmatmul.f32.gmra.mxu0 %v1283
        %v1332 = vpop.f32.mrf.mxu0
        %v1333 = vadd.f32 0.0, %v1332
        %1334 = vmatmul.f32.gmra.mxu0 %v1286
        %v1335 = vpop.f32.mrf.mxu0
        %v1336 = vadd.f32 0.0, %v1335
        %1337 = vmatmul.f32.gmra.mxu0 %v1289
        %v1338 = vpop.f32.mrf.mxu0
        %v1339 = vadd.f32 0.0, %v1338
        %1340 = vmatmul.f32.gmra.mxu0 %v1292
        %v1341 = vpop.f32.mrf.mxu0
        %v1342 = vadd.f32 0.0, %v1341
        %1343 = vmatmul.f32.gmra.mxu0 %v1295
        %v1344 = vpop.f32.mrf.mxu0
        %v1345 = vadd.f32 0.0, %v1344
        %1346 = vmatmul.f32.gmra.mxu0 %v1298
        %v1347 = vpop.f32.mrf.mxu0
        %v1348 = vadd.f32 0.0, %v1347
        %1349 = vmatmul.f32.gmra.mxu0 %v1301
        %v1350 = vpop.f32.mrf.mxu0
        %v1351 = vadd.f32 0.0, %v1350
        %1352 = vmatmul.f32.gmra.mxu0 %v1304
        %v1353 = vpop.f32.mrf.mxu0
        %v1354 = vadd.f32 0.0, %v1353
        %1355 = vmatmul.f32.gmra.mxu0 %v1307
        %v1356 = vpop.f32.mrf.mxu0
        %v1357 = vadd.f32 0.0, %v1356
        %1358 = vdwg.mxu0
        %v1359 = vadd.f32 %v1254, %v1330
        %v1360 = vadd.f32 %v1255, %v1333
        %v1361 = vadd.f32 %v1256, %v1336
        %v1362 = vadd.f32 %v1257, %v1339
        %v1363 = vadd.f32 %v1258, %v1342
        %v1364 = vadd.f32 %v1259, %v1345
        %v1365 = vadd.f32 %v1260, %v1348
        %v1366 = vadd.f32 %v1261, %v1351
        %v1367 = vadd.f32 %v1262, %v1354
        %v1368 = vadd.f32 %v1263, %v1357
        %s1369 = scalar_lea.vmem %s3, 40
        %v1370 = vld [vmem:[%s1369] sm:$0xf]
        %v1372 = vrot.slane %v1264, 1
        %v1373 = vrot.slane %v1265, 1
        %v1374 = vsel %vm447, %v1372, %v1373
        %v1375 = vrot.slane %v1266, 1
        %v1376 = vsel %vm447, %v1373, %v1375
        %v1377 = vrot.slane %v1267, 1
        %v1378 = vsel %vm447, %v1375, %v1377
        %v1379 = vrot.slane %v1268, 1
        %v1380 = vsel %vm447, %v1377, %v1379
        %v1381 = vrot.slane %v1269, 1
        %v1382 = vsel %vm447, %v1379, %v1381
        %v1383 = vrot.slane %v1270, 1
        %v1384 = vsel %vm447, %v1381, %v1383
        %v1385 = vrot.slane %v1271, 1
        %v1386 = vsel %vm447, %v1383, %v1385
        %v1387 = vrot.slane %v1272, 1
        %v1388 = vsel %vm447, %v1385, %v1387
        %v1389 = vrot.slane %v1273, 1
        %v1390 = vsel %vm447, %v1387, %v1389
        %v1391 = vrot.slane %v1274, 1
        %v1392 = vsel %vm447, %v1389, %v1391
        %v1393 = vsel %vm469, %v1374, 0
        %v1395 = vsel %vm469, %v1376, 0
        %v1397 = vsel %vm469, %v1378, 0
        %v1399 = vsel %vm469, %v1380, 0
        %v1401 = vsel %vm469, %v1382, 0
        %v1403 = vsel %vm469, %v1384, 0
        %v1405 = vsel %vm469, %v1386, 0
        %v1407 = vsel %vm469, %v1388, 0
        %v1409 = vsel %vm469, %v1390, 0
        %v1411 = vsel %vm469, %v1392, 0
        %v1414 = vsel %vm490, %v1370, 0
        %1416 = vmatpush.msra.mxu0 0.0
        %1417 = vmatpush.msra.mxu0 0.0
        %1418 = vmatpush.msra.mxu0 0.0
        %1419 = vmatpush.msra.mxu0 0.0
        %1420 = vmatpush.msra.mxu0 0.0
        %1421 = vmatpush.msra.mxu0 0.0
        %1422 = vmatpush.msra.mxu0 0.0
        %1423 = vmatpush.msra.mxu0 0.0
        %1424 = vmatpush.msra.mxu0 0.0
        %1425 = vmatpush.msra.mxu0 0.0
        %1426 = vmatpush.msra.mxu0 0.0
        %1427 = vmatpush.msra.mxu0 0.0
        %1428 = vmatpush.msra.mxu0 0.0
        %1429 = vmatpush.msra.mxu0 0.0
        %1430 = vmatpush.msra.mxu0 0.0
        %1431 = vmatpush.msra.mxu0 %v1414
        %1432 = vmatmul.f32.gmra.mxu0 %v1393
        %v1433 = vpop.f32.mrf.mxu0
        %v1434 = vadd.f32 0.0, %v1433
        %1435 = vmatmul.f32.gmra.mxu0 %v1395
        %v1436 = vpop.f32.mrf.mxu0
        %v1437 = vadd.f32 0.0, %v1436
        %1438 = vmatmul.f32.gmra.mxu0 %v1397
        %v1439 = vpop.f32.mrf.mxu0
        %v1440 = vadd.f32 0.0, %v1439
        %1441 = vmatmul.f32.gmra.mxu0 %v1399
        %v1442 = vpop.f32.mrf.mxu0
        %v1443 = vadd.f32 0.0, %v1442
        %1444 = vmatmul.f32.gmra.mxu0 %v1401
        %v1445 = vpop.f32.mrf.mxu0
        %v1446 = vadd.f32 0.0, %v1445
        %1447 = vmatmul.f32.gmra.mxu0 %v1403
        %v1448 = vpop.f32.mrf.mxu0
        %v1449 = vadd.f32 0.0, %v1448
        %1450 = vmatmul.f32.gmra.mxu0 %v1405
        %v1451 = vpop.f32.mrf.mxu0
        %v1452 = vadd.f32 0.0, %v1451
        %1453 = vmatmul.f32.gmra.mxu0 %v1407
        %v1454 = vpop.f32.mrf.mxu0
        %v1455 = vadd.f32 0.0, %v1454
        %1456 = vmatmul.f32.gmra.mxu0 %v1409
        %v1457 = vpop.f32.mrf.mxu0
        %v1458 = vadd.f32 0.0, %v1457
        %1459 = vmatmul.f32.gmra.mxu0 %v1411
        %v1460 = vpop.f32.mrf.mxu0
        %v1461 = vadd.f32 0.0, %v1460
        %1462 = vdwg.mxu0
        %v1463 = vadd.f32 %v1359, %v1434
        %v1464 = vadd.f32 %v1360, %v1437
        %v1465 = vadd.f32 %v1361, %v1440
        %v1466 = vadd.f32 %v1362, %v1443
        %v1467 = vadd.f32 %v1363, %v1446
        %v1468 = vadd.f32 %v1364, %v1449
        %v1469 = vadd.f32 %v1365, %v1452
        %v1470 = vadd.f32 %v1366, %v1455
        %v1471 = vadd.f32 %v1367, %v1458
        %v1472 = vadd.f32 %v1368, %v1461
        %s1473 = scalar_lea.vmem %s3, 44
        %v1474 = vld [vmem:[%s1473] sm:$0xf]
        %v1475 = vrot.slane %v1264, 2
        %v1476 = vrot.slane %v1265, 2
        %v1477 = vsel %vm613, %v1475, %v1476
        %v1478 = vrot.slane %v1266, 2
        %v1479 = vsel %vm613, %v1476, %v1478
        %v1480 = vrot.slane %v1267, 2
        %v1481 = vsel %vm613, %v1478, %v1480
        %v1482 = vrot.slane %v1268, 2
        %v1483 = vsel %vm613, %v1480, %v1482
        %v1484 = vrot.slane %v1269, 2
        %v1485 = vsel %vm613, %v1482, %v1484
        %v1486 = vrot.slane %v1270, 2
        %v1487 = vsel %vm613, %v1484, %v1486
        %v1488 = vrot.slane %v1271, 2
        %v1489 = vsel %vm613, %v1486, %v1488
        %v1490 = vrot.slane %v1272, 2
        %v1491 = vsel %vm613, %v1488, %v1490
        %v1492 = vrot.slane %v1273, 2
        %v1493 = vsel %vm613, %v1490, %v1492
        %v1494 = vrot.slane %v1274, 2
        %v1495 = vsel %vm613, %v1492, %v1494
        %v1496 = vsel %vm469, %v1477, 0
        %v1498 = vsel %vm469, %v1479, 0
        %v1500 = vsel %vm469, %v1481, 0
        %v1502 = vsel %vm469, %v1483, 0
        %v1504 = vsel %vm469, %v1485, 0
        %v1506 = vsel %vm469, %v1487, 0
        %v1508 = vsel %vm469, %v1489, 0
        %v1510 = vsel %vm469, %v1491, 0
        %v1512 = vsel %vm469, %v1493, 0
        %v1514 = vsel %vm469, %v1495, 0
        %v1517 = vsel %vm490, %v1474, 0
        %1519 = vmatpush.msra.mxu0 0.0
        %1520 = vmatpush.msra.mxu0 0.0
        %1521 = vmatpush.msra.mxu0 0.0
        %1522 = vmatpush.msra.mxu0 0.0
        %1523 = vmatpush.msra.mxu0 0.0
        %1524 = vmatpush.msra.mxu0 0.0
        %1525 = vmatpush.msra.mxu0 0.0
        %1526 = vmatpush.msra.mxu0 0.0
        %1527 = vmatpush.msra.mxu0 0.0
        %1528 = vmatpush.msra.mxu0 0.0
        %1529 = vmatpush.msra.mxu0 0.0
        %1530 = vmatpush.msra.mxu0 0.0
        %1531 = vmatpush.msra.mxu0 0.0
        %1532 = vmatpush.msra.mxu0 0.0
        %1533 = vmatpush.msra.mxu0 0.0
        %1534 = vmatpush.msra.mxu0 %v1517
        %1535 = vmatmul.f32.gmra.mxu0 %v1496
        %v1536 = vpop.f32.mrf.mxu0
        %v1537 = vadd.f32 0.0, %v1536
        %1538 = vmatmul.f32.gmra.mxu0 %v1498
        %v1539 = vpop.f32.mrf.mxu0
        %v1540 = vadd.f32 0.0, %v1539
        %1541 = vmatmul.f32.gmra.mxu0 %v1500
        %v1542 = vpop.f32.mrf.mxu0
        %v1543 = vadd.f32 0.0, %v1542
        %1544 = vmatmul.f32.gmra.mxu0 %v1502
        %v1545 = vpop.f32.mrf.mxu0
        %v1546 = vadd.f32 0.0, %v1545
        %1547 = vmatmul.f32.gmra.mxu0 %v1504
        %v1548 = vpop.f32.mrf.mxu0
        %v1549 = vadd.f32 0.0, %v1548
        %1550 = vmatmul.f32.gmra.mxu0 %v1506
        %v1551 = vpop.f32.mrf.mxu0
        %v1552 = vadd.f32 0.0, %v1551
        %1553 = vmatmul.f32.gmra.mxu0 %v1508
        %v1554 = vpop.f32.mrf.mxu0
        %v1555 = vadd.f32 0.0, %v1554
        %1556 = vmatmul.f32.gmra.mxu0 %v1510
        %v1557 = vpop.f32.mrf.mxu0
        %v1558 = vadd.f32 0.0, %v1557
        %1559 = vmatmul.f32.gmra.mxu0 %v1512
        %v1560 = vpop.f32.mrf.mxu0
        %v1561 = vadd.f32 0.0, %v1560
        %1562 = vmatmul.f32.gmra.mxu0 %v1514
        %v1563 = vpop.f32.mrf.mxu0
        %v1564 = vadd.f32 0.0, %v1563
        %1565 = vdwg.mxu0
        %v1566 = vadd.f32 %v1463, %v1537
        %v1567 = vadd.f32 %v1464, %v1540
        %v1568 = vadd.f32 %v1465, %v1543
        %v1569 = vadd.f32 %v1466, %v1546
        %v1570 = vadd.f32 %v1467, %v1549
        %v1571 = vadd.f32 %v1468, %v1552
        %v1572 = vadd.f32 %v1469, %v1555
        %v1573 = vadd.f32 %v1470, %v1558
        %v1574 = vadd.f32 %v1471, %v1561
        %v1575 = vadd.f32 %v1472, %v1564
        %s1576 = scalar_lea.vmem %s3, 48
        %v1577 = vld [vmem:[%s1576] sm:$0xf]
        %v1579 = vrot.slane %v1275, 2
        %v1580 = vsel %vm613, %v1494, %v1579
        %v1581 = vsel %vm469, %v1580, 0
        %v1584 = vsel %vm490, %v1577, 0
        %1586 = vmatpush.msra.mxu0 0.0
        %1587 = vmatpush.msra.mxu0 0.0
        %1588 = vmatpush.msra.mxu0 0.0
        %1589 = vmatpush.msra.mxu0 0.0
        %1590 = vmatpush.msra.mxu0 0.0
        %1591 = vmatpush.msra.mxu0 0.0
        %1592 = vmatpush.msra.mxu0 0.0
        %1593 = vmatpush.msra.mxu0 0.0
        %1594 = vmatpush.msra.mxu0 0.0
        %1595 = vmatpush.msra.mxu0 0.0
        %1596 = vmatpush.msra.mxu0 0.0
        %1597 = vmatpush.msra.mxu0 0.0
        %1598 = vmatpush.msra.mxu0 0.0
        %1599 = vmatpush.msra.mxu0 0.0
        %1600 = vmatpush.msra.mxu0 0.0
        %1601 = vmatpush.msra.mxu0 %v1584
        %1602 = vmatmul.f32.gmra.mxu0 %v1498
        %v1603 = vpop.f32.mrf.mxu0
        %v1604 = vadd.f32 0.0, %v1603
        %1605 = vmatmul.f32.gmra.mxu0 %v1500
        %v1606 = vpop.f32.mrf.mxu0
        %v1607 = vadd.f32 0.0, %v1606
        %1608 = vmatmul.f32.gmra.mxu0 %v1502
        %v1609 = vpop.f32.mrf.mxu0
        %v1610 = vadd.f32 0.0, %v1609
        %1611 = vmatmul.f32.gmra.mxu0 %v1504
        %v1612 = vpop.f32.mrf.mxu0
        %v1613 = vadd.f32 0.0, %v1612
        %1614 = vmatmul.f32.gmra.mxu0 %v1506
        %v1615 = vpop.f32.mrf.mxu0
        %v1616 = vadd.f32 0.0, %v1615
        %1617 = vmatmul.f32.gmra.mxu0 %v1508
        %v1618 = vpop.f32.mrf.mxu0
        %v1619 = vadd.f32 0.0, %v1618
        %1620 = vmatmul.f32.gmra.mxu0 %v1510
        %v1621 = vpop.f32.mrf.mxu0
        %v1622 = vadd.f32 0.0, %v1621
        %1623 = vmatmul.f32.gmra.mxu0 %v1512
        %v1624 = vpop.f32.mrf.mxu0
        %v1625 = vadd.f32 0.0, %v1624
        %1626 = vmatmul.f32.gmra.mxu0 %v1514
        %v1627 = vpop.f32.mrf.mxu0
        %v1628 = vadd.f32 0.0, %v1627
        %1629 = vmatmul.f32.gmra.mxu0 %v1581
        %v1630 = vpop.f32.mrf.mxu0
        %v1631 = vadd.f32 0.0, %v1630
        %1632 = vdwg.mxu0
        %v1633 = vadd.f32 %v1566, %v1604
        %v1634 = vadd.f32 %v1567, %v1607
        %v1635 = vadd.f32 %v1568, %v1610
        %v1636 = vadd.f32 %v1569, %v1613
        %v1637 = vadd.f32 %v1570, %v1616
        %v1638 = vadd.f32 %v1571, %v1619
        %v1639 = vadd.f32 %v1572, %v1622
        %v1640 = vadd.f32 %v1573, %v1625
        %v1641 = vadd.f32 %v1574, %v1628
        %v1642 = vadd.f32 %v1575, %v1631
        %s1643 = scalar_lea.vmem %s3, 52
        %v1644 = vld [vmem:[%s1643] sm:$0xf]
        %v1645 = vrot.slane %v1265, 3
        %v1646 = vrot.slane %v1266, 3
        %v1647 = vsel %vm784, %v1645, %v1646
        %v1648 = vrot.slane %v1267, 3
        %v1649 = vsel %vm784, %v1646, %v1648
        %v1650 = vrot.slane %v1268, 3
        %v1651 = vsel %vm784, %v1648, %v1650
        %v1652 = vrot.slane %v1269, 3
        %v1653 = vsel %vm784, %v1650, %v1652
        %v1654 = vrot.slane %v1270, 3
        %v1655 = vsel %vm784, %v1652, %v1654
        %v1656 = vrot.slane %v1271, 3
        %v1657 = vsel %vm784, %v1654, %v1656
        %v1658 = vrot.slane %v1272, 3
        %v1659 = vsel %vm784, %v1656, %v1658
        %v1660 = vrot.slane %v1273, 3
        %v1661 = vsel %vm784, %v1658, %v1660
        %v1662 = vrot.slane %v1274, 3
        %v1663 = vsel %vm784, %v1660, %v1662
        %v1664 = vrot.slane %v1275, 3
        %v1665 = vsel %vm784, %v1662, %v1664
        %v1666 = vsel %vm469, %v1647, 0
        %v1668 = vsel %vm469, %v1649, 0
        %v1670 = vsel %vm469, %v1651, 0
        %v1672 = vsel %vm469, %v1653, 0
        %v1674 = vsel %vm469, %v1655, 0
        %v1676 = vsel %vm469, %v1657, 0
        %v1678 = vsel %vm469, %v1659, 0
        %v1680 = vsel %vm469, %v1661, 0
        %v1682 = vsel %vm469, %v1663, 0
        %v1684 = vsel %vm469, %v1665, 0
        %v1687 = vsel %vm490, %v1644, 0
        %1689 = vmatpush.msra.mxu0 0.0
        %1690 = vmatpush.msra.mxu0 0.0
        %1691 = vmatpush.msra.mxu0 0.0
        %1692 = vmatpush.msra.mxu0 0.0
        %1693 = vmatpush.msra.mxu0 0.0
        %1694 = vmatpush.msra.mxu0 0.0
        %1695 = vmatpush.msra.mxu0 0.0
        %1696 = vmatpush.msra.mxu0 0.0
        %1697 = vmatpush.msra.mxu0 0.0
        %1698 = vmatpush.msra.mxu0 0.0
        %1699 = vmatpush.msra.mxu0 0.0
        %1700 = vmatpush.msra.mxu0 0.0
        %1701 = vmatpush.msra.mxu0 0.0
        %1702 = vmatpush.msra.mxu0 0.0
        %1703 = vmatpush.msra.mxu0 0.0
        %1704 = vmatpush.msra.mxu0 %v1687
        %1705 = vmatmul.f32.gmra.mxu0 %v1666
        %v1706 = vpop.f32.mrf.mxu0
        %v1707 = vadd.f32 0.0, %v1706
        %1708 = vmatmul.f32.gmra.mxu0 %v1668
        %v1709 = vpop.f32.mrf.mxu0
        %v1710 = vadd.f32 0.0, %v1709
        %1711 = vmatmul.f32.gmra.mxu0 %v1670
        %v1712 = vpop.f32.mrf.mxu0
        %v1713 = vadd.f32 0.0, %v1712
        %1714 = vmatmul.f32.gmra.mxu0 %v1672
        %v1715 = vpop.f32.mrf.mxu0
        %v1716 = vadd.f32 0.0, %v1715
        %1717 = vmatmul.f32.gmra.mxu0 %v1674
        %v1718 = vpop.f32.mrf.mxu0
        %v1719 = vadd.f32 0.0, %v1718
        %1720 = vmatmul.f32.gmra.mxu0 %v1676
        %v1721 = vpop.f32.mrf.mxu0
        %v1722 = vadd.f32 0.0, %v1721
        %1723 = vmatmul.f32.gmra.mxu0 %v1678
        %v1724 = vpop.f32.mrf.mxu0
        %v1725 = vadd.f32 0.0, %v1724
        %1726 = vmatmul.f32.gmra.mxu0 %v1680
        %v1727 = vpop.f32.mrf.mxu0
        %v1728 = vadd.f32 0.0, %v1727
        %1729 = vmatmul.f32.gmra.mxu0 %v1682
        %v1730 = vpop.f32.mrf.mxu0
        %v1731 = vadd.f32 0.0, %v1730
        %1732 = vmatmul.f32.gmra.mxu0 %v1684
        %v1733 = vpop.f32.mrf.mxu0
        %v1734 = vadd.f32 0.0, %v1733
        %1735 = vdwg.mxu0
        %v1736 = vadd.f32 %v1633, %v1707
        %v1737 = vadd.f32 %v1634, %v1710
        %v1738 = vadd.f32 %v1635, %v1713
        %v1739 = vadd.f32 %v1636, %v1716
        %v1740 = vadd.f32 %v1637, %v1719
        %v1741 = vadd.f32 %v1638, %v1722
        %v1742 = vadd.f32 %v1639, %v1725
        %v1743 = vadd.f32 %v1640, %v1728
        %v1744 = vadd.f32 %v1641, %v1731
        %v1745 = vadd.f32 %v1642, %v1734
        %s1746 = scalar_lea.vmem %s3, 56
        %v1747 = vld [vmem:[%s1746] sm:$0xf]
        %v1748 = vrot.slane %v1265, 4
        %v1749 = vrot.slane %v1266, 4
        %v1750 = vsel %vm490, %v1748, %v1749
        %v1751 = vrot.slane %v1267, 4
        %v1752 = vsel %vm490, %v1749, %v1751
        %v1753 = vrot.slane %v1268, 4
        %v1754 = vsel %vm490, %v1751, %v1753
        %v1755 = vrot.slane %v1269, 4
        %v1756 = vsel %vm490, %v1753, %v1755
        %v1757 = vrot.slane %v1270, 4
        %v1758 = vsel %vm490, %v1755, %v1757
        %v1759 = vrot.slane %v1271, 4
        %v1760 = vsel %vm490, %v1757, %v1759
        %v1761 = vrot.slane %v1272, 4
        %v1762 = vsel %vm490, %v1759, %v1761
        %v1763 = vrot.slane %v1273, 4
        %v1764 = vsel %vm490, %v1761, %v1763
        %v1765 = vrot.slane %v1274, 4
        %v1766 = vsel %vm490, %v1763, %v1765
        %v1767 = vrot.slane %v1275, 4
        %v1768 = vsel %vm490, %v1765, %v1767
        %v1769 = vsel %vm469, %v1750, 0
        %v1771 = vsel %vm469, %v1752, 0
        %v1773 = vsel %vm469, %v1754, 0
        %v1775 = vsel %vm469, %v1756, 0
        %v1777 = vsel %vm469, %v1758, 0
        %v1779 = vsel %vm469, %v1760, 0
        %v1781 = vsel %vm469, %v1762, 0
        %v1783 = vsel %vm469, %v1764, 0
        %v1785 = vsel %vm469, %v1766, 0
        %v1787 = vsel %vm469, %v1768, 0
        %v1790 = vsel %vm490, %v1747, 0
        %1792 = vmatpush.msra.mxu0 0.0
        %1793 = vmatpush.msra.mxu0 0.0
        %1794 = vmatpush.msra.mxu0 0.0
        %1795 = vmatpush.msra.mxu0 0.0
        %1796 = vmatpush.msra.mxu0 0.0
        %1797 = vmatpush.msra.mxu0 0.0
        %1798 = vmatpush.msra.mxu0 0.0
        %1799 = vmatpush.msra.mxu0 0.0
        %1800 = vmatpush.msra.mxu0 0.0
        %1801 = vmatpush.msra.mxu0 0.0
        %1802 = vmatpush.msra.mxu0 0.0
        %1803 = vmatpush.msra.mxu0 0.0
        %1804 = vmatpush.msra.mxu0 0.0
        %1805 = vmatpush.msra.mxu0 0.0
        %1806 = vmatpush.msra.mxu0 0.0
        %1807 = vmatpush.msra.mxu0 %v1790
        %1808 = vmatmul.f32.gmra.mxu0 %v1769
        %v1809 = vpop.f32.mrf.mxu0
        %v1810 = vadd.f32 0.0, %v1809
        %1811 = vmatmul.f32.gmra.mxu0 %v1771
        %v1812 = vpop.f32.mrf.mxu0
        %v1813 = vadd.f32 0.0, %v1812
        %1814 = vmatmul.f32.gmra.mxu0 %v1773
        %v1815 = vpop.f32.mrf.mxu0
        %v1816 = vadd.f32 0.0, %v1815
        %1817 = vmatmul.f32.gmra.mxu0 %v1775
        %v1818 = vpop.f32.mrf.mxu0
        %v1819 = vadd.f32 0.0, %v1818
        %1820 = vmatmul.f32.gmra.mxu0 %v1777
        %v1821 = vpop.f32.mrf.mxu0
        %v1822 = vadd.f32 0.0, %v1821
        %1823 = vmatmul.f32.gmra.mxu0 %v1779
        %v1824 = vpop.f32.mrf.mxu0
        %v1825 = vadd.f32 0.0, %v1824
        %1826 = vmatmul.f32.gmra.mxu0 %v1781
        %v1827 = vpop.f32.mrf.mxu0
        %v1828 = vadd.f32 0.0, %v1827
        %1829 = vmatmul.f32.gmra.mxu0 %v1783
        %v1830 = vpop.f32.mrf.mxu0
        %v1831 = vadd.f32 0.0, %v1830
        %1832 = vmatmul.f32.gmra.mxu0 %v1785
        %v1833 = vpop.f32.mrf.mxu0
        %v1834 = vadd.f32 0.0, %v1833
        %1835 = vmatmul.f32.gmra.mxu0 %v1787
        %v1836 = vpop.f32.mrf.mxu0
        %v1837 = vadd.f32 0.0, %v1836
        %1838 = vdwg.mxu0
        %v1839 = vadd.f32 %v1736, %v1810
        %v1840 = vadd.f32 %v1737, %v1813
        %v1841 = vadd.f32 %v1738, %v1816
        %v1842 = vadd.f32 %v1739, %v1819
        %v1843 = vadd.f32 %v1740, %v1822
        %v1844 = vadd.f32 %v1741, %v1825
        %v1845 = vadd.f32 %v1742, %v1828
        %v1846 = vadd.f32 %v1743, %v1831
        %v1847 = vadd.f32 %v1744, %v1834
        %v1848 = vadd.f32 %v1745, %v1837
        %s1849 = scalar_lea.vmem %s3, 60
        %v1850 = vld [vmem:[%s1849] sm:$0xf]
        %v1852 = vrot.slane %v1276, 4
        %v1853 = vsel %vm490, %v1767, %v1852
        %v1854 = vsel %vm469, %v1853, 0
        %v1857 = vsel %vm490, %v1850, 0
        %1859 = vmatpush.msra.mxu0 0.0
        %1860 = vmatpush.msra.mxu0 0.0
        %1861 = vmatpush.msra.mxu0 0.0
        %1862 = vmatpush.msra.mxu0 0.0
        %1863 = vmatpush.msra.mxu0 0.0
        %1864 = vmatpush.msra.mxu0 0.0
        %1865 = vmatpush.msra.mxu0 0.0
        %1866 = vmatpush.msra.mxu0 0.0
        %1867 = vmatpush.msra.mxu0 0.0
        %1868 = vmatpush.msra.mxu0 0.0
        %1869 = vmatpush.msra.mxu0 0.0
        %1870 = vmatpush.msra.mxu0 0.0
        %1871 = vmatpush.msra.mxu0 0.0
        %1872 = vmatpush.msra.mxu0 0.0
        %1873 = vmatpush.msra.mxu0 0.0
        %1874 = vmatpush.msra.mxu0 %v1857
        %1875 = vmatmul.f32.gmra.mxu0 %v1771
        %v1876 = vpop.f32.mrf.mxu0
        %v1877 = vadd.f32 0.0, %v1876
        %1878 = vmatmul.f32.gmra.mxu0 %v1773
        %v1879 = vpop.f32.mrf.mxu0
        %v1880 = vadd.f32 0.0, %v1879
        %1881 = vmatmul.f32.gmra.mxu0 %v1775
        %v1882 = vpop.f32.mrf.mxu0
        %v1883 = vadd.f32 0.0, %v1882
        %1884 = vmatmul.f32.gmra.mxu0 %v1777
        %v1885 = vpop.f32.mrf.mxu0
        %v1886 = vadd.f32 0.0, %v1885
        %1887 = vmatmul.f32.gmra.mxu0 %v1779
        %v1888 = vpop.f32.mrf.mxu0
        %v1889 = vadd.f32 0.0, %v1888
        %1890 = vmatmul.f32.gmra.mxu0 %v1781
        %v1891 = vpop.f32.mrf.mxu0
        %v1892 = vadd.f32 0.0, %v1891
        %1893 = vmatmul.f32.gmra.mxu0 %v1783
        %v1894 = vpop.f32.mrf.mxu0
        %v1895 = vadd.f32 0.0, %v1894
        %1896 = vmatmul.f32.gmra.mxu0 %v1785
        %v1897 = vpop.f32.mrf.mxu0
        %v1898 = vadd.f32 0.0, %v1897
        %1899 = vmatmul.f32.gmra.mxu0 %v1787
        %v1900 = vpop.f32.mrf.mxu0
        %v1901 = vadd.f32 0.0, %v1900
        %1902 = vmatmul.f32.gmra.mxu0 %v1854
        %v1903 = vpop.f32.mrf.mxu0
        %v1904 = vadd.f32 0.0, %v1903
        %1905 = vdwg.mxu0
        %v1906 = vadd.f32 %v1839, %v1877
        %v1907 = vadd.f32 %v1840, %v1880
        %v1908 = vadd.f32 %v1841, %v1883
        %v1909 = vadd.f32 %v1842, %v1886
        %v1910 = vadd.f32 %v1843, %v1889
        %v1911 = vadd.f32 %v1844, %v1892
        %v1912 = vadd.f32 %v1845, %v1895
        %v1913 = vadd.f32 %v1846, %v1898
        %v1914 = vadd.f32 %v1847, %v1901
        %v1915 = vadd.f32 %v1848, %v1904
        %s1916 = scalar_lea.vmem %s3, 64
        %v1917 = vld [vmem:[%s1916] sm:$0xf]
        %v1918 = vrot.slane %v1266, 5
        %v1919 = vrot.slane %v1267, 5
        %v1920 = vsel %vm1058, %v1918, %v1919
        %v1921 = vrot.slane %v1268, 5
        %v1922 = vsel %vm1058, %v1919, %v1921
        %v1923 = vrot.slane %v1269, 5
        %v1924 = vsel %vm1058, %v1921, %v1923
        %v1925 = vrot.slane %v1270, 5
        %v1926 = vsel %vm1058, %v1923, %v1925
        %v1927 = vrot.slane %v1271, 5
        %v1928 = vsel %vm1058, %v1925, %v1927
        %v1929 = vrot.slane %v1272, 5
        %v1930 = vsel %vm1058, %v1927, %v1929
        %v1931 = vrot.slane %v1273, 5
        %v1932 = vsel %vm1058, %v1929, %v1931
        %v1933 = vrot.slane %v1274, 5
        %v1934 = vsel %vm1058, %v1931, %v1933
        %v1935 = vrot.slane %v1275, 5
        %v1936 = vsel %vm1058, %v1933, %v1935
        %v1937 = vrot.slane %v1276, 5
        %v1938 = vsel %vm1058, %v1935, %v1937
        %v1939 = vsel %vm469, %v1920, 0
        %v1941 = vsel %vm469, %v1922, 0
        %v1943 = vsel %vm469, %v1924, 0
        %v1945 = vsel %vm469, %v1926, 0
        %v1947 = vsel %vm469, %v1928, 0
        %v1949 = vsel %vm469, %v1930, 0
        %v1951 = vsel %vm469, %v1932, 0
        %v1953 = vsel %vm469, %v1934, 0
        %v1955 = vsel %vm469, %v1936, 0
        %v1957 = vsel %vm469, %v1938, 0
        %v1960 = vsel %vm490, %v1917, 0
        %1962 = vmatpush.msra.mxu0 0.0
        %1963 = vmatpush.msra.mxu0 0.0
        %1964 = vmatpush.msra.mxu0 0.0
        %1965 = vmatpush.msra.mxu0 0.0
        %1966 = vmatpush.msra.mxu0 0.0
        %1967 = vmatpush.msra.mxu0 0.0
        %1968 = vmatpush.msra.mxu0 0.0
        %1969 = vmatpush.msra.mxu0 0.0
        %1970 = vmatpush.msra.mxu0 0.0
        %1971 = vmatpush.msra.mxu0 0.0
        %1972 = vmatpush.msra.mxu0 0.0
        %1973 = vmatpush.msra.mxu0 0.0
        %1974 = vmatpush.msra.mxu0 0.0
        %1975 = vmatpush.msra.mxu0 0.0
        %1976 = vmatpush.msra.mxu0 0.0
        %1977 = vmatpush.msra.mxu0 %v1960
        %1978 = vmatmul.f32.gmra.mxu0 %v1939
        %v1979 = vpop.f32.mrf.mxu0
        %v1980 = vadd.f32 0.0, %v1979
        %1981 = vmatmul.f32.gmra.mxu0 %v1941
        %v1982 = vpop.f32.mrf.mxu0
        %v1983 = vadd.f32 0.0, %v1982
        %1984 = vmatmul.f32.gmra.mxu0 %v1943
        %v1985 = vpop.f32.mrf.mxu0
        %v1986 = vadd.f32 0.0, %v1985
        %1987 = vmatmul.f32.gmra.mxu0 %v1945
        %v1988 = vpop.f32.mrf.mxu0
        %v1989 = vadd.f32 0.0, %v1988
        %1990 = vmatmul.f32.gmra.mxu0 %v1947
        %v1991 = vpop.f32.mrf.mxu0
        %v1992 = vadd.f32 0.0, %v1991
        %1993 = vmatmul.f32.gmra.mxu0 %v1949
        %v1994 = vpop.f32.mrf.mxu0
        %v1995 = vadd.f32 0.0, %v1994
        %1996 = vmatmul.f32.gmra.mxu0 %v1951
        %v1997 = vpop.f32.mrf.mxu0
        %v1998 = vadd.f32 0.0, %v1997
        %1999 = vmatmul.f32.gmra.mxu0 %v1953
        %v2000 = vpop.f32.mrf.mxu0
        %v2001 = vadd.f32 0.0, %v2000
        %2002 = vmatmul.f32.gmra.mxu0 %v1955
        %v2003 = vpop.f32.mrf.mxu0
        %v2004 = vadd.f32 0.0, %v2003
        %2005 = vmatmul.f32.gmra.mxu0 %v1957
        %v2006 = vpop.f32.mrf.mxu0
        %v2007 = vadd.f32 0.0, %v2006
        %2008 = vdwg.mxu0
        %v2009 = vadd.f32 %v1906, %v1980
        %v2010 = vadd.f32 %v1907, %v1983
        %v2011 = vadd.f32 %v1908, %v1986
        %v2012 = vadd.f32 %v1909, %v1989
        %v2013 = vadd.f32 %v1910, %v1992
        %v2014 = vadd.f32 %v1911, %v1995
        %v2015 = vadd.f32 %v1912, %v1998
        %v2016 = vadd.f32 %v1913, %v2001
        %v2017 = vadd.f32 %v1914, %v2004
        %v2018 = vadd.f32 %v1915, %v2007
        %s2019 = scalar_lea.vmem %s3, 68
        %v2020 = vld [vmem:[%s2019] sm:$0xf]
        %v2021 = vrot.slane %v1266, 6
        %v2022 = vrot.slane %v1267, 6
        %v2023 = vsel %vm1162, %v2021, %v2022
        %v2024 = vrot.slane %v1268, 6
        %v2025 = vsel %vm1162, %v2022, %v2024
        %v2026 = vrot.slane %v1269, 6
        %v2027 = vsel %vm1162, %v2024, %v2026
        %v2028 = vrot.slane %v1270, 6
        %v2029 = vsel %vm1162, %v2026, %v2028
        %v2030 = vrot.slane %v1271, 6
        %v2031 = vsel %vm1162, %v2028, %v2030
        %v2032 = vrot.slane %v1272, 6
        %v2033 = vsel %vm1162, %v2030, %v2032
        %v2034 = vrot.slane %v1273, 6
        %v2035 = vsel %vm1162, %v2032, %v2034
        %v2036 = vrot.slane %v1274, 6
        %v2037 = vsel %vm1162, %v2034, %v2036
        %v2038 = vrot.slane %v1275, 6
        %v2039 = vsel %vm1162, %v2036, %v2038
        %v2040 = vrot.slane %v1276, 6
        %v2041 = vsel %vm1162, %v2038, %v2040
        %v2042 = vsel %vm469, %v2023, 0
        %v2044 = vsel %vm469, %v2025, 0
        %v2046 = vsel %vm469, %v2027, 0
        %v2048 = vsel %vm469, %v2029, 0
        %v2050 = vsel %vm469, %v2031, 0
        %v2052 = vsel %vm469, %v2033, 0
        %v2054 = vsel %vm469, %v2035, 0
        %v2056 = vsel %vm469, %v2037, 0
        %v2058 = vsel %vm469, %v2039, 0
        %v2060 = vsel %vm469, %v2041, 0
        %v2063 = vsel %vm490, %v2020, 0
        %2065 = vmatpush.msra.mxu0 0.0
        %2066 = vmatpush.msra.mxu0 0.0
        %2067 = vmatpush.msra.mxu0 0.0
        %2068 = vmatpush.msra.mxu0 0.0
        %2069 = vmatpush.msra.mxu0 0.0
        %2070 = vmatpush.msra.mxu0 0.0
        %2071 = vmatpush.msra.mxu0 0.0
        %2072 = vmatpush.msra.mxu0 0.0
        %2073 = vmatpush.msra.mxu0 0.0
        %2074 = vmatpush.msra.mxu0 0.0
        %2075 = vmatpush.msra.mxu0 0.0
        %2076 = vmatpush.msra.mxu0 0.0
        %2077 = vmatpush.msra.mxu0 0.0
        %2078 = vmatpush.msra.mxu0 0.0
        %2079 = vmatpush.msra.mxu0 0.0
        %2080 = vmatpush.msra.mxu0 %v2063
        %2081 = vmatmul.f32.gmra.mxu0 %v2042
        %v2082 = vpop.f32.mrf.mxu0
        %v2083 = vadd.f32 0.0, %v2082
        %2084 = vmatmul.f32.gmra.mxu0 %v2044
        %v2085 = vpop.f32.mrf.mxu0
        %v2086 = vadd.f32 0.0, %v2085
        %2087 = vmatmul.f32.gmra.mxu0 %v2046
        %v2088 = vpop.f32.mrf.mxu0
        %v2089 = vadd.f32 0.0, %v2088
        %2090 = vmatmul.f32.gmra.mxu0 %v2048
        %v2091 = vpop.f32.mrf.mxu0
        %v2092 = vadd.f32 0.0, %v2091
        %2093 = vmatmul.f32.gmra.mxu0 %v2050
        %v2094 = vpop.f32.mrf.mxu0
        %v2095 = vadd.f32 0.0, %v2094
        %2096 = vmatmul.f32.gmra.mxu0 %v2052
        %v2097 = vpop.f32.mrf.mxu0
        %v2098 = vadd.f32 0.0, %v2097
        %2099 = vmatmul.f32.gmra.mxu0 %v2054
        %v2100 = vpop.f32.mrf.mxu0
        %v2101 = vadd.f32 0.0, %v2100
        %2102 = vmatmul.f32.gmra.mxu0 %v2056
        %v2103 = vpop.f32.mrf.mxu0
        %v2104 = vadd.f32 0.0, %v2103
        %2105 = vmatmul.f32.gmra.mxu0 %v2058
        %v2106 = vpop.f32.mrf.mxu0
        %v2107 = vadd.f32 0.0, %v2106
        %2108 = vmatmul.f32.gmra.mxu0 %v2060
        %v2109 = vpop.f32.mrf.mxu0
        %v2110 = vadd.f32 0.0, %v2109
        %2111 = vdwg.mxu0
        %v2112 = vadd.f32 %v2009, %v2083
        %v2113 = vadd.f32 %v2010, %v2086
        %v2114 = vadd.f32 %v2011, %v2089
        %v2115 = vadd.f32 %v2012, %v2092
        %v2116 = vadd.f32 %v2013, %v2095
        %v2117 = vadd.f32 %v2014, %v2098
        %v2118 = vadd.f32 %v2015, %v2101
        %v2119 = vadd.f32 %v2016, %v2104
        %v2120 = vadd.f32 %v2017, %v2107
        %v2121 = vadd.f32 %v2018, %v2110
        %v2122 = vld [vmem:[%s409] sm:$0xff]
        %v2123 = vld [vmem:[%s409 + $0x8] sm:$0xff]
        %v2124 = vld [vmem:[%s409 + $0x10] sm:$0xff]
        %v2125 = vld [vmem:[%s409 + $0x18] sm:$0xff]
        %v2126 = vld [vmem:[%s409 + $0x20] sm:$0xff]
        %v2127 = vld [vmem:[%s409 + $0x28] sm:$0xff]
        %v2128 = vld [vmem:[%s409 + $0x30] sm:$0xff]
        %v2129 = vld [vmem:[%s409 + $0x38] sm:$0xff]
        %v2130 = vld [vmem:[%s409 + $0x40] sm:$0xff]
        %v2131 = vld [vmem:[%s409 + $0x48] sm:$0xff]
        %v2132 = vld [vmem:[%s409 + $0x50] sm:$0xff]
        %v2133 = vld [vmem:[%s409 + $0x58] sm:$0xff]
        %v2134 = vld [vmem:[%s409 + $0x60] sm:$0xff]
        %s2135 = scalar_lea.vmem %s3, 72
        %v2136 = vld [vmem:[%s2135] sm:$0xf]
        %v2138 = vsel %vm469, %v2122, 0
        %v2141 = vsel %vm469, %v2123, 0
        %v2144 = vsel %vm469, %v2124, 0
        %v2147 = vsel %vm469, %v2125, 0
        %v2150 = vsel %vm469, %v2126, 0
        %v2153 = vsel %vm469, %v2127, 0
        %v2156 = vsel %vm469, %v2128, 0
        %v2159 = vsel %vm469, %v2129, 0
        %v2162 = vsel %vm469, %v2130, 0
        %v2165 = vsel %vm469, %v2131, 0
        %v2168 = vsel %vm490, %v2136, 0
        %2170 = vmatpush.msra.mxu0 0.0
        %2171 = vmatpush.msra.mxu0 0.0
        %2172 = vmatpush.msra.mxu0 0.0
        %2173 = vmatpush.msra.mxu0 0.0
        %2174 = vmatpush.msra.mxu0 0.0
        %2175 = vmatpush.msra.mxu0 0.0
        %2176 = vmatpush.msra.mxu0 0.0
        %2177 = vmatpush.msra.mxu0 0.0
        %2178 = vmatpush.msra.mxu0 0.0
        %2179 = vmatpush.msra.mxu0 0.0
        %2180 = vmatpush.msra.mxu0 0.0
        %2181 = vmatpush.msra.mxu0 0.0
        %2182 = vmatpush.msra.mxu0 0.0
        %2183 = vmatpush.msra.mxu0 0.0
        %2184 = vmatpush.msra.mxu0 0.0
        %2185 = vmatpush.msra.mxu0 %v2168
        %2186 = vmatmul.f32.gmra.mxu0 %v2138
        %v2187 = vpop.f32.mrf.mxu0
        %v2188 = vadd.f32 0.0, %v2187
        %2189 = vmatmul.f32.gmra.mxu0 %v2141
        %v2190 = vpop.f32.mrf.mxu0
        %v2191 = vadd.f32 0.0, %v2190
        %2192 = vmatmul.f32.gmra.mxu0 %v2144
        %v2193 = vpop.f32.mrf.mxu0
        %v2194 = vadd.f32 0.0, %v2193
        %2195 = vmatmul.f32.gmra.mxu0 %v2147
        %v2196 = vpop.f32.mrf.mxu0
        %v2197 = vadd.f32 0.0, %v2196
        %2198 = vmatmul.f32.gmra.mxu0 %v2150
        %v2199 = vpop.f32.mrf.mxu0
        %v2200 = vadd.f32 0.0, %v2199
        %2201 = vmatmul.f32.gmra.mxu0 %v2153
        %v2202 = vpop.f32.mrf.mxu0
        %v2203 = vadd.f32 0.0, %v2202
        %2204 = vmatmul.f32.gmra.mxu0 %v2156
        %v2205 = vpop.f32.mrf.mxu0
        %v2206 = vadd.f32 0.0, %v2205
        %2207 = vmatmul.f32.gmra.mxu0 %v2159
        %v2208 = vpop.f32.mrf.mxu0
        %v2209 = vadd.f32 0.0, %v2208
        %2210 = vmatmul.f32.gmra.mxu0 %v2162
        %v2211 = vpop.f32.mrf.mxu0
        %v2212 = vadd.f32 0.0, %v2211
        %2213 = vmatmul.f32.gmra.mxu0 %v2165
        %v2214 = vpop.f32.mrf.mxu0
        %v2215 = vadd.f32 0.0, %v2214
        %2216 = vdwg.mxu0
        %v2217 = vadd.f32 %v2112, %v2188
        %v2218 = vadd.f32 %v2113, %v2191
        %v2219 = vadd.f32 %v2114, %v2194
        %v2220 = vadd.f32 %v2115, %v2197
        %v2221 = vadd.f32 %v2116, %v2200
        %v2222 = vadd.f32 %v2117, %v2203
        %v2223 = vadd.f32 %v2118, %v2206
        %v2224 = vadd.f32 %v2119, %v2209
        %v2225 = vadd.f32 %v2120, %v2212
        %v2226 = vadd.f32 %v2121, %v2215
        %s2227 = scalar_lea.vmem %s3, 76
        %v2228 = vld [vmem:[%s2227] sm:$0xf]
        %v2230 = vrot.slane %v2122, 1
        %v2231 = vrot.slane %v2123, 1
        %v2232 = vsel %vm447, %v2230, %v2231
        %v2233 = vrot.slane %v2124, 1
        %v2234 = vsel %vm447, %v2231, %v2233
        %v2235 = vrot.slane %v2125, 1
        %v2236 = vsel %vm447, %v2233, %v2235
        %v2237 = vrot.slane %v2126, 1
        %v2238 = vsel %vm447, %v2235, %v2237
        %v2239 = vrot.slane %v2127, 1
        %v2240 = vsel %vm447, %v2237, %v2239
        %v2241 = vrot.slane %v2128, 1
        %v2242 = vsel %vm447, %v2239, %v2241
        %v2243 = vrot.slane %v2129, 1
        %v2244 = vsel %vm447, %v2241, %v2243
        %v2245 = vrot.slane %v2130, 1
        %v2246 = vsel %vm447, %v2243, %v2245
        %v2247 = vrot.slane %v2131, 1
        %v2248 = vsel %vm447, %v2245, %v2247
        %v2249 = vrot.slane %v2132, 1
        %v2250 = vsel %vm447, %v2247, %v2249
        %v2251 = vsel %vm469, %v2232, 0
        %v2253 = vsel %vm469, %v2234, 0
        %v2255 = vsel %vm469, %v2236, 0
        %v2257 = vsel %vm469, %v2238, 0
        %v2259 = vsel %vm469, %v2240, 0
        %v2261 = vsel %vm469, %v2242, 0
        %v2263 = vsel %vm469, %v2244, 0
        %v2265 = vsel %vm469, %v2246, 0
        %v2267 = vsel %vm469, %v2248, 0
        %v2269 = vsel %vm469, %v2250, 0
        %v2272 = vsel %vm490, %v2228, 0
        %2274 = vmatpush.msra.mxu0 0.0
        %2275 = vmatpush.msra.mxu0 0.0
        %2276 = vmatpush.msra.mxu0 0.0
        %2277 = vmatpush.msra.mxu0 0.0
        %2278 = vmatpush.msra.mxu0 0.0
        %2279 = vmatpush.msra.mxu0 0.0
        %2280 = vmatpush.msra.mxu0 0.0
        %2281 = vmatpush.msra.mxu0 0.0
        %2282 = vmatpush.msra.mxu0 0.0
        %2283 = vmatpush.msra.mxu0 0.0
        %2284 = vmatpush.msra.mxu0 0.0
        %2285 = vmatpush.msra.mxu0 0.0
        %2286 = vmatpush.msra.mxu0 0.0
        %2287 = vmatpush.msra.mxu0 0.0
        %2288 = vmatpush.msra.mxu0 0.0
        %2289 = vmatpush.msra.mxu0 %v2272
        %2290 = vmatmul.f32.gmra.mxu0 %v2251
        %v2291 = vpop.f32.mrf.mxu0
        %v2292 = vadd.f32 0.0, %v2291
        %2293 = vmatmul.f32.gmra.mxu0 %v2253
        %v2294 = vpop.f32.mrf.mxu0
        %v2295 = vadd.f32 0.0, %v2294
        %2296 = vmatmul.f32.gmra.mxu0 %v2255
        %v2297 = vpop.f32.mrf.mxu0
        %v2298 = vadd.f32 0.0, %v2297
        %2299 = vmatmul.f32.gmra.mxu0 %v2257
        %v2300 = vpop.f32.mrf.mxu0
        %v2301 = vadd.f32 0.0, %v2300
        %2302 = vmatmul.f32.gmra.mxu0 %v2259
        %v2303 = vpop.f32.mrf.mxu0
        %v2304 = vadd.f32 0.0, %v2303
        %2305 = vmatmul.f32.gmra.mxu0 %v2261
        %v2306 = vpop.f32.mrf.mxu0
        %v2307 = vadd.f32 0.0, %v2306
        %2308 = vmatmul.f32.gmra.mxu0 %v2263
        %v2309 = vpop.f32.mrf.mxu0
        %v2310 = vadd.f32 0.0, %v2309
        %2311 = vmatmul.f32.gmra.mxu0 %v2265
        %v2312 = vpop.f32.mrf.mxu0
        %v2313 = vadd.f32 0.0, %v2312
        %2314 = vmatmul.f32.gmra.mxu0 %v2267
        %v2315 = vpop.f32.mrf.mxu0
        %v2316 = vadd.f32 0.0, %v2315
        %2317 = vmatmul.f32.gmra.mxu0 %v2269
        %v2318 = vpop.f32.mrf.mxu0
        %v2319 = vadd.f32 0.0, %v2318
        %2320 = vdwg.mxu0
        %v2321 = vadd.f32 %v2217, %v2292
        %v2322 = vadd.f32 %v2218, %v2295
        %v2323 = vadd.f32 %v2219, %v2298
        %v2324 = vadd.f32 %v2220, %v2301
        %v2325 = vadd.f32 %v2221, %v2304
        %v2326 = vadd.f32 %v2222, %v2307
        %v2327 = vadd.f32 %v2223, %v2310
        %v2328 = vadd.f32 %v2224, %v2313
        %v2329 = vadd.f32 %v2225, %v2316
        %v2330 = vadd.f32 %v2226, %v2319
        %s2331 = scalar_lea.vmem %s3, 80
        %v2332 = vld [vmem:[%s2331] sm:$0xf]
        %v2333 = vrot.slane %v2122, 2
        %v2334 = vrot.slane %v2123, 2
        %v2335 = vsel %vm613, %v2333, %v2334
        %v2336 = vrot.slane %v2124, 2
        %v2337 = vsel %vm613, %v2334, %v2336
        %v2338 = vrot.slane %v2125, 2
        %v2339 = vsel %vm613, %v2336, %v2338
        %v2340 = vrot.slane %v2126, 2
        %v2341 = vsel %vm613, %v2338, %v2340
        %v2342 = vrot.slane %v2127, 2
        %v2343 = vsel %vm613, %v2340, %v2342
        %v2344 = vrot.slane %v2128, 2
        %v2345 = vsel %vm613, %v2342, %v2344
        %v2346 = vrot.slane %v2129, 2
        %v2347 = vsel %vm613, %v2344, %v2346
        %v2348 = vrot.slane %v2130, 2
        %v2349 = vsel %vm613, %v2346, %v2348
        %v2350 = vrot.slane %v2131, 2
        %v2351 = vsel %vm613, %v2348, %v2350
        %v2352 = vrot.slane %v2132, 2
        %v2353 = vsel %vm613, %v2350, %v2352
        %v2354 = vsel %vm469, %v2335, 0
        %v2356 = vsel %vm469, %v2337, 0
        %v2358 = vsel %vm469, %v2339, 0
        %v2360 = vsel %vm469, %v2341, 0
        %v2362 = vsel %vm469, %v2343, 0
        %v2364 = vsel %vm469, %v2345, 0
        %v2366 = vsel %vm469, %v2347, 0
        %v2368 = vsel %vm469, %v2349, 0
        %v2370 = vsel %vm469, %v2351, 0
        %v2372 = vsel %vm469, %v2353, 0
        %v2375 = vsel %vm490, %v2332, 0
        %2377 = vmatpush.msra.mxu0 0.0
        %2378 = vmatpush.msra.mxu0 0.0
        %2379 = vmatpush.msra.mxu0 0.0
        %2380 = vmatpush.msra.mxu0 0.0
        %2381 = vmatpush.msra.mxu0 0.0
        %2382 = vmatpush.msra.mxu0 0.0
        %2383 = vmatpush.msra.mxu0 0.0
        %2384 = vmatpush.msra.mxu0 0.0
        %2385 = vmatpush.msra.mxu0 0.0
        %2386 = vmatpush.msra.mxu0 0.0
        %2387 = vmatpush.msra.mxu0 0.0
        %2388 = vmatpush.msra.mxu0 0.0
        %2389 = vmatpush.msra.mxu0 0.0
        %2390 = vmatpush.msra.mxu0 0.0
        %2391 = vmatpush.msra.mxu0 0.0
        %2392 = vmatpush.msra.mxu0 %v2375
        %2393 = vmatmul.f32.gmra.mxu0 %v2354
        %v2394 = vpop.f32.mrf.mxu0
        %v2395 = vadd.f32 0.0, %v2394
        %2396 = vmatmul.f32.gmra.mxu0 %v2356
        %v2397 = vpop.f32.mrf.mxu0
        %v2398 = vadd.f32 0.0, %v2397
        %2399 = vmatmul.f32.gmra.mxu0 %v2358
        %v2400 = vpop.f32.mrf.mxu0
        %v2401 = vadd.f32 0.0, %v2400
        %2402 = vmatmul.f32.gmra.mxu0 %v2360
        %v2403 = vpop.f32.mrf.mxu0
        %v2404 = vadd.f32 0.0, %v2403
        %2405 = vmatmul.f32.gmra.mxu0 %v2362
        %v2406 = vpop.f32.mrf.mxu0
        %v2407 = vadd.f32 0.0, %v2406
        %2408 = vmatmul.f32.gmra.mxu0 %v2364
        %v2409 = vpop.f32.mrf.mxu0
        %v2410 = vadd.f32 0.0, %v2409
        %2411 = vmatmul.f32.gmra.mxu0 %v2366
        %v2412 = vpop.f32.mrf.mxu0
        %v2413 = vadd.f32 0.0, %v2412
        %2414 = vmatmul.f32.gmra.mxu0 %v2368
        %v2415 = vpop.f32.mrf.mxu0
        %v2416 = vadd.f32 0.0, %v2415
        %2417 = vmatmul.f32.gmra.mxu0 %v2370
        %v2418 = vpop.f32.mrf.mxu0
        %v2419 = vadd.f32 0.0, %v2418
        %2420 = vmatmul.f32.gmra.mxu0 %v2372
        %v2421 = vpop.f32.mrf.mxu0
        %v2422 = vadd.f32 0.0, %v2421
        %2423 = vdwg.mxu0
        %v2424 = vadd.f32 %v2321, %v2395
        %v2425 = vadd.f32 %v2322, %v2398
        %v2426 = vadd.f32 %v2323, %v2401
        %v2427 = vadd.f32 %v2324, %v2404
        %v2428 = vadd.f32 %v2325, %v2407
        %v2429 = vadd.f32 %v2326, %v2410
        %v2430 = vadd.f32 %v2327, %v2413
        %v2431 = vadd.f32 %v2328, %v2416
        %v2432 = vadd.f32 %v2329, %v2419
        %v2433 = vadd.f32 %v2330, %v2422
        %s2434 = scalar_lea.vmem %s3, 84
        %v2435 = vld [vmem:[%s2434] sm:$0xf]
        %v2437 = vrot.slane %v2133, 2
        %v2438 = vsel %vm613, %v2352, %v2437
        %v2439 = vsel %vm469, %v2438, 0
        %v2442 = vsel %vm490, %v2435, 0
        %2444 = vmatpush.msra.mxu0 0.0
        %2445 = vmatpush.msra.mxu0 0.0
        %2446 = vmatpush.msra.mxu0 0.0
        %2447 = vmatpush.msra.mxu0 0.0
        %2448 = vmatpush.msra.mxu0 0.0
        %2449 = vmatpush.msra.mxu0 0.0
        %2450 = vmatpush.msra.mxu0 0.0
        %2451 = vmatpush.msra.mxu0 0.0
        %2452 = vmatpush.msra.mxu0 0.0
        %2453 = vmatpush.msra.mxu0 0.0
        %2454 = vmatpush.msra.mxu0 0.0
        %2455 = vmatpush.msra.mxu0 0.0
        %2456 = vmatpush.msra.mxu0 0.0
        %2457 = vmatpush.msra.mxu0 0.0
        %2458 = vmatpush.msra.mxu0 0.0
        %2459 = vmatpush.msra.mxu0 %v2442
        %2460 = vmatmul.f32.gmra.mxu0 %v2356
        %v2461 = vpop.f32.mrf.mxu0
        %v2462 = vadd.f32 0.0, %v2461
        %2463 = vmatmul.f32.gmra.mxu0 %v2358
        %v2464 = vpop.f32.mrf.mxu0
        %v2465 = vadd.f32 0.0, %v2464
        %2466 = vmatmul.f32.gmra.mxu0 %v2360
        %v2467 = vpop.f32.mrf.mxu0
        %v2468 = vadd.f32 0.0, %v2467
        %2469 = vmatmul.f32.gmra.mxu0 %v2362
        %v2470 = vpop.f32.mrf.mxu0
        %v2471 = vadd.f32 0.0, %v2470
        %2472 = vmatmul.f32.gmra.mxu0 %v2364
        %v2473 = vpop.f32.mrf.mxu0
        %v2474 = vadd.f32 0.0, %v2473
        %2475 = vmatmul.f32.gmra.mxu0 %v2366
        %v2476 = vpop.f32.mrf.mxu0
        %v2477 = vadd.f32 0.0, %v2476
        %2478 = vmatmul.f32.gmra.mxu0 %v2368
        %v2479 = vpop.f32.mrf.mxu0
        %v2480 = vadd.f32 0.0, %v2479
        %2481 = vmatmul.f32.gmra.mxu0 %v2370
        %v2482 = vpop.f32.mrf.mxu0
        %v2483 = vadd.f32 0.0, %v2482
        %2484 = vmatmul.f32.gmra.mxu0 %v2372
        %v2485 = vpop.f32.mrf.mxu0
        %v2486 = vadd.f32 0.0, %v2485
        %2487 = vmatmul.f32.gmra.mxu0 %v2439
        %v2488 = vpop.f32.mrf.mxu0
        %v2489 = vadd.f32 0.0, %v2488
        %2490 = vdwg.mxu0
        %v2491 = vadd.f32 %v2424, %v2462
        %v2492 = vadd.f32 %v2425, %v2465
        %v2493 = vadd.f32 %v2426, %v2468
        %v2494 = vadd.f32 %v2427, %v2471
        %v2495 = vadd.f32 %v2428, %v2474
        %v2496 = vadd.f32 %v2429, %v2477
        %v2497 = vadd.f32 %v2430, %v2480
        %v2498 = vadd.f32 %v2431, %v2483
        %v2499 = vadd.f32 %v2432, %v2486
        %v2500 = vadd.f32 %v2433, %v2489
        %s2501 = scalar_lea.vmem %s3, 88
        %v2502 = vld [vmem:[%s2501] sm:$0xf]
        %v2503 = vrot.slane %v2123, 3
        %v2504 = vrot.slane %v2124, 3
        %v2505 = vsel %vm784, %v2503, %v2504
        %v2506 = vrot.slane %v2125, 3
        %v2507 = vsel %vm784, %v2504, %v2506
        %v2508 = vrot.slane %v2126, 3
        %v2509 = vsel %vm784, %v2506, %v2508
        %v2510 = vrot.slane %v2127, 3
        %v2511 = vsel %vm784, %v2508, %v2510
        %v2512 = vrot.slane %v2128, 3
        %v2513 = vsel %vm784, %v2510, %v2512
        %v2514 = vrot.slane %v2129, 3
        %v2515 = vsel %vm784, %v2512, %v2514
        %v2516 = vrot.slane %v2130, 3
        %v2517 = vsel %vm784, %v2514, %v2516
        %v2518 = vrot.slane %v2131, 3
        %v2519 = vsel %vm784, %v2516, %v2518
        %v2520 = vrot.slane %v2132, 3
        %v2521 = vsel %vm784, %v2518, %v2520
        %v2522 = vrot.slane %v2133, 3
        %v2523 = vsel %vm784, %v2520, %v2522
        %v2524 = vsel %vm469, %v2505, 0
        %v2526 = vsel %vm469, %v2507, 0
        %v2528 = vsel %vm469, %v2509, 0
        %v2530 = vsel %vm469, %v2511, 0
        %v2532 = vsel %vm469, %v2513, 0
        %v2534 = vsel %vm469, %v2515, 0
        %v2536 = vsel %vm469, %v2517, 0
        %v2538 = vsel %vm469, %v2519, 0
        %v2540 = vsel %vm469, %v2521, 0
        %v2542 = vsel %vm469, %v2523, 0
        %v2545 = vsel %vm490, %v2502, 0
        %2547 = vmatpush.msra.mxu0 0.0
        %2548 = vmatpush.msra.mxu0 0.0
        %2549 = vmatpush.msra.mxu0 0.0
        %2550 = vmatpush.msra.mxu0 0.0
        %2551 = vmatpush.msra.mxu0 0.0
        %2552 = vmatpush.msra.mxu0 0.0
        %2553 = vmatpush.msra.mxu0 0.0
        %2554 = vmatpush.msra.mxu0 0.0
        %2555 = vmatpush.msra.mxu0 0.0
        %2556 = vmatpush.msra.mxu0 0.0
        %2557 = vmatpush.msra.mxu0 0.0
        %2558 = vmatpush.msra.mxu0 0.0
        %2559 = vmatpush.msra.mxu0 0.0
        %2560 = vmatpush.msra.mxu0 0.0
        %2561 = vmatpush.msra.mxu0 0.0
        %2562 = vmatpush.msra.mxu0 %v2545
        %2563 = vmatmul.f32.gmra.mxu0 %v2524
        %v2564 = vpop.f32.mrf.mxu0
        %v2565 = vadd.f32 0.0, %v2564
        %2566 = vmatmul.f32.gmra.mxu0 %v2526
        %v2567 = vpop.f32.mrf.mxu0
        %v2568 = vadd.f32 0.0, %v2567
        %2569 = vmatmul.f32.gmra.mxu0 %v2528
        %v2570 = vpop.f32.mrf.mxu0
        %v2571 = vadd.f32 0.0, %v2570
        %2572 = vmatmul.f32.gmra.mxu0 %v2530
        %v2573 = vpop.f32.mrf.mxu0
        %v2574 = vadd.f32 0.0, %v2573
        %2575 = vmatmul.f32.gmra.mxu0 %v2532
        %v2576 = vpop.f32.mrf.mxu0
        %v2577 = vadd.f32 0.0, %v2576
        %2578 = vmatmul.f32.gmra.mxu0 %v2534
        %v2579 = vpop.f32.mrf.mxu0
        %v2580 = vadd.f32 0.0, %v2579
        %2581 = vmatmul.f32.gmra.mxu0 %v2536
        %v2582 = vpop.f32.mrf.mxu0
        %v2583 = vadd.f32 0.0, %v2582
        %2584 = vmatmul.f32.gmra.mxu0 %v2538
        %v2585 = vpop.f32.mrf.mxu0
        %v2586 = vadd.f32 0.0, %v2585
        %2587 = vmatmul.f32.gmra.mxu0 %v2540
        %v2588 = vpop.f32.mrf.mxu0
        %v2589 = vadd.f32 0.0, %v2588
        %2590 = vmatmul.f32.gmra.mxu0 %v2542
        %v2591 = vpop.f32.mrf.mxu0
        %v2592 = vadd.f32 0.0, %v2591
        %2593 = vdwg.mxu0
        %v2594 = vadd.f32 %v2491, %v2565
        %v2595 = vadd.f32 %v2492, %v2568
        %v2596 = vadd.f32 %v2493, %v2571
        %v2597 = vadd.f32 %v2494, %v2574
        %v2598 = vadd.f32 %v2495, %v2577
        %v2599 = vadd.f32 %v2496, %v2580
        %v2600 = vadd.f32 %v2497, %v2583
        %v2601 = vadd.f32 %v2498, %v2586
        %v2602 = vadd.f32 %v2499, %v2589
        %v2603 = vadd.f32 %v2500, %v2592
        %s2604 = scalar_lea.vmem %s3, 92
        %v2605 = vld [vmem:[%s2604] sm:$0xf]
        %v2606 = vrot.slane %v2123, 4
        %v2607 = vrot.slane %v2124, 4
        %v2608 = vsel %vm490, %v2606, %v2607
        %v2609 = vrot.slane %v2125, 4
        %v2610 = vsel %vm490, %v2607, %v2609
        %v2611 = vrot.slane %v2126, 4
        %v2612 = vsel %vm490, %v2609, %v2611
        %v2613 = vrot.slane %v2127, 4
        %v2614 = vsel %vm490, %v2611, %v2613
        %v2615 = vrot.slane %v2128, 4
        %v2616 = vsel %vm490, %v2613, %v2615
        %v2617 = vrot.slane %v2129, 4
        %v2618 = vsel %vm490, %v2615, %v2617
        %v2619 = vrot.slane %v2130, 4
        %v2620 = vsel %vm490, %v2617, %v2619
        %v2621 = vrot.slane %v2131, 4
        %v2622 = vsel %vm490, %v2619, %v2621
        %v2623 = vrot.slane %v2132, 4
        %v2624 = vsel %vm490, %v2621, %v2623
        %v2625 = vrot.slane %v2133, 4
        %v2626 = vsel %vm490, %v2623, %v2625
        %v2627 = vsel %vm469, %v2608, 0
        %v2629 = vsel %vm469, %v2610, 0
        %v2631 = vsel %vm469, %v2612, 0
        %v2633 = vsel %vm469, %v2614, 0
        %v2635 = vsel %vm469, %v2616, 0
        %v2637 = vsel %vm469, %v2618, 0
        %v2639 = vsel %vm469, %v2620, 0
        %v2641 = vsel %vm469, %v2622, 0
        %v2643 = vsel %vm469, %v2624, 0
        %v2645 = vsel %vm469, %v2626, 0
        %v2648 = vsel %vm490, %v2605, 0
        %2650 = vmatpush.msra.mxu0 0.0
        %2651 = vmatpush.msra.mxu0 0.0
        %2652 = vmatpush.msra.mxu0 0.0
        %2653 = vmatpush.msra.mxu0 0.0
        %2654 = vmatpush.msra.mxu0 0.0
        %2655 = vmatpush.msra.mxu0 0.0
        %2656 = vmatpush.msra.mxu0 0.0
        %2657 = vmatpush.msra.mxu0 0.0
        %2658 = vmatpush.msra.mxu0 0.0
        %2659 = vmatpush.msra.mxu0 0.0
        %2660 = vmatpush.msra.mxu0 0.0
        %2661 = vmatpush.msra.mxu0 0.0
        %2662 = vmatpush.msra.mxu0 0.0
        %2663 = vmatpush.msra.mxu0 0.0
        %2664 = vmatpush.msra.mxu0 0.0
        %2665 = vmatpush.msra.mxu0 %v2648
        %2666 = vmatmul.f32.gmra.mxu0 %v2627
        %v2667 = vpop.f32.mrf.mxu0
        %v2668 = vadd.f32 0.0, %v2667
        %2669 = vmatmul.f32.gmra.mxu0 %v2629
        %v2670 = vpop.f32.mrf.mxu0
        %v2671 = vadd.f32 0.0, %v2670
        %2672 = vmatmul.f32.gmra.mxu0 %v2631
        %v2673 = vpop.f32.mrf.mxu0
        %v2674 = vadd.f32 0.0, %v2673
        %2675 = vmatmul.f32.gmra.mxu0 %v2633
        %v2676 = vpop.f32.mrf.mxu0
        %v2677 = vadd.f32 0.0, %v2676
        %2678 = vmatmul.f32.gmra.mxu0 %v2635
        %v2679 = vpop.f32.mrf.mxu0
        %v2680 = vadd.f32 0.0, %v2679
        %2681 = vmatmul.f32.gmra.mxu0 %v2637
        %v2682 = vpop.f32.mrf.mxu0
        %v2683 = vadd.f32 0.0, %v2682
        %2684 = vmatmul.f32.gmra.mxu0 %v2639
        %v2685 = vpop.f32.mrf.mxu0
        %v2686 = vadd.f32 0.0, %v2685
        %2687 = vmatmul.f32.gmra.mxu0 %v2641
        %v2688 = vpop.f32.mrf.mxu0
        %v2689 = vadd.f32 0.0, %v2688
        %2690 = vmatmul.f32.gmra.mxu0 %v2643
        %v2691 = vpop.f32.mrf.mxu0
        %v2692 = vadd.f32 0.0, %v2691
        %2693 = vmatmul.f32.gmra.mxu0 %v2645
        %v2694 = vpop.f32.mrf.mxu0
        %v2695 = vadd.f32 0.0, %v2694
        %2696 = vdwg.mxu0
        %v2697 = vadd.f32 %v2594, %v2668
        %v2698 = vadd.f32 %v2595, %v2671
        %v2699 = vadd.f32 %v2596, %v2674
        %v2700 = vadd.f32 %v2597, %v2677
        %v2701 = vadd.f32 %v2598, %v2680
        %v2702 = vadd.f32 %v2599, %v2683
        %v2703 = vadd.f32 %v2600, %v2686
        %v2704 = vadd.f32 %v2601, %v2689
        %v2705 = vadd.f32 %v2602, %v2692
        %v2706 = vadd.f32 %v2603, %v2695
        %s2707 = scalar_lea.vmem %s3, 96
        %v2708 = vld [vmem:[%s2707] sm:$0xf]
        %v2710 = vrot.slane %v2134, 4
        %v2711 = vsel %vm490, %v2625, %v2710
        %v2712 = vsel %vm469, %v2711, 0
        %v2715 = vsel %vm490, %v2708, 0
        %2717 = vmatpush.msra.mxu0 0.0
        %2718 = vmatpush.msra.mxu0 0.0
        %2719 = vmatpush.msra.mxu0 0.0
        %2720 = vmatpush.msra.mxu0 0.0
        %2721 = vmatpush.msra.mxu0 0.0
        %2722 = vmatpush.msra.mxu0 0.0
        %2723 = vmatpush.msra.mxu0 0.0
        %2724 = vmatpush.msra.mxu0 0.0
        %2725 = vmatpush.msra.mxu0 0.0
        %2726 = vmatpush.msra.mxu0 0.0
        %2727 = vmatpush.msra.mxu0 0.0
        %2728 = vmatpush.msra.mxu0 0.0
        %2729 = vmatpush.msra.mxu0 0.0
        %2730 = vmatpush.msra.mxu0 0.0
        %2731 = vmatpush.msra.mxu0 0.0
        %2732 = vmatpush.msra.mxu0 %v2715
        %2733 = vmatmul.f32.gmra.mxu0 %v2629
        %v2734 = vpop.f32.mrf.mxu0
        %v2735 = vadd.f32 0.0, %v2734
        %2736 = vmatmul.f32.gmra.mxu0 %v2631
        %v2737 = vpop.f32.mrf.mxu0
        %v2738 = vadd.f32 0.0, %v2737
        %2739 = vmatmul.f32.gmra.mxu0 %v2633
        %v2740 = vpop.f32.mrf.mxu0
        %v2741 = vadd.f32 0.0, %v2740
        %2742 = vmatmul.f32.gmra.mxu0 %v2635
        %v2743 = vpop.f32.mrf.mxu0
        %v2744 = vadd.f32 0.0, %v2743
        %2745 = vmatmul.f32.gmra.mxu0 %v2637
        %v2746 = vpop.f32.mrf.mxu0
        %v2747 = vadd.f32 0.0, %v2746
        %2748 = vmatmul.f32.gmra.mxu0 %v2639
        %v2749 = vpop.f32.mrf.mxu0
        %v2750 = vadd.f32 0.0, %v2749
        %2751 = vmatmul.f32.gmra.mxu0 %v2641
        %v2752 = vpop.f32.mrf.mxu0
        %v2753 = vadd.f32 0.0, %v2752
        %2754 = vmatmul.f32.gmra.mxu0 %v2643
        %v2755 = vpop.f32.mrf.mxu0
        %v2756 = vadd.f32 0.0, %v2755
        %2757 = vmatmul.f32.gmra.mxu0 %v2645
        %v2758 = vpop.f32.mrf.mxu0
        %v2759 = vadd.f32 0.0, %v2758
        %2760 = vmatmul.f32.gmra.mxu0 %v2712
        %v2761 = vpop.f32.mrf.mxu0
        %v2762 = vadd.f32 0.0, %v2761
        %2763 = vdwg.mxu0
        %v2764 = vadd.f32 %v2697, %v2735
        %v2765 = vadd.f32 %v2698, %v2738
        %v2766 = vadd.f32 %v2699, %v2741
        %v2767 = vadd.f32 %v2700, %v2744
        %v2768 = vadd.f32 %v2701, %v2747
        %v2769 = vadd.f32 %v2702, %v2750
        %v2770 = vadd.f32 %v2703, %v2753
        %v2771 = vadd.f32 %v2704, %v2756
        %v2772 = vadd.f32 %v2705, %v2759
        %v2773 = vadd.f32 %v2706, %v2762
        %s2774 = scalar_lea.vmem %s3, 100
        %v2775 = vld [vmem:[%s2774] sm:$0xf]
        %v2776 = vrot.slane %v2124, 5
        %v2777 = vrot.slane %v2125, 5
        %v2778 = vsel %vm1058, %v2776, %v2777
        %v2779 = vrot.slane %v2126, 5
        %v2780 = vsel %vm1058, %v2777, %v2779
        %v2781 = vrot.slane %v2127, 5
        %v2782 = vsel %vm1058, %v2779, %v2781
        %v2783 = vrot.slane %v2128, 5
        %v2784 = vsel %vm1058, %v2781, %v2783
        %v2785 = vrot.slane %v2129, 5
        %v2786 = vsel %vm1058, %v2783, %v2785
        %v2787 = vrot.slane %v2130, 5
        %v2788 = vsel %vm1058, %v2785, %v2787
        %v2789 = vrot.slane %v2131, 5
        %v2790 = vsel %vm1058, %v2787, %v2789
        %v2791 = vrot.slane %v2132, 5
        %v2792 = vsel %vm1058, %v2789, %v2791
        %v2793 = vrot.slane %v2133, 5
        %v2794 = vsel %vm1058, %v2791, %v2793
        %v2795 = vrot.slane %v2134, 5
        %v2796 = vsel %vm1058, %v2793, %v2795
        %v2797 = vsel %vm469, %v2778, 0
        %v2799 = vsel %vm469, %v2780, 0
        %v2801 = vsel %vm469, %v2782, 0
        %v2803 = vsel %vm469, %v2784, 0
        %v2805 = vsel %vm469, %v2786, 0
        %v2807 = vsel %vm469, %v2788, 0
        %v2809 = vsel %vm469, %v2790, 0
        %v2811 = vsel %vm469, %v2792, 0
        %v2813 = vsel %vm469, %v2794, 0
        %v2815 = vsel %vm469, %v2796, 0
        %v2818 = vsel %vm490, %v2775, 0
        %2820 = vmatpush.msra.mxu0 0.0
        %2821 = vmatpush.msra.mxu0 0.0
        %2822 = vmatpush.msra.mxu0 0.0
        %2823 = vmatpush.msra.mxu0 0.0
        %2824 = vmatpush.msra.mxu0 0.0
        %2825 = vmatpush.msra.mxu0 0.0
        %2826 = vmatpush.msra.mxu0 0.0
        %2827 = vmatpush.msra.mxu0 0.0
        %2828 = vmatpush.msra.mxu0 0.0
        %2829 = vmatpush.msra.mxu0 0.0
        %2830 = vmatpush.msra.mxu0 0.0
        %2831 = vmatpush.msra.mxu0 0.0
        %2832 = vmatpush.msra.mxu0 0.0
        %2833 = vmatpush.msra.mxu0 0.0
        %2834 = vmatpush.msra.mxu0 0.0
        %2835 = vmatpush.msra.mxu0 %v2818
        %2836 = vmatmul.f32.gmra.mxu0 %v2797
        %v2837 = vpop.f32.mrf.mxu0
        %v2838 = vadd.f32 0.0, %v2837
        %2839 = vmatmul.f32.gmra.mxu0 %v2799
        %v2840 = vpop.f32.mrf.mxu0
        %v2841 = vadd.f32 0.0, %v2840
        %2842 = vmatmul.f32.gmra.mxu0 %v2801
        %v2843 = vpop.f32.mrf.mxu0
        %v2844 = vadd.f32 0.0, %v2843
        %2845 = vmatmul.f32.gmra.mxu0 %v2803
        %v2846 = vpop.f32.mrf.mxu0
        %v2847 = vadd.f32 0.0, %v2846
        %2848 = vmatmul.f32.gmra.mxu0 %v2805
        %v2849 = vpop.f32.mrf.mxu0
        %v2850 = vadd.f32 0.0, %v2849
        %2851 = vmatmul.f32.gmra.mxu0 %v2807
        %v2852 = vpop.f32.mrf.mxu0
        %v2853 = vadd.f32 0.0, %v2852
        %2854 = vmatmul.f32.gmra.mxu0 %v2809
        %v2855 = vpop.f32.mrf.mxu0
        %v2856 = vadd.f32 0.0, %v2855
        %2857 = vmatmul.f32.gmra.mxu0 %v2811
        %v2858 = vpop.f32.mrf.mxu0
        %v2859 = vadd.f32 0.0, %v2858
        %2860 = vmatmul.f32.gmra.mxu0 %v2813
        %v2861 = vpop.f32.mrf.mxu0
        %v2862 = vadd.f32 0.0, %v2861
        %2863 = vmatmul.f32.gmra.mxu0 %v2815
        %v2864 = vpop.f32.mrf.mxu0
        %v2865 = vadd.f32 0.0, %v2864
        %2866 = vdwg.mxu0
        %v2867 = vadd.f32 %v2764, %v2838
        %v2868 = vadd.f32 %v2765, %v2841
        %v2869 = vadd.f32 %v2766, %v2844
        %v2870 = vadd.f32 %v2767, %v2847
        %v2871 = vadd.f32 %v2768, %v2850
        %v2872 = vadd.f32 %v2769, %v2853
        %v2873 = vadd.f32 %v2770, %v2856
        %v2874 = vadd.f32 %v2771, %v2859
        %v2875 = vadd.f32 %v2772, %v2862
        %v2876 = vadd.f32 %v2773, %v2865
        %s2877 = scalar_lea.vmem %s3, 104
        %v2878 = vld [vmem:[%s2877] sm:$0xf]
        %v2879 = vrot.slane %v2124, 6
        %v2880 = vrot.slane %v2125, 6
        %v2881 = vsel %vm1162, %v2879, %v2880
        %v2882 = vrot.slane %v2126, 6
        %v2883 = vsel %vm1162, %v2880, %v2882
        %v2884 = vrot.slane %v2127, 6
        %v2885 = vsel %vm1162, %v2882, %v2884
        %v2886 = vrot.slane %v2128, 6
        %v2887 = vsel %vm1162, %v2884, %v2886
        %v2888 = vrot.slane %v2129, 6
        %v2889 = vsel %vm1162, %v2886, %v2888
        %v2890 = vrot.slane %v2130, 6
        %v2891 = vsel %vm1162, %v2888, %v2890
        %v2892 = vrot.slane %v2131, 6
        %v2893 = vsel %vm1162, %v2890, %v2892
        %v2894 = vrot.slane %v2132, 6
        %v2895 = vsel %vm1162, %v2892, %v2894
        %v2896 = vrot.slane %v2133, 6
        %v2897 = vsel %vm1162, %v2894, %v2896
        %v2898 = vrot.slane %v2134, 6
        %v2899 = vsel %vm1162, %v2896, %v2898
        %v2900 = vsel %vm469, %v2881, 0
        %v2902 = vsel %vm469, %v2883, 0
        %v2904 = vsel %vm469, %v2885, 0
        %v2906 = vsel %vm469, %v2887, 0
        %v2908 = vsel %vm469, %v2889, 0
        %v2910 = vsel %vm469, %v2891, 0
        %v2912 = vsel %vm469, %v2893, 0
        %v2914 = vsel %vm469, %v2895, 0
        %v2916 = vsel %vm469, %v2897, 0
        %v2918 = vsel %vm469, %v2899, 0
        %v2921 = vsel %vm490, %v2878, 0
        %2923 = vmatpush.msra.mxu0 0.0
        %2924 = vmatpush.msra.mxu0 0.0
        %2925 = vmatpush.msra.mxu0 0.0
        %2926 = vmatpush.msra.mxu0 0.0
        %2927 = vmatpush.msra.mxu0 0.0
        %2928 = vmatpush.msra.mxu0 0.0
        %2929 = vmatpush.msra.mxu0 0.0
        %2930 = vmatpush.msra.mxu0 0.0
        %2931 = vmatpush.msra.mxu0 0.0
        %2932 = vmatpush.msra.mxu0 0.0
        %2933 = vmatpush.msra.mxu0 0.0
        %2934 = vmatpush.msra.mxu0 0.0
        %2935 = vmatpush.msra.mxu0 0.0
        %2936 = vmatpush.msra.mxu0 0.0
        %2937 = vmatpush.msra.mxu0 0.0
        %2938 = vmatpush.msra.mxu0 %v2921
        %2939 = vmatmul.f32.gmra.mxu0 %v2900
        %v2940 = vpop.f32.mrf.mxu0
        %v2941 = vadd.f32 0.0, %v2940
        %2942 = vmatmul.f32.gmra.mxu0 %v2902
        %v2943 = vpop.f32.mrf.mxu0
        %v2944 = vadd.f32 0.0, %v2943
        %2945 = vmatmul.f32.gmra.mxu0 %v2904
        %v2946 = vpop.f32.mrf.mxu0
        %v2947 = vadd.f32 0.0, %v2946
        %2948 = vmatmul.f32.gmra.mxu0 %v2906
        %v2949 = vpop.f32.mrf.mxu0
        %v2950 = vadd.f32 0.0, %v2949
        %2951 = vmatmul.f32.gmra.mxu0 %v2908
        %v2952 = vpop.f32.mrf.mxu0
        %v2953 = vadd.f32 0.0, %v2952
        %2954 = vmatmul.f32.gmra.mxu0 %v2910
        %v2955 = vpop.f32.mrf.mxu0
        %v2956 = vadd.f32 0.0, %v2955
        %2957 = vmatmul.f32.gmra.mxu0 %v2912
        %v2958 = vpop.f32.mrf.mxu0
        %v2959 = vadd.f32 0.0, %v2958
        %2960 = vmatmul.f32.gmra.mxu0 %v2914
        %v2961 = vpop.f32.mrf.mxu0
        %v2962 = vadd.f32 0.0, %v2961
        %2963 = vmatmul.f32.gmra.mxu0 %v2916
        %v2964 = vpop.f32.mrf.mxu0
        %v2965 = vadd.f32 0.0, %v2964
        %2966 = vmatmul.f32.gmra.mxu0 %v2918
        %v2967 = vpop.f32.mrf.mxu0
        %v2968 = vadd.f32 0.0, %v2967
        %2969 = vdwg.mxu0
        %v2970 = vadd.f32 %v2867, %v2941
        %v2971 = vadd.f32 %v2868, %v2944
        %v2972 = vadd.f32 %v2869, %v2947
        %v2973 = vadd.f32 %v2870, %v2950
        %v2974 = vadd.f32 %v2871, %v2953
        %v2975 = vadd.f32 %v2872, %v2956
        %v2976 = vadd.f32 %v2873, %v2959
        %v2977 = vadd.f32 %v2874, %v2962
        %v2978 = vadd.f32 %v2875, %v2965
        %v2979 = vadd.f32 %v2876, %v2968
        %2980 = vst.msk [vmem:[%s419] sm:$0xff] %vm469, %v2970
        %2981 = vst.msk [vmem:[%s419 + $0x8] sm:$0xff] %vm469, %v2971
        %2982 = vst.msk [vmem:[%s419 + $0x10] sm:$0xff] %vm469, %v2972
        %2983 = vst.msk [vmem:[%s419 + $0x18] sm:$0xff] %vm469, %v2973
        %2984 = vst.msk [vmem:[%s419 + $0x20] sm:$0xff] %vm469, %v2974
        %2985 = vst.msk [vmem:[%s419 + $0x28] sm:$0xff] %vm469, %v2975
        %2986 = vst.msk [vmem:[%s419 + $0x30] sm:$0xff] %vm469, %v2976
        %2987 = vst.msk [vmem:[%s419 + $0x38] sm:$0xff] %vm469, %v2977
        %2988 = vst.msk [vmem:[%s419 + $0x40] sm:$0xff] %vm469, %v2978
        %2989 = vst.msk [vmem:[%s419 + $0x48] sm:$0xff] %vm469, %v2979
        %v2990 = vld [vmem:[%s4] sm:$0xff]
        %v2991 = vld [vmem:[%s4 + $0x8] sm:$0xff]
        %v2992 = vld [vmem:[%s4 + $0x10] sm:$0xff]
        %v2993 = vld [vmem:[%s4 + $0x18] sm:$0xff]
        %v2994 = vld [vmem:[%s4 + $0x20] sm:$0xff]
        %v2995 = vld [vmem:[%s4 + $0x28] sm:$0xff]
        %v2996 = vld [vmem:[%s4 + $0x30] sm:$0xff]
        %v2997 = vld [vmem:[%s4 + $0x38] sm:$0xff]
        %v2998 = vld [vmem:[%s4 + $0x40] sm:$0xff]
        %v2999 = vld [vmem:[%s4 + $0x48] sm:$0xff]
        %3001 = vset.pattern.permute.xlu0 0
        %3002 = vperm.xlu0 %3001, %v2990
        %v3003 = vpop.permute.xlu0 %3002
        %3006 = vset.pattern.permute.xlu0 0
        %3007 = vperm.xlu0 %3006, %v2991
        %v3008 = vpop.permute.xlu0 %3007
        %3011 = vset.pattern.permute.xlu0 0
        %3012 = vperm.xlu0 %3011, %v2992
        %v3013 = vpop.permute.xlu0 %3012
        %3016 = vset.pattern.permute.xlu0 0
        %3017 = vperm.xlu0 %3016, %v2993
        %v3018 = vpop.permute.xlu0 %3017
        %3021 = vset.pattern.permute.xlu0 0
        %3022 = vperm.xlu0 %3021, %v2994
        %v3023 = vpop.permute.xlu0 %3022
        %3026 = vset.pattern.permute.xlu0 0
        %3027 = vperm.xlu0 %3026, %v2995
        %v3028 = vpop.permute.xlu0 %3027
        %3031 = vset.pattern.permute.xlu0 0
        %3032 = vperm.xlu0 %3031, %v2996
        %v3033 = vpop.permute.xlu0 %3032
        %3036 = vset.pattern.permute.xlu0 0
        %3037 = vperm.xlu0 %3036, %v2997
        %v3038 = vpop.permute.xlu0 %3037
        %3041 = vset.pattern.permute.xlu0 0
        %3042 = vperm.xlu0 %3041, %v2998
        %v3043 = vpop.permute.xlu0 %3042
        %3046 = vset.pattern.permute.xlu0 0
        %3047 = vperm.xlu0 %3046, %v2999
        %v3048 = vpop.permute.xlu0 %3047
        %v3050 = vmul.f32 %v2970, %v3003
        %v3051 = vmul.f32 %v2971, %v3008
        %v3052 = vmul.f32 %v2972, %v3013
        %v3053 = vmul.f32 %v2973, %v3018
        %v3054 = vmul.f32 %v2974, %v3023
        %v3055 = vmul.f32 %v2975, %v3028
        %v3056 = vmul.f32 %v2976, %v3033
        %v3057 = vmul.f32 %v2977, %v3038
        %v3058 = vmul.f32 %v2978, %v3043
        %v3059 = vmul.f32 %v2979, %v3048
        %v3060 = vsel %vm469, %v3050, 0.0
        %v3061 = vsel %vm469, %v3051, 0.0
        %v3062 = vadd.f32 %v3060, %v3061
        %v3063 = vsel %vm469, %v3052, 0.0
        %v3064 = vadd.f32 %v3062, %v3063
        %v3065 = vsel %vm469, %v3053, 0.0
        %v3066 = vadd.f32 %v3064, %v3065
        %v3067 = vsel %vm469, %v3054, 0.0
        %v3068 = vadd.f32 %v3066, %v3067
        %v3069 = vsel %vm469, %v3055, 0.0
        %v3070 = vadd.f32 %v3068, %v3069
        %v3071 = vsel %vm469, %v3056, 0.0
        %v3072 = vadd.f32 %v3070, %v3071
        %v3073 = vsel %vm469, %v3057, 0.0
        %v3074 = vadd.f32 %v3072, %v3073
        %v3075 = vsel %vm469, %v3058, 0.0
        %v3076 = vadd.f32 %v3074, %v3075
        %v3077 = vsel %vm469, %v3059, 0.0
        %v3078 = vadd.f32 %v3076, %v3077
        %v3079 = vrot.slane %v3078, 4
        %v3080 = vadd.f32 %v3078, %v3079
        %v3081 = vrot.slane %v3080, 2
        %v3082 = vadd.f32 %v3080, %v3081
        %v3083 = vrot.slane %v3082, 1
        %v3084 = vadd.f32 %v3082, %v3083
        %vm3085 = vcmask 24576
        %3086 = vst.msk [vmem:[%s373] sm:$0x1] %vm3085, %v3084
        %v3087 = vmul.f32 %v3050, %v3050
        %v3088 = vmul.f32 %v3051, %v3051
        %v3089 = vmul.f32 %v3052, %v3052
        %v3090 = vmul.f32 %v3053, %v3053
        %v3091 = vmul.f32 %v3054, %v3054
        %v3092 = vmul.f32 %v3055, %v3055
        %v3093 = vmul.f32 %v3056, %v3056
        %v3094 = vmul.f32 %v3057, %v3057
        %v3095 = vmul.f32 %v3058, %v3058
        %v3096 = vmul.f32 %v3059, %v3059
        %v3097 = vsel %vm469, %v3087, 0.0
        %v3098 = vsel %vm469, %v3088, 0.0
        %v3099 = vadd.f32 %v3097, %v3098
        %v3100 = vsel %vm469, %v3089, 0.0
        %v3101 = vadd.f32 %v3099, %v3100
        %v3102 = vsel %vm469, %v3090, 0.0
        %v3103 = vadd.f32 %v3101, %v3102
        %v3104 = vsel %vm469, %v3091, 0.0
        %v3105 = vadd.f32 %v3103, %v3104
        %v3106 = vsel %vm469, %v3092, 0.0
        %v3107 = vadd.f32 %v3105, %v3106
        %v3108 = vsel %vm469, %v3093, 0.0
        %v3109 = vadd.f32 %v3107, %v3108
        %v3110 = vsel %vm469, %v3094, 0.0
        %v3111 = vadd.f32 %v3109, %v3110
        %v3112 = vsel %vm469, %v3095, 0.0
        %v3113 = vadd.f32 %v3111, %v3112
        %v3114 = vsel %vm469, %v3096, 0.0
        %v3115 = vadd.f32 %v3113, %v3114
        %v3116 = vrot.slane %v3115, 4
        %v3117 = vadd.f32 %v3115, %v3116
        %v3118 = vrot.slane %v3117, 2
        %v3119 = vadd.f32 %v3117, %v3118
        %v3120 = vrot.slane %v3119, 1
        %v3121 = vadd.f32 %v3119, %v3120
        %3122 = vst.msk [vmem:[%s379] sm:$0x1] %vm3085, %v3121
        %p3123 = scmp.lt.s32.totalorder %s29, 1
        %s3124 = scalar_select %p3123, %s29, 1
        %p3125 = scmp.lt.s32.totalorder %s30, 7
        %s3126 = scalar_select %p3125, %s30, 7
        %s3127 = smul.addr %s3126, 10
        %s3128 = smul.addr %s3124, 80
        %s3129 = sadd.s32 %s3127, %s3128
        %s3130 = smul.addr %s3129, 8
        %s3131 = scalar_lea.vmem %s5, %s3130
        %s3132 = sand.u32 %s205, 1
        %s3133 = scalar_lea.sflag [#allocation3], %s3132
        %s3134 = sand.u32 %s205, 1
        %s3135 = scalar_lea.vmem [#allocation2], %s3134
        %s3136 = sand.u32 %s233, 1
        %s3137 = scalar_lea.sflag [#allocation5], %s3136
        %s3138 = sand.u32 %s233, 1
        %s3139 = scalar_lea.vmem [#allocation4], %s3138
        // Predicated region
        $region41: #{sdc_forward.5} parent=39 // pred_check
          %p3140 = pneg %p187
        $region42: #{sdc_forward.5} parent=39 // pred_check_branch
          %3142 = sbr.rel (%p3140) target = $region44
        $region43: #{sdc_forward.5} parent=39 // pred_region
          _
        $region44: #{sdc_forward.5} parent=39 // pred_fallthru
          _
        // Predicated region
        $region45: #{sdc_forward.5} parent=39 // pred_check
          %p3143 = pneg %p215
        $region46: #{sdc_forward.5} parent=39 // pred_check_branch
          %3145 = sbr.rel (%p3143) target = $region48
        $region47: #{sdc_forward.5} parent=39 // pred_region
          %3147 = vsyncadd %s3133, 0
          %s3148 = smul.addr %s29, 8
          %s3149 = sadd.s32 %s30, %s3148
          %s3150 = scalar_lea.hbm %s6, %s3149
          %s3152 = sshll.u32 %s3135, 4
          %s3153 = int_to_ptr.vmem [resolvable:$true] %s3152
          %s3154 = sshll.u32 %s3150, 4
          %s3155 = int_to_ptr.hbm [resolvable:$true] %s3154
          %3157 = dma.vmem_to_hbm [thread:$0]  %s3153, 16, %s3155, %s3133
        $region48: #{sdc_forward.5} parent=39 // pred_fallthru
          _
        // Predicated region
        $region49: #{sdc_forward.5} parent=39 // pred_check
          %p3158 = pneg %p243
        $region50: #{sdc_forward.5} parent=39 // pred_check_branch
          %3160 = sbr.rel (%p3158) target = $region52
        $region51: #{sdc_forward.5} parent=39 // pred_region
          %3162 = vsyncadd %s3137, 0
          %s3163 = smul.addr %s29, 8
          %s3164 = sadd.s32 %s30, %s3163
          %s3165 = scalar_lea.hbm %s7, %s3164
          %s3167 = sshll.u32 %s3139, 4
          %s3168 = int_to_ptr.vmem [resolvable:$true] %s3167
          %s3169 = sshll.u32 %s3165, 4
          %s3170 = int_to_ptr.hbm [resolvable:$true] %s3169
          %3172 = dma.vmem_to_hbm [thread:$0]  %s3168, 16, %s3170, %s3137
        $region52: #{sdc_forward.5} parent=39 // pred_fallthru
          _
      $region40: #{sdc_forward.5} parent=5 // pred_fallthru
        _
      %p3173 = scmp.le.s32.totalorder 2, %s20
      // Predicated region
      $region53: #{sdc_forward.5} parent=5 // pred_check
        %p3174 = pneg %p3173
      $region54: #{sdc_forward.5} parent=5 // pred_check_branch
        %3176 = sbr.rel (%p3174) target = $region56
      $region55: #{sdc_forward.5} parent=5 // pred_region
        %s3177 = ssub.s32 %s20, 2
        // Predicated region
        $region57: #{sdc_forward.5} parent=55 // pred_check
          %p3178 = pneg %p193
        $region58: #{sdc_forward.5} parent=55 // pred_check_branch
          %3180 = sbr.rel (%p3178) target = $region60
        $region59: #{sdc_forward.5} parent=55 // pred_region
          %p3181 = scmp.lt.s32.totalorder %s31, 1
          %s3182 = scalar_select %p3181, %s31, 1
          %p3183 = scmp.lt.s32.totalorder %s32, 7
          %s3184 = scalar_select %p3183, %s32, 7
          %s3185 = smul.addr %s3184, 10
          %s3186 = smul.addr %s3182, 80
          %s3187 = sadd.s32 %s3185, %s3186
          %s3188 = smul.addr %s3187, 8
          %s3189 = scalar_lea.vmem %s5, %s3188
        $region60: #{sdc_forward.5} parent=55 // pred_fallthru
          _
        // Predicated region
        $region61: #{sdc_forward.5} parent=55 // pred_check
          %p3190 = pneg %p221
        $region62: #{sdc_forward.5} parent=55 // pred_check_branch
          %3192 = sbr.rel (%p3190) target = $region64
        $region63: #{sdc_forward.5} parent=55 // pred_region
          %s3193 = sand.u32 %s206, 1
          %s3194 = scalar_lea.sflag [#allocation3], %s3193
          %s3195 = sand.u32 %s206, 1
          %s3196 = scalar_lea.vmem [#allocation2], %s3195
          %3198 = dma.done %s3194, 16
        $region64: #{sdc_forward.5} parent=55 // pred_fallthru
          _
        // Predicated region
        $region65: #{sdc_forward.5} parent=55 // pred_check
          %p3199 = pneg %p249
        $region66: #{sdc_forward.5} parent=55 // pred_check_branch
          %3201 = sbr.rel (%p3199) target = $region68
        $region67: #{sdc_forward.5} parent=55 // pred_region
          %s3202 = sand.u32 %s234, 1
          %s3203 = scalar_lea.sflag [#allocation5], %s3202
          %s3204 = sand.u32 %s234, 1
          %s3205 = scalar_lea.vmem [#allocation4], %s3204
          %3207 = dma.done %s3203, 16
        $region68: #{sdc_forward.5} parent=55 // pred_fallthru
          _
      $region56: #{sdc_forward.5} parent=5 // pred_fallthru
        _
    $region6: #{sdc_forward.5} parent=1 // loop_footer
      %s24 = sadd.s32 1, %s20
    $region7: #{sdc_forward.5} parent=1 // loop_footer_branch
      %19 = sbr.rel target = $region3
    $region8: #{sdc_forward.5} parent=1 // loop_exit
      _
    %3208 = vsyncpa [#allocation3], 1
    %s3209 = scalar_lea.sflag [#allocation3], 1
    %3210 = vsyncpa %s3209, 1
    %3211 = vsyncpa [#allocation5], 1
    %s3212 = scalar_lea.sflag [#allocation5], 1
    %3213 = vsyncpa %s3212, 1

</llo_original>
